<compile_context>
chip_gen: v5e
topology: v5e:2x2
jax: 0.10.0
libtpu: 0.0.40
codegen_flags: <defaults>
</compile_context>

<pallas_src>
import functools
import math

import jax
import jax.numpy as jnp
from jax.experimental import pallas as pl
from jax.experimental.pallas import tpu as pltpu


# ---------------------------------------------------------------------------
# Pallas kernels: GEMM with fused per-row/per-col scale & shift (+ ReLU)
# ---------------------------------------------------------------------------
def _gemm_kernel_1k(a_ref, b_ref, s_ref, t_ref, o_ref, *, apply_relu):
    # Single K step: no accumulator scratch, direct epilogue + store.
    y = jnp.dot(a_ref[...], b_ref[...], preferred_element_type=jnp.float32)
    y = y * s_ref[...] + t_ref[...]
    if apply_relu:
        y = jnp.maximum(y, 0.0)
    o_ref[...] = y.astype(o_ref.dtype)


def _gemm_kernel_nk(a_ref, b_ref, s_ref, t_ref, o_ref, acc_ref, *, apply_relu):
    k = pl.program_id(2)

    @pl.when(k == 0)
    def _():
        acc_ref[...] = jnp.zeros_like(acc_ref)

    acc_ref[...] += jnp.dot(a_ref[...], b_ref[...],
                            preferred_element_type=jnp.float32)

    @pl.when(k == pl.num_programs(2) - 1)
    def _():
        y = acc_ref[...] * s_ref[...] + t_ref[...]
        if apply_relu:
            y = jnp.maximum(y, 0.0)
        o_ref[...] = y.astype(o_ref.dtype)


# ---------------------------------------------------------------------------
# Tiling helpers
# ---------------------------------------------------------------------------
def _round_up(x, m):
    return ((x + m - 1) // m) * m


def _gemm_dims(M, K, N):
    # Sublane multiple of 16 (bf16 packing safe), lane multiple of 128.
    tm = min(256, _round_up(M, 16))
    tn = min(512, _round_up(N, 128))
    tk = min(2048, _round_up(K, 128))
    return tm, tn, tk, _round_up(M, tm), _round_up(K, tk), _round_up(N, tn)


def _pad2d(x, rows, cols, dtype):
    x = x.astype(dtype)
    if x.shape == (rows, cols):
        return x                        # already prepared -> no copy
    out = jnp.zeros((rows, cols), dtype)
    return out.at[:x.shape[0], :x.shape[1]].set(x)


def fused_gemm(a, b, scale, shift, *, M, K, N, relu, scale_per_row,
               out_dtype=jnp.bfloat16):
    """Computes relu?((a @ b) * scale + shift).

    a: logical (M, K) (possibly pre-padded), b: logical (K, N) (possibly
    pre-padded).  scale/shift are length-M (per-row) or length-N (per-col).
    MXU operands bf16, f32 accumulate/epilogue, result sliced to (M, N).
    """
    tm, tn, tk, Mp, Kp, Np = _gemm_dims(M, K, N)
    a = _pad2d(a, Mp, Kp, jnp.bfloat16)
    b = _pad2d(b, Kp, Np, jnp.bfloat16)
    scale = scale.astype(jnp.float32)
    shift = shift.astype(jnp.float32)

    if scale_per_row:
        s = jnp.zeros((Mp, 1), jnp.float32).at[:M, 0].set(scale)
        t = jnp.zeros((Mp, 1), jnp.float32).at[:M, 0].set(shift)
        s_block = (tm, 1)
    else:
        s = jnp.zeros((1, Np), jnp.float32).at[0, :N].set(scale)
        t = jnp.zeros((1, Np), jnp.float32).at[0, :N].set(shift)
        s_block = (1, tn)

    nk = Kp // tk
    if nk == 1:
        s_map = (lambda i, j: (i, 0)) if scale_per_row else (lambda i, j: (0, j))
        kernel = functools.partial(_gemm_kernel_1k, apply_relu=relu)
        out = pl.pallas_call(
            kernel,
            out_shape=jax.ShapeDtypeStruct((Mp, Np), out_dtype),
            grid_spec=pltpu.PrefetchScalarGridSpec(
                num_scalar_prefetch=0,
                grid=(Mp // tm, Np // tn),
                in_specs=[
                    pl.BlockSpec((tm, Kp), lambda i, j: (i, 0)),
                    pl.BlockSpec((Kp, tn), lambda i, j: (0, j)),
                    pl.BlockSpec(s_block, s_map),
                    pl.BlockSpec(s_block, s_map),
                ],
                out_specs=pl.BlockSpec((tm, tn), lambda i, j: (i, j)),
            ),
            compiler_params=pltpu.CompilerParams(
                dimension_semantics=("parallel", "parallel")),
        )(a, b, s, t)
    else:
        s_map = (lambda i, j, k: (i, 0)) if scale_per_row else (lambda i, j, k: (0, j))
        kernel = functools.partial(_gemm_kernel_nk, apply_relu=relu)
        out = pl.pallas_call(
            kernel,
            out_shape=jax.ShapeDtypeStruct((Mp, Np), out_dtype),
            grid_spec=pltpu.PrefetchScalarGridSpec(
                num_scalar_prefetch=0,
                grid=(Mp // tm, Np // tn, nk),
                in_specs=[
                    pl.BlockSpec((tm, tk), lambda i, j, k: (i, k)),
                    pl.BlockSpec((tk, tn), lambda i, j, k: (k, j)),
                    pl.BlockSpec(s_block, s_map),
                    pl.BlockSpec(s_block, s_map),
                ],
                out_specs=pl.BlockSpec((tm, tn), lambda i, j, k: (i, j)),
                scratch_shapes=[pltpu.VMEM((tm, tn), jnp.float32)],
            ),
            compiler_params=pltpu.CompilerParams(
                dimension_semantics=("parallel", "parallel", "arbitrary")),
        )(a, b, s, t)
    return out[:M, :N]


# ---------------------------------------------------------------------------
# Plain-JAX glue: BN folding, channel-major im2col
# ---------------------------------------------------------------------------
_BN_EPS = 1e-3  # matches nn.BatchNorm(eps=0.001)


def fold_bn(conv_bias, bn, eps=_BN_EPS):
    # y = gamma * (z + bias - mean) / sqrt(var+eps) + beta == z*scale + shift
    scale = bn["gamma"] / jnp.sqrt(bn["var"] + eps)
    shift = bn["beta"] + scale * (conv_bias - bn["mean"])
    return scale, shift


def conv2d_bn_relu_cm(x, prep):
    # x: (Cin, B, H, W) channel-major; returns (Cout, B, Ho, Wo) bf16
    Cin, B, H, W = x.shape
    k = prep["k"]
    Ho, Wo = H - k + 1, W - k + 1
    cols = []
    for dh in range(k):
        for dw in range(k):
            cols.append(x[:, :, dh:dh + Ho, dw:dw + Wo])
    patT = jnp.stack(cols, axis=1).reshape(Cin * k * k, B * Ho * Wo)  # (CKK, BHW)
    y = fused_gemm(prep["A"], patT, prep["scale"], prep["shift"],
                   M=prep["cout"], K=Cin * k * k, N=B * Ho * Wo,
                   relu=True, scale_per_row=True, out_dtype=jnp.bfloat16)
    return y.reshape(prep["cout"], B, Ho, Wo)


def conv1d_bn_relu_cm(x, prep, stride):
    # x: (Cin, B, L) channel-major; returns (Cout, B, Lo) bf16
    Cin, B, L = x.shape
    k = prep["k"]
    Lo = (L - k) // stride + 1
    cols = [x[:, :, d:d + stride * (Lo - 1) + 1:stride] for d in range(k)]
    patT = jnp.stack(cols, axis=1).reshape(Cin * k, B * Lo)           # (CK, BLo)
    y = fused_gemm(prep["A"], patT, prep["scale"], prep["shift"],
                   M=prep["cout"], K=Cin * k, N=B * Lo,
                   relu=True, scale_per_row=True, out_dtype=jnp.bfloat16)
    return y.reshape(prep["cout"], B, Lo)


def dense_layer(x, prep, relu, out_dtype):
    # x: (B, Fin); weight is pre-transposed/padded as (Kp, Np)
    return fused_gemm(x, prep["B"], prep["scale"], prep["shift"],
                      M=x.shape[0], K=prep["fin"], N=prep["fout"],
                      relu=relu, scale_per_row=False, out_dtype=out_dtype)


# ---------------------------------------------------------------------------
# Parameter init (raw, PyTorch-like shapes) + one-time inference preparation
# ---------------------------------------------------------------------------
def init_params(key, num_output=1):
    keys = iter(jax.random.split(key, 40))

    def bn_p(c):
        return dict(gamma=jnp.ones((c,), jnp.float32),
                    beta=jnp.zeros((c,), jnp.float32),
                    mean=jnp.zeros((c,), jnp.float32),
                    var=jnp.ones((c,), jnp.float32))

    def conv2d_p(cin, cout, k=5):
        fan = cin * k * k
        w = jax.random.normal(next(keys), (cout, cin, k, k), jnp.float32) / math.sqrt(fan)
        b = jax.random.normal(next(keys), (cout,), jnp.float32) * 0.01
        return w, b

    def conv1d_p(cin, cout, k=5):
        fan = cin * k
        w = jax.random.normal(next(keys), (cout, cin, k), jnp.float32) / math.sqrt(fan)
        b = jax.random.normal(next(keys), (cout,), jnp.float32) * 0.01
        return w, b

    def linear_p(fin, fout):
        w = jax.random.normal(next(keys), (fout, fin), jnp.float32) / math.sqrt(fin)
        b = jax.random.normal(next(keys), (fout,), jnp.float32) * 0.01
        return w, b

    nf = 8
    raw = {}
    raw["cellConv1"], raw["cellbn1"] = conv2d_p(1, nf), bn_p(nf)
    raw["cellConv2"], raw["cellbn2"] = conv2d_p(nf, nf * 2), bn_p(nf * 2)
    raw["cellConv3"], raw["cellbn3"] = conv2d_p(nf * 2, nf * 3), bn_p(nf * 3)
    raw["drugConv1"], raw["drugbn1"] = conv2d_p(1, nf), bn_p(nf)
    raw["drugConv2"], raw["drugbn2"] = conv2d_p(nf, nf * 2), bn_p(nf * 2)
    raw["drugConv3"], raw["drugbn3"] = conv2d_p(nf * 2, nf * 3), bn_p(nf * 3)
    raw["xConv1"], raw["xbn1"] = conv1d_p(1, nf * 2), bn_p(nf * 2)
    raw["xConv2"], raw["xbn2"] = conv1d_p(nf * 2, nf * 2), bn_p(nf * 2)
    raw["xConv3"], raw["xbn3"] = conv1d_p(nf * 2, nf * 2), bn_p(nf * 2)
    raw["dense1"], raw["xbn4"] = linear_p(13136, 128), bn_p(128)
    raw["dense2"] = linear_p(128, num_output)
    return raw


def prepare_params(raw):
    """Fold BN, pre-transpose / pre-pad / pre-cast weights to GEMM layout (once)."""
    p = {}

    def conv_prep(name, bn_name):
        w, b = raw[name]
        cout = w.shape[0]
        K = int(jnp.asarray(w).size) // cout          # Cin*k*k (2D) or Cin*k (1D)
        k = w.shape[-1]
        scale, shift = fold_bn(b, raw[bn_name])
        _, _, _, Mp, Kp, _ = _gemm_dims(cout, K, 128)  # Mp/Kp independent of N
        A = _pad2d(w.reshape(cout, K), Mp, Kp, jnp.bfloat16)
        return dict(A=A, scale=scale, shift=shift, cout=cout, k=k)

    def dense_prep(name, bn_name=None):
        w, b = raw[name]
        fout, fin = w.shape
        if bn_name is None:
            scale = jnp.ones((fout,), jnp.float32)
            shift = b.astype(jnp.float32)
        else:
            scale, shift = fold_bn(b, raw[bn_name])
        _, _, _, _, Kp, Np = _gemm_dims(16, fin, fout)  # Kp/Np independent of M
        Bmat = _pad2d(w.T, Kp, Np, jnp.bfloat16)
        return dict(B=Bmat, scale=scale, shift=shift, fin=fin, fout=fout)

    for branch in ("cell", "drug"):
        for idx in (1, 2, 3):
            p[f"{branch}Conv{idx}"] = conv_prep(f"{branch}Conv{idx}", f"{branch}bn{idx}")
    for idx in (1, 2, 3):
        p[f"xConv{idx}"] = conv_prep(f"xConv{idx}", f"xbn{idx}")
    p["dense1"] = dense_prep("dense1", "xbn4")
    p["dense2"] = dense_prep("dense2", None)
    return p


# ---------------------------------------------------------------------------
# Forward pass (eval mode: Dropout == identity, BN uses running stats)
# ---------------------------------------------------------------------------
def forward(params, cell_in, drug_in):
    # cell_in: (B, 34, 34), drug_in: (B, 33, 33) — matches view(-1, 11616/10584)
    B = cell_in.shape[0]
    cell = cell_in[None, :, :, :]                       # (1, B, 34, 34) channel-major
    drug = drug_in[None, :, :, :]                       # (1, B, 33, 33)

    drug = conv2d_bn_relu_cm(drug, params["drugConv1"])
    drug = conv2d_bn_relu_cm(drug, params["drugConv2"])
    drug = conv2d_bn_relu_cm(drug, params["drugConv3"])  # (24, B, 21, 21)
    drug = drug.transpose(1, 0, 2, 3).reshape(B, -1)     # (B, 10584)

    cell = conv2d_bn_relu_cm(cell, params["cellConv1"])
    cell = conv2d_bn_relu_cm(cell, params["cellConv2"])
    cell = conv2d_bn_relu_cm(cell, params["cellConv3"])  # (24, B, 22, 22)
    cell = cell.transpose(1, 0, 2, 3).reshape(B, -1)     # (B, 11616)

    x = jnp.concatenate([drug, cell], axis=1)            # (B, 22200) — torch.cat((drug, cell))
    x = x[None, :, :]                                    # (1, B, 22200) channel-major

    x = conv1d_bn_relu_cm(x, params["xConv1"], stride=3)  # (16, B, 7399)
    x = conv1d_bn_relu_cm(x, params["xConv2"], stride=3)  # (16, B, 2465)
    x = conv1d_bn_relu_cm(x, params["xConv3"], stride=3)  # (16, B, 821)
    # TODO(synk): Dropout (p=0.3) is the identity in eval mode; no RNG masking applied.
    x = x.transpose(1, 0, 2).reshape(B, -1)               # (B, 13136)

    x = dense_layer(x, params["dense1"], relu=True, out_dtype=jnp.bfloat16)  # (B, 128)
    x = dense_layer(x, params["dense2"], relu=False, out_dtype=jnp.float32)  # (B, 1)
    reg_loss = jnp.zeros((), jnp.float32)
    return x, reg_loss


if __name__ == "__main__":
    key = jax.random.PRNGKey(0)
    k_param, k_cell, k_drug = jax.random.split(key, 3)

    # Shapes implied by the module's hard-coded views:
    #   cell: 34x34 -> three 5x5 convs -> 24x22x22 = 11616
    #   drug: 33x33 -> three 5x5 convs -> 24x21x21 = 10584
    batch = 2
    cell_in = jax.random.normal(k_cell, (batch, 34, 34), jnp.float32)
    drug_in = jax.random.normal(k_drug, (batch, 33, 33), jnp.float32)

    raw = init_params(k_param, num_output=1)
    params = prepare_params(raw)   # weights folded/padded/cast once, outside the forward

    fwd = jax.jit(functools.partial(forward, params))
    out, reg_loss = fwd(cell_in, drug_in)
    out = jax.block_until_ready(out)
    assert out.shape == (batch, 1)
    assert bool(jnp.all(jnp.isfinite(out)))
    print("KERNEL_OK")
</pallas_src>

<mosaic_0001>
module attributes {stable_mosaic.version = 11 : i64} {
  func.func @_gemm_kernel_1k(%arg0: i32, %arg1: i32, %arg2: memref<16x128xbf16, #tpu.memory_space<vmem>>, %arg3: memref<128x512xbf16, #tpu.memory_space<vmem>>, %arg4: memref<16x1xf32, #tpu.memory_space<vmem>>, %arg5: memref<16x1xf32, #tpu.memory_space<vmem>>, %arg6: memref<16x512xbf16, #tpu.memory_space<vmem>>) attributes {dimension_semantics = [#tpu.dimension_semantics<parallel>, #tpu.dimension_semantics<parallel>], iteration_bounds = array<i64: 1, 4>, scalar_prefetch = 0 : i64, scratch_operands = 0 : i64, tpu.core_type = #tpu.core_type<tc>, window_params = [{transform_indices = @transform_0, window_bounds = array<i64: 16, 128>}, {transform_indices = @transform_1, window_bounds = array<i64: 128, 512>}, {transform_indices = @transform_2, window_bounds = array<i64: 16, 1>}, {transform_indices = @transform_3, window_bounds = array<i64: 16, 1>}, {transform_indices = @transform_4, window_bounds = array<i64: 16, 512>}]} {
    %c0 = arith.constant 0 : index
    %c0_0 = arith.constant 0 : index
    %0 = vector.load %arg2[%c0, %c0_0] : memref<16x128xbf16, #tpu.memory_space<vmem>>, vector<16x128xbf16>
    %c0_1 = arith.constant 0 : index
    %c0_2 = arith.constant 0 : index
    %1 = vector.load %arg3[%c0_1, %c0_2] : memref<128x512xbf16, #tpu.memory_space<vmem>>, vector<128x512xbf16>
    %cst = arith.constant dense<0.000000e+00> : vector<16x512xf32>
    %2 = tpu.matmul %0, %1, %cst {dimension_numbers = #tpu.dot_dimension_numbers<[1], [0], [0], [1], [0, 0, 1, 1], [], []>} : vector<16x128xbf16>, vector<128x512xbf16>, vector<16x512xf32> -> vector<16x512xf32>
    %c0_3 = arith.constant 0 : index
    %c0_4 = arith.constant 0 : index
    %3 = vector.load %arg4[%c0_3, %c0_4] : memref<16x1xf32, #tpu.memory_space<vmem>>, vector<16x1xf32>
    %4 = vector.broadcast %3 : vector<16x1xf32> to vector<16x512xf32>
    %5 = arith.mulf %2, %4 : vector<16x512xf32>
    %c0_5 = arith.constant 0 : index
    %c0_6 = arith.constant 0 : index
    %6 = vector.load %arg5[%c0_5, %c0_6] : memref<16x1xf32, #tpu.memory_space<vmem>>, vector<16x1xf32>
    %7 = vector.broadcast %6 : vector<16x1xf32> to vector<16x512xf32>
    %8 = arith.addf %5, %7 : vector<16x512xf32>
    %cst_7 = arith.constant 0.000000e+00 : f32
    %9 = vector.broadcast %cst_7 : f32 to vector<16x512xf32>
    %10 = arith.maximumf %8, %9 : vector<16x512xf32>
    %11 = arith.truncf %10 : vector<16x512xf32> to vector<16x512xbf16>
    %c0_8 = arith.constant 0 : index
    %c0_9 = arith.constant 0 : index
    %12 = vector.load %arg6[%c0_8, %c0_9] : memref<16x512xbf16, #tpu.memory_space<vmem>>, vector<16x512xbf16>
    tpu.vector_store %arg6[%c0_8, %c0_9], %11 {strides = array<i32>} : memref<16x512xbf16, #tpu.memory_space<vmem>>, vector<16x512xbf16>,
    return
  }
  func.func @transform_0(%arg0: i32, %arg1: i32) -> (i32, i32) {
    %c0_i32 = arith.constant 0 : i32
    %c0_i32_0 = arith.constant 0 : i32
    return %arg0, %c0_i32 : i32, i32
  }
  func.func @transform_1(%arg0: i32, %arg1: i32) -> (i32, i32) {
    %c0_i32 = arith.constant 0 : i32
    %c0_i32_0 = arith.constant 0 : i32
    return %c0_i32, %arg1 : i32, i32
  }
  func.func @transform_2(%arg0: i32, %arg1: i32) -> (i32, i32) {
    %c0_i32 = arith.constant 0 : i32
    %c0_i32_0 = arith.constant 0 : i32
    return %arg0, %c0_i32 : i32, i32
  }
  func.func @transform_3(%arg0: i32, %arg1: i32) -> (i32, i32) {
    %c0_i32 = arith.constant 0 : i32
    %c0_i32_0 = arith.constant 0 : i32
    return %arg0, %c0_i32 : i32, i32
  }
  func.func @transform_4(%arg0: i32, %arg1: i32) -> (i32, i32) {
    %c0_i32 = arith.constant 0 : i32
    return %arg0, %arg1 : i32, i32
  }
}

module attributes {stable_mosaic.version = 11 : i64} {
  func.func @_gemm_kernel_1k(%arg0: i32, %arg1: i32, %arg2: memref<16x256xbf16, #tpu.memory_space<vmem>>, %arg3: memref<256x512xbf16, #tpu.memory_space<vmem>>, %arg4: memref<16x1xf32, #tpu.memory_space<vmem>>, %arg5: memref<16x1xf32, #tpu.memory_space<vmem>>, %arg6: memref<16x512xbf16, #tpu.memory_space<vmem>>) attributes {dimension_semantics = [#tpu.dimension_semantics<parallel>, #tpu.dimension_semantics<parallel>], iteration_bounds = array<i64: 1, 3>, scalar_prefetch = 0 : i64, scratch_operands = 0 : i64, tpu.core_type = #tpu.core_type<tc>, window_params = [{transform_indices = @transform_0, window_bounds = array<i64: 16, 256>}, {transform_indices = @transform_1, window_bounds = array<i64: 256, 512>}, {transform_indices = @transform_2, window_bounds = array<i64: 16, 1>}, {transform_indices = @transform_3, window_bounds = array<i64: 16, 1>}, {transform_indices = @transform_4, window_bounds = array<i64: 16, 512>}]} {
    %c0 = arith.constant 0 : index
    %c0_0 = arith.constant 0 : index
    %0 = vector.load %arg2[%c0, %c0_0] : memref<16x256xbf16, #tpu.memory_space<vmem>>, vector<16x256xbf16>
    %c0_1 = arith.constant 0 : index
    %c0_2 = arith.constant 0 : index
    %1 = vector.load %arg3[%c0_1, %c0_2] : memref<256x512xbf16, #tpu.memory_space<vmem>>, vector<256x512xbf16>
    %cst = arith.constant dense<0.000000e+00> : vector<16x512xf32>
    %2 = tpu.matmul %0, %1, %cst {dimension_numbers = #tpu.dot_dimension_numbers<[1], [0], [0], [1], [0, 0, 1, 1], [], []>} : vector<16x256xbf16>, vector<256x512xbf16>, vector<16x512xf32> -> vector<16x512xf32>
    %c0_3 = arith.constant 0 : index
    %c0_4 = arith.constant 0 : index
    %3 = vector.load %arg4[%c0_3, %c0_4] : memref<16x1xf32, #tpu.memory_space<vmem>>, vector<16x1xf32>
    %4 = vector.broadcast %3 : vector<16x1xf32> to vector<16x512xf32>
    %5 = arith.mulf %2, %4 : vector<16x512xf32>
    %c0_5 = arith.constant 0 : index
    %c0_6 = arith.constant 0 : index
    %6 = vector.load %arg5[%c0_5, %c0_6] : memref<16x1xf32, #tpu.memory_space<vmem>>, vector<16x1xf32>
    %7 = vector.broadcast %6 : vector<16x1xf32> to vector<16x512xf32>
    %8 = arith.addf %5, %7 : vector<16x512xf32>
    %cst_7 = arith.constant 0.000000e+00 : f32
    %9 = vector.broadcast %cst_7 : f32 to vector<16x512xf32>
    %10 = arith.maximumf %8, %9 : vector<16x512xf32>
    %11 = arith.truncf %10 : vector<16x512xf32> to vector<16x512xbf16>
    %c0_8 = arith.constant 0 : index
    %c0_9 = arith.constant 0 : index
    %12 = vector.load %arg6[%c0_8, %c0_9] : memref<16x512xbf16, #tpu.memory_space<vmem>>, vector<16x512xbf16>
    tpu.vector_store %arg6[%c0_8, %c0_9], %11 {strides = array<i32>} : memref<16x512xbf16, #tpu.memory_space<vmem>>, vector<16x512xbf16>,
    return
  }
  func.func @transform_0(%arg0: i32, %arg1: i32) -> (i32, i32) {
    %c0_i32 = arith.constant 0 : i32
    %c0_i32_0 = arith.constant 0 : i32
    return %arg0, %c0_i32 : i32, i32
  }
  func.func @transform_1(%arg0: i32, %arg1: i32) -> (i32, i32) {
    %c0_i32 = arith.constant 0 : i32
    %c0_i32_0 = arith.constant 0 : i32
    return %c0_i32, %arg1 : i32, i32
  }
  func.func @transform_2(%arg0: i32, %arg1: i32) -> (i32, i32) {
    %c0_i32 = arith.constant 0 : i32
    %c0_i32_0 = arith.constant 0 : i32
    return %arg0, %c0_i32 : i32, i32
  }
  func.func @transform_3(%arg0: i32, %arg1: i32) -> (i32, i32) {
    %c0_i32 = arith.constant 0 : i32
    %c0_i32_0 = arith.constant 0 : i32
    return %arg0, %c0_i32 : i32, i32
  }
  func.func @transform_4(%arg0: i32, %arg1: i32) -> (i32, i32) {
    %c0_i32 = arith.constant 0 : i32
    return %arg0, %arg1 : i32, i32
  }
}

module attributes {stable_mosaic.version = 11 : i64} {
  func.func @_gemm_kernel_1k(%arg0: i32, %arg1: i32, %arg2: memref<32x512xbf16, #tpu.memory_space<vmem>>, %arg3: memref<512x512xbf16, #tpu.memory_space<vmem>>, %arg4: memref<32x1xf32, #tpu.memory_space<vmem>>, %arg5: memref<32x1xf32, #tpu.memory_space<vmem>>, %arg6: memref<32x512xbf16, #tpu.memory_space<vmem>>) attributes {dimension_semantics = [#tpu.dimension_semantics<parallel>, #tpu.dimension_semantics<parallel>], iteration_bounds = array<i64: 1, 2>, scalar_prefetch = 0 : i64, scratch_operands = 0 : i64, tpu.core_type = #tpu.core_type<tc>, window_params = [{transform_indices = @transform_0, window_bounds = array<i64: 32, 512>}, {transform_indices = @transform_1, window_bounds = array<i64: 512, 512>}, {transform_indices = @transform_2, window_bounds = array<i64: 32, 1>}, {transform_indices = @transform_3, window_bounds = array<i64: 32, 1>}, {transform_indices = @transform_4, window_bounds = array<i64: 32, 512>}]} {
    %c0 = arith.constant 0 : index
    %c0_0 = arith.constant 0 : index
    %0 = vector.load %arg2[%c0, %c0_0] : memref<32x512xbf16, #tpu.memory_space<vmem>>, vector<32x512xbf16>
    %c0_1 = arith.constant 0 : index
    %c0_2 = arith.constant 0 : index
    %1 = vector.load %arg3[%c0_1, %c0_2] : memref<512x512xbf16, #tpu.memory_space<vmem>>, vector<512x512xbf16>
    %cst = arith.constant dense<0.000000e+00> : vector<32x512xf32>
    %2 = tpu.matmul %0, %1, %cst {dimension_numbers = #tpu.dot_dimension_numbers<[1], [0], [0], [1], [0, 0, 1, 1], [], []>} : vector<32x512xbf16>, vector<512x512xbf16>, vector<32x512xf32> -> vector<32x512xf32>
    %c0_3 = arith.constant 0 : index
    %c0_4 = arith.constant 0 : index
    %3 = vector.load %arg4[%c0_3, %c0_4] : memref<32x1xf32, #tpu.memory_space<vmem>>, vector<32x1xf32>
    %4 = vector.broadcast %3 : vector<32x1xf32> to vector<32x512xf32>
    %5 = arith.mulf %2, %4 : vector<32x512xf32>
    %c0_5 = arith.constant 0 : index
    %c0_6 = arith.constant 0 : index
    %6 = vector.load %arg5[%c0_5, %c0_6] : memref<32x1xf32, #tpu.memory_space<vmem>>, vector<32x1xf32>
    %7 = vector.broadcast %6 : vector<32x1xf32> to vector<32x512xf32>
    %8 = arith.addf %5, %7 : vector<32x512xf32>
    %cst_7 = arith.constant 0.000000e+00 : f32
    %9 = vector.broadcast %cst_7 : f32 to vector<32x512xf32>
    %10 = arith.maximumf %8, %9 : vector<32x512xf32>
    %11 = arith.truncf %10 : vector<32x512xf32> to vector<32x512xbf16>
    %c0_8 = arith.constant 0 : index
    %c0_9 = arith.constant 0 : index
    %12 = vector.load %arg6[%c0_8, %c0_9] : memref<32x512xbf16, #tpu.memory_space<vmem>>, vector<32x512xbf16>
    tpu.vector_store %arg6[%c0_8, %c0_9], %11 {strides = array<i32>} : memref<32x512xbf16, #tpu.memory_space<vmem>>, vector<32x512xbf16>,
    return
  }
  func.func @transform_0(%arg0: i32, %arg1: i32) -> (i32, i32) {
    %c0_i32 = arith.constant 0 : i32
    %c0_i32_0 = arith.constant 0 : i32
    return %arg0, %c0_i32 : i32, i32
  }
  func.func @transform_1(%arg0: i32, %arg1: i32) -> (i32, i32) {
    %c0_i32 = arith.constant 0 : i32
    %c0_i32_0 = arith.constant 0 : i32
    return %c0_i32, %arg1 : i32, i32
  }
  func.func @transform_2(%arg0: i32, %arg1: i32) -> (i32, i32) {
    %c0_i32 = arith.constant 0 : i32
    %c0_i32_0 = arith.constant 0 : i32
    return %arg0, %c0_i32 : i32, i32
  }
  func.func @transform_3(%arg0: i32, %arg1: i32) -> (i32, i32) {
    %c0_i32 = arith.constant 0 : i32
    %c0_i32_0 = arith.constant 0 : i32
    return %arg0, %c0_i32 : i32, i32
  }
  func.func @transform_4(%arg0: i32, %arg1: i32) -> (i32, i32) {
    %c0_i32 = arith.constant 0 : i32
    return %arg0, %arg1 : i32, i32
  }
}

module attributes {stable_mosaic.version = 11 : i64} {
  func.func @_gemm_kernel_1k(%arg0: i32, %arg1: i32, %arg2: memref<16x128xbf16, #tpu.memory_space<vmem>>, %arg3: memref<128x512xbf16, #tpu.memory_space<vmem>>, %arg4: memref<16x1xf32, #tpu.memory_space<vmem>>, %arg5: memref<16x1xf32, #tpu.memory_space<vmem>>, %arg6: memref<16x512xbf16, #tpu.memory_space<vmem>>) attributes {dimension_semantics = [#tpu.dimension_semantics<parallel>, #tpu.dimension_semantics<parallel>], iteration_bounds = array<i64: 1, 4>, scalar_prefetch = 0 : i64, scratch_operands = 0 : i64, tpu.core_type = #tpu.core_type<tc>, window_params = [{transform_indices = @transform_0, window_bounds = array<i64: 16, 128>}, {transform_indices = @transform_1, window_bounds = array<i64: 128, 512>}, {transform_indices = @transform_2, window_bounds = array<i64: 16, 1>}, {transform_indices = @transform_3, window_bounds = array<i64: 16, 1>}, {transform_indices = @transform_4, window_bounds = array<i64: 16, 512>}]} {
    %c0 = arith.constant 0 : index
    %c0_0 = arith.constant 0 : index
    %0 = vector.load %arg2[%c0, %c0_0] : memref<16x128xbf16, #tpu.memory_space<vmem>>, vector<16x128xbf16>
    %c0_1 = arith.constant 0 : index
    %c0_2 = arith.constant 0 : index
    %1 = vector.load %arg3[%c0_1, %c0_2] : memref<128x512xbf16, #tpu.memory_space<vmem>>, vector<128x512xbf16>
    %cst = arith.constant dense<0.000000e+00> : vector<16x512xf32>
    %2 = tpu.matmul %0, %1, %cst {dimension_numbers = #tpu.dot_dimension_numbers<[1], [0], [0], [1], [0, 0, 1, 1], [], []>} : vector<16x128xbf16>, vector<128x512xbf16>, vector<16x512xf32> -> vector<16x512xf32>
    %c0_3 = arith.constant 0 : index
    %c0_4 = arith.constant 0 : index
    %3 = vector.load %arg4[%c0_3, %c0_4] : memref<16x1xf32, #tpu.memory_space<vmem>>, vector<16x1xf32>
    %4 = vector.broadcast %3 : vector<16x1xf32> to vector<16x512xf32>
    %5 = arith.mulf %2, %4 : vector<16x512xf32>
    %c0_5 = arith.constant 0 : index
    %c0_6 = arith.constant 0 : index
    %6 = vector.load %arg5[%c0_5, %c0_6] : memref<16x1xf32, #tpu.memory_space<vmem>>, vector<16x1xf32>
    %7 = vector.broadcast %6 : vector<16x1xf32> to vector<16x512xf32>
    %8 = arith.addf %5, %7 : vector<16x512xf32>
    %cst_7 = arith.constant 0.000000e+00 : f32
    %9 = vector.broadcast %cst_7 : f32 to vector<16x512xf32>
    %10 = arith.maximumf %8, %9 : vector<16x512xf32>
    %11 = arith.truncf %10 : vector<16x512xf32> to vector<16x512xbf16>
    %c0_8 = arith.constant 0 : index
    %c0_9 = arith.constant 0 : index
    %12 = vector.load %arg6[%c0_8, %c0_9] : memref<16x512xbf16, #tpu.memory_space<vmem>>, vector<16x512xbf16>
    tpu.vector_store %arg6[%c0_8, %c0_9], %11 {strides = array<i32>} : memref<16x512xbf16, #tpu.memory_space<vmem>>, vector<16x512xbf16>,
    return
  }
  func.func @transform_0(%arg0: i32, %arg1: i32) -> (i32, i32) {
    %c0_i32 = arith.constant 0 : i32
    %c0_i32_0 = arith.constant 0 : i32
    return %arg0, %c0_i32 : i32, i32
  }
  func.func @transform_1(%arg0: i32, %arg1: i32) -> (i32, i32) {
    %c0_i32 = arith.constant 0 : i32
    %c0_i32_0 = arith.constant 0 : i32
    return %c0_i32, %arg1 : i32, i32
  }
  func.func @transform_2(%arg0: i32, %arg1: i32) -> (i32, i32) {
    %c0_i32 = arith.constant 0 : i32
    %c0_i32_0 = arith.constant 0 : i32
    return %arg0, %c0_i32 : i32, i32
  }
  func.func @transform_3(%arg0: i32, %arg1: i32) -> (i32, i32) {
    %c0_i32 = arith.constant 0 : i32
    %c0_i32_0 = arith.constant 0 : i32
    return %arg0, %c0_i32 : i32, i32
  }
  func.func @transform_4(%arg0: i32, %arg1: i32) -> (i32, i32) {
    %c0_i32 = arith.constant 0 : i32
    return %arg0, %arg1 : i32, i32
  }
}

module attributes {stable_mosaic.version = 11 : i64} {
  func.func @_gemm_kernel_1k(%arg0: i32, %arg1: i32, %arg2: memref<16x128xbf16, #tpu.memory_space<vmem>>, %arg3: memref<128x512xbf16, #tpu.memory_space<vmem>>, %arg4: memref<16x1xf32, #tpu.memory_space<vmem>>, %arg5: memref<16x1xf32, #tpu.memory_space<vmem>>, %arg6: memref<16x512xbf16, #tpu.memory_space<vmem>>) attributes {dimension_semantics = [#tpu.dimension_semantics<parallel>, #tpu.dimension_semantics<parallel>], iteration_bounds = array<i64: 1, 29>, scalar_prefetch = 0 : i64, scratch_operands = 0 : i64, tpu.core_type = #tpu.core_type<tc>, window_params = [{transform_indices = @transform_0, window_bounds = array<i64: 16, 128>}, {transform_indices = @transform_1, window_bounds = array<i64: 128, 512>}, {transform_indices = @transform_2, window_bounds = array<i64: 16, 1>}, {transform_indices = @transform_3, window_bounds = array<i64: 16, 1>}, {transform_indices = @transform_4, window_bounds = array<i64: 16, 512>}]} {
    %c0 = arith.constant 0 : index
    %c0_0 = arith.constant 0 : index
    %0 = vector.load %arg2[%c0, %c0_0] : memref<16x128xbf16, #tpu.memory_space<vmem>>, vector<16x128xbf16>
    %c0_1 = arith.constant 0 : index
    %c0_2 = arith.constant 0 : index
    %1 = vector.load %arg3[%c0_1, %c0_2] : memref<128x512xbf16, #tpu.memory_space<vmem>>, vector<128x512xbf16>
    %cst = arith.constant dense<0.000000e+00> : vector<16x512xf32>
    %2 = tpu.matmul %0, %1, %cst {dimension_numbers = #tpu.dot_dimension_numbers<[1], [0], [0], [1], [0, 0, 1, 1], [], []>} : vector<16x128xbf16>, vector<128x512xbf16>, vector<16x512xf32> -> vector<16x512xf32>
    %c0_3 = arith.constant 0 : index
    %c0_4 = arith.constant 0 : index
    %3 = vector.load %arg4[%c0_3, %c0_4] : memref<16x1xf32, #tpu.memory_space<vmem>>, vector<16x1xf32>
    %4 = vector.broadcast %3 : vector<16x1xf32> to vector<16x512xf32>
    %5 = arith.mulf %2, %4 : vector<16x512xf32>
    %c0_5 = arith.constant 0 : index
    %c0_6 = arith.constant 0 : index
    %6 = vector.load %arg5[%c0_5, %c0_6] : memref<16x1xf32, #tpu.memory_space<vmem>>, vector<16x1xf32>
    %7 = vector.broadcast %6 : vector<16x1xf32> to vector<16x512xf32>
    %8 = arith.addf %5, %7 : vector<16x512xf32>
    %cst_7 = arith.constant 0.000000e+00 : f32
    %9 = vector.broadcast %cst_7 : f32 to vector<16x512xf32>
    %10 = arith.maximumf %8, %9 : vector<16x512xf32>
    %11 = arith.truncf %10 : vector<16x512xf32> to vector<16x512xbf16>
    %c0_8 = arith.constant 0 : index
    %c0_9 = arith.constant 0 : index
    %12 = vector.load %arg6[%c0_8, %c0_9] : memref<16x512xbf16, #tpu.memory_space<vmem>>, vector<16x512xbf16>
    tpu.vector_store %arg6[%c0_8, %c0_9], %11 {strides = array<i32>} : memref<16x512xbf16, #tpu.memory_space<vmem>>, vector<16x512xbf16>,
    return
  }
  func.func @transform_0(%arg0: i32, %arg1: i32) -> (i32, i32) {
    %c0_i32 = arith.constant 0 : i32
    %c0_i32_0 = arith.constant 0 : i32
    return %arg0, %c0_i32 : i32, i32
  }
  func.func @transform_1(%arg0: i32, %arg1: i32) -> (i32, i32) {
    %c0_i32 = arith.constant 0 : i32
    %c0_i32_0 = arith.constant 0 : i32
    return %c0_i32, %arg1 : i32, i32
  }
  func.func @transform_2(%arg0: i32, %arg1: i32) -> (i32, i32) {
    %c0_i32 = arith.constant 0 : i32
    %c0_i32_0 = arith.constant 0 : i32
    return %arg0, %c0_i32 : i32, i32
  }
  func.func @transform_3(%arg0: i32, %arg1: i32) -> (i32, i32) {
    %c0_i32 = arith.constant 0 : i32
    %c0_i32_0 = arith.constant 0 : i32
    return %arg0, %c0_i32 : i32, i32
  }
  func.func @transform_4(%arg0: i32, %arg1: i32) -> (i32, i32) {
    %c0_i32 = arith.constant 0 : i32
    return %arg0, %arg1 : i32, i32
  }
}

module attributes {stable_mosaic.version = 11 : i64} {
  func.func @_gemm_kernel_1k(%arg0: i32, %arg1: i32, %arg2: memref<16x128xbf16, #tpu.memory_space<vmem>>, %arg3: memref<128x512xbf16, #tpu.memory_space<vmem>>, %arg4: memref<16x1xf32, #tpu.memory_space<vmem>>, %arg5: memref<16x1xf32, #tpu.memory_space<vmem>>, %arg6: memref<16x512xbf16, #tpu.memory_space<vmem>>) attributes {dimension_semantics = [#tpu.dimension_semantics<parallel>, #tpu.dimension_semantics<parallel>], iteration_bounds = array<i64: 1, 10>, scalar_prefetch = 0 : i64, scratch_operands = 0 : i64, tpu.core_type = #tpu.core_type<tc>, window_params = [{transform_indices = @transform_0, window_bounds = array<i64: 16, 128>}, {transform_indices = @transform_1, window_bounds = array<i64: 128, 512>}, {transform_indices = @transform_2, window_bounds = array<i64: 16, 1>}, {transform_indices = @transform_3, window_bounds = array<i64: 16, 1>}, {transform_indices = @transform_4, window_bounds = array<i64: 16, 512>}]} {
    %c0 = arith.constant 0 : index
    %c0_0 = arith.constant 0 : index
    %0 = vector.load %arg2[%c0, %c0_0] : memref<16x128xbf16, #tpu.memory_space<vmem>>, vector<16x128xbf16>
    %c0_1 = arith.constant 0 : index
    %c0_2 = arith.constant 0 : index
    %1 = vector.load %arg3[%c0_1, %c0_2] : memref<128x512xbf16, #tpu.memory_space<vmem>>, vector<128x512xbf16>
    %cst = arith.constant dense<0.000000e+00> : vector<16x512xf32>
    %2 = tpu.matmul %0, %1, %cst {dimension_numbers = #tpu.dot_dimension_numbers<[1], [0], [0], [1], [0, 0, 1, 1], [], []>} : vector<16x128xbf16>, vector<128x512xbf16>, vector<16x512xf32> -> vector<16x512xf32>
    %c0_3 = arith.constant 0 : index
    %c0_4 = arith.constant 0 : index
    %3 = vector.load %arg4[%c0_3, %c0_4] : memref<16x1xf32, #tpu.memory_space<vmem>>, vector<16x1xf32>
    %4 = vector.broadcast %3 : vector<16x1xf32> to vector<16x512xf32>
    %5 = arith.mulf %2, %4 : vector<16x512xf32>
    %c0_5 = arith.constant 0 : index
    %c0_6 = arith.constant 0 : index
    %6 = vector.load %arg5[%c0_5, %c0_6] : memref<16x1xf32, #tpu.memory_space<vmem>>, vector<16x1xf32>
    %7 = vector.broadcast %6 : vector<16x1xf32> to vector<16x512xf32>
    %8 = arith.addf %5, %7 : vector<16x512xf32>
    %cst_7 = arith.constant 0.000000e+00 : f32
    %9 = vector.broadcast %cst_7 : f32 to vector<16x512xf32>
    %10 = arith.maximumf %8, %9 : vector<16x512xf32>
    %11 = arith.truncf %10 : vector<16x512xf32> to vector<16x512xbf16>
    %c0_8 = arith.constant 0 : index
    %c0_9 = arith.constant 0 : index
    %12 = vector.load %arg6[%c0_8, %c0_9] : memref<16x512xbf16, #tpu.memory_space<vmem>>, vector<16x512xbf16>
    tpu.vector_store %arg6[%c0_8, %c0_9], %11 {strides = array<i32>} : memref<16x512xbf16, #tpu.memory_space<vmem>>, vector<16x512xbf16>,
    return
  }
  func.func @transform_0(%arg0: i32, %arg1: i32) -> (i32, i32) {
    %c0_i32 = arith.constant 0 : i32
    %c0_i32_0 = arith.constant 0 : i32
    return %arg0, %c0_i32 : i32, i32
  }
  func.func @transform_1(%arg0: i32, %arg1: i32) -> (i32, i32) {
    %c0_i32 = arith.constant 0 : i32
    %c0_i32_0 = arith.constant 0 : i32
    return %c0_i32, %arg1 : i32, i32
  }
  func.func @transform_2(%arg0: i32, %arg1: i32) -> (i32, i32) {
    %c0_i32 = arith.constant 0 : i32
    %c0_i32_0 = arith.constant 0 : i32
    return %arg0, %c0_i32 : i32, i32
  }
  func.func @transform_3(%arg0: i32, %arg1: i32) -> (i32, i32) {
    %c0_i32 = arith.constant 0 : i32
    %c0_i32_0 = arith.constant 0 : i32
    return %arg0, %c0_i32 : i32, i32
  }
  func.func @transform_4(%arg0: i32, %arg1: i32) -> (i32, i32) {
    %c0_i32 = arith.constant 0 : i32
    return %arg0, %arg1 : i32, i32
  }
}

module attributes {stable_mosaic.version = 11 : i64} {
  func.func @_gemm_kernel_nk(%arg0: i32, %arg1: i32, %arg2: i32, %arg3: memref<16x2048xbf16, #tpu.memory_space<vmem>>, %arg4: memref<2048x128xbf16, #tpu.memory_space<vmem>>, %arg5: memref<1x128xf32, #tpu.memory_space<vmem>>, %arg6: memref<1x128xf32, #tpu.memory_space<vmem>>, %arg7: memref<16x128xbf16, #tpu.memory_space<vmem>>, %arg8: memref<16x128xf32, #tpu.memory_space<vmem>>) attributes {dimension_semantics = [#tpu.dimension_semantics<parallel>, #tpu.dimension_semantics<parallel>, #tpu.dimension_semantics<arbitrary>], iteration_bounds = array<i64: 1, 1, 7>, scalar_prefetch = 0 : i64, scratch_operands = 1 : i64, tpu.core_type = #tpu.core_type<tc>, window_params = [{transform_indices = @transform_0, window_bounds = array<i64: 16, 2048>}, {transform_indices = @transform_1, window_bounds = array<i64: 2048, 128>}, {transform_indices = @transform_2, window_bounds = array<i64: 1, 128>}, {transform_indices = @transform_3, window_bounds = array<i64: 1, 128>}, {transform_indices = @transform_4, window_bounds = array<i64: 16, 128>}]} {
    %c0_i32 = arith.constant 0 : i32
    %0 = arith.cmpi eq, %arg2, %c0_i32 : i32
    %1 = arith.extui %0 : i1 to i32
    %c0_i32_0 = arith.constant 0 : i32
    %2 = arith.cmpi ne, %1, %c0_i32_0 : i32
    scf.if %2 {
      %cst_9 = arith.constant 0.000000e+00 : f32
      %12 = vector.broadcast %cst_9 : f32 to vector<16x128xf32>
      %c0_10 = arith.constant 0 : index
      %c0_11 = arith.constant 0 : index
      %13 = vector.load %arg8[%c0_10, %c0_11] : memref<16x128xf32, #tpu.memory_space<vmem>>, vector<16x128xf32>
      tpu.vector_store %arg8[%c0_10, %c0_11], %12 {strides = array<i32>} : memref<16x128xf32, #tpu.memory_space<vmem>>, vector<16x128xf32>,
    } else {
    }
    %c0 = arith.constant 0 : index
    %c0_1 = arith.constant 0 : index
    %3 = vector.load %arg8[%c0, %c0_1] : memref<16x128xf32, #tpu.memory_space<vmem>>, vector<16x128xf32>
    %c0_2 = arith.constant 0 : index
    %c0_3 = arith.constant 0 : index
    %4 = vector.load %arg3[%c0_2, %c0_3] : memref<16x2048xbf16, #tpu.memory_space<vmem>>, vector<16x2048xbf16>
    %c0_4 = arith.constant 0 : index
    %c0_5 = arith.constant 0 : index
    %5 = vector.load %arg4[%c0_4, %c0_5] : memref<2048x128xbf16, #tpu.memory_space<vmem>>, vector<2048x128xbf16>
    %cst = arith.constant dense<0.000000e+00> : vector<16x128xf32>
    %6 = tpu.matmul %4, %5, %cst {dimension_numbers = #tpu.dot_dimension_numbers<[1], [0], [0], [1], [0, 0, 1, 1], [], []>} : vector<16x2048xbf16>, vector<2048x128xbf16>, vector<16x128xf32> -> vector<16x128xf32>
    %7 = arith.addf %3, %6 : vector<16x128xf32>
    %c0_6 = arith.constant 0 : index
    %c0_7 = arith.constant 0 : index
    %8 = vector.load %arg8[%c0_6, %c0_7] : memref<16x128xf32, #tpu.memory_space<vmem>>, vector<16x128xf32>
    tpu.vector_store %arg8[%c0_6, %c0_7], %7 {strides = array<i32>} : memref<16x128xf32, #tpu.memory_space<vmem>>, vector<16x128xf32>,
    %c6_i32 = arith.constant 6 : i32
    %9 = arith.cmpi eq, %arg2, %c6_i32 : i32
    %10 = arith.extui %9 : i1 to i32
    %c0_i32_8 = arith.constant 0 : i32
    %11 = arith.cmpi ne, %10, %c0_i32_8 : i32
    scf.if %11 {
      %c0_9 = arith.constant 0 : index
      %c0_10 = arith.constant 0 : index
      %12 = vector.load %arg8[%c0_9, %c0_10] : memref<16x128xf32, #tpu.memory_space<vmem>>, vector<16x128xf32>
      %c0_11 = arith.constant 0 : index
      %c0_12 = arith.constant 0 : index
      %13 = vector.load %arg5[%c0_11, %c0_12] : memref<1x128xf32, #tpu.memory_space<vmem>>, vector<1x128xf32>
      %14 = vector.broadcast %13 : vector<1x128xf32> to vector<16x128xf32>
      %15 = arith.mulf %12, %14 : vector<16x128xf32>
      %c0_13 = arith.constant 0 : index
      %c0_14 = arith.constant 0 : index
      %16 = vector.load %arg6[%c0_13, %c0_14] : memref<1x128xf32, #tpu.memory_space<vmem>>, vector<1x128xf32>
      %17 = vector.broadcast %16 : vector<1x128xf32> to vector<16x128xf32>
      %18 = arith.addf %15, %17 : vector<16x128xf32>
      %cst_15 = arith.constant 0.000000e+00 : f32
      %19 = vector.broadcast %cst_15 : f32 to vector<16x128xf32>
      %20 = arith.maximumf %18, %19 : vector<16x128xf32>
      %21 = arith.truncf %20 : vector<16x128xf32> to vector<16x128xbf16>
      %c0_16 = arith.constant 0 : index
      %c0_17 = arith.constant 0 : index
      %22 = vector.load %arg7[%c0_16, %c0_17] : memref<16x128xbf16, #tpu.memory_space<vmem>>, vector<16x128xbf16>
      tpu.vector_store %arg7[%c0_16, %c0_17], %21 {strides = array<i32>} : memref<16x128xbf16, #tpu.memory_space<vmem>>, vector<16x128xbf16>,
    } else {
    }
    return
  }
  func.func @transform_0(%arg0: i32, %arg1: i32, %arg2: i32) -> (i32, i32) {
    %c0_i32 = arith.constant 0 : i32
    return %arg0, %arg2 : i32, i32
  }
  func.func @transform_1(%arg0: i32, %arg1: i32, %arg2: i32) -> (i32, i32) {
    %c0_i32 = arith.constant 0 : i32
    return %arg2, %arg1 : i32, i32
  }
  func.func @transform_2(%arg0: i32, %arg1: i32, %arg2: i32) -> (i32, i32) {
    %c0_i32 = arith.constant 0 : i32
    %c0_i32_0 = arith.constant 0 : i32
    return %c0_i32, %arg1 : i32, i32
  }
  func.func @transform_3(%arg0: i32, %arg1: i32, %arg2: i32) -> (i32, i32) {
    %c0_i32 = arith.constant 0 : i32
    %c0_i32_0 = arith.constant 0 : i32
    return %c0_i32, %arg1 : i32, i32
  }
  func.func @transform_4(%arg0: i32, %arg1: i32, %arg2: i32) -> (i32, i32) {
    %c0_i32 = arith.constant 0 : i32
    return %arg0, %arg1 : i32, i32
  }
}

module attributes {stable_mosaic.version = 11 : i64} {
  func.func @_gemm_kernel_1k(%arg0: i32, %arg1: i32, %arg2: memref<16x128xbf16, #tpu.memory_space<vmem>>, %arg3: memref<128x128xbf16, #tpu.memory_space<vmem>>, %arg4: memref<1x128xf32, #tpu.memory_space<vmem>>, %arg5: memref<1x128xf32, #tpu.memory_space<vmem>>, %arg6: memref<16x128xf32, #tpu.memory_space<vmem>>) attributes {dimension_semantics = [#tpu.dimension_semantics<parallel>, #tpu.dimension_semantics<parallel>], iteration_bounds = array<i64: 1, 1>, scalar_prefetch = 0 : i64, scratch_operands = 0 : i64, tpu.core_type = #tpu.core_type<tc>, window_params = [{transform_indices = @transform_0, window_bounds = array<i64: 16, 128>}, {transform_indices = @transform_1, window_bounds = array<i64: 128, 128>}, {transform_indices = @transform_2, window_bounds = array<i64: 1, 128>}, {transform_indices = @transform_3, window_bounds = array<i64: 1, 128>}, {transform_indices = @transform_4, window_bounds = array<i64: 16, 128>}]} {
    %c0 = arith.constant 0 : index
    %c0_0 = arith.constant 0 : index
    %0 = vector.load %arg2[%c0, %c0_0] : memref<16x128xbf16, #tpu.memory_space<vmem>>, vector<16x128xbf16>
    %c0_1 = arith.constant 0 : index
    %c0_2 = arith.constant 0 : index
    %1 = vector.load %arg3[%c0_1, %c0_2] : memref<128x128xbf16, #tpu.memory_space<vmem>>, vector<128x128xbf16>
    %cst = arith.constant dense<0.000000e+00> : vector<16x128xf32>
    %2 = tpu.matmul %0, %1, %cst {dimension_numbers = #tpu.dot_dimension_numbers<[1], [0], [0], [1], [0, 0, 1, 1], [], []>} : vector<16x128xbf16>, vector<128x128xbf16>, vector<16x128xf32> -> vector<16x128xf32>
    %c0_3 = arith.constant 0 : index
    %c0_4 = arith.constant 0 : index
    %3 = vector.load %arg4[%c0_3, %c0_4] : memref<1x128xf32, #tpu.memory_space<vmem>>, vector<1x128xf32>
    %4 = vector.broadcast %3 : vector<1x128xf32> to vector<16x128xf32>
    %5 = arith.mulf %2, %4 : vector<16x128xf32>
    %c0_5 = arith.constant 0 : index
    %c0_6 = arith.constant 0 : index
    %6 = vector.load %arg5[%c0_5, %c0_6] : memref<1x128xf32, #tpu.memory_space<vmem>>, vector<1x128xf32>
    %7 = vector.broadcast %6 : vector<1x128xf32> to vector<16x128xf32>
    %8 = arith.addf %5, %7 : vector<16x128xf32>
    %c0_7 = arith.constant 0 : index
    %c0_8 = arith.constant 0 : index
    %9 = vector.load %arg6[%c0_7, %c0_8] : memref<16x128xf32, #tpu.memory_space<vmem>>, vector<16x128xf32>
    tpu.vector_store %arg6[%c0_7, %c0_8], %8 {strides = array<i32>} : memref<16x128xf32, #tpu.memory_space<vmem>>, vector<16x128xf32>,
    return
  }
  func.func @transform_0(%arg0: i32, %arg1: i32) -> (i32, i32) {
    %c0_i32 = arith.constant 0 : i32
    %c0_i32_0 = arith.constant 0 : i32
    return %arg0, %c0_i32 : i32, i32
  }
  func.func @transform_1(%arg0: i32, %arg1: i32) -> (i32, i32) {
    %c0_i32 = arith.constant 0 : i32
    %c0_i32_0 = arith.constant 0 : i32
    return %c0_i32, %arg1 : i32, i32
  }
  func.func @transform_2(%arg0: i32, %arg1: i32) -> (i32, i32) {
    %c0_i32 = arith.constant 0 : i32
    %c0_i32_0 = arith.constant 0 : i32
    return %c0_i32, %arg1 : i32, i32
  }
  func.func @transform_3(%arg0: i32, %arg1: i32) -> (i32, i32) {
    %c0_i32 = arith.constant 0 : i32
    %c0_i32_0 = arith.constant 0 : i32
    return %c0_i32, %arg1 : i32, i32
  }
  func.func @transform_4(%arg0: i32, %arg1: i32) -> (i32, i32) {
    %c0_i32 = arith.constant 0 : i32
    return %arg0, %arg1 : i32, i32
  }
}

</mosaic_0001>

<llo_original>
// kernel: forward.11
$region0: #{forward.11}
  #allocation0 [shape = 'u32[]', space=smem, size = 0x4, offset = 0x4, fixed_abs, tag = 'smem constant byte address 0x4 - core index']
  #allocation1 [shape = 'u32[72,128]{1,0:T(1,128)}', space=vmem, size = 0x9000, scoped, tag = 'internal scratch']
  %s0 = inlined_call_operand.hbm [shape: bf16[16,128], index: 0, kind: input, shape index: {}]
  %s1 = inlined_call_operand.vmem [shape: bf16[128,2048], index: 1, kind: input, shape index: {}]
  %s2 = inlined_call_operand.vmem [shape: f32[16,1], index: 2, kind: input, shape index: {}]
  %s3 = inlined_call_operand.hbm [shape: f32[16,1], index: 3, kind: input, shape index: {}]
  %s4 = inlined_call_operand.vmem [shape: bf16[16,2048], index: 4, kind: output, shape index: {}]
  %s5 = sld [smem:[#allocation0]]
  $region99: #{forward.11} parent=0
    _
  %s7 = ssub.s32 1, %s5
  %s8 = scalar_select 0, %s7, %s5
  $region1: #{forward.11} parent=0
    #allocation2 [shape = 'u8[4096]{0}', space=vmem, size = 0x1000, scoped, tag = 'input window, operand 0, single buffered']
    #allocation3 [shape = 's32[2]{0}', space=sflag, size = 0x8, scoped, tag = 'scoped memory for forward.11']
    #allocation4 [shape = 'u8[262144]{0}', space=vmem, size = 0x40000, scoped, tag = 'input window, operand 1']
    #allocation5 [shape = 'u8[8192]{0}', space=vmem, size = 0x2000, scoped, tag = 'input window, operand 3, single buffered']
    #allocation6 [shape = 's32[1]{0}', space=sflag, size = 0x4, scoped, tag = 'scoped memory for forward.11']
    #allocation7 [shape = 'u8[32768]{0}', space=vmem, size = 0x8000, scoped, tag = 'output window, operand 0']
    %9 = vsyncpa [#allocation3], 0
    %10 = vsyncpa [#allocation6], 0
    loop: start=0, step=1, limit=6
    $region2: #{forward.11} parent=1 // loop_pre_header
      _
    $region3: #{forward.11} parent=1 // loop_header
      %s12 = sphi 0, %s16
      %p13 = scmp.ge.s32.totalorder %s12, 6
      %s19 = sphi 0, %s31
      %s20 = sphi 0, %s27
      %s21 = sphi 0, %s19
      %s22 = sphi 0, %s20
      %s23 = sphi 0, %s21
      %s24 = sphi 0, %s22
      %s34 = sphi 0, %s36
      %s37 = sphi 0, %s34
      %s38 = sphi 0, %s37
      %s54 = sphi 0, %s38
      %s60 = sphi 0, %s62
      %s63 = sphi 0, %s60
      %s64 = sphi 0, %s63
      %s80 = sphi 0, %s64
      %s86 = sphi 0, %s88
      %s89 = sphi 0, %s86
      %s90 = sphi 0, %s89
      %s106 = sphi 0, %s90
      %s112 = sphi 0, %s114
      %s115 = sphi 0, %s112
      %s116 = sphi 0, %s115
      %s132 = sphi 0, %s116
      %s140 = sphi 0, %s142
      %s143 = sphi 0, %s140
      %s144 = sphi 0, %s143
      %s160 = sphi 0, %s144
    $region4: #{forward.11} parent=1 // loop_header_branch
      %15 = sbr.rel (%p13) target = $region8
    $region5: #{forward.11} parent=1 // loop_body
      %s17 = ssub.s32 %s12, 1
      %s18 = ssub.s32 %s12, 2
      %s25 = sadd.s32 1, %s20
      %p26 = scmp.ge.s32.totalorder %s25, 4
      %s27 = scalar_select %p26, 0, %s25
      %s28 = sadd.s32 1, %s19
      %s29 = scalar_select %p26, %s28, %s19
      %p30 = scmp.ge.s32.totalorder %s29, 1
      %s31 = scalar_select %p30, 0, %s29
      %s32 = ssub.s32 %s19, %s31
      %p33 = scmp.eq.s32.totalorder %s32, 0
      %s35 = sadd.s32 %s34, 1
      %s36 = scalar_select %p33, %s34, %s35
      %p39 = pneg %p33
      %p40 = scmp.eq.s32.totalorder %s12, 3
      %p41 = por %p39, %p40
      %p42 = scmp.ne.s32.totalorder %s34, %s37
      %p43 = scmp.eq.s32.totalorder %s12, 0
      %p44 = por %p42, %p43
      %p45 = scmp.ne.s32.totalorder %s34, %s37
      %p46 = scmp.eq.s32.totalorder %s17, 3
      %p47 = por %p45, %p46
      %p48 = scmp.ne.s32.totalorder %s37, %s38
      %p49 = scmp.eq.s32.totalorder %s17, 0
      %p50 = por %p48, %p49
      %p51 = scmp.ne.s32.totalorder %s37, %s38
      %p52 = scmp.eq.s32.totalorder %s18, 3
      %p53 = por %p51, %p52
      %p55 = scmp.ne.s32.totalorder %s38, %s54
      %p56 = scmp.eq.s32.totalorder %s18, 0
      %p57 = por %p55, %p56
      %s58 = ssub.s32 %s20, %s27
      %p59 = scmp.eq.s32.totalorder %s58, 0
      %s61 = sadd.s32 %s60, 1
      %s62 = scalar_select %p59, %s60, %s61
      %p65 = pneg %p59
      %p66 = scmp.eq.s32.totalorder %s12, 3
      %p67 = por %p65, %p66
      %p68 = scmp.ne.s32.totalorder %s60, %s63
      %p69 = scmp.eq.s32.totalorder %s12, 0
      %p70 = por %p68, %p69
      %p71 = scmp.ne.s32.totalorder %s60, %s63
      %p72 = scmp.eq.s32.totalorder %s17, 3
      %p73 = por %p71, %p72
      %p74 = scmp.ne.s32.totalorder %s63, %s64
      %p75 = scmp.eq.s32.totalorder %s17, 0
      %p76 = por %p74, %p75
      %p77 = scmp.ne.s32.totalorder %s63, %s64
      %p78 = scmp.eq.s32.totalorder %s18, 3
      %p79 = por %p77, %p78
      %p81 = scmp.ne.s32.totalorder %s64, %s80
      %p82 = scmp.eq.s32.totalorder %s18, 0
      %p83 = por %p81, %p82
      %s84 = ssub.s32 %s19, %s31
      %p85 = scmp.eq.s32.totalorder %s84, 0
      %s87 = sadd.s32 %s86, 1
      %s88 = scalar_select %p85, %s86, %s87
      %p91 = pneg %p85
      %p92 = scmp.eq.s32.totalorder %s12, 3
      %p93 = por %p91, %p92
      %p94 = scmp.ne.s32.totalorder %s86, %s89
      %p95 = scmp.eq.s32.totalorder %s12, 0
      %p96 = por %p94, %p95
      %p97 = scmp.ne.s32.totalorder %s86, %s89
      %p98 = scmp.eq.s32.totalorder %s17, 3
      %p99 = por %p97, %p98
      %p100 = scmp.ne.s32.totalorder %s89, %s90
      %p101 = scmp.eq.s32.totalorder %s17, 0
      %p102 = por %p100, %p101
      %p103 = scmp.ne.s32.totalorder %s89, %s90
      %p104 = scmp.eq.s32.totalorder %s18, 3
      %p105 = por %p103, %p104
      %p107 = scmp.ne.s32.totalorder %s90, %s106
      %p108 = scmp.eq.s32.totalorder %s18, 0
      %p109 = por %p107, %p108
      %s110 = ssub.s32 %s19, %s31
      %p111 = scmp.eq.s32.totalorder %s110, 0
      %s113 = sadd.s32 %s112, 1
      %s114 = scalar_select %p111, %s112, %s113
      %p117 = pneg %p111
      %p118 = scmp.eq.s32.totalorder %s12, 3
      %p119 = por %p117, %p118
      %p120 = scmp.ne.s32.totalorder %s112, %s115
      %p121 = scmp.eq.s32.totalorder %s12, 0
      %p122 = por %p120, %p121
      %p123 = scmp.ne.s32.totalorder %s112, %s115
      %p124 = scmp.eq.s32.totalorder %s17, 3
      %p125 = por %p123, %p124
      %p126 = scmp.ne.s32.totalorder %s115, %s116
      %p127 = scmp.eq.s32.totalorder %s17, 0
      %p128 = por %p126, %p127
      %p129 = scmp.ne.s32.totalorder %s115, %s116
      %p130 = scmp.eq.s32.totalorder %s18, 3
      %p131 = por %p129, %p130
      %p133 = scmp.ne.s32.totalorder %s116, %s132
      %p134 = scmp.eq.s32.totalorder %s18, 0
      %p135 = por %p133, %p134
      %s136 = ssub.s32 %s19, %s31
      %s137 = ssub.s32 %s20, %s27
      %s138 = sor.u32 %s136, %s137
      %p139 = scmp.eq.s32.totalorder %s138, 0
      %s141 = sadd.s32 %s140, 1
      %s142 = scalar_select %p139, %s140, %s141
      %p145 = pneg %p139
      %p146 = scmp.eq.s32.totalorder %s12, 3
      %p147 = por %p145, %p146
      %p148 = scmp.ne.s32.totalorder %s140, %s143
      %p149 = scmp.eq.s32.totalorder %s12, 0
      %p150 = por %p148, %p149
      %p151 = scmp.ne.s32.totalorder %s140, %s143
      %p152 = scmp.eq.s32.totalorder %s17, 3
      %p153 = por %p151, %p152
      %p154 = scmp.ne.s32.totalorder %s143, %s144
      %p155 = scmp.eq.s32.totalorder %s17, 0
      %p156 = por %p154, %p155
      %p157 = scmp.ne.s32.totalorder %s143, %s144
      %p158 = scmp.eq.s32.totalorder %s18, 3
      %p159 = por %p157, %p158
      %p161 = scmp.ne.s32.totalorder %s144, %s160
      %p162 = scmp.eq.s32.totalorder %s18, 0
      %p163 = por %p161, %p162
      %p164 = scmp.le.s32.totalorder 1, %s12
      %p165 = scmp.lt.s32.totalorder %s12, 5
      %p166 = pnand %p164, %p165
      %p167 = pneg %p166
      // Predicated region
      $region9: #{forward.11} parent=5 // pred_check
        _
      $region10: #{forward.11} parent=5 // pred_check_branch
        %169 = sbr.rel (%p166) target = $region12
      $region11: #{forward.11} parent=5 // pred_region
        %s170 = ssub.s32 %s12, 1
        // Predicated region
        $region13: #{forward.11} parent=11 // pred_check
          %p171 = pneg %p50
        $region14: #{forward.11} parent=11 // pred_check_branch
          %173 = sbr.rel (%p171) target = $region16
        $region15: #{forward.11} parent=11 // pred_region
          %s174 = smul.u32 2, %s21
          %176 = vsyncadd [#allocation3], 0
          %s177 = smul.addr %s174, 4
          %s178 = scalar_lea.hbm %s0, %s177
          %s179 = sshll.u32 %s178, 4
          %s180 = int_to_ptr.hbm [resolvable:$true] %s179
          %s181 = sshll.u32 [#allocation2], 4
          %s182 = int_to_ptr.vmem [resolvable:$true] %s181
          %187 = dma.hbm_to_vmem [thread:$0]  %s180, 128, %s182, [#allocation3], 64, 64, 4
        $region16: #{forward.11} parent=11 // pred_fallthru
          _
        // Predicated region
        $region17: #{forward.11} parent=11 // pred_check
          %p188 = pneg %p102
        $region18: #{forward.11} parent=11 // pred_check_branch
          %190 = sbr.rel (%p188) target = $region20
        $region19: #{forward.11} parent=11 // pred_region
          %s191 = smul.u32 2, %s21
          %p192 = scmp.lt.s32.totalorder %s191, 1
          %s193 = scalar_select %p192, %s191, 1
          %s194 = smul.addr %s193, 8
          %s195 = scalar_lea.vmem %s2, %s194
          %s196 = smul.u32 2, %s21
        $region20: #{forward.11} parent=11 // pred_fallthru
          _
        // Predicated region
        $region21: #{forward.11} parent=11 // pred_check
          %p197 = pneg %p128
        $region22: #{forward.11} parent=11 // pred_check_branch
          %199 = sbr.rel (%p197) target = $region24
        $region23: #{forward.11} parent=11 // pred_region
          %s200 = smul.u32 2, %s21
          %202 = vsyncadd [#allocation6], 0
          %s203 = smul.addr %s200, 8
          %s204 = scalar_lea.hbm %s3, %s203
          %s205 = sshll.u32 %s204, 4
          %s206 = int_to_ptr.hbm [resolvable:$true] %s205
          %s207 = sshll.u32 [#allocation5], 4
          %s208 = int_to_ptr.vmem [resolvable:$true] %s207
          %213 = dma.hbm_to_vmem [thread:$0]  %s206, 256, %s208, [#allocation6], 128, 128, 8
        $region24: #{forward.11} parent=11 // pred_fallthru
          _
      $region12: #{forward.11} parent=5 // pred_fallthru
        _
      %p214 = scmp.lt.s32.totalorder %s12, 4
      // Predicated region
      $region25: #{forward.11} parent=5 // pred_check
        %p215 = pneg %p214
      $region26: #{forward.11} parent=5 // pred_check_branch
        %217 = sbr.rel (%p215) target = $region28
      $region27: #{forward.11} parent=5 // pred_region
        // Predicated region
        $region29: #{forward.11} parent=27 // pred_check
          %p218 = pneg %p70
        $region30: #{forward.11} parent=27 // pred_check_branch
          %220 = sbr.rel (%p218) target = $region32
        $region31: #{forward.11} parent=27 // pred_region
          %s221 = sand.u32 %s60, 1
          %s222 = sand.u32 %s60, 1
          %s223 = smul.addr %s222, 256
          %s224 = scalar_lea.vmem [#allocation4], %s223
          %s225 = smul.u32 4, %s20
          %s226 = smul.addr %s225, 4
          %s227 = scalar_lea.vmem %s1, %s226
          // Predicated region
          $region33: #{forward.11} parent=31 // pred_check
            _
          $region34: #{forward.11} parent=31 // pred_check_branch
            %229 = sbr.rel (0) target = $region36
          $region35: #{forward.11} parent=31 // pred_region
            // Predicated region
            $region37: #{forward.11} parent=35 // pred_check
              _
            $region38: #{forward.11} parent=35 // pred_check_branch
              %231 = sbr.rel (0) target = $region40
            $region39: #{forward.11} parent=35 // pred_region
              loop: start=0, step=1, limit=1
              $region41: #{forward.11} parent=39 // loop_pre_header
                _
              $region42: #{forward.11} parent=39 // loop_header
                %s233 = sphi 0, %s237
                %p234 = scmp.ge.s32.totalorder %s233, 1
                %s238 = sphi %s227, %s227
                %s239 = sphi %s224, %s224
              $region43: #{forward.11} parent=39 // loop_header_branch
                %236 = sbr.rel (%p234) target = $region47
              $region44: #{forward.11} parent=39 // loop_body
                %v240 = vld [vmem:[%s238] sm:$0xff]
                %241 = vst [vmem:[%s239] sm:$0xff] %v240
                %v242 = vld [vmem:[%s238 + $0x8] sm:$0xff]
                %243 = vst [vmem:[%s239 + $0x8] sm:$0xff] %v242
                %v244 = vld [vmem:[%s238 + $0x40] sm:$0xff]
                %245 = vst [vmem:[%s239 + $0x10] sm:$0xff] %v244
                %v246 = vld [vmem:[%s238 + $0x48] sm:$0xff]
                %247 = vst [vmem:[%s239 + $0x18] sm:$0xff] %v246
                %v248 = vld [vmem:[%s238 + $0x80] sm:$0xff]
                %249 = vst [vmem:[%s239 + $0x20] sm:$0xff] %v248
                %v250 = vld [vmem:[%s238 + $0x88] sm:$0xff]
                %251 = vst [vmem:[%s239 + $0x28] sm:$0xff] %v250
                %v252 = vld [vmem:[%s238 + $0xc0] sm:$0xff]
                %253 = vst [vmem:[%s239 + $0x30] sm:$0xff] %v252
                %v254 = vld [vmem:[%s238 + $0xc8] sm:$0xff]
                %255 = vst [vmem:[%s239 + $0x38] sm:$0xff] %v254
                %v256 = vld [vmem:[%s238 + $0x100] sm:$0xff]
                %257 = vst [vmem:[%s239 + $0x40] sm:$0xff] %v256
                %v258 = vld [vmem:[%s238 + $0x108] sm:$0xff]
                %259 = vst [vmem:[%s239 + $0x48] sm:$0xff] %v258
                %v260 = vld [vmem:[%s238 + $0x140] sm:$0xff]
                %261 = vst [vmem:[%s239 + $0x50] sm:$0xff] %v260
                %v262 = vld [vmem:[%s238 + $0x148] sm:$0xff]
                %263 = vst [vmem:[%s239 + $0x58] sm:$0xff] %v262
                %v264 = vld [vmem:[%s238 + $0x180] sm:$0xff]
                %265 = vst [vmem:[%s239 + $0x60] sm:$0xff] %v264
                %v266 = vld [vmem:[%s238 + $0x188] sm:$0xff]
                %267 = vst [vmem:[%s239 + $0x68] sm:$0xff] %v266
                %v268 = vld [vmem:[%s238 + $0x1c0] sm:$0xff]
                %269 = vst [vmem:[%s239 + $0x70] sm:$0xff] %v268
                %v270 = vld [vmem:[%s238 + $0x1c8] sm:$0xff]
                %271 = vst [vmem:[%s239 + $0x78] sm:$0xff] %v270
                %v272 = vld [vmem:[%s238 + $0x200] sm:$0xff]
                %273 = vst [vmem:[%s239 + $0x80] sm:$0xff] %v272
                %v274 = vld [vmem:[%s238 + $0x208] sm:$0xff]
                %275 = vst [vmem:[%s239 + $0x88] sm:$0xff] %v274
                %v276 = vld [vmem:[%s238 + $0x240] sm:$0xff]
                %277 = vst [vmem:[%s239 + $0x90] sm:$0xff] %v276
                %v278 = vld [vmem:[%s238 + $0x248] sm:$0xff]
                %279 = vst [vmem:[%s239 + $0x98] sm:$0xff] %v278
                %v280 = vld [vmem:[%s238 + $0x280] sm:$0xff]
                %281 = vst [vmem:[%s239 + $0xa0] sm:$0xff] %v280
                %v282 = vld [vmem:[%s238 + $0x288] sm:$0xff]
                %283 = vst [vmem:[%s239 + $0xa8] sm:$0xff] %v282
                %v284 = vld [vmem:[%s238 + $0x2c0] sm:$0xff]
                %285 = vst [vmem:[%s239 + $0xb0] sm:$0xff] %v284
                %v286 = vld [vmem:[%s238 + $0x2c8] sm:$0xff]
                %287 = vst [vmem:[%s239 + $0xb8] sm:$0xff] %v286
                %v288 = vld [vmem:[%s238 + $0x300] sm:$0xff]
                %289 = vst [vmem:[%s239 + $0xc0] sm:$0xff] %v288
                %v290 = vld [vmem:[%s238 + $0x308] sm:$0xff]
                %291 = vst [vmem:[%s239 + $0xc8] sm:$0xff] %v290
                %v292 = vld [vmem:[%s238 + $0x340] sm:$0xff]
                %293 = vst [vmem:[%s239 + $0xd0] sm:$0xff] %v292
                %v294 = vld [vmem:[%s238 + $0x348] sm:$0xff]
                %295 = vst [vmem:[%s239 + $0xd8] sm:$0xff] %v294
                %v296 = vld [vmem:[%s238 + $0x380] sm:$0xff]
                %297 = vst [vmem:[%s239 + $0xe0] sm:$0xff] %v296
                %v298 = vld [vmem:[%s238 + $0x388] sm:$0xff]
                %299 = vst [vmem:[%s239 + $0xe8] sm:$0xff] %v298
                %v300 = vld [vmem:[%s238 + $0x3c0] sm:$0xff]
                %301 = vst [vmem:[%s239 + $0xf0] sm:$0xff] %v300
                %v302 = vld [vmem:[%s238 + $0x3c8] sm:$0xff]
                %303 = vst [vmem:[%s239 + $0xf8] sm:$0xff] %v302
              $region45: #{forward.11} parent=39 // loop_footer
                %s237 = sadd.s32 1, %s233
              $region46: #{forward.11} parent=39 // loop_footer_branch
                %232 = sbr.rel target = $region42
              $region47: #{forward.11} parent=39 // loop_exit
                _
            $region40: #{forward.11} parent=35 // pred_fallthru
              _
            // Predicated region
            $region48: #{forward.11} parent=35 // pred_check
              _
            $region49: #{forward.11} parent=35 // pred_check_branch
              %305 = sbr.rel target = $region51
            $region50: #{forward.11} parent=35 // pred_region
              _
            $region51: #{forward.11} parent=35 // pred_fallthru
              _
          $region36: #{forward.11} parent=31 // pred_fallthru
            _
          %306 = vnop
        $region32: #{forward.11} parent=27 // pred_fallthru
          _
      $region28: #{forward.11} parent=5 // pred_fallthru
        _
      %p307 = scmp.le.s32.totalorder 1, %s12
      %p308 = scmp.lt.s32.totalorder %s12, 5
      %p309 = pnand %p307, %p308
      %p310 = pneg %p309
      // Predicated region
      $region52: #{forward.11} parent=5 // pred_check
        _
      $region53: #{forward.11} parent=5 // pred_check_branch
        %312 = sbr.rel (%p309) target = $region55
      $region54: #{forward.11} parent=5 // pred_region
        %s313 = ssub.s32 %s12, 1
        // Predicated region
        $region56: #{forward.11} parent=54 // pred_check
          %p314 = pneg %p50
        $region57: #{forward.11} parent=54 // pred_check_branch
          %316 = sbr.rel (%p314) target = $region59
        $region58: #{forward.11} parent=54 // pred_region
          %318 = dma.done [#allocation3], 128
        $region59: #{forward.11} parent=54 // pred_fallthru
          _
        %s319 = sand.u32 %s63, 1
        %s320 = sand.u32 %s63, 1
        %s321 = smul.addr %s320, 256
        %s322 = scalar_lea.vmem [#allocation4], %s321
        // Predicated region
        $region60: #{forward.11} parent=54 // pred_check
          %p323 = pneg %p76
        $region61: #{forward.11} parent=54 // pred_check_branch
          %325 = sbr.rel (%p323) target = $region63
        $region62: #{forward.11} parent=54 // pred_region
          _
        $region63: #{forward.11} parent=54 // pred_fallthru
          _
        // Predicated region
        $region64: #{forward.11} parent=54 // pred_check
          %p326 = pneg %p128
        $region65: #{forward.11} parent=54 // pred_check_branch
          %328 = sbr.rel (%p326) target = $region67
        $region66: #{forward.11} parent=54 // pred_region
          %330 = dma.done [#allocation6], 256
        $region67: #{forward.11} parent=54 // pred_fallthru
          _
        %p331 = pneg %p50
        %p332 = pneg %p47
        %s333 = sand.u32 %s63, 1
        %s334 = sand.u32 %s63, 1
        %s335 = smul.addr %s334, 256
        %s336 = scalar_lea.vmem [#allocation4], %s335
        %p337 = pneg %p76
        %p338 = pneg %p73
        %s339 = smul.u32 2, %s21
        %p340 = scmp.lt.s32.totalorder %s339, 1
        %s341 = scalar_select %p340, %s339, 1
        %s342 = smul.addr %s341, 8
        %s343 = scalar_lea.vmem %s2, %s342
        %p344 = pneg %p102
        %p345 = pneg %p99
        %p346 = pneg %p128
        %p347 = pneg %p125
        %p348 = pneg %p156
        %p349 = pneg %p153
        %s350 = sand.u32 %s143, 1
        %s351 = sand.u32 %s143, 1
        %s352 = smul.addr %s351, 32
        %s353 = scalar_lea.vmem [#allocation7], %s352
        %s354 = smul.u32 2, %s21
        %s355 = smul.u32 4, %s22
        %s356 = smul.u32 2, %s21
        %p357 = scmp.lt.s32.totalorder %s356, 1
        %s358 = scalar_select %p357, %s356, 1
        %s359 = smul.addr %s358, 8
        %s360 = scalar_lea.vmem %s2, %s359
        %s361 = smul.u32 2, %s21
        %s362 = smul.u32 2, %s21
        %s363 = smul.u32 2, %s21
        %s364 = smul.u32 4, %s22
        %v365 = vld [vmem:[#allocation2] sm:$0xf]
        %v366 = vld [vmem:[#allocation2 + $0x4] sm:$0xf]
        %v367 = vld [vmem:[%s322] sm:$0xff]
        %v368 = vld [vmem:[%s322 + $0x8] sm:$0xff]
        %v369 = vld [vmem:[%s322 + $0x10] sm:$0xff]
        %v370 = vld [vmem:[%s322 + $0x18] sm:$0xff]
        %v371 = vld [vmem:[%s322 + $0x20] sm:$0xff]
        %v372 = vld [vmem:[%s322 + $0x28] sm:$0xff]
        %v373 = vld [vmem:[%s322 + $0x30] sm:$0xff]
        %v374 = vld [vmem:[%s322 + $0x38] sm:$0xff]
        %v375 = vld [vmem:[%s322 + $0x40] sm:$0xff]
        %v376 = vld [vmem:[%s322 + $0x48] sm:$0xff]
        %v377 = vld [vmem:[%s322 + $0x50] sm:$0xff]
        %v378 = vld [vmem:[%s322 + $0x58] sm:$0xff]
        %v379 = vld [vmem:[%s322 + $0x60] sm:$0xff]
        %v380 = vld [vmem:[%s322 + $0x68] sm:$0xff]
        %v381 = vld [vmem:[%s322 + $0x70] sm:$0xff]
        %v382 = vld [vmem:[%s322 + $0x78] sm:$0xff]
        %v383 = vld [vmem:[%s322 + $0x80] sm:$0xff]
        %v384 = vld [vmem:[%s322 + $0x88] sm:$0xff]
        %v385 = vld [vmem:[%s322 + $0x90] sm:$0xff]
        %v386 = vld [vmem:[%s322 + $0x98] sm:$0xff]
        %v387 = vld [vmem:[%s322 + $0xa0] sm:$0xff]
        %v388 = vld [vmem:[%s322 + $0xa8] sm:$0xff]
        %v389 = vld [vmem:[%s322 + $0xb0] sm:$0xff]
        %v390 = vld [vmem:[%s322 + $0xb8] sm:$0xff]
        %v391 = vld [vmem:[%s322 + $0xc0] sm:$0xff]
        %v392 = vld [vmem:[%s322 + $0xc8] sm:$0xff]
        %v393 = vld [vmem:[%s322 + $0xd0] sm:$0xff]
        %v394 = vld [vmem:[%s322 + $0xd8] sm:$0xff]
        %v395 = vld [vmem:[%s322 + $0xe0] sm:$0xff]
        %v396 = vld [vmem:[%s322 + $0xe8] sm:$0xff]
        %v397 = vld [vmem:[%s322 + $0xf0] sm:$0xff]
        %v398 = vld [vmem:[%s322 + $0xf8] sm:$0xff]
        %v401 = vunpack.c.l.b16 %v365
        %v402 = vunpack.c.l.b16 %v366
        %v403 = vpack.c.b16 %v402, %v401
        %v437 = vunpack.c.l.b16 %v367
        %v438 = vunpack.c.h.b16 %v367
        %v439 = vunpack.c.l.b16 %v368
        %v440 = vunpack.c.h.b16 %v368
        %v441 = vunpack.c.l.b16 %v369
        %v442 = vunpack.c.h.b16 %v369
        %v443 = vunpack.c.l.b16 %v370
        %v444 = vunpack.c.h.b16 %v370
        %v445 = vunpack.c.l.b16 %v371
        %v446 = vunpack.c.h.b16 %v371
        %v447 = vunpack.c.l.b16 %v372
        %v448 = vunpack.c.h.b16 %v372
        %v449 = vunpack.c.l.b16 %v373
        %v450 = vunpack.c.h.b16 %v373
        %v451 = vunpack.c.l.b16 %v374
        %v452 = vunpack.c.h.b16 %v374
        %v453 = vunpack.c.l.b16 %v375
        %v454 = vunpack.c.h.b16 %v375
        %v455 = vunpack.c.l.b16 %v376
        %v456 = vunpack.c.h.b16 %v376
        %v457 = vunpack.c.l.b16 %v377
        %v458 = vunpack.c.h.b16 %v377
        %v459 = vunpack.c.l.b16 %v378
        %v460 = vunpack.c.h.b16 %v378
        %v461 = vunpack.c.l.b16 %v379
        %v462 = vunpack.c.h.b16 %v379
        %v463 = vunpack.c.l.b16 %v380
        %v464 = vunpack.c.h.b16 %v380
        %v465 = vunpack.c.l.b16 %v381
        %v466 = vunpack.c.h.b16 %v381
        %v467 = vunpack.c.l.b16 %v382
        %v468 = vunpack.c.h.b16 %v382
        %v469 = vunpack.c.l.b16 %v383
        %v470 = vunpack.c.h.b16 %v383
        %v471 = vunpack.c.l.b16 %v384
        %v472 = vunpack.c.h.b16 %v384
        %v473 = vunpack.c.l.b16 %v385
        %v474 = vunpack.c.h.b16 %v385
        %v475 = vunpack.c.l.b16 %v386
        %v476 = vunpack.c.h.b16 %v386
        %v477 = vunpack.c.l.b16 %v387
        %v478 = vunpack.c.h.b16 %v387
        %v479 = vunpack.c.l.b16 %v388
        %v480 = vunpack.c.h.b16 %v388
        %v481 = vunpack.c.l.b16 %v389
        %v482 = vunpack.c.h.b16 %v389
        %v483 = vunpack.c.l.b16 %v390
        %v484 = vunpack.c.h.b16 %v390
        %v485 = vunpack.c.l.b16 %v391
        %v486 = vunpack.c.h.b16 %v391
        %v487 = vunpack.c.l.b16 %v392
        %v488 = vunpack.c.h.b16 %v392
        %v489 = vunpack.c.l.b16 %v393
        %v490 = vunpack.c.h.b16 %v393
        %v491 = vunpack.c.l.b16 %v394
        %v492 = vunpack.c.h.b16 %v394
        %v493 = vunpack.c.l.b16 %v395
        %v494 = vunpack.c.h.b16 %v395
        %v495 = vunpack.c.l.b16 %v396
        %v496 = vunpack.c.h.b16 %v396
        %v497 = vunpack.c.l.b16 %v397
        %v498 = vunpack.c.h.b16 %v397
        %v499 = vunpack.c.l.b16 %v398
        %v500 = vunpack.c.h.b16 %v398
        %v501 = vpack.c.b16 %v441, %v437
        %v502 = vpack.c.b16 %v442, %v438
        %v503 = vpack.c.b16 %v443, %v439
        %v504 = vpack.c.b16 %v444, %v440
        %v505 = vpack.c.b16 %v449, %v445
        %v506 = vpack.c.b16 %v450, %v446
        %v507 = vpack.c.b16 %v451, %v447
        %v508 = vpack.c.b16 %v452, %v448
        %v509 = vpack.c.b16 %v457, %v453
        %v510 = vpack.c.b16 %v458, %v454
        %v511 = vpack.c.b16 %v459, %v455
        %v512 = vpack.c.b16 %v460, %v456
        %v513 = vpack.c.b16 %v465, %v461
        %v514 = vpack.c.b16 %v466, %v462
        %v515 = vpack.c.b16 %v467, %v463
        %v516 = vpack.c.b16 %v468, %v464
        %v517 = vpack.c.b16 %v473, %v469
        %v518 = vpack.c.b16 %v474, %v470
        %v519 = vpack.c.b16 %v475, %v471
        %v520 = vpack.c.b16 %v476, %v472
        %v521 = vpack.c.b16 %v481, %v477
        %v522 = vpack.c.b16 %v482, %v478
        %v523 = vpack.c.b16 %v483, %v479
        %v524 = vpack.c.b16 %v484, %v480
        %v525 = vpack.c.b16 %v489, %v485
        %v526 = vpack.c.b16 %v490, %v486
        %v527 = vpack.c.b16 %v491, %v487
        %v528 = vpack.c.b16 %v492, %v488
        %v529 = vpack.c.b16 %v497, %v493
        %v530 = vpack.c.b16 %v498, %v494
        %v531 = vpack.c.b16 %v499, %v495
        %v532 = vpack.c.b16 %v500, %v496
        %565 = vmatpush.bf16.msra.mxu0 %v529
        %566 = vmatpush.bf16.msra.mxu0 %v525
        %567 = vmatpush.bf16.msra.mxu0 %v521
        %568 = vmatpush.bf16.msra.mxu0 %v517
        %569 = vmatpush.bf16.msra.mxu0 %v513
        %570 = vmatpush.bf16.msra.mxu0 %v509
        %571 = vmatpush.bf16.msra.mxu0 %v505
        %572 = vmatpush.bf16.msra.mxu0 %v501
        %573 = vmatmul.bf16.gmra.mxu0 %v403
        %v574 = vpop.f32.mrf.mxu0
        %v575 = vadd.f32 0.0, %v574
        %v576 = vpop.f32.mrf.mxu0
        %v577 = vadd.f32 0.0, %v576
        %578 = vdwg.mxu0
        %579 = vmatpush.bf16.msra.mxu0 %v530
        %580 = vmatpush.bf16.msra.mxu0 %v526
        %581 = vmatpush.bf16.msra.mxu0 %v522
        %582 = vmatpush.bf16.msra.mxu0 %v518
        %583 = vmatpush.bf16.msra.mxu0 %v514
        %584 = vmatpush.bf16.msra.mxu0 %v510
        %585 = vmatpush.bf16.msra.mxu0 %v506
        %586 = vmatpush.bf16.msra.mxu0 %v502
        %587 = vmatmul.bf16.gmra.mxu0 %v403
        %v588 = vpop.f32.mrf.mxu0
        %v589 = vadd.f32 0.0, %v588
        %v590 = vpop.f32.mrf.mxu0
        %v591 = vadd.f32 0.0, %v590
        %592 = vdwg.mxu0
        %593 = vmatpush.bf16.msra.mxu0 %v531
        %594 = vmatpush.bf16.msra.mxu0 %v527
        %595 = vmatpush.bf16.msra.mxu0 %v523
        %596 = vmatpush.bf16.msra.mxu0 %v519
        %597 = vmatpush.bf16.msra.mxu0 %v515
        %598 = vmatpush.bf16.msra.mxu0 %v511
        %599 = vmatpush.bf16.msra.mxu0 %v507
        %600 = vmatpush.bf16.msra.mxu0 %v503
        %601 = vmatmul.bf16.gmra.mxu0 %v403
        %v602 = vpop.f32.mrf.mxu0
        %v603 = vadd.f32 0.0, %v602
        %v604 = vpop.f32.mrf.mxu0
        %v605 = vadd.f32 0.0, %v604
        %606 = vdwg.mxu0
        %607 = vmatpush.bf16.msra.mxu0 %v532
        %608 = vmatpush.bf16.msra.mxu0 %v528
        %609 = vmatpush.bf16.msra.mxu0 %v524
        %610 = vmatpush.bf16.msra.mxu0 %v520
        %611 = vmatpush.bf16.msra.mxu0 %v516
        %612 = vmatpush.bf16.msra.mxu0 %v512
        %613 = vmatpush.bf16.msra.mxu0 %v508
        %614 = vmatpush.bf16.msra.mxu0 %v504
        %615 = vmatmul.bf16.gmra.mxu0 %v403
        %v616 = vpop.f32.mrf.mxu0
        %v617 = vadd.f32 0.0, %v616
        %v618 = vpop.f32.mrf.mxu0
        %v619 = vadd.f32 0.0, %v618
        %620 = vdwg.mxu0
        %v621 = vld [vmem:[%s360] sm:$0xff]
        %v622 = vld [vmem:[%s360 + $0x8] sm:$0xff]
        %624 = vset.pattern.permute.xlu0 0
        %625 = vperm.xlu0 %624, %v621
        %v626 = vpop.permute.xlu0 %625
        %629 = vset.pattern.permute.xlu0 0
        %630 = vperm.xlu0 %629, %v622
        %v631 = vpop.permute.xlu0 %630
        %v633 = vmul.f32 %v575, %v626
        %v634 = vmul.f32 %v589, %v626
        %v635 = vmul.f32 %v603, %v626
        %v636 = vmul.f32 %v617, %v626
        %v637 = vmul.f32 %v577, %v631
        %v638 = vmul.f32 %v591, %v631
        %v639 = vmul.f32 %v605, %v631
        %v640 = vmul.f32 %v619, %v631
        %v641 = vld [vmem:[#allocation5] sm:$0xff]
        %v642 = vld [vmem:[#allocation5 + $0x8] sm:$0xff]
        %644 = vset.pattern.permute.xlu0 0
        %645 = vperm.xlu0 %644, %v641
        %v646 = vpop.permute.xlu0 %645
        %649 = vset.pattern.permute.xlu0 0
        %650 = vperm.xlu0 %649, %v642
        %v651 = vpop.permute.xlu0 %650
        %v653 = vadd.f32 %v633, %v646
        %v654 = vadd.f32 %v634, %v646
        %v655 = vadd.f32 %v635, %v646
        %v656 = vadd.f32 %v636, %v646
        %v657 = vadd.f32 %v637, %v651
        %v658 = vadd.f32 %v638, %v651
        %v659 = vadd.f32 %v639, %v651
        %v660 = vadd.f32 %v640, %v651
        %v661 = vmax.f32 %v653, 0.0
        %v662 = vmax.f32 %v654, 0.0
        %v663 = vmax.f32 %v655, 0.0
        %v664 = vmax.f32 %v656, 0.0
        %v665 = vmax.f32 %v657, 0.0
        %v666 = vmax.f32 %v658, 0.0
        %v667 = vmax.f32 %v659, 0.0
        %v668 = vmax.f32 %v660, 0.0
        %v669 = vpack.c.bf16 %v662, %v661
        %v670 = vpack.c.bf16 %v664, %v663
        %v671 = vpack.c.bf16 %v666, %v665
        %v672 = vpack.c.bf16 %v668, %v667
        %673 = vst [vmem:[%s353] sm:$0xff] %v669
        %674 = vst [vmem:[%s353 + $0x8] sm:$0xff] %v670
        %675 = vst [vmem:[%s353 + $0x10] sm:$0xff] %v671
        %676 = vst [vmem:[%s353 + $0x18] sm:$0xff] %v672
        %s677 = sand.u32 %s143, 1
        %s678 = sand.u32 %s143, 1
        %s679 = smul.addr %s678, 32
        %s680 = scalar_lea.vmem [#allocation7], %s679
        // Predicated region
        $region68: #{forward.11} parent=54 // pred_check
          %p681 = pneg %p153
        $region69: #{forward.11} parent=54 // pred_check_branch
          %683 = sbr.rel (%p681) target = $region71
        $region70: #{forward.11} parent=54 // pred_region
          %s684 = smul.u32 2, %s21
          %s685 = smul.u32 4, %s22
          %s686 = smul.addr %s684, 16
          %s687 = sadd.s32 %s685, %s686
          %s688 = smul.addr %s687, 4
          %s689 = scalar_lea.vmem %s4, %s688
          // Predicated region
          $region72: #{forward.11} parent=70 // pred_check
            _
          $region73: #{forward.11} parent=70 // pred_check_branch
            %691 = sbr.rel (0) target = $region75
          $region74: #{forward.11} parent=70 // pred_region
            // Predicated region
            $region76: #{forward.11} parent=74 // pred_check
              _
            $region77: #{forward.11} parent=74 // pred_check_branch
              %693 = sbr.rel (0) target = $region79
            $region78: #{forward.11} parent=74 // pred_region
              loop: start=0, step=1, limit=1
              $region80: #{forward.11} parent=78 // loop_pre_header
                _
              $region81: #{forward.11} parent=78 // loop_header
                %s695 = sphi 0, %s699
                %p696 = scmp.ge.s32.totalorder %s695, 1
                %s700 = sphi %s680, %s680
                %s701 = sphi %s689, %s689
              $region82: #{forward.11} parent=78 // loop_header_branch
                %698 = sbr.rel (%p696) target = $region86
              $region83: #{forward.11} parent=78 // loop_body
                %v702 = vld [vmem:[%s700] sm:$0xff]
                %703 = vst [vmem:[%s701] sm:$0xff] %v702
                %v704 = vld [vmem:[%s700 + $0x8] sm:$0xff]
                %705 = vst [vmem:[%s701 + $0x8] sm:$0xff] %v704
                %v706 = vld [vmem:[%s700 + $0x10] sm:$0xff]
                %707 = vst [vmem:[%s701 + $0x40] sm:$0xff] %v706
                %v708 = vld [vmem:[%s700 + $0x18] sm:$0xff]
                %709 = vst [vmem:[%s701 + $0x48] sm:$0xff] %v708
              $region84: #{forward.11} parent=78 // loop_footer
                %s699 = sadd.s32 1, %s695
              $region85: #{forward.11} parent=78 // loop_footer_branch
                %694 = sbr.rel target = $region81
              $region86: #{forward.11} parent=78 // loop_exit
                _
            $region79: #{forward.11} parent=74 // pred_fallthru
              _
            // Predicated region
            $region87: #{forward.11} parent=74 // pred_check
              _
            $region88: #{forward.11} parent=74 // pred_check_branch
              %711 = sbr.rel target = $region90
            $region89: #{forward.11} parent=74 // pred_region
              _
            $region90: #{forward.11} parent=74 // pred_fallthru
              _
          $region75: #{forward.11} parent=70 // pred_fallthru
            _
          %712 = vnop
        $region71: #{forward.11} parent=54 // pred_fallthru
          _
      $region55: #{forward.11} parent=5 // pred_fallthru
        _
      %p713 = scmp.le.s32.totalorder 2, %s12
      // Predicated region
      $region91: #{forward.11} parent=5 // pred_check
        %p714 = pneg %p713
      $region92: #{forward.11} parent=5 // pred_check_branch
        %716 = sbr.rel (%p714) target = $region94
      $region93: #{forward.11} parent=5 // pred_region
        %s717 = ssub.s32 %s12, 2
        // Predicated region
        $region95: #{forward.11} parent=93 // pred_check
          %p718 = pneg %p159
        $region96: #{forward.11} parent=93 // pred_check_branch
          %720 = sbr.rel (%p718) target = $region98
        $region97: #{forward.11} parent=93 // pred_region
          %s721 = sand.u32 %s144, 1
          %s722 = sand.u32 %s144, 1
          %s723 = smul.addr %s722, 32
          %s724 = scalar_lea.vmem [#allocation7], %s723
        $region98: #{forward.11} parent=93 // pred_fallthru
          _
      $region94: #{forward.11} parent=5 // pred_fallthru
        _
    $region6: #{forward.11} parent=1 // loop_footer
      %s16 = sadd.s32 1, %s12
    $region7: #{forward.11} parent=1 // loop_footer_branch
      %11 = sbr.rel target = $region3
    $region8: #{forward.11} parent=1 // loop_exit
      _
    %725 = vsyncpa [#allocation3], 1
    %s726 = scalar_lea.sflag [#allocation3], 1
    %727 = vsyncpa %s726, 1
    %728 = vsyncpa [#allocation6], 1

// kernel: forward.12
$region0: #{forward.12}
  #allocation0 [shape = 'u32[]', space=smem, size = 0x4, offset = 0x4, fixed_abs, tag = 'smem constant byte address 0x4 - core index']
  #allocation1 [shape = 'u32[72,128]{1,0:T(1,128)}', space=vmem, size = 0x9000, scoped, tag = 'internal scratch']
  %s0 = inlined_call_operand.vmem [shape: bf16[16,256], index: 0, kind: input, shape index: {}]
  %s1 = inlined_call_operand.vmem [shape: bf16[256,1536], index: 1, kind: input, shape index: {}]
  %s2 = inlined_call_operand.vmem [shape: f32[16,1], index: 2, kind: input, shape index: {}]
  %s3 = inlined_call_operand.vmem [shape: f32[16,1], index: 3, kind: input, shape index: {}]
  %s4 = inlined_call_operand.vmem [shape: bf16[16,1536], index: 4, kind: output, shape index: {}]
  %s5 = sld [smem:[#allocation0]]
  $region91: #{forward.12} parent=0
    _
  %s7 = ssub.s32 1, %s5
  %s8 = scalar_select 0, %s7, %s5
  $region1: #{forward.12} parent=0
    #allocation2 [shape = 'u8[524288]{0}', space=vmem, size = 0x80000, scoped, tag = 'input window, operand 1']
    #allocation3 [shape = 'u8[32768]{0}', space=vmem, size = 0x8000, scoped, tag = 'output window, operand 0']
    loop: start=0, step=1, limit=5
    $region2: #{forward.12} parent=1 // loop_pre_header
      _
    $region3: #{forward.12} parent=1 // loop_header
      %s10 = sphi 0, %s14
      %p11 = scmp.ge.s32.totalorder %s10, 5
      %s17 = sphi 0, %s29
      %s18 = sphi 0, %s25
      %s19 = sphi 0, %s17
      %s20 = sphi 0, %s18
      %s21 = sphi 0, %s19
      %s22 = sphi 0, %s20
      %s32 = sphi 0, %s34
      %s35 = sphi 0, %s32
      %s36 = sphi 0, %s35
      %s52 = sphi 0, %s36
      %s58 = sphi 0, %s60
      %s61 = sphi 0, %s58
      %s62 = sphi 0, %s61
      %s78 = sphi 0, %s62
      %s84 = sphi 0, %s86
      %s87 = sphi 0, %s84
      %s88 = sphi 0, %s87
      %s104 = sphi 0, %s88
      %s110 = sphi 0, %s112
      %s113 = sphi 0, %s110
      %s114 = sphi 0, %s113
      %s130 = sphi 0, %s114
      %s138 = sphi 0, %s140
      %s141 = sphi 0, %s138
      %s142 = sphi 0, %s141
      %s158 = sphi 0, %s142
    $region4: #{forward.12} parent=1 // loop_header_branch
      %13 = sbr.rel (%p11) target = $region8
    $region5: #{forward.12} parent=1 // loop_body
      %s15 = ssub.s32 %s10, 1
      %s16 = ssub.s32 %s10, 2
      %s23 = sadd.s32 1, %s18
      %p24 = scmp.ge.s32.totalorder %s23, 3
      %s25 = scalar_select %p24, 0, %s23
      %s26 = sadd.s32 1, %s17
      %s27 = scalar_select %p24, %s26, %s17
      %p28 = scmp.ge.s32.totalorder %s27, 1
      %s29 = scalar_select %p28, 0, %s27
      %s30 = ssub.s32 %s17, %s29
      %p31 = scmp.eq.s32.totalorder %s30, 0
      %s33 = sadd.s32 %s32, 1
      %s34 = scalar_select %p31, %s32, %s33
      %p37 = pneg %p31
      %p38 = scmp.eq.s32.totalorder %s10, 2
      %p39 = por %p37, %p38
      %p40 = scmp.ne.s32.totalorder %s32, %s35
      %p41 = scmp.eq.s32.totalorder %s10, 0
      %p42 = por %p40, %p41
      %p43 = scmp.ne.s32.totalorder %s32, %s35
      %p44 = scmp.eq.s32.totalorder %s15, 2
      %p45 = por %p43, %p44
      %p46 = scmp.ne.s32.totalorder %s35, %s36
      %p47 = scmp.eq.s32.totalorder %s15, 0
      %p48 = por %p46, %p47
      %p49 = scmp.ne.s32.totalorder %s35, %s36
      %p50 = scmp.eq.s32.totalorder %s16, 2
      %p51 = por %p49, %p50
      %p53 = scmp.ne.s32.totalorder %s36, %s52
      %p54 = scmp.eq.s32.totalorder %s16, 0
      %p55 = por %p53, %p54
      %s56 = ssub.s32 %s18, %s25
      %p57 = scmp.eq.s32.totalorder %s56, 0
      %s59 = sadd.s32 %s58, 1
      %s60 = scalar_select %p57, %s58, %s59
      %p63 = pneg %p57
      %p64 = scmp.eq.s32.totalorder %s10, 2
      %p65 = por %p63, %p64
      %p66 = scmp.ne.s32.totalorder %s58, %s61
      %p67 = scmp.eq.s32.totalorder %s10, 0
      %p68 = por %p66, %p67
      %p69 = scmp.ne.s32.totalorder %s58, %s61
      %p70 = scmp.eq.s32.totalorder %s15, 2
      %p71 = por %p69, %p70
      %p72 = scmp.ne.s32.totalorder %s61, %s62
      %p73 = scmp.eq.s32.totalorder %s15, 0
      %p74 = por %p72, %p73
      %p75 = scmp.ne.s32.totalorder %s61, %s62
      %p76 = scmp.eq.s32.totalorder %s16, 2
      %p77 = por %p75, %p76
      %p79 = scmp.ne.s32.totalorder %s62, %s78
      %p80 = scmp.eq.s32.totalorder %s16, 0
      %p81 = por %p79, %p80
      %s82 = ssub.s32 %s17, %s29
      %p83 = scmp.eq.s32.totalorder %s82, 0
      %s85 = sadd.s32 %s84, 1
      %s86 = scalar_select %p83, %s84, %s85
      %p89 = pneg %p83
      %p90 = scmp.eq.s32.totalorder %s10, 2
      %p91 = por %p89, %p90
      %p92 = scmp.ne.s32.totalorder %s84, %s87
      %p93 = scmp.eq.s32.totalorder %s10, 0
      %p94 = por %p92, %p93
      %p95 = scmp.ne.s32.totalorder %s84, %s87
      %p96 = scmp.eq.s32.totalorder %s15, 2
      %p97 = por %p95, %p96
      %p98 = scmp.ne.s32.totalorder %s87, %s88
      %p99 = scmp.eq.s32.totalorder %s15, 0
      %p100 = por %p98, %p99
      %p101 = scmp.ne.s32.totalorder %s87, %s88
      %p102 = scmp.eq.s32.totalorder %s16, 2
      %p103 = por %p101, %p102
      %p105 = scmp.ne.s32.totalorder %s88, %s104
      %p106 = scmp.eq.s32.totalorder %s16, 0
      %p107 = por %p105, %p106
      %s108 = ssub.s32 %s17, %s29
      %p109 = scmp.eq.s32.totalorder %s108, 0
      %s111 = sadd.s32 %s110, 1
      %s112 = scalar_select %p109, %s110, %s111
      %p115 = pneg %p109
      %p116 = scmp.eq.s32.totalorder %s10, 2
      %p117 = por %p115, %p116
      %p118 = scmp.ne.s32.totalorder %s110, %s113
      %p119 = scmp.eq.s32.totalorder %s10, 0
      %p120 = por %p118, %p119
      %p121 = scmp.ne.s32.totalorder %s110, %s113
      %p122 = scmp.eq.s32.totalorder %s15, 2
      %p123 = por %p121, %p122
      %p124 = scmp.ne.s32.totalorder %s113, %s114
      %p125 = scmp.eq.s32.totalorder %s15, 0
      %p126 = por %p124, %p125
      %p127 = scmp.ne.s32.totalorder %s113, %s114
      %p128 = scmp.eq.s32.totalorder %s16, 2
      %p129 = por %p127, %p128
      %p131 = scmp.ne.s32.totalorder %s114, %s130
      %p132 = scmp.eq.s32.totalorder %s16, 0
      %p133 = por %p131, %p132
      %s134 = ssub.s32 %s17, %s29
      %s135 = ssub.s32 %s18, %s25
      %s136 = sor.u32 %s134, %s135
      %p137 = scmp.eq.s32.totalorder %s136, 0
      %s139 = sadd.s32 %s138, 1
      %s140 = scalar_select %p137, %s138, %s139
      %p143 = pneg %p137
      %p144 = scmp.eq.s32.totalorder %s10, 2
      %p145 = por %p143, %p144
      %p146 = scmp.ne.s32.totalorder %s138, %s141
      %p147 = scmp.eq.s32.totalorder %s10, 0
      %p148 = por %p146, %p147
      %p149 = scmp.ne.s32.totalorder %s138, %s141
      %p150 = scmp.eq.s32.totalorder %s15, 2
      %p151 = por %p149, %p150
      %p152 = scmp.ne.s32.totalorder %s141, %s142
      %p153 = scmp.eq.s32.totalorder %s15, 0
      %p154 = por %p152, %p153
      %p155 = scmp.ne.s32.totalorder %s141, %s142
      %p156 = scmp.eq.s32.totalorder %s16, 2
      %p157 = por %p155, %p156
      %p159 = scmp.ne.s32.totalorder %s142, %s158
      %p160 = scmp.eq.s32.totalorder %s16, 0
      %p161 = por %p159, %p160
      %p162 = scmp.le.s32.totalorder 1, %s10
      %p163 = scmp.lt.s32.totalorder %s10, 4
      %p164 = pnand %p162, %p163
      %p165 = pneg %p164
      // Predicated region
      $region9: #{forward.12} parent=5 // pred_check
        _
      $region10: #{forward.12} parent=5 // pred_check_branch
        %167 = sbr.rel (%p164) target = $region12
      $region11: #{forward.12} parent=5 // pred_region
        %s168 = ssub.s32 %s10, 1
        // Predicated region
        $region13: #{forward.12} parent=11 // pred_check
          %p169 = pneg %p48
        $region14: #{forward.12} parent=11 // pred_check_branch
          %171 = sbr.rel (%p169) target = $region16
        $region15: #{forward.12} parent=11 // pred_region
          %s172 = smul.u32 2, %s19
          %p173 = scmp.lt.s32.totalorder %s172, 1
          %s174 = scalar_select %p173, %s172, 1
          %s175 = smul.addr %s174, 2
          %s176 = smul.addr %s175, 4
          %s177 = scalar_lea.vmem %s0, %s176
          %s178 = smul.u32 2, %s19
        $region16: #{forward.12} parent=11 // pred_fallthru
          _
        // Predicated region
        $region17: #{forward.12} parent=11 // pred_check
          %p179 = pneg %p100
        $region18: #{forward.12} parent=11 // pred_check_branch
          %181 = sbr.rel (%p179) target = $region20
        $region19: #{forward.12} parent=11 // pred_region
          %s182 = smul.u32 2, %s19
          %p183 = scmp.lt.s32.totalorder %s182, 1
          %s184 = scalar_select %p183, %s182, 1
          %s185 = smul.addr %s184, 8
          %s186 = scalar_lea.vmem %s2, %s185
          %s187 = smul.u32 2, %s19
        $region20: #{forward.12} parent=11 // pred_fallthru
          _
        // Predicated region
        $region21: #{forward.12} parent=11 // pred_check
          %p188 = pneg %p126
        $region22: #{forward.12} parent=11 // pred_check_branch
          %190 = sbr.rel (%p188) target = $region24
        $region23: #{forward.12} parent=11 // pred_region
          %s191 = smul.u32 2, %s19
          %p192 = scmp.lt.s32.totalorder %s191, 1
          %s193 = scalar_select %p192, %s191, 1
          %s194 = smul.addr %s193, 8
          %s195 = scalar_lea.vmem %s3, %s194
          %s196 = smul.u32 2, %s19
        $region24: #{forward.12} parent=11 // pred_fallthru
          _
      $region12: #{forward.12} parent=5 // pred_fallthru
        _
      %p197 = scmp.lt.s32.totalorder %s10, 3
      // Predicated region
      $region25: #{forward.12} parent=5 // pred_check
        %p198 = pneg %p197
      $region26: #{forward.12} parent=5 // pred_check_branch
        %200 = sbr.rel (%p198) target = $region28
      $region27: #{forward.12} parent=5 // pred_region
        // Predicated region
        $region29: #{forward.12} parent=27 // pred_check
          %p201 = pneg %p68
        $region30: #{forward.12} parent=27 // pred_check_branch
          %203 = sbr.rel (%p201) target = $region32
        $region31: #{forward.12} parent=27 // pred_region
          %s204 = sand.u32 %s58, 1
          %s205 = sand.u32 %s58, 1
          %s206 = smul.addr %s205, 512
          %s207 = scalar_lea.vmem [#allocation2], %s206
          %s208 = smul.u32 4, %s18
          %s209 = smul.addr %s208, 4
          %s210 = scalar_lea.vmem %s1, %s209
          // Predicated region
          $region33: #{forward.12} parent=31 // pred_check
            _
          $region34: #{forward.12} parent=31 // pred_check_branch
            %212 = sbr.rel (0) target = $region36
          $region35: #{forward.12} parent=31 // pred_region
            // Predicated region
            $region37: #{forward.12} parent=35 // pred_check
              _
            $region38: #{forward.12} parent=35 // pred_check_branch
              %214 = sbr.rel (0) target = $region40
            $region39: #{forward.12} parent=35 // pred_region
              loop: start=0, step=1, limit=1
              $region41: #{forward.12} parent=39 // loop_pre_header
                _
              $region42: #{forward.12} parent=39 // loop_header
                %s216 = sphi 0, %s220
                %p217 = scmp.ge.s32.totalorder %s216, 1
                %s221 = sphi %s210, %s210
                %s222 = sphi %s207, %s207
              $region43: #{forward.12} parent=39 // loop_header_branch
                %219 = sbr.rel (%p217) target = $region47
              $region44: #{forward.12} parent=39 // loop_body
                %v223 = vld [vmem:[%s221] sm:$0xff]
                %224 = vst [vmem:[%s222] sm:$0xff] %v223
                %v225 = vld [vmem:[%s221 + $0x8] sm:$0xff]
                %226 = vst [vmem:[%s222 + $0x8] sm:$0xff] %v225
                %v227 = vld [vmem:[%s221 + $0x30] sm:$0xff]
                %228 = vst [vmem:[%s222 + $0x10] sm:$0xff] %v227
                %v229 = vld [vmem:[%s221 + $0x38] sm:$0xff]
                %230 = vst [vmem:[%s222 + $0x18] sm:$0xff] %v229
                %v231 = vld [vmem:[%s221 + $0x60] sm:$0xff]
                %232 = vst [vmem:[%s222 + $0x20] sm:$0xff] %v231
                %v233 = vld [vmem:[%s221 + $0x68] sm:$0xff]
                %234 = vst [vmem:[%s222 + $0x28] sm:$0xff] %v233
                %v235 = vld [vmem:[%s221 + $0x90] sm:$0xff]
                %236 = vst [vmem:[%s222 + $0x30] sm:$0xff] %v235
                %v237 = vld [vmem:[%s221 + $0x98] sm:$0xff]
                %238 = vst [vmem:[%s222 + $0x38] sm:$0xff] %v237
                %v239 = vld [vmem:[%s221 + $0xc0] sm:$0xff]
                %240 = vst [vmem:[%s222 + $0x40] sm:$0xff] %v239
                %v241 = vld [vmem:[%s221 + $0xc8] sm:$0xff]
                %242 = vst [vmem:[%s222 + $0x48] sm:$0xff] %v241
                %v243 = vld [vmem:[%s221 + $0xf0] sm:$0xff]
                %244 = vst [vmem:[%s222 + $0x50] sm:$0xff] %v243
                %v245 = vld [vmem:[%s221 + $0xf8] sm:$0xff]
                %246 = vst [vmem:[%s222 + $0x58] sm:$0xff] %v245
                %v247 = vld [vmem:[%s221 + $0x120] sm:$0xff]
                %248 = vst [vmem:[%s222 + $0x60] sm:$0xff] %v247
                %v249 = vld [vmem:[%s221 + $0x128] sm:$0xff]
                %250 = vst [vmem:[%s222 + $0x68] sm:$0xff] %v249
                %v251 = vld [vmem:[%s221 + $0x150] sm:$0xff]
                %252 = vst [vmem:[%s222 + $0x70] sm:$0xff] %v251
                %v253 = vld [vmem:[%s221 + $0x158] sm:$0xff]
                %254 = vst [vmem:[%s222 + $0x78] sm:$0xff] %v253
                %v255 = vld [vmem:[%s221 + $0x180] sm:$0xff]
                %256 = vst [vmem:[%s222 + $0x80] sm:$0xff] %v255
                %v257 = vld [vmem:[%s221 + $0x188] sm:$0xff]
                %258 = vst [vmem:[%s222 + $0x88] sm:$0xff] %v257
                %v259 = vld [vmem:[%s221 + $0x1b0] sm:$0xff]
                %260 = vst [vmem:[%s222 + $0x90] sm:$0xff] %v259
                %v261 = vld [vmem:[%s221 + $0x1b8] sm:$0xff]
                %262 = vst [vmem:[%s222 + $0x98] sm:$0xff] %v261
                %v263 = vld [vmem:[%s221 + $0x1e0] sm:$0xff]
                %264 = vst [vmem:[%s222 + $0xa0] sm:$0xff] %v263
                %v265 = vld [vmem:[%s221 + $0x1e8] sm:$0xff]
                %266 = vst [vmem:[%s222 + $0xa8] sm:$0xff] %v265
                %v267 = vld [vmem:[%s221 + $0x210] sm:$0xff]
                %268 = vst [vmem:[%s222 + $0xb0] sm:$0xff] %v267
                %v269 = vld [vmem:[%s221 + $0x218] sm:$0xff]
                %270 = vst [vmem:[%s222 + $0xb8] sm:$0xff] %v269
                %v271 = vld [vmem:[%s221 + $0x240] sm:$0xff]
                %272 = vst [vmem:[%s222 + $0xc0] sm:$0xff] %v271
                %v273 = vld [vmem:[%s221 + $0x248] sm:$0xff]
                %274 = vst [vmem:[%s222 + $0xc8] sm:$0xff] %v273
                %v275 = vld [vmem:[%s221 + $0x270] sm:$0xff]
                %276 = vst [vmem:[%s222 + $0xd0] sm:$0xff] %v275
                %v277 = vld [vmem:[%s221 + $0x278] sm:$0xff]
                %278 = vst [vmem:[%s222 + $0xd8] sm:$0xff] %v277
                %v279 = vld [vmem:[%s221 + $0x2a0] sm:$0xff]
                %280 = vst [vmem:[%s222 + $0xe0] sm:$0xff] %v279
                %v281 = vld [vmem:[%s221 + $0x2a8] sm:$0xff]
                %282 = vst [vmem:[%s222 + $0xe8] sm:$0xff] %v281
                %v283 = vld [vmem:[%s221 + $0x2d0] sm:$0xff]
                %284 = vst [vmem:[%s222 + $0xf0] sm:$0xff] %v283
                %v285 = vld [vmem:[%s221 + $0x2d8] sm:$0xff]
                %286 = vst [vmem:[%s222 + $0xf8] sm:$0xff] %v285
                %v287 = vld [vmem:[%s221 + $0x300] sm:$0xff]
                %288 = vst [vmem:[%s222 + $0x100] sm:$0xff] %v287
                %v289 = vld [vmem:[%s221 + $0x308] sm:$0xff]
                %290 = vst [vmem:[%s222 + $0x108] sm:$0xff] %v289
                %v291 = vld [vmem:[%s221 + $0x330] sm:$0xff]
                %292 = vst [vmem:[%s222 + $0x110] sm:$0xff] %v291
                %v293 = vld [vmem:[%s221 + $0x338] sm:$0xff]
                %294 = vst [vmem:[%s222 + $0x118] sm:$0xff] %v293
                %v295 = vld [vmem:[%s221 + $0x360] sm:$0xff]
                %296 = vst [vmem:[%s222 + $0x120] sm:$0xff] %v295
                %v297 = vld [vmem:[%s221 + $0x368] sm:$0xff]
                %298 = vst [vmem:[%s222 + $0x128] sm:$0xff] %v297
                %v299 = vld [vmem:[%s221 + $0x390] sm:$0xff]
                %300 = vst [vmem:[%s222 + $0x130] sm:$0xff] %v299
                %v301 = vld [vmem:[%s221 + $0x398] sm:$0xff]
                %302 = vst [vmem:[%s222 + $0x138] sm:$0xff] %v301
                %v303 = vld [vmem:[%s221 + $0x3c0] sm:$0xff]
                %304 = vst [vmem:[%s222 + $0x140] sm:$0xff] %v303
                %v305 = vld [vmem:[%s221 + $0x3c8] sm:$0xff]
                %306 = vst [vmem:[%s222 + $0x148] sm:$0xff] %v305
                %v307 = vld [vmem:[%s221 + $0x3f0] sm:$0xff]
                %308 = vst [vmem:[%s222 + $0x150] sm:$0xff] %v307
                %v309 = vld [vmem:[%s221 + $0x3f8] sm:$0xff]
                %310 = vst [vmem:[%s222 + $0x158] sm:$0xff] %v309
                %v311 = vld [vmem:[%s221 + $0x420] sm:$0xff]
                %312 = vst [vmem:[%s222 + $0x160] sm:$0xff] %v311
                %v313 = vld [vmem:[%s221 + $0x428] sm:$0xff]
                %314 = vst [vmem:[%s222 + $0x168] sm:$0xff] %v313
                %v315 = vld [vmem:[%s221 + $0x450] sm:$0xff]
                %316 = vst [vmem:[%s222 + $0x170] sm:$0xff] %v315
                %v317 = vld [vmem:[%s221 + $0x458] sm:$0xff]
                %318 = vst [vmem:[%s222 + $0x178] sm:$0xff] %v317
                %v319 = vld [vmem:[%s221 + $0x480] sm:$0xff]
                %320 = vst [vmem:[%s222 + $0x180] sm:$0xff] %v319
                %v321 = vld [vmem:[%s221 + $0x488] sm:$0xff]
                %322 = vst [vmem:[%s222 + $0x188] sm:$0xff] %v321
                %v323 = vld [vmem:[%s221 + $0x4b0] sm:$0xff]
                %324 = vst [vmem:[%s222 + $0x190] sm:$0xff] %v323
                %v325 = vld [vmem:[%s221 + $0x4b8] sm:$0xff]
                %326 = vst [vmem:[%s222 + $0x198] sm:$0xff] %v325
                %v327 = vld [vmem:[%s221 + $0x4e0] sm:$0xff]
                %328 = vst [vmem:[%s222 + $0x1a0] sm:$0xff] %v327
                %v329 = vld [vmem:[%s221 + $0x4e8] sm:$0xff]
                %330 = vst [vmem:[%s222 + $0x1a8] sm:$0xff] %v329
                %v331 = vld [vmem:[%s221 + $0x510] sm:$0xff]
                %332 = vst [vmem:[%s222 + $0x1b0] sm:$0xff] %v331
                %v333 = vld [vmem:[%s221 + $0x518] sm:$0xff]
                %334 = vst [vmem:[%s222 + $0x1b8] sm:$0xff] %v333
                %v335 = vld [vmem:[%s221 + $0x540] sm:$0xff]
                %336 = vst [vmem:[%s222 + $0x1c0] sm:$0xff] %v335
                %v337 = vld [vmem:[%s221 + $0x548] sm:$0xff]
                %338 = vst [vmem:[%s222 + $0x1c8] sm:$0xff] %v337
                %v339 = vld [vmem:[%s221 + $0x570] sm:$0xff]
                %340 = vst [vmem:[%s222 + $0x1d0] sm:$0xff] %v339
                %v341 = vld [vmem:[%s221 + $0x578] sm:$0xff]
                %342 = vst [vmem:[%s222 + $0x1d8] sm:$0xff] %v341
                %v343 = vld [vmem:[%s221 + $0x5a0] sm:$0xff]
                %344 = vst [vmem:[%s222 + $0x1e0] sm:$0xff] %v343
                %v345 = vld [vmem:[%s221 + $0x5a8] sm:$0xff]
                %346 = vst [vmem:[%s222 + $0x1e8] sm:$0xff] %v345
                %v347 = vld [vmem:[%s221 + $0x5d0] sm:$0xff]
                %348 = vst [vmem:[%s222 + $0x1f0] sm:$0xff] %v347
                %v349 = vld [vmem:[%s221 + $0x5d8] sm:$0xff]
                %350 = vst [vmem:[%s222 + $0x1f8] sm:$0xff] %v349
              $region45: #{forward.12} parent=39 // loop_footer
                %s220 = sadd.s32 1, %s216
              $region46: #{forward.12} parent=39 // loop_footer_branch
                %215 = sbr.rel target = $region42
              $region47: #{forward.12} parent=39 // loop_exit
                _
            $region40: #{forward.12} parent=35 // pred_fallthru
              _
            // Predicated region
            $region48: #{forward.12} parent=35 // pred_check
              _
            $region49: #{forward.12} parent=35 // pred_check_branch
              %352 = sbr.rel target = $region51
            $region50: #{forward.12} parent=35 // pred_region
              _
            $region51: #{forward.12} parent=35 // pred_fallthru
              _
          $region36: #{forward.12} parent=31 // pred_fallthru
            _
          %353 = vnop
        $region32: #{forward.12} parent=27 // pred_fallthru
          _
      $region28: #{forward.12} parent=5 // pred_fallthru
        _
      %p354 = scmp.le.s32.totalorder 1, %s10
      %p355 = scmp.lt.s32.totalorder %s10, 4
      %p356 = pnand %p354, %p355
      %p357 = pneg %p356
      // Predicated region
      $region52: #{forward.12} parent=5 // pred_check
        _
      $region53: #{forward.12} parent=5 // pred_check_branch
        %359 = sbr.rel (%p356) target = $region55
      $region54: #{forward.12} parent=5 // pred_region
        %s360 = ssub.s32 %s10, 1
        %s361 = sand.u32 %s61, 1
        %s362 = sand.u32 %s61, 1
        %s363 = smul.addr %s362, 512
        %s364 = scalar_lea.vmem [#allocation2], %s363
        // Predicated region
        $region56: #{forward.12} parent=54 // pred_check
          %p365 = pneg %p74
        $region57: #{forward.12} parent=54 // pred_check_branch
          %367 = sbr.rel (%p365) target = $region59
        $region58: #{forward.12} parent=54 // pred_region
          _
        $region59: #{forward.12} parent=54 // pred_fallthru
          _
        %s368 = smul.u32 2, %s19
        %p369 = scmp.lt.s32.totalorder %s368, 1
        %s370 = scalar_select %p369, %s368, 1
        %s371 = smul.addr %s370, 2
        %s372 = smul.addr %s371, 4
        %s373 = scalar_lea.vmem %s0, %s372
        %p374 = pneg %p48
        %p375 = pneg %p45
        %s376 = sand.u32 %s61, 1
        %s377 = sand.u32 %s61, 1
        %s378 = smul.addr %s377, 512
        %s379 = scalar_lea.vmem [#allocation2], %s378
        %p380 = pneg %p74
        %p381 = pneg %p71
        %s382 = smul.u32 2, %s19
        %p383 = scmp.lt.s32.totalorder %s382, 1
        %s384 = scalar_select %p383, %s382, 1
        %s385 = smul.addr %s384, 8
        %s386 = scalar_lea.vmem %s2, %s385
        %p387 = pneg %p100
        %p388 = pneg %p97
        %s389 = smul.u32 2, %s19
        %p390 = scmp.lt.s32.totalorder %s389, 1
        %s391 = scalar_select %p390, %s389, 1
        %s392 = smul.addr %s391, 8
        %s393 = scalar_lea.vmem %s3, %s392
        %p394 = pneg %p126
        %p395 = pneg %p123
        %p396 = pneg %p154
        %p397 = pneg %p151
        %s398 = sand.u32 %s141, 1
        %s399 = sand.u32 %s141, 1
        %s400 = smul.addr %s399, 32
        %s401 = scalar_lea.vmem [#allocation3], %s400
        %s402 = smul.u32 2, %s19
        %p403 = scmp.lt.s32.totalorder %s402, 1
        %s404 = scalar_select %p403, %s402, 1
        %s405 = smul.addr %s404, 2
        %s406 = smul.addr %s405, 4
        %s407 = scalar_lea.vmem %s0, %s406
        %s408 = smul.u32 2, %s19
        %s409 = smul.u32 4, %s20
        %s410 = smul.u32 2, %s19
        %p411 = scmp.lt.s32.totalorder %s410, 1
        %s412 = scalar_select %p411, %s410, 1
        %s413 = smul.addr %s412, 8
        %s414 = scalar_lea.vmem %s2, %s413
        %s415 = smul.u32 2, %s19
        %s416 = smul.u32 2, %s19
        %p417 = scmp.lt.s32.totalorder %s416, 1
        %s418 = scalar_select %p417, %s416, 1
        %s419 = smul.addr %s418, 8
        %s420 = scalar_lea.vmem %s3, %s419
        %s421 = smul.u32 2, %s19
        %s422 = smul.u32 2, %s19
        %s423 = smul.u32 4, %s20
        %v424 = vld [vmem:[%s407] sm:$0xff]
        %v425 = vld [vmem:[%s407 + $0x8] sm:$0xff]
        %v426 = vld [vmem:[%s364] sm:$0xff]
        %v427 = vld [vmem:[%s364 + $0x8] sm:$0xff]
        %v428 = vld [vmem:[%s364 + $0x10] sm:$0xff]
        %v429 = vld [vmem:[%s364 + $0x18] sm:$0xff]
        %v430 = vld [vmem:[%s364 + $0x20] sm:$0xff]
        %v431 = vld [vmem:[%s364 + $0x28] sm:$0xff]
        %v432 = vld [vmem:[%s364 + $0x30] sm:$0xff]
        %v433 = vld [vmem:[%s364 + $0x38] sm:$0xff]
        %v434 = vld [vmem:[%s364 + $0x40] sm:$0xff]
        %v435 = vld [vmem:[%s364 + $0x48] sm:$0xff]
        %v436 = vld [vmem:[%s364 + $0x50] sm:$0xff]
        %v437 = vld [vmem:[%s364 + $0x58] sm:$0xff]
        %v438 = vld [vmem:[%s364 + $0x60] sm:$0xff]
        %v439 = vld [vmem:[%s364 + $0x68] sm:$0xff]
        %v440 = vld [vmem:[%s364 + $0x70] sm:$0xff]
        %v441 = vld [vmem:[%s364 + $0x78] sm:$0xff]
        %v442 = vld [vmem:[%s364 + $0x80] sm:$0xff]
        %v443 = vld [vmem:[%s364 + $0x88] sm:$0xff]
        %v444 = vld [vmem:[%s364 + $0x90] sm:$0xff]
        %v445 = vld [vmem:[%s364 + $0x98] sm:$0xff]
        %v446 = vld [vmem:[%s364 + $0xa0] sm:$0xff]
        %v447 = vld [vmem:[%s364 + $0xa8] sm:$0xff]
        %v448 = vld [vmem:[%s364 + $0xb0] sm:$0xff]
        %v449 = vld [vmem:[%s364 + $0xb8] sm:$0xff]
        %v450 = vld [vmem:[%s364 + $0xc0] sm:$0xff]
        %v451 = vld [vmem:[%s364 + $0xc8] sm:$0xff]
        %v452 = vld [vmem:[%s364 + $0xd0] sm:$0xff]
        %v453 = vld [vmem:[%s364 + $0xd8] sm:$0xff]
        %v454 = vld [vmem:[%s364 + $0xe0] sm:$0xff]
        %v455 = vld [vmem:[%s364 + $0xe8] sm:$0xff]
        %v456 = vld [vmem:[%s364 + $0xf0] sm:$0xff]
        %v457 = vld [vmem:[%s364 + $0xf8] sm:$0xff]
        %v458 = vld [vmem:[%s364 + $0x100] sm:$0xff]
        %v459 = vld [vmem:[%s364 + $0x108] sm:$0xff]
        %v460 = vld [vmem:[%s364 + $0x110] sm:$0xff]
        %v461 = vld [vmem:[%s364 + $0x118] sm:$0xff]
        %v462 = vld [vmem:[%s364 + $0x120] sm:$0xff]
        %v463 = vld [vmem:[%s364 + $0x128] sm:$0xff]
        %v464 = vld [vmem:[%s364 + $0x130] sm:$0xff]
        %v465 = vld [vmem:[%s364 + $0x138] sm:$0xff]
        %v466 = vld [vmem:[%s364 + $0x140] sm:$0xff]
        %v467 = vld [vmem:[%s364 + $0x148] sm:$0xff]
        %v468 = vld [vmem:[%s364 + $0x150] sm:$0xff]
        %v469 = vld [vmem:[%s364 + $0x158] sm:$0xff]
        %v470 = vld [vmem:[%s364 + $0x160] sm:$0xff]
        %v471 = vld [vmem:[%s364 + $0x168] sm:$0xff]
        %v472 = vld [vmem:[%s364 + $0x170] sm:$0xff]
        %v473 = vld [vmem:[%s364 + $0x178] sm:$0xff]
        %v474 = vld [vmem:[%s364 + $0x180] sm:$0xff]
        %v475 = vld [vmem:[%s364 + $0x188] sm:$0xff]
        %v476 = vld [vmem:[%s364 + $0x190] sm:$0xff]
        %v477 = vld [vmem:[%s364 + $0x198] sm:$0xff]
        %v478 = vld [vmem:[%s364 + $0x1a0] sm:$0xff]
        %v479 = vld [vmem:[%s364 + $0x1a8] sm:$0xff]
        %v480 = vld [vmem:[%s364 + $0x1b0] sm:$0xff]
        %v481 = vld [vmem:[%s364 + $0x1b8] sm:$0xff]
        %v482 = vld [vmem:[%s364 + $0x1c0] sm:$0xff]
        %v483 = vld [vmem:[%s364 + $0x1c8] sm:$0xff]
        %v484 = vld [vmem:[%s364 + $0x1d0] sm:$0xff]
        %v485 = vld [vmem:[%s364 + $0x1d8] sm:$0xff]
        %v486 = vld [vmem:[%s364 + $0x1e0] sm:$0xff]
        %v487 = vld [vmem:[%s364 + $0x1e8] sm:$0xff]
        %v488 = vld [vmem:[%s364 + $0x1f0] sm:$0xff]
        %v489 = vld [vmem:[%s364 + $0x1f8] sm:$0xff]
        %v492 = vunpack.c.l.b16 %v424
        %v493 = vunpack.c.h.b16 %v424
        %v494 = vunpack.c.l.b16 %v425
        %v495 = vunpack.c.h.b16 %v425
        %v496 = vpack.c.b16 %v494, %v492
        %v497 = vpack.c.b16 %v495, %v493
        %v564 = vunpack.c.l.b16 %v426
        %v565 = vunpack.c.h.b16 %v426
        %v566 = vunpack.c.l.b16 %v427
        %v567 = vunpack.c.h.b16 %v427
        %v568 = vunpack.c.l.b16 %v428
        %v569 = vunpack.c.h.b16 %v428
        %v570 = vunpack.c.l.b16 %v429
        %v571 = vunpack.c.h.b16 %v429
        %v572 = vunpack.c.l.b16 %v430
        %v573 = vunpack.c.h.b16 %v430
        %v574 = vunpack.c.l.b16 %v431
        %v575 = vunpack.c.h.b16 %v431
        %v576 = vunpack.c.l.b16 %v432
        %v577 = vunpack.c.h.b16 %v432
        %v578 = vunpack.c.l.b16 %v433
        %v579 = vunpack.c.h.b16 %v433
        %v580 = vunpack.c.l.b16 %v434
        %v581 = vunpack.c.h.b16 %v434
        %v582 = vunpack.c.l.b16 %v435
        %v583 = vunpack.c.h.b16 %v435
        %v584 = vunpack.c.l.b16 %v436
        %v585 = vunpack.c.h.b16 %v436
        %v586 = vunpack.c.l.b16 %v437
        %v587 = vunpack.c.h.b16 %v437
        %v588 = vunpack.c.l.b16 %v438
        %v589 = vunpack.c.h.b16 %v438
        %v590 = vunpack.c.l.b16 %v439
        %v591 = vunpack.c.h.b16 %v439
        %v592 = vunpack.c.l.b16 %v440
        %v593 = vunpack.c.h.b16 %v440
        %v594 = vunpack.c.l.b16 %v441
        %v595 = vunpack.c.h.b16 %v441
        %v596 = vunpack.c.l.b16 %v442
        %v597 = vunpack.c.h.b16 %v442
        %v598 = vunpack.c.l.b16 %v443
        %v599 = vunpack.c.h.b16 %v443
        %v600 = vunpack.c.l.b16 %v444
        %v601 = vunpack.c.h.b16 %v444
        %v602 = vunpack.c.l.b16 %v445
        %v603 = vunpack.c.h.b16 %v445
        %v604 = vunpack.c.l.b16 %v446
        %v605 = vunpack.c.h.b16 %v446
        %v606 = vunpack.c.l.b16 %v447
        %v607 = vunpack.c.h.b16 %v447
        %v608 = vunpack.c.l.b16 %v448
        %v609 = vunpack.c.h.b16 %v448
        %v610 = vunpack.c.l.b16 %v449
        %v611 = vunpack.c.h.b16 %v449
        %v612 = vunpack.c.l.b16 %v450
        %v613 = vunpack.c.h.b16 %v450
        %v614 = vunpack.c.l.b16 %v451
        %v615 = vunpack.c.h.b16 %v451
        %v616 = vunpack.c.l.b16 %v452
        %v617 = vunpack.c.h.b16 %v452
        %v618 = vunpack.c.l.b16 %v453
        %v619 = vunpack.c.h.b16 %v453
        %v620 = vunpack.c.l.b16 %v454
        %v621 = vunpack.c.h.b16 %v454
        %v622 = vunpack.c.l.b16 %v455
        %v623 = vunpack.c.h.b16 %v455
        %v624 = vunpack.c.l.b16 %v456
        %v625 = vunpack.c.h.b16 %v456
        %v626 = vunpack.c.l.b16 %v457
        %v627 = vunpack.c.h.b16 %v457
        %v628 = vunpack.c.l.b16 %v458
        %v629 = vunpack.c.h.b16 %v458
        %v630 = vunpack.c.l.b16 %v459
        %v631 = vunpack.c.h.b16 %v459
        %v632 = vunpack.c.l.b16 %v460
        %v633 = vunpack.c.h.b16 %v460
        %v634 = vunpack.c.l.b16 %v461
        %v635 = vunpack.c.h.b16 %v461
        %v636 = vunpack.c.l.b16 %v462
        %v637 = vunpack.c.h.b16 %v462
        %v638 = vunpack.c.l.b16 %v463
        %v639 = vunpack.c.h.b16 %v463
        %v640 = vunpack.c.l.b16 %v464
        %v641 = vunpack.c.h.b16 %v464
        %v642 = vunpack.c.l.b16 %v465
        %v643 = vunpack.c.h.b16 %v465
        %v644 = vunpack.c.l.b16 %v466
        %v645 = vunpack.c.h.b16 %v466
        %v646 = vunpack.c.l.b16 %v467
        %v647 = vunpack.c.h.b16 %v467
        %v648 = vunpack.c.l.b16 %v468
        %v649 = vunpack.c.h.b16 %v468
        %v650 = vunpack.c.l.b16 %v469
        %v651 = vunpack.c.h.b16 %v469
        %v652 = vunpack.c.l.b16 %v470
        %v653 = vunpack.c.h.b16 %v470
        %v654 = vunpack.c.l.b16 %v471
        %v655 = vunpack.c.h.b16 %v471
        %v656 = vunpack.c.l.b16 %v472
        %v657 = vunpack.c.h.b16 %v472
        %v658 = vunpack.c.l.b16 %v473
        %v659 = vunpack.c.h.b16 %v473
        %v660 = vunpack.c.l.b16 %v474
        %v661 = vunpack.c.h.b16 %v474
        %v662 = vunpack.c.l.b16 %v475
        %v663 = vunpack.c.h.b16 %v475
        %v664 = vunpack.c.l.b16 %v476
        %v665 = vunpack.c.h.b16 %v476
        %v666 = vunpack.c.l.b16 %v477
        %v667 = vunpack.c.h.b16 %v477
        %v668 = vunpack.c.l.b16 %v478
        %v669 = vunpack.c.h.b16 %v478
        %v670 = vunpack.c.l.b16 %v479
        %v671 = vunpack.c.h.b16 %v479
        %v672 = vunpack.c.l.b16 %v480
        %v673 = vunpack.c.h.b16 %v480
        %v674 = vunpack.c.l.b16 %v481
        %v675 = vunpack.c.h.b16 %v481
        %v676 = vunpack.c.l.b16 %v482
        %v677 = vunpack.c.h.b16 %v482
        %v678 = vunpack.c.l.b16 %v483
        %v679 = vunpack.c.h.b16 %v483
        %v680 = vunpack.c.l.b16 %v484
        %v681 = vunpack.c.h.b16 %v484
        %v682 = vunpack.c.l.b16 %v485
        %v683 = vunpack.c.h.b16 %v485
        %v684 = vunpack.c.l.b16 %v486
        %v685 = vunpack.c.h.b16 %v486
        %v686 = vunpack.c.l.b16 %v487
        %v687 = vunpack.c.h.b16 %v487
        %v688 = vunpack.c.l.b16 %v488
        %v689 = vunpack.c.h.b16 %v488
        %v690 = vunpack.c.l.b16 %v489
        %v691 = vunpack.c.h.b16 %v489
        %v692 = vpack.c.b16 %v568, %v564
        %v693 = vpack.c.b16 %v569, %v565
        %v694 = vpack.c.b16 %v570, %v566
        %v695 = vpack.c.b16 %v571, %v567
        %v696 = vpack.c.b16 %v576, %v572
        %v697 = vpack.c.b16 %v577, %v573
        %v698 = vpack.c.b16 %v578, %v574
        %v699 = vpack.c.b16 %v579, %v575
        %v700 = vpack.c.b16 %v584, %v580
        %v701 = vpack.c.b16 %v585, %v581
        %v702 = vpack.c.b16 %v586, %v582
        %v703 = vpack.c.b16 %v587, %v583
        %v704 = vpack.c.b16 %v592, %v588
        %v705 = vpack.c.b16 %v593, %v589
        %v706 = vpack.c.b16 %v594, %v590
        %v707 = vpack.c.b16 %v595, %v591
        %v708 = vpack.c.b16 %v600, %v596
        %v709 = vpack.c.b16 %v601, %v597
        %v710 = vpack.c.b16 %v602, %v598
        %v711 = vpack.c.b16 %v603, %v599
        %v712 = vpack.c.b16 %v608, %v604
        %v713 = vpack.c.b16 %v609, %v605
        %v714 = vpack.c.b16 %v610, %v606
        %v715 = vpack.c.b16 %v611, %v607
        %v716 = vpack.c.b16 %v616, %v612
        %v717 = vpack.c.b16 %v617, %v613
        %v718 = vpack.c.b16 %v618, %v614
        %v719 = vpack.c.b16 %v619, %v615
        %v720 = vpack.c.b16 %v624, %v620
        %v721 = vpack.c.b16 %v625, %v621
        %v722 = vpack.c.b16 %v626, %v622
        %v723 = vpack.c.b16 %v627, %v623
        %v724 = vpack.c.b16 %v632, %v628
        %v725 = vpack.c.b16 %v633, %v629
        %v726 = vpack.c.b16 %v634, %v630
        %v727 = vpack.c.b16 %v635, %v631
        %v728 = vpack.c.b16 %v640, %v636
        %v729 = vpack.c.b16 %v641, %v637
        %v730 = vpack.c.b16 %v642, %v638
        %v731 = vpack.c.b16 %v643, %v639
        %v732 = vpack.c.b16 %v648, %v644
        %v733 = vpack.c.b16 %v649, %v645
        %v734 = vpack.c.b16 %v650, %v646
        %v735 = vpack.c.b16 %v651, %v647
        %v736 = vpack.c.b16 %v656, %v652
        %v737 = vpack.c.b16 %v657, %v653
        %v738 = vpack.c.b16 %v658, %v654
        %v739 = vpack.c.b16 %v659, %v655
        %v740 = vpack.c.b16 %v664, %v660
        %v741 = vpack.c.b16 %v665, %v661
        %v742 = vpack.c.b16 %v666, %v662
        %v743 = vpack.c.b16 %v667, %v663
        %v744 = vpack.c.b16 %v672, %v668
        %v745 = vpack.c.b16 %v673, %v669
        %v746 = vpack.c.b16 %v674, %v670
        %v747 = vpack.c.b16 %v675, %v671
        %v748 = vpack.c.b16 %v680, %v676
        %v749 = vpack.c.b16 %v681, %v677
        %v750 = vpack.c.b16 %v682, %v678
        %v751 = vpack.c.b16 %v683, %v679
        %v752 = vpack.c.b16 %v688, %v684
        %v753 = vpack.c.b16 %v689, %v685
        %v754 = vpack.c.b16 %v690, %v686
        %v755 = vpack.c.b16 %v691, %v687
        %820 = vmatpush.bf16.msra.mxu0 %v720
        %821 = vmatpush.bf16.msra.mxu0 %v716
        %822 = vmatpush.bf16.msra.mxu0 %v712
        %823 = vmatpush.bf16.msra.mxu0 %v708
        %824 = vmatpush.bf16.msra.mxu0 %v704
        %825 = vmatpush.bf16.msra.mxu0 %v700
        %826 = vmatpush.bf16.msra.mxu0 %v696
        %827 = vmatpush.bf16.msra.mxu0 %v692
        %828 = vmatmul.bf16.gmra.mxu0 %v496
        %v829 = vpop.f32.mrf.mxu0
        %v830 = vadd.f32 0.0, %v829
        %v831 = vpop.f32.mrf.mxu0
        %v832 = vadd.f32 0.0, %v831
        %833 = vdwg.mxu0
        %834 = vmatpush.bf16.msra.mxu0 %v752
        %835 = vmatpush.bf16.msra.mxu0 %v748
        %836 = vmatpush.bf16.msra.mxu0 %v744
        %837 = vmatpush.bf16.msra.mxu0 %v740
        %838 = vmatpush.bf16.msra.mxu0 %v736
        %839 = vmatpush.bf16.msra.mxu0 %v732
        %840 = vmatpush.bf16.msra.mxu0 %v728
        %841 = vmatpush.bf16.msra.mxu0 %v724
        %842 = vmatmul.bf16.gmra.mxu0 %v497
        %v843 = vpop.f32.mrf.mxu0
        %v844 = vadd.f32 %v830, %v843
        %v845 = vpop.f32.mrf.mxu0
        %v846 = vadd.f32 %v832, %v845
        %847 = vdwg.mxu0
        %848 = vmatpush.bf16.msra.mxu0 %v721
        %849 = vmatpush.bf16.msra.mxu0 %v717
        %850 = vmatpush.bf16.msra.mxu0 %v713
        %851 = vmatpush.bf16.msra.mxu0 %v709
        %852 = vmatpush.bf16.msra.mxu0 %v705
        %853 = vmatpush.bf16.msra.mxu0 %v701
        %854 = vmatpush.bf16.msra.mxu0 %v697
        %855 = vmatpush.bf16.msra.mxu0 %v693
        %856 = vmatmul.bf16.gmra.mxu0 %v496
        %v857 = vpop.f32.mrf.mxu0
        %v858 = vadd.f32 0.0, %v857
        %v859 = vpop.f32.mrf.mxu0
        %v860 = vadd.f32 0.0, %v859
        %861 = vdwg.mxu0
        %862 = vmatpush.bf16.msra.mxu0 %v753
        %863 = vmatpush.bf16.msra.mxu0 %v749
        %864 = vmatpush.bf16.msra.mxu0 %v745
        %865 = vmatpush.bf16.msra.mxu0 %v741
        %866 = vmatpush.bf16.msra.mxu0 %v737
        %867 = vmatpush.bf16.msra.mxu0 %v733
        %868 = vmatpush.bf16.msra.mxu0 %v729
        %869 = vmatpush.bf16.msra.mxu0 %v725
        %870 = vmatmul.bf16.gmra.mxu0 %v497
        %v871 = vpop.f32.mrf.mxu0
        %v872 = vadd.f32 %v858, %v871
        %v873 = vpop.f32.mrf.mxu0
        %v874 = vadd.f32 %v860, %v873
        %875 = vdwg.mxu0
        %876 = vmatpush.bf16.msra.mxu0 %v722
        %877 = vmatpush.bf16.msra.mxu0 %v718
        %878 = vmatpush.bf16.msra.mxu0 %v714
        %879 = vmatpush.bf16.msra.mxu0 %v710
        %880 = vmatpush.bf16.msra.mxu0 %v706
        %881 = vmatpush.bf16.msra.mxu0 %v702
        %882 = vmatpush.bf16.msra.mxu0 %v698
        %883 = vmatpush.bf16.msra.mxu0 %v694
        %884 = vmatmul.bf16.gmra.mxu0 %v496
        %v885 = vpop.f32.mrf.mxu0
        %v886 = vadd.f32 0.0, %v885
        %v887 = vpop.f32.mrf.mxu0
        %v888 = vadd.f32 0.0, %v887
        %889 = vdwg.mxu0
        %890 = vmatpush.bf16.msra.mxu0 %v754
        %891 = vmatpush.bf16.msra.mxu0 %v750
        %892 = vmatpush.bf16.msra.mxu0 %v746
        %893 = vmatpush.bf16.msra.mxu0 %v742
        %894 = vmatpush.bf16.msra.mxu0 %v738
        %895 = vmatpush.bf16.msra.mxu0 %v734
        %896 = vmatpush.bf16.msra.mxu0 %v730
        %897 = vmatpush.bf16.msra.mxu0 %v726
        %898 = vmatmul.bf16.gmra.mxu0 %v497
        %v899 = vpop.f32.mrf.mxu0
        %v900 = vadd.f32 %v886, %v899
        %v901 = vpop.f32.mrf.mxu0
        %v902 = vadd.f32 %v888, %v901
        %903 = vdwg.mxu0
        %904 = vmatpush.bf16.msra.mxu0 %v723
        %905 = vmatpush.bf16.msra.mxu0 %v719
        %906 = vmatpush.bf16.msra.mxu0 %v715
        %907 = vmatpush.bf16.msra.mxu0 %v711
        %908 = vmatpush.bf16.msra.mxu0 %v707
        %909 = vmatpush.bf16.msra.mxu0 %v703
        %910 = vmatpush.bf16.msra.mxu0 %v699
        %911 = vmatpush.bf16.msra.mxu0 %v695
        %912 = vmatmul.bf16.gmra.mxu0 %v496
        %v913 = vpop.f32.mrf.mxu0
        %v914 = vadd.f32 0.0, %v913
        %v915 = vpop.f32.mrf.mxu0
        %v916 = vadd.f32 0.0, %v915
        %917 = vdwg.mxu0
        %918 = vmatpush.bf16.msra.mxu0 %v755
        %919 = vmatpush.bf16.msra.mxu0 %v751
        %920 = vmatpush.bf16.msra.mxu0 %v747
        %921 = vmatpush.bf16.msra.mxu0 %v743
        %922 = vmatpush.bf16.msra.mxu0 %v739
        %923 = vmatpush.bf16.msra.mxu0 %v735
        %924 = vmatpush.bf16.msra.mxu0 %v731
        %925 = vmatpush.bf16.msra.mxu0 %v727
        %926 = vmatmul.bf16.gmra.mxu0 %v497
        %v927 = vpop.f32.mrf.mxu0
        %v928 = vadd.f32 %v914, %v927
        %v929 = vpop.f32.mrf.mxu0
        %v930 = vadd.f32 %v916, %v929
        %931 = vdwg.mxu0
        %v932 = vld [vmem:[%s414] sm:$0xff]
        %v933 = vld [vmem:[%s414 + $0x8] sm:$0xff]
        %935 = vset.pattern.permute.xlu0 0
        %936 = vperm.xlu0 %935, %v932
        %v937 = vpop.permute.xlu0 %936
        %940 = vset.pattern.permute.xlu0 0
        %941 = vperm.xlu0 %940, %v933
        %v942 = vpop.permute.xlu0 %941
        %v944 = vmul.f32 %v844, %v937
        %v945 = vmul.f32 %v872, %v937
        %v946 = vmul.f32 %v900, %v937
        %v947 = vmul.f32 %v928, %v937
        %v948 = vmul.f32 %v846, %v942
        %v949 = vmul.f32 %v874, %v942
        %v950 = vmul.f32 %v902, %v942
        %v951 = vmul.f32 %v930, %v942
        %v952 = vld [vmem:[%s420] sm:$0xff]
        %v953 = vld [vmem:[%s420 + $0x8] sm:$0xff]
        %955 = vset.pattern.permute.xlu0 0
        %956 = vperm.xlu0 %955, %v952
        %v957 = vpop.permute.xlu0 %956
        %960 = vset.pattern.permute.xlu0 0
        %961 = vperm.xlu0 %960, %v953
        %v962 = vpop.permute.xlu0 %961
        %v964 = vadd.f32 %v944, %v957
        %v965 = vadd.f32 %v945, %v957
        %v966 = vadd.f32 %v946, %v957
        %v967 = vadd.f32 %v947, %v957
        %v968 = vadd.f32 %v948, %v962
        %v969 = vadd.f32 %v949, %v962
        %v970 = vadd.f32 %v950, %v962
        %v971 = vadd.f32 %v951, %v962
        %v972 = vmax.f32 %v964, 0.0
        %v973 = vmax.f32 %v965, 0.0
        %v974 = vmax.f32 %v966, 0.0
        %v975 = vmax.f32 %v967, 0.0
        %v976 = vmax.f32 %v968, 0.0
        %v977 = vmax.f32 %v969, 0.0
        %v978 = vmax.f32 %v970, 0.0
        %v979 = vmax.f32 %v971, 0.0
        %v980 = vpack.c.bf16 %v973, %v972
        %v981 = vpack.c.bf16 %v975, %v974
        %v982 = vpack.c.bf16 %v977, %v976
        %v983 = vpack.c.bf16 %v979, %v978
        %984 = vst [vmem:[%s401] sm:$0xff] %v980
        %985 = vst [vmem:[%s401 + $0x8] sm:$0xff] %v981
        %986 = vst [vmem:[%s401 + $0x10] sm:$0xff] %v982
        %987 = vst [vmem:[%s401 + $0x18] sm:$0xff] %v983
        %s988 = sand.u32 %s141, 1
        %s989 = sand.u32 %s141, 1
        %s990 = smul.addr %s989, 32
        %s991 = scalar_lea.vmem [#allocation3], %s990
        // Predicated region
        $region60: #{forward.12} parent=54 // pred_check
          %p992 = pneg %p151
        $region61: #{forward.12} parent=54 // pred_check_branch
          %994 = sbr.rel (%p992) target = $region63
        $region62: #{forward.12} parent=54 // pred_region
          %s995 = smul.u32 2, %s19
          %s996 = smul.u32 4, %s20
          %s997 = smul.addr %s995, 12
          %s998 = sadd.s32 %s996, %s997
          %s999 = smul.addr %s998, 4
          %s1000 = scalar_lea.vmem %s4, %s999
          // Predicated region
          $region64: #{forward.12} parent=62 // pred_check
            _
          $region65: #{forward.12} parent=62 // pred_check_branch
            %1002 = sbr.rel (0) target = $region67
          $region66: #{forward.12} parent=62 // pred_region
            // Predicated region
            $region68: #{forward.12} parent=66 // pred_check
              _
            $region69: #{forward.12} parent=66 // pred_check_branch
              %1004 = sbr.rel (0) target = $region71
            $region70: #{forward.12} parent=66 // pred_region
              loop: start=0, step=1, limit=1
              $region72: #{forward.12} parent=70 // loop_pre_header
                _
              $region73: #{forward.12} parent=70 // loop_header
                %s1006 = sphi 0, %s1010
                %p1007 = scmp.ge.s32.totalorder %s1006, 1
                %s1011 = sphi %s991, %s991
                %s1012 = sphi %s1000, %s1000
              $region74: #{forward.12} parent=70 // loop_header_branch
                %1009 = sbr.rel (%p1007) target = $region78
              $region75: #{forward.12} parent=70 // loop_body
                %v1013 = vld [vmem:[%s1011] sm:$0xff]
                %1014 = vst [vmem:[%s1012] sm:$0xff] %v1013
                %v1015 = vld [vmem:[%s1011 + $0x8] sm:$0xff]
                %1016 = vst [vmem:[%s1012 + $0x8] sm:$0xff] %v1015
                %v1017 = vld [vmem:[%s1011 + $0x10] sm:$0xff]
                %1018 = vst [vmem:[%s1012 + $0x30] sm:$0xff] %v1017
                %v1019 = vld [vmem:[%s1011 + $0x18] sm:$0xff]
                %1020 = vst [vmem:[%s1012 + $0x38] sm:$0xff] %v1019
              $region76: #{forward.12} parent=70 // loop_footer
                %s1010 = sadd.s32 1, %s1006
              $region77: #{forward.12} parent=70 // loop_footer_branch
                %1005 = sbr.rel target = $region73
              $region78: #{forward.12} parent=70 // loop_exit
                _
            $region71: #{forward.12} parent=66 // pred_fallthru
              _
            // Predicated region
            $region79: #{forward.12} parent=66 // pred_check
              _
            $region80: #{forward.12} parent=66 // pred_check_branch
              %1022 = sbr.rel target = $region82
            $region81: #{forward.12} parent=66 // pred_region
              _
            $region82: #{forward.12} parent=66 // pred_fallthru
              _
          $region67: #{forward.12} parent=62 // pred_fallthru
            _
          %1023 = vnop
        $region63: #{forward.12} parent=54 // pred_fallthru
          _
      $region55: #{forward.12} parent=5 // pred_fallthru
        _
      %p1024 = scmp.le.s32.totalorder 2, %s10
      // Predicated region
      $region83: #{forward.12} parent=5 // pred_check
        %p1025 = pneg %p1024
      $region84: #{forward.12} parent=5 // pred_check_branch
        %1027 = sbr.rel (%p1025) target = $region86
      $region85: #{forward.12} parent=5 // pred_region
        %s1028 = ssub.s32 %s10, 2
        // Predicated region
        $region87: #{forward.12} parent=85 // pred_check
          %p1029 = pneg %p157
        $region88: #{forward.12} parent=85 // pred_check_branch
          %1031 = sbr.rel (%p1029) target = $region90
        $region89: #{forward.12} parent=85 // pred_region
          %s1032 = sand.u32 %s142, 1
          %s1033 = sand.u32 %s142, 1
          %s1034 = smul.addr %s1033, 32
          %s1035 = scalar_lea.vmem [#allocation3], %s1034
        $region90: #{forward.12} parent=85 // pred_fallthru
          _
      $region86: #{forward.12} parent=5 // pred_fallthru
        _
    $region6: #{forward.12} parent=1 // loop_footer
      %s14 = sadd.s32 1, %s10
    $region7: #{forward.12} parent=1 // loop_footer_branch
      %9 = sbr.rel target = $region3
    $region8: #{forward.12} parent=1 // loop_exit
      _

// kernel: forward.13
$region0: #{forward.13}
  #allocation0 [shape = 'u32[]', space=smem, size = 0x4, offset = 0x4, fixed_abs, tag = 'smem constant byte address 0x4 - core index']
  #allocation1 [shape = 'u32[72,128]{1,0:T(1,128)}', space=vmem, size = 0x9000, scoped, tag = 'internal scratch']
  %s0 = inlined_call_operand.vmem [shape: bf16[32,512], index: 0, kind: input, shape index: {}]
  %s1 = inlined_call_operand.vmem [shape: bf16[512,1024], index: 1, kind: input, shape index: {}]
  %s2 = inlined_call_operand.vmem [shape: f32[32,1], index: 2, kind: input, shape index: {}]
  %s3 = inlined_call_operand.vmem [shape: f32[32,1], index: 3, kind: input, shape index: {}]
  %s4 = inlined_call_operand.vmem [shape: bf16[32,1024], index: 4, kind: output, shape index: {}]
  %s5 = sld [smem:[#allocation0]]
  $region91: #{forward.13} parent=0
    _
  %s7 = ssub.s32 1, %s5
  %s8 = scalar_select 0, %s7, %s5
  $region1: #{forward.13} parent=0
    #allocation2 [shape = 'u8[1048576]{0}', space=vmem, size = 0x100000, scoped, tag = 'input window, operand 1']
    #allocation3 [shape = 'u8[65536]{0}', space=vmem, size = 0x10000, scoped, tag = 'output window, operand 0']
    loop: start=0, step=1, limit=4
    $region2: #{forward.13} parent=1 // loop_pre_header
      _
    $region3: #{forward.13} parent=1 // loop_header
      %s10 = sphi 0, %s14
      %p11 = scmp.ge.s32.totalorder %s10, 4
      %s17 = sphi 0, %s29
      %s18 = sphi 0, %s25
      %s19 = sphi 0, %s17
      %s20 = sphi 0, %s18
      %s21 = sphi 0, %s19
      %s22 = sphi 0, %s20
      %s32 = sphi 0, %s34
      %s35 = sphi 0, %s32
      %s36 = sphi 0, %s35
      %s52 = sphi 0, %s36
      %s58 = sphi 0, %s60
      %s61 = sphi 0, %s58
      %s62 = sphi 0, %s61
      %s78 = sphi 0, %s62
      %s84 = sphi 0, %s86
      %s87 = sphi 0, %s84
      %s88 = sphi 0, %s87
      %s104 = sphi 0, %s88
      %s110 = sphi 0, %s112
      %s113 = sphi 0, %s110
      %s114 = sphi 0, %s113
      %s130 = sphi 0, %s114
      %s138 = sphi 0, %s140
      %s141 = sphi 0, %s138
      %s142 = sphi 0, %s141
      %s158 = sphi 0, %s142
    $region4: #{forward.13} parent=1 // loop_header_branch
      %13 = sbr.rel (%p11) target = $region8
    $region5: #{forward.13} parent=1 // loop_body
      %s15 = ssub.s32 %s10, 1
      %s16 = ssub.s32 %s10, 2
      %s23 = sadd.s32 1, %s18
      %p24 = scmp.ge.s32.totalorder %s23, 2
      %s25 = scalar_select %p24, 0, %s23
      %s26 = sadd.s32 1, %s17
      %s27 = scalar_select %p24, %s26, %s17
      %p28 = scmp.ge.s32.totalorder %s27, 1
      %s29 = scalar_select %p28, 0, %s27
      %s30 = ssub.s32 %s17, %s29
      %p31 = scmp.eq.s32.totalorder %s30, 0
      %s33 = sadd.s32 %s32, 1
      %s34 = scalar_select %p31, %s32, %s33
      %p37 = pneg %p31
      %p38 = scmp.eq.s32.totalorder %s10, 1
      %p39 = por %p37, %p38
      %p40 = scmp.ne.s32.totalorder %s32, %s35
      %p41 = scmp.eq.s32.totalorder %s10, 0
      %p42 = por %p40, %p41
      %p43 = scmp.ne.s32.totalorder %s32, %s35
      %p44 = scmp.eq.s32.totalorder %s15, 1
      %p45 = por %p43, %p44
      %p46 = scmp.ne.s32.totalorder %s35, %s36
      %p47 = scmp.eq.s32.totalorder %s15, 0
      %p48 = por %p46, %p47
      %p49 = scmp.ne.s32.totalorder %s35, %s36
      %p50 = scmp.eq.s32.totalorder %s16, 1
      %p51 = por %p49, %p50
      %p53 = scmp.ne.s32.totalorder %s36, %s52
      %p54 = scmp.eq.s32.totalorder %s16, 0
      %p55 = por %p53, %p54
      %s56 = ssub.s32 %s18, %s25
      %p57 = scmp.eq.s32.totalorder %s56, 0
      %s59 = sadd.s32 %s58, 1
      %s60 = scalar_select %p57, %s58, %s59
      %p63 = pneg %p57
      %p64 = scmp.eq.s32.totalorder %s10, 1
      %p65 = por %p63, %p64
      %p66 = scmp.ne.s32.totalorder %s58, %s61
      %p67 = scmp.eq.s32.totalorder %s10, 0
      %p68 = por %p66, %p67
      %p69 = scmp.ne.s32.totalorder %s58, %s61
      %p70 = scmp.eq.s32.totalorder %s15, 1
      %p71 = por %p69, %p70
      %p72 = scmp.ne.s32.totalorder %s61, %s62
      %p73 = scmp.eq.s32.totalorder %s15, 0
      %p74 = por %p72, %p73
      %p75 = scmp.ne.s32.totalorder %s61, %s62
      %p76 = scmp.eq.s32.totalorder %s16, 1
      %p77 = por %p75, %p76
      %p79 = scmp.ne.s32.totalorder %s62, %s78
      %p80 = scmp.eq.s32.totalorder %s16, 0
      %p81 = por %p79, %p80
      %s82 = ssub.s32 %s17, %s29
      %p83 = scmp.eq.s32.totalorder %s82, 0
      %s85 = sadd.s32 %s84, 1
      %s86 = scalar_select %p83, %s84, %s85
      %p89 = pneg %p83
      %p90 = scmp.eq.s32.totalorder %s10, 1
      %p91 = por %p89, %p90
      %p92 = scmp.ne.s32.totalorder %s84, %s87
      %p93 = scmp.eq.s32.totalorder %s10, 0
      %p94 = por %p92, %p93
      %p95 = scmp.ne.s32.totalorder %s84, %s87
      %p96 = scmp.eq.s32.totalorder %s15, 1
      %p97 = por %p95, %p96
      %p98 = scmp.ne.s32.totalorder %s87, %s88
      %p99 = scmp.eq.s32.totalorder %s15, 0
      %p100 = por %p98, %p99
      %p101 = scmp.ne.s32.totalorder %s87, %s88
      %p102 = scmp.eq.s32.totalorder %s16, 1
      %p103 = por %p101, %p102
      %p105 = scmp.ne.s32.totalorder %s88, %s104
      %p106 = scmp.eq.s32.totalorder %s16, 0
      %p107 = por %p105, %p106
      %s108 = ssub.s32 %s17, %s29
      %p109 = scmp.eq.s32.totalorder %s108, 0
      %s111 = sadd.s32 %s110, 1
      %s112 = scalar_select %p109, %s110, %s111
      %p115 = pneg %p109
      %p116 = scmp.eq.s32.totalorder %s10, 1
      %p117 = por %p115, %p116
      %p118 = scmp.ne.s32.totalorder %s110, %s113
      %p119 = scmp.eq.s32.totalorder %s10, 0
      %p120 = por %p118, %p119
      %p121 = scmp.ne.s32.totalorder %s110, %s113
      %p122 = scmp.eq.s32.totalorder %s15, 1
      %p123 = por %p121, %p122
      %p124 = scmp.ne.s32.totalorder %s113, %s114
      %p125 = scmp.eq.s32.totalorder %s15, 0
      %p126 = por %p124, %p125
      %p127 = scmp.ne.s32.totalorder %s113, %s114
      %p128 = scmp.eq.s32.totalorder %s16, 1
      %p129 = por %p127, %p128
      %p131 = scmp.ne.s32.totalorder %s114, %s130
      %p132 = scmp.eq.s32.totalorder %s16, 0
      %p133 = por %p131, %p132
      %s134 = ssub.s32 %s17, %s29
      %s135 = ssub.s32 %s18, %s25
      %s136 = sor.u32 %s134, %s135
      %p137 = scmp.eq.s32.totalorder %s136, 0
      %s139 = sadd.s32 %s138, 1
      %s140 = scalar_select %p137, %s138, %s139
      %p143 = pneg %p137
      %p144 = scmp.eq.s32.totalorder %s10, 1
      %p145 = por %p143, %p144
      %p146 = scmp.ne.s32.totalorder %s138, %s141
      %p147 = scmp.eq.s32.totalorder %s10, 0
      %p148 = por %p146, %p147
      %p149 = scmp.ne.s32.totalorder %s138, %s141
      %p150 = scmp.eq.s32.totalorder %s15, 1
      %p151 = por %p149, %p150
      %p152 = scmp.ne.s32.totalorder %s141, %s142
      %p153 = scmp.eq.s32.totalorder %s15, 0
      %p154 = por %p152, %p153
      %p155 = scmp.ne.s32.totalorder %s141, %s142
      %p156 = scmp.eq.s32.totalorder %s16, 1
      %p157 = por %p155, %p156
      %p159 = scmp.ne.s32.totalorder %s142, %s158
      %p160 = scmp.eq.s32.totalorder %s16, 0
      %p161 = por %p159, %p160
      %p162 = scmp.le.s32.totalorder 1, %s10
      %p163 = scmp.lt.s32.totalorder %s10, 3
      %p164 = pnand %p162, %p163
      %p165 = pneg %p164
      // Predicated region
      $region9: #{forward.13} parent=5 // pred_check
        _
      $region10: #{forward.13} parent=5 // pred_check_branch
        %167 = sbr.rel (%p164) target = $region12
      $region11: #{forward.13} parent=5 // pred_region
        %s168 = ssub.s32 %s10, 1
        // Predicated region
        $region13: #{forward.13} parent=11 // pred_check
          %p169 = pneg %p48
        $region14: #{forward.13} parent=11 // pred_check_branch
          %171 = sbr.rel (%p169) target = $region16
        $region15: #{forward.13} parent=11 // pred_region
          %s172 = smul.u32 4, %s19
          %p173 = scmp.lt.s32.totalorder %s172, 3
          %s174 = scalar_select %p173, %s172, 3
          %s175 = smul.addr %s174, 4
          %s176 = smul.addr %s175, 4
          %s177 = scalar_lea.vmem %s0, %s176
          %s178 = smul.u32 4, %s19
        $region16: #{forward.13} parent=11 // pred_fallthru
          _
        // Predicated region
        $region17: #{forward.13} parent=11 // pred_check
          %p179 = pneg %p100
        $region18: #{forward.13} parent=11 // pred_check_branch
          %181 = sbr.rel (%p179) target = $region20
        $region19: #{forward.13} parent=11 // pred_region
          %s182 = smul.u32 4, %s19
          %p183 = scmp.lt.s32.totalorder %s182, 3
          %s184 = scalar_select %p183, %s182, 3
          %s185 = smul.addr %s184, 8
          %s186 = scalar_lea.vmem %s2, %s185
          %s187 = smul.u32 4, %s19
        $region20: #{forward.13} parent=11 // pred_fallthru
          _
        // Predicated region
        $region21: #{forward.13} parent=11 // pred_check
          %p188 = pneg %p126
        $region22: #{forward.13} parent=11 // pred_check_branch
          %190 = sbr.rel (%p188) target = $region24
        $region23: #{forward.13} parent=11 // pred_region
          %s191 = smul.u32 4, %s19
          %p192 = scmp.lt.s32.totalorder %s191, 3
          %s193 = scalar_select %p192, %s191, 3
          %s194 = smul.addr %s193, 8
          %s195 = scalar_lea.vmem %s3, %s194
          %s196 = smul.u32 4, %s19
        $region24: #{forward.13} parent=11 // pred_fallthru
          _
      $region12: #{forward.13} parent=5 // pred_fallthru
        _
      %p197 = scmp.lt.s32.totalorder %s10, 2
      // Predicated region
      $region25: #{forward.13} parent=5 // pred_check
        %p198 = pneg %p197
      $region26: #{forward.13} parent=5 // pred_check_branch
        %200 = sbr.rel (%p198) target = $region28
      $region27: #{forward.13} parent=5 // pred_region
        // Predicated region
        $region29: #{forward.13} parent=27 // pred_check
          %p201 = pneg %p68
        $region30: #{forward.13} parent=27 // pred_check_branch
          %203 = sbr.rel (%p201) target = $region32
        $region31: #{forward.13} parent=27 // pred_region
          %s204 = sand.u32 %s58, 1
          %s205 = sand.u32 %s58, 1
          %s206 = smul.addr %s205, 1024
          %s207 = scalar_lea.vmem [#allocation2], %s206
          %s208 = smul.u32 4, %s18
          %s209 = smul.addr %s208, 4
          %s210 = scalar_lea.vmem %s1, %s209
          // Predicated region
          $region33: #{forward.13} parent=31 // pred_check
            _
          $region34: #{forward.13} parent=31 // pred_check_branch
            %212 = sbr.rel (0) target = $region36
          $region35: #{forward.13} parent=31 // pred_region
            // Predicated region
            $region37: #{forward.13} parent=35 // pred_check
              _
            $region38: #{forward.13} parent=35 // pred_check_branch
              %214 = sbr.rel (0) target = $region40
            $region39: #{forward.13} parent=35 // pred_region
              loop: start=0, step=1, limit=1
              $region41: #{forward.13} parent=39 // loop_pre_header
                _
              $region42: #{forward.13} parent=39 // loop_header
                %s216 = sphi 0, %s220
                %p217 = scmp.ge.s32.totalorder %s216, 1
                %s221 = sphi %s210, %s210
                %s222 = sphi %s207, %s207
              $region43: #{forward.13} parent=39 // loop_header_branch
                %219 = sbr.rel (%p217) target = $region47
              $region44: #{forward.13} parent=39 // loop_body
                %v223 = vld [vmem:[%s221] sm:$0xff]
                %224 = vst [vmem:[%s222] sm:$0xff] %v223
                %v225 = vld [vmem:[%s221 + $0x8] sm:$0xff]
                %226 = vst [vmem:[%s222 + $0x8] sm:$0xff] %v225
                %v227 = vld [vmem:[%s221 + $0x20] sm:$0xff]
                %228 = vst [vmem:[%s222 + $0x10] sm:$0xff] %v227
                %v229 = vld [vmem:[%s221 + $0x28] sm:$0xff]
                %230 = vst [vmem:[%s222 + $0x18] sm:$0xff] %v229
                %v231 = vld [vmem:[%s221 + $0x40] sm:$0xff]
                %232 = vst [vmem:[%s222 + $0x20] sm:$0xff] %v231
                %v233 = vld [vmem:[%s221 + $0x48] sm:$0xff]
                %234 = vst [vmem:[%s222 + $0x28] sm:$0xff] %v233
                %v235 = vld [vmem:[%s221 + $0x60] sm:$0xff]
                %236 = vst [vmem:[%s222 + $0x30] sm:$0xff] %v235
                %v237 = vld [vmem:[%s221 + $0x68] sm:$0xff]
                %238 = vst [vmem:[%s222 + $0x38] sm:$0xff] %v237
                %v239 = vld [vmem:[%s221 + $0x80] sm:$0xff]
                %240 = vst [vmem:[%s222 + $0x40] sm:$0xff] %v239
                %v241 = vld [vmem:[%s221 + $0x88] sm:$0xff]
                %242 = vst [vmem:[%s222 + $0x48] sm:$0xff] %v241
                %v243 = vld [vmem:[%s221 + $0xa0] sm:$0xff]
                %244 = vst [vmem:[%s222 + $0x50] sm:$0xff] %v243
                %v245 = vld [vmem:[%s221 + $0xa8] sm:$0xff]
                %246 = vst [vmem:[%s222 + $0x58] sm:$0xff] %v245
                %v247 = vld [vmem:[%s221 + $0xc0] sm:$0xff]
                %248 = vst [vmem:[%s222 + $0x60] sm:$0xff] %v247
                %v249 = vld [vmem:[%s221 + $0xc8] sm:$0xff]
                %250 = vst [vmem:[%s222 + $0x68] sm:$0xff] %v249
                %v251 = vld [vmem:[%s221 + $0xe0] sm:$0xff]
                %252 = vst [vmem:[%s222 + $0x70] sm:$0xff] %v251
                %v253 = vld [vmem:[%s221 + $0xe8] sm:$0xff]
                %254 = vst [vmem:[%s222 + $0x78] sm:$0xff] %v253
                %v255 = vld [vmem:[%s221 + $0x100] sm:$0xff]
                %256 = vst [vmem:[%s222 + $0x80] sm:$0xff] %v255
                %v257 = vld [vmem:[%s221 + $0x108] sm:$0xff]
                %258 = vst [vmem:[%s222 + $0x88] sm:$0xff] %v257
                %v259 = vld [vmem:[%s221 + $0x120] sm:$0xff]
                %260 = vst [vmem:[%s222 + $0x90] sm:$0xff] %v259
                %v261 = vld [vmem:[%s221 + $0x128] sm:$0xff]
                %262 = vst [vmem:[%s222 + $0x98] sm:$0xff] %v261
                %v263 = vld [vmem:[%s221 + $0x140] sm:$0xff]
                %264 = vst [vmem:[%s222 + $0xa0] sm:$0xff] %v263
                %v265 = vld [vmem:[%s221 + $0x148] sm:$0xff]
                %266 = vst [vmem:[%s222 + $0xa8] sm:$0xff] %v265
                %v267 = vld [vmem:[%s221 + $0x160] sm:$0xff]
                %268 = vst [vmem:[%s222 + $0xb0] sm:$0xff] %v267
                %v269 = vld [vmem:[%s221 + $0x168] sm:$0xff]
                %270 = vst [vmem:[%s222 + $0xb8] sm:$0xff] %v269
                %v271 = vld [vmem:[%s221 + $0x180] sm:$0xff]
                %272 = vst [vmem:[%s222 + $0xc0] sm:$0xff] %v271
                %v273 = vld [vmem:[%s221 + $0x188] sm:$0xff]
                %274 = vst [vmem:[%s222 + $0xc8] sm:$0xff] %v273
                %v275 = vld [vmem:[%s221 + $0x1a0] sm:$0xff]
                %276 = vst [vmem:[%s222 + $0xd0] sm:$0xff] %v275
                %v277 = vld [vmem:[%s221 + $0x1a8] sm:$0xff]
                %278 = vst [vmem:[%s222 + $0xd8] sm:$0xff] %v277
                %v279 = vld [vmem:[%s221 + $0x1c0] sm:$0xff]
                %280 = vst [vmem:[%s222 + $0xe0] sm:$0xff] %v279
                %v281 = vld [vmem:[%s221 + $0x1c8] sm:$0xff]
                %282 = vst [vmem:[%s222 + $0xe8] sm:$0xff] %v281
                %v283 = vld [vmem:[%s221 + $0x1e0] sm:$0xff]
                %284 = vst [vmem:[%s222 + $0xf0] sm:$0xff] %v283
                %v285 = vld [vmem:[%s221 + $0x1e8] sm:$0xff]
                %286 = vst [vmem:[%s222 + $0xf8] sm:$0xff] %v285
                %v287 = vld [vmem:[%s221 + $0x200] sm:$0xff]
                %288 = vst [vmem:[%s222 + $0x100] sm:$0xff] %v287
                %v289 = vld [vmem:[%s221 + $0x208] sm:$0xff]
                %290 = vst [vmem:[%s222 + $0x108] sm:$0xff] %v289
                %v291 = vld [vmem:[%s221 + $0x220] sm:$0xff]
                %292 = vst [vmem:[%s222 + $0x110] sm:$0xff] %v291
                %v293 = vld [vmem:[%s221 + $0x228] sm:$0xff]
                %294 = vst [vmem:[%s222 + $0x118] sm:$0xff] %v293
                %v295 = vld [vmem:[%s221 + $0x240] sm:$0xff]
                %296 = vst [vmem:[%s222 + $0x120] sm:$0xff] %v295
                %v297 = vld [vmem:[%s221 + $0x248] sm:$0xff]
                %298 = vst [vmem:[%s222 + $0x128] sm:$0xff] %v297
                %v299 = vld [vmem:[%s221 + $0x260] sm:$0xff]
                %300 = vst [vmem:[%s222 + $0x130] sm:$0xff] %v299
                %v301 = vld [vmem:[%s221 + $0x268] sm:$0xff]
                %302 = vst [vmem:[%s222 + $0x138] sm:$0xff] %v301
                %v303 = vld [vmem:[%s221 + $0x280] sm:$0xff]
                %304 = vst [vmem:[%s222 + $0x140] sm:$0xff] %v303
                %v305 = vld [vmem:[%s221 + $0x288] sm:$0xff]
                %306 = vst [vmem:[%s222 + $0x148] sm:$0xff] %v305
                %v307 = vld [vmem:[%s221 + $0x2a0] sm:$0xff]
                %308 = vst [vmem:[%s222 + $0x150] sm:$0xff] %v307
                %v309 = vld [vmem:[%s221 + $0x2a8] sm:$0xff]
                %310 = vst [vmem:[%s222 + $0x158] sm:$0xff] %v309
                %v311 = vld [vmem:[%s221 + $0x2c0] sm:$0xff]
                %312 = vst [vmem:[%s222 + $0x160] sm:$0xff] %v311
                %v313 = vld [vmem:[%s221 + $0x2c8] sm:$0xff]
                %314 = vst [vmem:[%s222 + $0x168] sm:$0xff] %v313
                %v315 = vld [vmem:[%s221 + $0x2e0] sm:$0xff]
                %316 = vst [vmem:[%s222 + $0x170] sm:$0xff] %v315
                %v317 = vld [vmem:[%s221 + $0x2e8] sm:$0xff]
                %318 = vst [vmem:[%s222 + $0x178] sm:$0xff] %v317
                %v319 = vld [vmem:[%s221 + $0x300] sm:$0xff]
                %320 = vst [vmem:[%s222 + $0x180] sm:$0xff] %v319
                %v321 = vld [vmem:[%s221 + $0x308] sm:$0xff]
                %322 = vst [vmem:[%s222 + $0x188] sm:$0xff] %v321
                %v323 = vld [vmem:[%s221 + $0x320] sm:$0xff]
                %324 = vst [vmem:[%s222 + $0x190] sm:$0xff] %v323
                %v325 = vld [vmem:[%s221 + $0x328] sm:$0xff]
                %326 = vst [vmem:[%s222 + $0x198] sm:$0xff] %v325
                %v327 = vld [vmem:[%s221 + $0x340] sm:$0xff]
                %328 = vst [vmem:[%s222 + $0x1a0] sm:$0xff] %v327
                %v329 = vld [vmem:[%s221 + $0x348] sm:$0xff]
                %330 = vst [vmem:[%s222 + $0x1a8] sm:$0xff] %v329
                %v331 = vld [vmem:[%s221 + $0x360] sm:$0xff]
                %332 = vst [vmem:[%s222 + $0x1b0] sm:$0xff] %v331
                %v333 = vld [vmem:[%s221 + $0x368] sm:$0xff]
                %334 = vst [vmem:[%s222 + $0x1b8] sm:$0xff] %v333
                %v335 = vld [vmem:[%s221 + $0x380] sm:$0xff]
                %336 = vst [vmem:[%s222 + $0x1c0] sm:$0xff] %v335
                %v337 = vld [vmem:[%s221 + $0x388] sm:$0xff]
                %338 = vst [vmem:[%s222 + $0x1c8] sm:$0xff] %v337
                %v339 = vld [vmem:[%s221 + $0x3a0] sm:$0xff]
                %340 = vst [vmem:[%s222 + $0x1d0] sm:$0xff] %v339
                %v341 = vld [vmem:[%s221 + $0x3a8] sm:$0xff]
                %342 = vst [vmem:[%s222 + $0x1d8] sm:$0xff] %v341
                %v343 = vld [vmem:[%s221 + $0x3c0] sm:$0xff]
                %344 = vst [vmem:[%s222 + $0x1e0] sm:$0xff] %v343
                %v345 = vld [vmem:[%s221 + $0x3c8] sm:$0xff]
                %346 = vst [vmem:[%s222 + $0x1e8] sm:$0xff] %v345
                %v347 = vld [vmem:[%s221 + $0x3e0] sm:$0xff]
                %348 = vst [vmem:[%s222 + $0x1f0] sm:$0xff] %v347
                %v349 = vld [vmem:[%s221 + $0x3e8] sm:$0xff]
                %350 = vst [vmem:[%s222 + $0x1f8] sm:$0xff] %v349
                %v351 = vld [vmem:[%s221 + $0x400] sm:$0xff]
                %352 = vst [vmem:[%s222 + $0x200] sm:$0xff] %v351
                %v353 = vld [vmem:[%s221 + $0x408] sm:$0xff]
                %354 = vst [vmem:[%s222 + $0x208] sm:$0xff] %v353
                %v355 = vld [vmem:[%s221 + $0x420] sm:$0xff]
                %356 = vst [vmem:[%s222 + $0x210] sm:$0xff] %v355
                %v357 = vld [vmem:[%s221 + $0x428] sm:$0xff]
                %358 = vst [vmem:[%s222 + $0x218] sm:$0xff] %v357
                %v359 = vld [vmem:[%s221 + $0x440] sm:$0xff]
                %360 = vst [vmem:[%s222 + $0x220] sm:$0xff] %v359
                %v361 = vld [vmem:[%s221 + $0x448] sm:$0xff]
                %362 = vst [vmem:[%s222 + $0x228] sm:$0xff] %v361
                %v363 = vld [vmem:[%s221 + $0x460] sm:$0xff]
                %364 = vst [vmem:[%s222 + $0x230] sm:$0xff] %v363
                %v365 = vld [vmem:[%s221 + $0x468] sm:$0xff]
                %366 = vst [vmem:[%s222 + $0x238] sm:$0xff] %v365
                %v367 = vld [vmem:[%s221 + $0x480] sm:$0xff]
                %368 = vst [vmem:[%s222 + $0x240] sm:$0xff] %v367
                %v369 = vld [vmem:[%s221 + $0x488] sm:$0xff]
                %370 = vst [vmem:[%s222 + $0x248] sm:$0xff] %v369
                %v371 = vld [vmem:[%s221 + $0x4a0] sm:$0xff]
                %372 = vst [vmem:[%s222 + $0x250] sm:$0xff] %v371
                %v373 = vld [vmem:[%s221 + $0x4a8] sm:$0xff]
                %374 = vst [vmem:[%s222 + $0x258] sm:$0xff] %v373
                %v375 = vld [vmem:[%s221 + $0x4c0] sm:$0xff]
                %376 = vst [vmem:[%s222 + $0x260] sm:$0xff] %v375
                %v377 = vld [vmem:[%s221 + $0x4c8] sm:$0xff]
                %378 = vst [vmem:[%s222 + $0x268] sm:$0xff] %v377
                %v379 = vld [vmem:[%s221 + $0x4e0] sm:$0xff]
                %380 = vst [vmem:[%s222 + $0x270] sm:$0xff] %v379
                %v381 = vld [vmem:[%s221 + $0x4e8] sm:$0xff]
                %382 = vst [vmem:[%s222 + $0x278] sm:$0xff] %v381
                %v383 = vld [vmem:[%s221 + $0x500] sm:$0xff]
                %384 = vst [vmem:[%s222 + $0x280] sm:$0xff] %v383
                %v385 = vld [vmem:[%s221 + $0x508] sm:$0xff]
                %386 = vst [vmem:[%s222 + $0x288] sm:$0xff] %v385
                %v387 = vld [vmem:[%s221 + $0x520] sm:$0xff]
                %388 = vst [vmem:[%s222 + $0x290] sm:$0xff] %v387
                %v389 = vld [vmem:[%s221 + $0x528] sm:$0xff]
                %390 = vst [vmem:[%s222 + $0x298] sm:$0xff] %v389
                %v391 = vld [vmem:[%s221 + $0x540] sm:$0xff]
                %392 = vst [vmem:[%s222 + $0x2a0] sm:$0xff] %v391
                %v393 = vld [vmem:[%s221 + $0x548] sm:$0xff]
                %394 = vst [vmem:[%s222 + $0x2a8] sm:$0xff] %v393
                %v395 = vld [vmem:[%s221 + $0x560] sm:$0xff]
                %396 = vst [vmem:[%s222 + $0x2b0] sm:$0xff] %v395
                %v397 = vld [vmem:[%s221 + $0x568] sm:$0xff]
                %398 = vst [vmem:[%s222 + $0x2b8] sm:$0xff] %v397
                %v399 = vld [vmem:[%s221 + $0x580] sm:$0xff]
                %400 = vst [vmem:[%s222 + $0x2c0] sm:$0xff] %v399
                %v401 = vld [vmem:[%s221 + $0x588] sm:$0xff]
                %402 = vst [vmem:[%s222 + $0x2c8] sm:$0xff] %v401
                %v403 = vld [vmem:[%s221 + $0x5a0] sm:$0xff]
                %404 = vst [vmem:[%s222 + $0x2d0] sm:$0xff] %v403
                %v405 = vld [vmem:[%s221 + $0x5a8] sm:$0xff]
                %406 = vst [vmem:[%s222 + $0x2d8] sm:$0xff] %v405
                %v407 = vld [vmem:[%s221 + $0x5c0] sm:$0xff]
                %408 = vst [vmem:[%s222 + $0x2e0] sm:$0xff] %v407
                %v409 = vld [vmem:[%s221 + $0x5c8] sm:$0xff]
                %410 = vst [vmem:[%s222 + $0x2e8] sm:$0xff] %v409
                %v411 = vld [vmem:[%s221 + $0x5e0] sm:$0xff]
                %412 = vst [vmem:[%s222 + $0x2f0] sm:$0xff] %v411
                %v413 = vld [vmem:[%s221 + $0x5e8] sm:$0xff]
                %414 = vst [vmem:[%s222 + $0x2f8] sm:$0xff] %v413
                %v415 = vld [vmem:[%s221 + $0x600] sm:$0xff]
                %416 = vst [vmem:[%s222 + $0x300] sm:$0xff] %v415
                %v417 = vld [vmem:[%s221 + $0x608] sm:$0xff]
                %418 = vst [vmem:[%s222 + $0x308] sm:$0xff] %v417
                %v419 = vld [vmem:[%s221 + $0x620] sm:$0xff]
                %420 = vst [vmem:[%s222 + $0x310] sm:$0xff] %v419
                %v421 = vld [vmem:[%s221 + $0x628] sm:$0xff]
                %422 = vst [vmem:[%s222 + $0x318] sm:$0xff] %v421
                %v423 = vld [vmem:[%s221 + $0x640] sm:$0xff]
                %424 = vst [vmem:[%s222 + $0x320] sm:$0xff] %v423
                %v425 = vld [vmem:[%s221 + $0x648] sm:$0xff]
                %426 = vst [vmem:[%s222 + $0x328] sm:$0xff] %v425
                %v427 = vld [vmem:[%s221 + $0x660] sm:$0xff]
                %428 = vst [vmem:[%s222 + $0x330] sm:$0xff] %v427
                %v429 = vld [vmem:[%s221 + $0x668] sm:$0xff]
                %430 = vst [vmem:[%s222 + $0x338] sm:$0xff] %v429
                %v431 = vld [vmem:[%s221 + $0x680] sm:$0xff]
                %432 = vst [vmem:[%s222 + $0x340] sm:$0xff] %v431
                %v433 = vld [vmem:[%s221 + $0x688] sm:$0xff]
                %434 = vst [vmem:[%s222 + $0x348] sm:$0xff] %v433
                %v435 = vld [vmem:[%s221 + $0x6a0] sm:$0xff]
                %436 = vst [vmem:[%s222 + $0x350] sm:$0xff] %v435
                %v437 = vld [vmem:[%s221 + $0x6a8] sm:$0xff]
                %438 = vst [vmem:[%s222 + $0x358] sm:$0xff] %v437
                %v439 = vld [vmem:[%s221 + $0x6c0] sm:$0xff]
                %440 = vst [vmem:[%s222 + $0x360] sm:$0xff] %v439
                %v441 = vld [vmem:[%s221 + $0x6c8] sm:$0xff]
                %442 = vst [vmem:[%s222 + $0x368] sm:$0xff] %v441
                %v443 = vld [vmem:[%s221 + $0x6e0] sm:$0xff]
                %444 = vst [vmem:[%s222 + $0x370] sm:$0xff] %v443
                %v445 = vld [vmem:[%s221 + $0x6e8] sm:$0xff]
                %446 = vst [vmem:[%s222 + $0x378] sm:$0xff] %v445
                %v447 = vld [vmem:[%s221 + $0x700] sm:$0xff]
                %448 = vst [vmem:[%s222 + $0x380] sm:$0xff] %v447
                %v449 = vld [vmem:[%s221 + $0x708] sm:$0xff]
                %450 = vst [vmem:[%s222 + $0x388] sm:$0xff] %v449
                %v451 = vld [vmem:[%s221 + $0x720] sm:$0xff]
                %452 = vst [vmem:[%s222 + $0x390] sm:$0xff] %v451
                %v453 = vld [vmem:[%s221 + $0x728] sm:$0xff]
                %454 = vst [vmem:[%s222 + $0x398] sm:$0xff] %v453
                %v455 = vld [vmem:[%s221 + $0x740] sm:$0xff]
                %456 = vst [vmem:[%s222 + $0x3a0] sm:$0xff] %v455
                %v457 = vld [vmem:[%s221 + $0x748] sm:$0xff]
                %458 = vst [vmem:[%s222 + $0x3a8] sm:$0xff] %v457
                %v459 = vld [vmem:[%s221 + $0x760] sm:$0xff]
                %460 = vst [vmem:[%s222 + $0x3b0] sm:$0xff] %v459
                %v461 = vld [vmem:[%s221 + $0x768] sm:$0xff]
                %462 = vst [vmem:[%s222 + $0x3b8] sm:$0xff] %v461
                %v463 = vld [vmem:[%s221 + $0x780] sm:$0xff]
                %464 = vst [vmem:[%s222 + $0x3c0] sm:$0xff] %v463
                %v465 = vld [vmem:[%s221 + $0x788] sm:$0xff]
                %466 = vst [vmem:[%s222 + $0x3c8] sm:$0xff] %v465
                %v467 = vld [vmem:[%s221 + $0x7a0] sm:$0xff]
                %468 = vst [vmem:[%s222 + $0x3d0] sm:$0xff] %v467
                %v469 = vld [vmem:[%s221 + $0x7a8] sm:$0xff]
                %470 = vst [vmem:[%s222 + $0x3d8] sm:$0xff] %v469
                %v471 = vld [vmem:[%s221 + $0x7c0] sm:$0xff]
                %472 = vst [vmem:[%s222 + $0x3e0] sm:$0xff] %v471
                %v473 = vld [vmem:[%s221 + $0x7c8] sm:$0xff]
                %474 = vst [vmem:[%s222 + $0x3e8] sm:$0xff] %v473
                %v475 = vld [vmem:[%s221 + $0x7e0] sm:$0xff]
                %476 = vst [vmem:[%s222 + $0x3f0] sm:$0xff] %v475
                %v477 = vld [vmem:[%s221 + $0x7e8] sm:$0xff]
                %478 = vst [vmem:[%s222 + $0x3f8] sm:$0xff] %v477
              $region45: #{forward.13} parent=39 // loop_footer
                %s220 = sadd.s32 1, %s216
              $region46: #{forward.13} parent=39 // loop_footer_branch
                %215 = sbr.rel target = $region42
              $region47: #{forward.13} parent=39 // loop_exit
                _
            $region40: #{forward.13} parent=35 // pred_fallthru
              _
            // Predicated region
            $region48: #{forward.13} parent=35 // pred_check
              _
            $region49: #{forward.13} parent=35 // pred_check_branch
              %480 = sbr.rel target = $region51
            $region50: #{forward.13} parent=35 // pred_region
              _
            $region51: #{forward.13} parent=35 // pred_fallthru
              _
          $region36: #{forward.13} parent=31 // pred_fallthru
            _
          %481 = vnop
        $region32: #{forward.13} parent=27 // pred_fallthru
          _
      $region28: #{forward.13} parent=5 // pred_fallthru
        _
      %p482 = scmp.le.s32.totalorder 1, %s10
      %p483 = scmp.lt.s32.totalorder %s10, 3
      %p484 = pnand %p482, %p483
      %p485 = pneg %p484
      // Predicated region
      $region52: #{forward.13} parent=5 // pred_check
        _
      $region53: #{forward.13} parent=5 // pred_check_branch
        %487 = sbr.rel (%p484) target = $region55
      $region54: #{forward.13} parent=5 // pred_region
        %s488 = ssub.s32 %s10, 1
        %s489 = sand.u32 %s61, 1
        %s490 = sand.u32 %s61, 1
        %s491 = smul.addr %s490, 1024
        %s492 = scalar_lea.vmem [#allocation2], %s491
        // Predicated region
        $region56: #{forward.13} parent=54 // pred_check
          %p493 = pneg %p74
        $region57: #{forward.13} parent=54 // pred_check_branch
          %495 = sbr.rel (%p493) target = $region59
        $region58: #{forward.13} parent=54 // pred_region
          _
        $region59: #{forward.13} parent=54 // pred_fallthru
          _
        %s496 = smul.u32 4, %s19
        %p497 = scmp.lt.s32.totalorder %s496, 3
        %s498 = scalar_select %p497, %s496, 3
        %s499 = smul.addr %s498, 4
        %s500 = smul.addr %s499, 4
        %s501 = scalar_lea.vmem %s0, %s500
        %p502 = pneg %p48
        %p503 = pneg %p45
        %s504 = sand.u32 %s61, 1
        %s505 = sand.u32 %s61, 1
        %s506 = smul.addr %s505, 1024
        %s507 = scalar_lea.vmem [#allocation2], %s506
        %p508 = pneg %p74
        %p509 = pneg %p71
        %s510 = smul.u32 4, %s19
        %p511 = scmp.lt.s32.totalorder %s510, 3
        %s512 = scalar_select %p511, %s510, 3
        %s513 = smul.addr %s512, 8
        %s514 = scalar_lea.vmem %s2, %s513
        %p515 = pneg %p100
        %p516 = pneg %p97
        %s517 = smul.u32 4, %s19
        %p518 = scmp.lt.s32.totalorder %s517, 3
        %s519 = scalar_select %p518, %s517, 3
        %s520 = smul.addr %s519, 8
        %s521 = scalar_lea.vmem %s3, %s520
        %p522 = pneg %p126
        %p523 = pneg %p123
        %p524 = pneg %p154
        %p525 = pneg %p151
        %s526 = sand.u32 %s141, 1
        %s527 = sand.u32 %s141, 1
        %s528 = smul.addr %s527, 64
        %s529 = scalar_lea.vmem [#allocation3], %s528
        %s530 = smul.u32 4, %s19
        %p531 = scmp.lt.s32.totalorder %s530, 3
        %s532 = scalar_select %p531, %s530, 3
        %s533 = smul.addr %s532, 4
        %s534 = smul.addr %s533, 4
        %s535 = scalar_lea.vmem %s0, %s534
        %s536 = smul.u32 4, %s19
        %s537 = smul.u32 4, %s20
        %s538 = smul.u32 4, %s19
        %p539 = scmp.lt.s32.totalorder %s538, 3
        %s540 = scalar_select %p539, %s538, 3
        %s541 = smul.addr %s540, 8
        %s542 = scalar_lea.vmem %s2, %s541
        %s543 = smul.u32 4, %s19
        %s544 = smul.u32 4, %s19
        %p545 = scmp.lt.s32.totalorder %s544, 3
        %s546 = scalar_select %p545, %s544, 3
        %s547 = smul.addr %s546, 8
        %s548 = scalar_lea.vmem %s3, %s547
        %s549 = smul.u32 4, %s19
        %s550 = smul.u32 4, %s19
        %s551 = smul.u32 4, %s20
        %v552 = vld [vmem:[%s535] sm:$0xff]
        %v553 = vld [vmem:[%s535 + $0x8] sm:$0xff]
        %v554 = vld [vmem:[%s535 + $0x10] sm:$0xff]
        %v555 = vld [vmem:[%s535 + $0x18] sm:$0xff]
        %v556 = vld [vmem:[%s535 + $0x20] sm:$0xff]
        %v557 = vld [vmem:[%s535 + $0x28] sm:$0xff]
        %v558 = vld [vmem:[%s535 + $0x30] sm:$0xff]
        %v559 = vld [vmem:[%s535 + $0x38] sm:$0xff]
        %v560 = vld [vmem:[%s492] sm:$0xff]
        %v561 = vld [vmem:[%s492 + $0x8] sm:$0xff]
        %v562 = vld [vmem:[%s492 + $0x10] sm:$0xff]
        %v563 = vld [vmem:[%s492 + $0x18] sm:$0xff]
        %v564 = vld [vmem:[%s492 + $0x20] sm:$0xff]
        %v565 = vld [vmem:[%s492 + $0x28] sm:$0xff]
        %v566 = vld [vmem:[%s492 + $0x30] sm:$0xff]
        %v567 = vld [vmem:[%s492 + $0x38] sm:$0xff]
        %v568 = vld [vmem:[%s492 + $0x40] sm:$0xff]
        %v569 = vld [vmem:[%s492 + $0x48] sm:$0xff]
        %v570 = vld [vmem:[%s492 + $0x50] sm:$0xff]
        %v571 = vld [vmem:[%s492 + $0x58] sm:$0xff]
        %v572 = vld [vmem:[%s492 + $0x60] sm:$0xff]
        %v573 = vld [vmem:[%s492 + $0x68] sm:$0xff]
        %v574 = vld [vmem:[%s492 + $0x70] sm:$0xff]
        %v575 = vld [vmem:[%s492 + $0x78] sm:$0xff]
        %v576 = vld [vmem:[%s492 + $0x80] sm:$0xff]
        %v577 = vld [vmem:[%s492 + $0x88] sm:$0xff]
        %v578 = vld [vmem:[%s492 + $0x90] sm:$0xff]
        %v579 = vld [vmem:[%s492 + $0x98] sm:$0xff]
        %v580 = vld [vmem:[%s492 + $0xa0] sm:$0xff]
        %v581 = vld [vmem:[%s492 + $0xa8] sm:$0xff]
        %v582 = vld [vmem:[%s492 + $0xb0] sm:$0xff]
        %v583 = vld [vmem:[%s492 + $0xb8] sm:$0xff]
        %v584 = vld [vmem:[%s492 + $0xc0] sm:$0xff]
        %v585 = vld [vmem:[%s492 + $0xc8] sm:$0xff]
        %v586 = vld [vmem:[%s492 + $0xd0] sm:$0xff]
        %v587 = vld [vmem:[%s492 + $0xd8] sm:$0xff]
        %v588 = vld [vmem:[%s492 + $0xe0] sm:$0xff]
        %v589 = vld [vmem:[%s492 + $0xe8] sm:$0xff]
        %v590 = vld [vmem:[%s492 + $0xf0] sm:$0xff]
        %v591 = vld [vmem:[%s492 + $0xf8] sm:$0xff]
        %v592 = vld [vmem:[%s492 + $0x100] sm:$0xff]
        %v593 = vld [vmem:[%s492 + $0x108] sm:$0xff]
        %v594 = vld [vmem:[%s492 + $0x110] sm:$0xff]
        %v595 = vld [vmem:[%s492 + $0x118] sm:$0xff]
        %v596 = vld [vmem:[%s492 + $0x120] sm:$0xff]
        %v597 = vld [vmem:[%s492 + $0x128] sm:$0xff]
        %v598 = vld [vmem:[%s492 + $0x130] sm:$0xff]
        %v599 = vld [vmem:[%s492 + $0x138] sm:$0xff]
        %v600 = vld [vmem:[%s492 + $0x140] sm:$0xff]
        %v601 = vld [vmem:[%s492 + $0x148] sm:$0xff]
        %v602 = vld [vmem:[%s492 + $0x150] sm:$0xff]
        %v603 = vld [vmem:[%s492 + $0x158] sm:$0xff]
        %v604 = vld [vmem:[%s492 + $0x160] sm:$0xff]
        %v605 = vld [vmem:[%s492 + $0x168] sm:$0xff]
        %v606 = vld [vmem:[%s492 + $0x170] sm:$0xff]
        %v607 = vld [vmem:[%s492 + $0x178] sm:$0xff]
        %v608 = vld [vmem:[%s492 + $0x180] sm:$0xff]
        %v609 = vld [vmem:[%s492 + $0x188] sm:$0xff]
        %v610 = vld [vmem:[%s492 + $0x190] sm:$0xff]
        %v611 = vld [vmem:[%s492 + $0x198] sm:$0xff]
        %v612 = vld [vmem:[%s492 + $0x1a0] sm:$0xff]
        %v613 = vld [vmem:[%s492 + $0x1a8] sm:$0xff]
        %v614 = vld [vmem:[%s492 + $0x1b0] sm:$0xff]
        %v615 = vld [vmem:[%s492 + $0x1b8] sm:$0xff]
        %v616 = vld [vmem:[%s492 + $0x1c0] sm:$0xff]
        %v617 = vld [vmem:[%s492 + $0x1c8] sm:$0xff]
        %v618 = vld [vmem:[%s492 + $0x1d0] sm:$0xff]
        %v619 = vld [vmem:[%s492 + $0x1d8] sm:$0xff]
        %v620 = vld [vmem:[%s492 + $0x1e0] sm:$0xff]
        %v621 = vld [vmem:[%s492 + $0x1e8] sm:$0xff]
        %v622 = vld [vmem:[%s492 + $0x1f0] sm:$0xff]
        %v623 = vld [vmem:[%s492 + $0x1f8] sm:$0xff]
        %v624 = vld [vmem:[%s492 + $0x200] sm:$0xff]
        %v625 = vld [vmem:[%s492 + $0x208] sm:$0xff]
        %v626 = vld [vmem:[%s492 + $0x210] sm:$0xff]
        %v627 = vld [vmem:[%s492 + $0x218] sm:$0xff]
        %v628 = vld [vmem:[%s492 + $0x220] sm:$0xff]
        %v629 = vld [vmem:[%s492 + $0x228] sm:$0xff]
        %v630 = vld [vmem:[%s492 + $0x230] sm:$0xff]
        %v631 = vld [vmem:[%s492 + $0x238] sm:$0xff]
        %v632 = vld [vmem:[%s492 + $0x240] sm:$0xff]
        %v633 = vld [vmem:[%s492 + $0x248] sm:$0xff]
        %v634 = vld [vmem:[%s492 + $0x250] sm:$0xff]
        %v635 = vld [vmem:[%s492 + $0x258] sm:$0xff]
        %v636 = vld [vmem:[%s492 + $0x260] sm:$0xff]
        %v637 = vld [vmem:[%s492 + $0x268] sm:$0xff]
        %v638 = vld [vmem:[%s492 + $0x270] sm:$0xff]
        %v639 = vld [vmem:[%s492 + $0x278] sm:$0xff]
        %v640 = vld [vmem:[%s492 + $0x280] sm:$0xff]
        %v641 = vld [vmem:[%s492 + $0x288] sm:$0xff]
        %v642 = vld [vmem:[%s492 + $0x290] sm:$0xff]
        %v643 = vld [vmem:[%s492 + $0x298] sm:$0xff]
        %v644 = vld [vmem:[%s492 + $0x2a0] sm:$0xff]
        %v645 = vld [vmem:[%s492 + $0x2a8] sm:$0xff]
        %v646 = vld [vmem:[%s492 + $0x2b0] sm:$0xff]
        %v647 = vld [vmem:[%s492 + $0x2b8] sm:$0xff]
        %v648 = vld [vmem:[%s492 + $0x2c0] sm:$0xff]
        %v649 = vld [vmem:[%s492 + $0x2c8] sm:$0xff]
        %v650 = vld [vmem:[%s492 + $0x2d0] sm:$0xff]
        %v651 = vld [vmem:[%s492 + $0x2d8] sm:$0xff]
        %v652 = vld [vmem:[%s492 + $0x2e0] sm:$0xff]
        %v653 = vld [vmem:[%s492 + $0x2e8] sm:$0xff]
        %v654 = vld [vmem:[%s492 + $0x2f0] sm:$0xff]
        %v655 = vld [vmem:[%s492 + $0x2f8] sm:$0xff]
        %v656 = vld [vmem:[%s492 + $0x300] sm:$0xff]
        %v657 = vld [vmem:[%s492 + $0x308] sm:$0xff]
        %v658 = vld [vmem:[%s492 + $0x310] sm:$0xff]
        %v659 = vld [vmem:[%s492 + $0x318] sm:$0xff]
        %v660 = vld [vmem:[%s492 + $0x320] sm:$0xff]
        %v661 = vld [vmem:[%s492 + $0x328] sm:$0xff]
        %v662 = vld [vmem:[%s492 + $0x330] sm:$0xff]
        %v663 = vld [vmem:[%s492 + $0x338] sm:$0xff]
        %v664 = vld [vmem:[%s492 + $0x340] sm:$0xff]
        %v665 = vld [vmem:[%s492 + $0x348] sm:$0xff]
        %v666 = vld [vmem:[%s492 + $0x350] sm:$0xff]
        %v667 = vld [vmem:[%s492 + $0x358] sm:$0xff]
        %v668 = vld [vmem:[%s492 + $0x360] sm:$0xff]
        %v669 = vld [vmem:[%s492 + $0x368] sm:$0xff]
        %v670 = vld [vmem:[%s492 + $0x370] sm:$0xff]
        %v671 = vld [vmem:[%s492 + $0x378] sm:$0xff]
        %v672 = vld [vmem:[%s492 + $0x380] sm:$0xff]
        %v673 = vld [vmem:[%s492 + $0x388] sm:$0xff]
        %v674 = vld [vmem:[%s492 + $0x390] sm:$0xff]
        %v675 = vld [vmem:[%s492 + $0x398] sm:$0xff]
        %v676 = vld [vmem:[%s492 + $0x3a0] sm:$0xff]
        %v677 = vld [vmem:[%s492 + $0x3a8] sm:$0xff]
        %v678 = vld [vmem:[%s492 + $0x3b0] sm:$0xff]
        %v679 = vld [vmem:[%s492 + $0x3b8] sm:$0xff]
        %v680 = vld [vmem:[%s492 + $0x3c0] sm:$0xff]
        %v681 = vld [vmem:[%s492 + $0x3c8] sm:$0xff]
        %v682 = vld [vmem:[%s492 + $0x3d0] sm:$0xff]
        %v683 = vld [vmem:[%s492 + $0x3d8] sm:$0xff]
        %v684 = vld [vmem:[%s492 + $0x3e0] sm:$0xff]
        %v685 = vld [vmem:[%s492 + $0x3e8] sm:$0xff]
        %v686 = vld [vmem:[%s492 + $0x3f0] sm:$0xff]
        %v687 = vld [vmem:[%s492 + $0x3f8] sm:$0xff]
        %v696 = vunpack.c.l.b16 %v552
        %v697 = vunpack.c.h.b16 %v552
        %v698 = vunpack.c.l.b16 %v553
        %v699 = vunpack.c.h.b16 %v553
        %v700 = vunpack.c.l.b16 %v554
        %v701 = vunpack.c.h.b16 %v554
        %v702 = vunpack.c.l.b16 %v555
        %v703 = vunpack.c.h.b16 %v555
        %v704 = vunpack.c.l.b16 %v556
        %v705 = vunpack.c.h.b16 %v556
        %v706 = vunpack.c.l.b16 %v557
        %v707 = vunpack.c.h.b16 %v557
        %v708 = vunpack.c.l.b16 %v558
        %v709 = vunpack.c.h.b16 %v558
        %v710 = vunpack.c.l.b16 %v559
        %v711 = vunpack.c.h.b16 %v559
        %v712 = vpack.c.b16 %v700, %v696
        %v713 = vpack.c.b16 %v701, %v697
        %v714 = vpack.c.b16 %v702, %v698
        %v715 = vpack.c.b16 %v703, %v699
        %v716 = vpack.c.b16 %v708, %v704
        %v717 = vpack.c.b16 %v709, %v705
        %v718 = vpack.c.b16 %v710, %v706
        %v719 = vpack.c.b16 %v711, %v707
        %v856 = vunpack.c.l.b16 %v560
        %v857 = vunpack.c.h.b16 %v560
        %v858 = vunpack.c.l.b16 %v561
        %v859 = vunpack.c.h.b16 %v561
        %v860 = vunpack.c.l.b16 %v562
        %v861 = vunpack.c.h.b16 %v562
        %v862 = vunpack.c.l.b16 %v563
        %v863 = vunpack.c.h.b16 %v563
        %v864 = vunpack.c.l.b16 %v564
        %v865 = vunpack.c.h.b16 %v564
        %v866 = vunpack.c.l.b16 %v565
        %v867 = vunpack.c.h.b16 %v565
        %v868 = vunpack.c.l.b16 %v566
        %v869 = vunpack.c.h.b16 %v566
        %v870 = vunpack.c.l.b16 %v567
        %v871 = vunpack.c.h.b16 %v567
        %v872 = vunpack.c.l.b16 %v568
        %v873 = vunpack.c.h.b16 %v568
        %v874 = vunpack.c.l.b16 %v569
        %v875 = vunpack.c.h.b16 %v569
        %v876 = vunpack.c.l.b16 %v570
        %v877 = vunpack.c.h.b16 %v570
        %v878 = vunpack.c.l.b16 %v571
        %v879 = vunpack.c.h.b16 %v571
        %v880 = vunpack.c.l.b16 %v572
        %v881 = vunpack.c.h.b16 %v572
        %v882 = vunpack.c.l.b16 %v573
        %v883 = vunpack.c.h.b16 %v573
        %v884 = vunpack.c.l.b16 %v574
        %v885 = vunpack.c.h.b16 %v574
        %v886 = vunpack.c.l.b16 %v575
        %v887 = vunpack.c.h.b16 %v575
        %v888 = vunpack.c.l.b16 %v576
        %v889 = vunpack.c.h.b16 %v576
        %v890 = vunpack.c.l.b16 %v577
        %v891 = vunpack.c.h.b16 %v577
        %v892 = vunpack.c.l.b16 %v578
        %v893 = vunpack.c.h.b16 %v578
        %v894 = vunpack.c.l.b16 %v579
        %v895 = vunpack.c.h.b16 %v579
        %v896 = vunpack.c.l.b16 %v580
        %v897 = vunpack.c.h.b16 %v580
        %v898 = vunpack.c.l.b16 %v581
        %v899 = vunpack.c.h.b16 %v581
        %v900 = vunpack.c.l.b16 %v582
        %v901 = vunpack.c.h.b16 %v582
        %v902 = vunpack.c.l.b16 %v583
        %v903 = vunpack.c.h.b16 %v583
        %v904 = vunpack.c.l.b16 %v584
        %v905 = vunpack.c.h.b16 %v584
        %v906 = vunpack.c.l.b16 %v585
        %v907 = vunpack.c.h.b16 %v585
        %v908 = vunpack.c.l.b16 %v586
        %v909 = vunpack.c.h.b16 %v586
        %v910 = vunpack.c.l.b16 %v587
        %v911 = vunpack.c.h.b16 %v587
        %v912 = vunpack.c.l.b16 %v588
        %v913 = vunpack.c.h.b16 %v588
        %v914 = vunpack.c.l.b16 %v589
        %v915 = vunpack.c.h.b16 %v589
        %v916 = vunpack.c.l.b16 %v590
        %v917 = vunpack.c.h.b16 %v590
        %v918 = vunpack.c.l.b16 %v591
        %v919 = vunpack.c.h.b16 %v591
        %v920 = vunpack.c.l.b16 %v592
        %v921 = vunpack.c.h.b16 %v592
        %v922 = vunpack.c.l.b16 %v593
        %v923 = vunpack.c.h.b16 %v593
        %v924 = vunpack.c.l.b16 %v594
        %v925 = vunpack.c.h.b16 %v594
        %v926 = vunpack.c.l.b16 %v595
        %v927 = vunpack.c.h.b16 %v595
        %v928 = vunpack.c.l.b16 %v596
        %v929 = vunpack.c.h.b16 %v596
        %v930 = vunpack.c.l.b16 %v597
        %v931 = vunpack.c.h.b16 %v597
        %v932 = vunpack.c.l.b16 %v598
        %v933 = vunpack.c.h.b16 %v598
        %v934 = vunpack.c.l.b16 %v599
        %v935 = vunpack.c.h.b16 %v599
        %v936 = vunpack.c.l.b16 %v600
        %v937 = vunpack.c.h.b16 %v600
        %v938 = vunpack.c.l.b16 %v601
        %v939 = vunpack.c.h.b16 %v601
        %v940 = vunpack.c.l.b16 %v602
        %v941 = vunpack.c.h.b16 %v602
        %v942 = vunpack.c.l.b16 %v603
        %v943 = vunpack.c.h.b16 %v603
        %v944 = vunpack.c.l.b16 %v604
        %v945 = vunpack.c.h.b16 %v604
        %v946 = vunpack.c.l.b16 %v605
        %v947 = vunpack.c.h.b16 %v605
        %v948 = vunpack.c.l.b16 %v606
        %v949 = vunpack.c.h.b16 %v606
        %v950 = vunpack.c.l.b16 %v607
        %v951 = vunpack.c.h.b16 %v607
        %v952 = vunpack.c.l.b16 %v608
        %v953 = vunpack.c.h.b16 %v608
        %v954 = vunpack.c.l.b16 %v609
        %v955 = vunpack.c.h.b16 %v609
        %v956 = vunpack.c.l.b16 %v610
        %v957 = vunpack.c.h.b16 %v610
        %v958 = vunpack.c.l.b16 %v611
        %v959 = vunpack.c.h.b16 %v611
        %v960 = vunpack.c.l.b16 %v612
        %v961 = vunpack.c.h.b16 %v612
        %v962 = vunpack.c.l.b16 %v613
        %v963 = vunpack.c.h.b16 %v613
        %v964 = vunpack.c.l.b16 %v614
        %v965 = vunpack.c.h.b16 %v614
        %v966 = vunpack.c.l.b16 %v615
        %v967 = vunpack.c.h.b16 %v615
        %v968 = vunpack.c.l.b16 %v616
        %v969 = vunpack.c.h.b16 %v616
        %v970 = vunpack.c.l.b16 %v617
        %v971 = vunpack.c.h.b16 %v617
        %v972 = vunpack.c.l.b16 %v618
        %v973 = vunpack.c.h.b16 %v618
        %v974 = vunpack.c.l.b16 %v619
        %v975 = vunpack.c.h.b16 %v619
        %v976 = vunpack.c.l.b16 %v620
        %v977 = vunpack.c.h.b16 %v620
        %v978 = vunpack.c.l.b16 %v621
        %v979 = vunpack.c.h.b16 %v621
        %v980 = vunpack.c.l.b16 %v622
        %v981 = vunpack.c.h.b16 %v622
        %v982 = vunpack.c.l.b16 %v623
        %v983 = vunpack.c.h.b16 %v623
        %v984 = vunpack.c.l.b16 %v624
        %v985 = vunpack.c.h.b16 %v624
        %v986 = vunpack.c.l.b16 %v625
        %v987 = vunpack.c.h.b16 %v625
        %v988 = vunpack.c.l.b16 %v626
        %v989 = vunpack.c.h.b16 %v626
        %v990 = vunpack.c.l.b16 %v627
        %v991 = vunpack.c.h.b16 %v627
        %v992 = vunpack.c.l.b16 %v628
        %v993 = vunpack.c.h.b16 %v628
        %v994 = vunpack.c.l.b16 %v629
        %v995 = vunpack.c.h.b16 %v629
        %v996 = vunpack.c.l.b16 %v630
        %v997 = vunpack.c.h.b16 %v630
        %v998 = vunpack.c.l.b16 %v631
        %v999 = vunpack.c.h.b16 %v631
        %v1000 = vunpack.c.l.b16 %v632
        %v1001 = vunpack.c.h.b16 %v632
        %v1002 = vunpack.c.l.b16 %v633
        %v1003 = vunpack.c.h.b16 %v633
        %v1004 = vunpack.c.l.b16 %v634
        %v1005 = vunpack.c.h.b16 %v634
        %v1006 = vunpack.c.l.b16 %v635
        %v1007 = vunpack.c.h.b16 %v635
        %v1008 = vunpack.c.l.b16 %v636
        %v1009 = vunpack.c.h.b16 %v636
        %v1010 = vunpack.c.l.b16 %v637
        %v1011 = vunpack.c.h.b16 %v637
        %v1012 = vunpack.c.l.b16 %v638
        %v1013 = vunpack.c.h.b16 %v638
        %v1014 = vunpack.c.l.b16 %v639
        %v1015 = vunpack.c.h.b16 %v639
        %v1016 = vunpack.c.l.b16 %v640
        %v1017 = vunpack.c.h.b16 %v640
        %v1018 = vunpack.c.l.b16 %v641
        %v1019 = vunpack.c.h.b16 %v641
        %v1020 = vunpack.c.l.b16 %v642
        %v1021 = vunpack.c.h.b16 %v642
        %v1022 = vunpack.c.l.b16 %v643
        %v1023 = vunpack.c.h.b16 %v643
        %v1024 = vunpack.c.l.b16 %v644
        %v1025 = vunpack.c.h.b16 %v644
        %v1026 = vunpack.c.l.b16 %v645
        %v1027 = vunpack.c.h.b16 %v645
        %v1028 = vunpack.c.l.b16 %v646
        %v1029 = vunpack.c.h.b16 %v646
        %v1030 = vunpack.c.l.b16 %v647
        %v1031 = vunpack.c.h.b16 %v647
        %v1032 = vunpack.c.l.b16 %v648
        %v1033 = vunpack.c.h.b16 %v648
        %v1034 = vunpack.c.l.b16 %v649
        %v1035 = vunpack.c.h.b16 %v649
        %v1036 = vunpack.c.l.b16 %v650
        %v1037 = vunpack.c.h.b16 %v650
        %v1038 = vunpack.c.l.b16 %v651
        %v1039 = vunpack.c.h.b16 %v651
        %v1040 = vunpack.c.l.b16 %v652
        %v1041 = vunpack.c.h.b16 %v652
        %v1042 = vunpack.c.l.b16 %v653
        %v1043 = vunpack.c.h.b16 %v653
        %v1044 = vunpack.c.l.b16 %v654
        %v1045 = vunpack.c.h.b16 %v654
        %v1046 = vunpack.c.l.b16 %v655
        %v1047 = vunpack.c.h.b16 %v655
        %v1048 = vunpack.c.l.b16 %v656
        %v1049 = vunpack.c.h.b16 %v656
        %v1050 = vunpack.c.l.b16 %v657
        %v1051 = vunpack.c.h.b16 %v657
        %v1052 = vunpack.c.l.b16 %v658
        %v1053 = vunpack.c.h.b16 %v658
        %v1054 = vunpack.c.l.b16 %v659
        %v1055 = vunpack.c.h.b16 %v659
        %v1056 = vunpack.c.l.b16 %v660
        %v1057 = vunpack.c.h.b16 %v660
        %v1058 = vunpack.c.l.b16 %v661
        %v1059 = vunpack.c.h.b16 %v661
        %v1060 = vunpack.c.l.b16 %v662
        %v1061 = vunpack.c.h.b16 %v662
        %v1062 = vunpack.c.l.b16 %v663
        %v1063 = vunpack.c.h.b16 %v663
        %v1064 = vunpack.c.l.b16 %v664
        %v1065 = vunpack.c.h.b16 %v664
        %v1066 = vunpack.c.l.b16 %v665
        %v1067 = vunpack.c.h.b16 %v665
        %v1068 = vunpack.c.l.b16 %v666
        %v1069 = vunpack.c.h.b16 %v666
        %v1070 = vunpack.c.l.b16 %v667
        %v1071 = vunpack.c.h.b16 %v667
        %v1072 = vunpack.c.l.b16 %v668
        %v1073 = vunpack.c.h.b16 %v668
        %v1074 = vunpack.c.l.b16 %v669
        %v1075 = vunpack.c.h.b16 %v669
        %v1076 = vunpack.c.l.b16 %v670
        %v1077 = vunpack.c.h.b16 %v670
        %v1078 = vunpack.c.l.b16 %v671
        %v1079 = vunpack.c.h.b16 %v671
        %v1080 = vunpack.c.l.b16 %v672
        %v1081 = vunpack.c.h.b16 %v672
        %v1082 = vunpack.c.l.b16 %v673
        %v1083 = vunpack.c.h.b16 %v673
        %v1084 = vunpack.c.l.b16 %v674
        %v1085 = vunpack.c.h.b16 %v674
        %v1086 = vunpack.c.l.b16 %v675
        %v1087 = vunpack.c.h.b16 %v675
        %v1088 = vunpack.c.l.b16 %v676
        %v1089 = vunpack.c.h.b16 %v676
        %v1090 = vunpack.c.l.b16 %v677
        %v1091 = vunpack.c.h.b16 %v677
        %v1092 = vunpack.c.l.b16 %v678
        %v1093 = vunpack.c.h.b16 %v678
        %v1094 = vunpack.c.l.b16 %v679
        %v1095 = vunpack.c.h.b16 %v679
        %v1096 = vunpack.c.l.b16 %v680
        %v1097 = vunpack.c.h.b16 %v680
        %v1098 = vunpack.c.l.b16 %v681
        %v1099 = vunpack.c.h.b16 %v681
        %v1100 = vunpack.c.l.b16 %v682
        %v1101 = vunpack.c.h.b16 %v682
        %v1102 = vunpack.c.l.b16 %v683
        %v1103 = vunpack.c.h.b16 %v683
        %v1104 = vunpack.c.l.b16 %v684
        %v1105 = vunpack.c.h.b16 %v684
        %v1106 = vunpack.c.l.b16 %v685
        %v1107 = vunpack.c.h.b16 %v685
        %v1108 = vunpack.c.l.b16 %v686
        %v1109 = vunpack.c.h.b16 %v686
        %v1110 = vunpack.c.l.b16 %v687
        %v1111 = vunpack.c.h.b16 %v687
        %v1112 = vpack.c.b16 %v860, %v856
        %v1113 = vpack.c.b16 %v861, %v857
        %v1114 = vpack.c.b16 %v862, %v858
        %v1115 = vpack.c.b16 %v863, %v859
        %v1116 = vpack.c.b16 %v868, %v864
        %v1117 = vpack.c.b16 %v869, %v865
        %v1118 = vpack.c.b16 %v870, %v866
        %v1119 = vpack.c.b16 %v871, %v867
        %v1120 = vpack.c.b16 %v876, %v872
        %v1121 = vpack.c.b16 %v877, %v873
        %v1122 = vpack.c.b16 %v878, %v874
        %v1123 = vpack.c.b16 %v879, %v875
        %v1124 = vpack.c.b16 %v884, %v880
        %v1125 = vpack.c.b16 %v885, %v881
        %v1126 = vpack.c.b16 %v886, %v882
        %v1127 = vpack.c.b16 %v887, %v883
        %v1128 = vpack.c.b16 %v892, %v888
        %v1129 = vpack.c.b16 %v893, %v889
        %v1130 = vpack.c.b16 %v894, %v890
        %v1131 = vpack.c.b16 %v895, %v891
        %v1132 = vpack.c.b16 %v900, %v896
        %v1133 = vpack.c.b16 %v901, %v897
        %v1134 = vpack.c.b16 %v902, %v898
        %v1135 = vpack.c.b16 %v903, %v899
        %v1136 = vpack.c.b16 %v908, %v904
        %v1137 = vpack.c.b16 %v909, %v905
        %v1138 = vpack.c.b16 %v910, %v906
        %v1139 = vpack.c.b16 %v911, %v907
        %v1140 = vpack.c.b16 %v916, %v912
        %v1141 = vpack.c.b16 %v917, %v913
        %v1142 = vpack.c.b16 %v918, %v914
        %v1143 = vpack.c.b16 %v919, %v915
        %v1144 = vpack.c.b16 %v924, %v920
        %v1145 = vpack.c.b16 %v925, %v921
        %v1146 = vpack.c.b16 %v926, %v922
        %v1147 = vpack.c.b16 %v927, %v923
        %v1148 = vpack.c.b16 %v932, %v928
        %v1149 = vpack.c.b16 %v933, %v929
        %v1150 = vpack.c.b16 %v934, %v930
        %v1151 = vpack.c.b16 %v935, %v931
        %v1152 = vpack.c.b16 %v940, %v936
        %v1153 = vpack.c.b16 %v941, %v937
        %v1154 = vpack.c.b16 %v942, %v938
        %v1155 = vpack.c.b16 %v943, %v939
        %v1156 = vpack.c.b16 %v948, %v944
        %v1157 = vpack.c.b16 %v949, %v945
        %v1158 = vpack.c.b16 %v950, %v946
        %v1159 = vpack.c.b16 %v951, %v947
        %v1160 = vpack.c.b16 %v956, %v952
        %v1161 = vpack.c.b16 %v957, %v953
        %v1162 = vpack.c.b16 %v958, %v954
        %v1163 = vpack.c.b16 %v959, %v955
        %v1164 = vpack.c.b16 %v964, %v960
        %v1165 = vpack.c.b16 %v965, %v961
        %v1166 = vpack.c.b16 %v966, %v962
        %v1167 = vpack.c.b16 %v967, %v963
        %v1168 = vpack.c.b16 %v972, %v968
        %v1169 = vpack.c.b16 %v973, %v969
        %v1170 = vpack.c.b16 %v974, %v970
        %v1171 = vpack.c.b16 %v975, %v971
        %v1172 = vpack.c.b16 %v980, %v976
        %v1173 = vpack.c.b16 %v981, %v977
        %v1174 = vpack.c.b16 %v982, %v978
        %v1175 = vpack.c.b16 %v983, %v979
        %v1176 = vpack.c.b16 %v988, %v984
        %v1177 = vpack.c.b16 %v989, %v985
        %v1178 = vpack.c.b16 %v990, %v986
        %v1179 = vpack.c.b16 %v991, %v987
        %v1180 = vpack.c.b16 %v996, %v992
        %v1181 = vpack.c.b16 %v997, %v993
        %v1182 = vpack.c.b16 %v998, %v994
        %v1183 = vpack.c.b16 %v999, %v995
        %v1184 = vpack.c.b16 %v1004, %v1000
        %v1185 = vpack.c.b16 %v1005, %v1001
        %v1186 = vpack.c.b16 %v1006, %v1002
        %v1187 = vpack.c.b16 %v1007, %v1003
        %v1188 = vpack.c.b16 %v1012, %v1008
        %v1189 = vpack.c.b16 %v1013, %v1009
        %v1190 = vpack.c.b16 %v1014, %v1010
        %v1191 = vpack.c.b16 %v1015, %v1011
        %v1192 = vpack.c.b16 %v1020, %v1016
        %v1193 = vpack.c.b16 %v1021, %v1017
        %v1194 = vpack.c.b16 %v1022, %v1018
        %v1195 = vpack.c.b16 %v1023, %v1019
        %v1196 = vpack.c.b16 %v1028, %v1024
        %v1197 = vpack.c.b16 %v1029, %v1025
        %v1198 = vpack.c.b16 %v1030, %v1026
        %v1199 = vpack.c.b16 %v1031, %v1027
        %v1200 = vpack.c.b16 %v1036, %v1032
        %v1201 = vpack.c.b16 %v1037, %v1033
        %v1202 = vpack.c.b16 %v1038, %v1034
        %v1203 = vpack.c.b16 %v1039, %v1035
        %v1204 = vpack.c.b16 %v1044, %v1040
        %v1205 = vpack.c.b16 %v1045, %v1041
        %v1206 = vpack.c.b16 %v1046, %v1042
        %v1207 = vpack.c.b16 %v1047, %v1043
        %v1208 = vpack.c.b16 %v1052, %v1048
        %v1209 = vpack.c.b16 %v1053, %v1049
        %v1210 = vpack.c.b16 %v1054, %v1050
        %v1211 = vpack.c.b16 %v1055, %v1051
        %v1212 = vpack.c.b16 %v1060, %v1056
        %v1213 = vpack.c.b16 %v1061, %v1057
        %v1214 = vpack.c.b16 %v1062, %v1058
        %v1215 = vpack.c.b16 %v1063, %v1059
        %v1216 = vpack.c.b16 %v1068, %v1064
        %v1217 = vpack.c.b16 %v1069, %v1065
        %v1218 = vpack.c.b16 %v1070, %v1066
        %v1219 = vpack.c.b16 %v1071, %v1067
        %v1220 = vpack.c.b16 %v1076, %v1072
        %v1221 = vpack.c.b16 %v1077, %v1073
        %v1222 = vpack.c.b16 %v1078, %v1074
        %v1223 = vpack.c.b16 %v1079, %v1075
        %v1224 = vpack.c.b16 %v1084, %v1080
        %v1225 = vpack.c.b16 %v1085, %v1081
        %v1226 = vpack.c.b16 %v1086, %v1082
        %v1227 = vpack.c.b16 %v1087, %v1083
        %v1228 = vpack.c.b16 %v1092, %v1088
        %v1229 = vpack.c.b16 %v1093, %v1089
        %v1230 = vpack.c.b16 %v1094, %v1090
        %v1231 = vpack.c.b16 %v1095, %v1091
        %v1232 = vpack.c.b16 %v1100, %v1096
        %v1233 = vpack.c.b16 %v1101, %v1097
        %v1234 = vpack.c.b16 %v1102, %v1098
        %v1235 = vpack.c.b16 %v1103, %v1099
        %v1236 = vpack.c.b16 %v1108, %v1104
        %v1237 = vpack.c.b16 %v1109, %v1105
        %v1238 = vpack.c.b16 %v1110, %v1106
        %v1239 = vpack.c.b16 %v1111, %v1107
        %1368 = vmatpush.bf16.msra.mxu0 %v1140
        %1369 = vmatpush.bf16.msra.mxu0 %v1136
        %1370 = vmatpush.bf16.msra.mxu0 %v1132
        %1371 = vmatpush.bf16.msra.mxu0 %v1128
        %1372 = vmatpush.bf16.msra.mxu0 %v1124
        %1373 = vmatpush.bf16.msra.mxu0 %v1120
        %1374 = vmatpush.bf16.msra.mxu0 %v1116
        %1375 = vmatpush.bf16.msra.mxu0 %v1112
        %1376 = vmatmul.bf16.gmra.mxu0 %v712
        %v1377 = vpop.f32.mrf.mxu0
        %v1378 = vadd.f32 0.0, %v1377
        %v1379 = vpop.f32.mrf.mxu0
        %v1380 = vadd.f32 0.0, %v1379
        %1381 = vmatmul.bf16.gmra.mxu0 %v716
        %v1382 = vpop.f32.mrf.mxu0
        %v1383 = vadd.f32 0.0, %v1382
        %v1384 = vpop.f32.mrf.mxu0
        %v1385 = vadd.f32 0.0, %v1384
        %1386 = vdwg.mxu0
        %1387 = vmatpush.bf16.msra.mxu0 %v1172
        %1388 = vmatpush.bf16.msra.mxu0 %v1168
        %1389 = vmatpush.bf16.msra.mxu0 %v1164
        %1390 = vmatpush.bf16.msra.mxu0 %v1160
        %1391 = vmatpush.bf16.msra.mxu0 %v1156
        %1392 = vmatpush.bf16.msra.mxu0 %v1152
        %1393 = vmatpush.bf16.msra.mxu0 %v1148
        %1394 = vmatpush.bf16.msra.mxu0 %v1144
        %1395 = vmatmul.bf16.gmra.mxu0 %v713
        %v1396 = vpop.f32.mrf.mxu0
        %v1397 = vadd.f32 %v1378, %v1396
        %v1398 = vpop.f32.mrf.mxu0
        %v1399 = vadd.f32 %v1380, %v1398
        %1400 = vmatmul.bf16.gmra.mxu0 %v717
        %v1401 = vpop.f32.mrf.mxu0
        %v1402 = vadd.f32 %v1383, %v1401
        %v1403 = vpop.f32.mrf.mxu0
        %v1404 = vadd.f32 %v1385, %v1403
        %1405 = vdwg.mxu0
        %1406 = vmatpush.bf16.msra.mxu0 %v1204
        %1407 = vmatpush.bf16.msra.mxu0 %v1200
        %1408 = vmatpush.bf16.msra.mxu0 %v1196
        %1409 = vmatpush.bf16.msra.mxu0 %v1192
        %1410 = vmatpush.bf16.msra.mxu0 %v1188
        %1411 = vmatpush.bf16.msra.mxu0 %v1184
        %1412 = vmatpush.bf16.msra.mxu0 %v1180
        %1413 = vmatpush.bf16.msra.mxu0 %v1176
        %1414 = vmatmul.bf16.gmra.mxu0 %v714
        %v1415 = vpop.f32.mrf.mxu0
        %v1416 = vadd.f32 %v1397, %v1415
        %v1417 = vpop.f32.mrf.mxu0
        %v1418 = vadd.f32 %v1399, %v1417
        %1419 = vmatmul.bf16.gmra.mxu0 %v718
        %v1420 = vpop.f32.mrf.mxu0
        %v1421 = vadd.f32 %v1402, %v1420
        %v1422 = vpop.f32.mrf.mxu0
        %v1423 = vadd.f32 %v1404, %v1422
        %1424 = vdwg.mxu0
        %1425 = vmatpush.bf16.msra.mxu0 %v1236
        %1426 = vmatpush.bf16.msra.mxu0 %v1232
        %1427 = vmatpush.bf16.msra.mxu0 %v1228
        %1428 = vmatpush.bf16.msra.mxu0 %v1224
        %1429 = vmatpush.bf16.msra.mxu0 %v1220
        %1430 = vmatpush.bf16.msra.mxu0 %v1216
        %1431 = vmatpush.bf16.msra.mxu0 %v1212
        %1432 = vmatpush.bf16.msra.mxu0 %v1208
        %1433 = vmatmul.bf16.gmra.mxu0 %v715
        %v1434 = vpop.f32.mrf.mxu0
        %v1435 = vadd.f32 %v1416, %v1434
        %v1436 = vpop.f32.mrf.mxu0
        %v1437 = vadd.f32 %v1418, %v1436
        %1438 = vmatmul.bf16.gmra.mxu0 %v719
        %v1439 = vpop.f32.mrf.mxu0
        %v1440 = vadd.f32 %v1421, %v1439
        %v1441 = vpop.f32.mrf.mxu0
        %v1442 = vadd.f32 %v1423, %v1441
        %1443 = vdwg.mxu0
        %1444 = vmatpush.bf16.msra.mxu0 %v1141
        %1445 = vmatpush.bf16.msra.mxu0 %v1137
        %1446 = vmatpush.bf16.msra.mxu0 %v1133
        %1447 = vmatpush.bf16.msra.mxu0 %v1129
        %1448 = vmatpush.bf16.msra.mxu0 %v1125
        %1449 = vmatpush.bf16.msra.mxu0 %v1121
        %1450 = vmatpush.bf16.msra.mxu0 %v1117
        %1451 = vmatpush.bf16.msra.mxu0 %v1113
        %1452 = vmatmul.bf16.gmra.mxu0 %v712
        %v1453 = vpop.f32.mrf.mxu0
        %v1454 = vadd.f32 0.0, %v1453
        %v1455 = vpop.f32.mrf.mxu0
        %v1456 = vadd.f32 0.0, %v1455
        %1457 = vmatmul.bf16.gmra.mxu0 %v716
        %v1458 = vpop.f32.mrf.mxu0
        %v1459 = vadd.f32 0.0, %v1458
        %v1460 = vpop.f32.mrf.mxu0
        %v1461 = vadd.f32 0.0, %v1460
        %1462 = vdwg.mxu0
        %1463 = vmatpush.bf16.msra.mxu0 %v1173
        %1464 = vmatpush.bf16.msra.mxu0 %v1169
        %1465 = vmatpush.bf16.msra.mxu0 %v1165
        %1466 = vmatpush.bf16.msra.mxu0 %v1161
        %1467 = vmatpush.bf16.msra.mxu0 %v1157
        %1468 = vmatpush.bf16.msra.mxu0 %v1153
        %1469 = vmatpush.bf16.msra.mxu0 %v1149
        %1470 = vmatpush.bf16.msra.mxu0 %v1145
        %1471 = vmatmul.bf16.gmra.mxu0 %v713
        %v1472 = vpop.f32.mrf.mxu0
        %v1473 = vadd.f32 %v1454, %v1472
        %v1474 = vpop.f32.mrf.mxu0
        %v1475 = vadd.f32 %v1456, %v1474
        %1476 = vmatmul.bf16.gmra.mxu0 %v717
        %v1477 = vpop.f32.mrf.mxu0
        %v1478 = vadd.f32 %v1459, %v1477
        %v1479 = vpop.f32.mrf.mxu0
        %v1480 = vadd.f32 %v1461, %v1479
        %1481 = vdwg.mxu0
        %1482 = vmatpush.bf16.msra.mxu0 %v1205
        %1483 = vmatpush.bf16.msra.mxu0 %v1201
        %1484 = vmatpush.bf16.msra.mxu0 %v1197
        %1485 = vmatpush.bf16.msra.mxu0 %v1193
        %1486 = vmatpush.bf16.msra.mxu0 %v1189
        %1487 = vmatpush.bf16.msra.mxu0 %v1185
        %1488 = vmatpush.bf16.msra.mxu0 %v1181
        %1489 = vmatpush.bf16.msra.mxu0 %v1177
        %1490 = vmatmul.bf16.gmra.mxu0 %v714
        %v1491 = vpop.f32.mrf.mxu0
        %v1492 = vadd.f32 %v1473, %v1491
        %v1493 = vpop.f32.mrf.mxu0
        %v1494 = vadd.f32 %v1475, %v1493
        %1495 = vmatmul.bf16.gmra.mxu0 %v718
        %v1496 = vpop.f32.mrf.mxu0
        %v1497 = vadd.f32 %v1478, %v1496
        %v1498 = vpop.f32.mrf.mxu0
        %v1499 = vadd.f32 %v1480, %v1498
        %1500 = vdwg.mxu0
        %1501 = vmatpush.bf16.msra.mxu0 %v1237
        %1502 = vmatpush.bf16.msra.mxu0 %v1233
        %1503 = vmatpush.bf16.msra.mxu0 %v1229
        %1504 = vmatpush.bf16.msra.mxu0 %v1225
        %1505 = vmatpush.bf16.msra.mxu0 %v1221
        %1506 = vmatpush.bf16.msra.mxu0 %v1217
        %1507 = vmatpush.bf16.msra.mxu0 %v1213
        %1508 = vmatpush.bf16.msra.mxu0 %v1209
        %1509 = vmatmul.bf16.gmra.mxu0 %v715
        %v1510 = vpop.f32.mrf.mxu0
        %v1511 = vadd.f32 %v1492, %v1510
        %v1512 = vpop.f32.mrf.mxu0
        %v1513 = vadd.f32 %v1494, %v1512
        %1514 = vmatmul.bf16.gmra.mxu0 %v719
        %v1515 = vpop.f32.mrf.mxu0
        %v1516 = vadd.f32 %v1497, %v1515
        %v1517 = vpop.f32.mrf.mxu0
        %v1518 = vadd.f32 %v1499, %v1517
        %1519 = vdwg.mxu0
        %1520 = vmatpush.bf16.msra.mxu0 %v1142
        %1521 = vmatpush.bf16.msra.mxu0 %v1138
        %1522 = vmatpush.bf16.msra.mxu0 %v1134
        %1523 = vmatpush.bf16.msra.mxu0 %v1130
        %1524 = vmatpush.bf16.msra.mxu0 %v1126
        %1525 = vmatpush.bf16.msra.mxu0 %v1122
        %1526 = vmatpush.bf16.msra.mxu0 %v1118
        %1527 = vmatpush.bf16.msra.mxu0 %v1114
        %1528 = vmatmul.bf16.gmra.mxu0 %v712
        %v1529 = vpop.f32.mrf.mxu0
        %v1530 = vadd.f32 0.0, %v1529
        %v1531 = vpop.f32.mrf.mxu0
        %v1532 = vadd.f32 0.0, %v1531
        %1533 = vmatmul.bf16.gmra.mxu0 %v716
        %v1534 = vpop.f32.mrf.mxu0
        %v1535 = vadd.f32 0.0, %v1534
        %v1536 = vpop.f32.mrf.mxu0
        %v1537 = vadd.f32 0.0, %v1536
        %1538 = vdwg.mxu0
        %1539 = vmatpush.bf16.msra.mxu0 %v1174
        %1540 = vmatpush.bf16.msra.mxu0 %v1170
        %1541 = vmatpush.bf16.msra.mxu0 %v1166
        %1542 = vmatpush.bf16.msra.mxu0 %v1162
        %1543 = vmatpush.bf16.msra.mxu0 %v1158
        %1544 = vmatpush.bf16.msra.mxu0 %v1154
        %1545 = vmatpush.bf16.msra.mxu0 %v1150
        %1546 = vmatpush.bf16.msra.mxu0 %v1146
        %1547 = vmatmul.bf16.gmra.mxu0 %v713
        %v1548 = vpop.f32.mrf.mxu0
        %v1549 = vadd.f32 %v1530, %v1548
        %v1550 = vpop.f32.mrf.mxu0
        %v1551 = vadd.f32 %v1532, %v1550
        %1552 = vmatmul.bf16.gmra.mxu0 %v717
        %v1553 = vpop.f32.mrf.mxu0
        %v1554 = vadd.f32 %v1535, %v1553
        %v1555 = vpop.f32.mrf.mxu0
        %v1556 = vadd.f32 %v1537, %v1555
        %1557 = vdwg.mxu0
        %1558 = vmatpush.bf16.msra.mxu0 %v1206
        %1559 = vmatpush.bf16.msra.mxu0 %v1202
        %1560 = vmatpush.bf16.msra.mxu0 %v1198
        %1561 = vmatpush.bf16.msra.mxu0 %v1194
        %1562 = vmatpush.bf16.msra.mxu0 %v1190
        %1563 = vmatpush.bf16.msra.mxu0 %v1186
        %1564 = vmatpush.bf16.msra.mxu0 %v1182
        %1565 = vmatpush.bf16.msra.mxu0 %v1178
        %1566 = vmatmul.bf16.gmra.mxu0 %v714
        %v1567 = vpop.f32.mrf.mxu0
        %v1568 = vadd.f32 %v1549, %v1567
        %v1569 = vpop.f32.mrf.mxu0
        %v1570 = vadd.f32 %v1551, %v1569
        %1571 = vmatmul.bf16.gmra.mxu0 %v718
        %v1572 = vpop.f32.mrf.mxu0
        %v1573 = vadd.f32 %v1554, %v1572
        %v1574 = vpop.f32.mrf.mxu0
        %v1575 = vadd.f32 %v1556, %v1574
        %1576 = vdwg.mxu0
        %1577 = vmatpush.bf16.msra.mxu0 %v1238
        %1578 = vmatpush.bf16.msra.mxu0 %v1234
        %1579 = vmatpush.bf16.msra.mxu0 %v1230
        %1580 = vmatpush.bf16.msra.mxu0 %v1226
        %1581 = vmatpush.bf16.msra.mxu0 %v1222
        %1582 = vmatpush.bf16.msra.mxu0 %v1218
        %1583 = vmatpush.bf16.msra.mxu0 %v1214
        %1584 = vmatpush.bf16.msra.mxu0 %v1210
        %1585 = vmatmul.bf16.gmra.mxu0 %v715
        %v1586 = vpop.f32.mrf.mxu0
        %v1587 = vadd.f32 %v1568, %v1586
        %v1588 = vpop.f32.mrf.mxu0
        %v1589 = vadd.f32 %v1570, %v1588
        %1590 = vmatmul.bf16.gmra.mxu0 %v719
        %v1591 = vpop.f32.mrf.mxu0
        %v1592 = vadd.f32 %v1573, %v1591
        %v1593 = vpop.f32.mrf.mxu0
        %v1594 = vadd.f32 %v1575, %v1593
        %1595 = vdwg.mxu0
        %1596 = vmatpush.bf16.msra.mxu0 %v1143
        %1597 = vmatpush.bf16.msra.mxu0 %v1139
        %1598 = vmatpush.bf16.msra.mxu0 %v1135
        %1599 = vmatpush.bf16.msra.mxu0 %v1131
        %1600 = vmatpush.bf16.msra.mxu0 %v1127
        %1601 = vmatpush.bf16.msra.mxu0 %v1123
        %1602 = vmatpush.bf16.msra.mxu0 %v1119
        %1603 = vmatpush.bf16.msra.mxu0 %v1115
        %1604 = vmatmul.bf16.gmra.mxu0 %v712
        %v1605 = vpop.f32.mrf.mxu0
        %v1606 = vadd.f32 0.0, %v1605
        %v1607 = vpop.f32.mrf.mxu0
        %v1608 = vadd.f32 0.0, %v1607
        %1609 = vmatmul.bf16.gmra.mxu0 %v716
        %v1610 = vpop.f32.mrf.mxu0
        %v1611 = vadd.f32 0.0, %v1610
        %v1612 = vpop.f32.mrf.mxu0
        %v1613 = vadd.f32 0.0, %v1612
        %1614 = vdwg.mxu0
        %1615 = vmatpush.bf16.msra.mxu0 %v1175
        %1616 = vmatpush.bf16.msra.mxu0 %v1171
        %1617 = vmatpush.bf16.msra.mxu0 %v1167
        %1618 = vmatpush.bf16.msra.mxu0 %v1163
        %1619 = vmatpush.bf16.msra.mxu0 %v1159
        %1620 = vmatpush.bf16.msra.mxu0 %v1155
        %1621 = vmatpush.bf16.msra.mxu0 %v1151
        %1622 = vmatpush.bf16.msra.mxu0 %v1147
        %1623 = vmatmul.bf16.gmra.mxu0 %v713
        %v1624 = vpop.f32.mrf.mxu0
        %v1625 = vadd.f32 %v1606, %v1624
        %v1626 = vpop.f32.mrf.mxu0
        %v1627 = vadd.f32 %v1608, %v1626
        %1628 = vmatmul.bf16.gmra.mxu0 %v717
        %v1629 = vpop.f32.mrf.mxu0
        %v1630 = vadd.f32 %v1611, %v1629
        %v1631 = vpop.f32.mrf.mxu0
        %v1632 = vadd.f32 %v1613, %v1631
        %1633 = vdwg.mxu0
        %1634 = vmatpush.bf16.msra.mxu0 %v1207
        %1635 = vmatpush.bf16.msra.mxu0 %v1203
        %1636 = vmatpush.bf16.msra.mxu0 %v1199
        %1637 = vmatpush.bf16.msra.mxu0 %v1195
        %1638 = vmatpush.bf16.msra.mxu0 %v1191
        %1639 = vmatpush.bf16.msra.mxu0 %v1187
        %1640 = vmatpush.bf16.msra.mxu0 %v1183
        %1641 = vmatpush.bf16.msra.mxu0 %v1179
        %1642 = vmatmul.bf16.gmra.mxu0 %v714
        %v1643 = vpop.f32.mrf.mxu0
        %v1644 = vadd.f32 %v1625, %v1643
        %v1645 = vpop.f32.mrf.mxu0
        %v1646 = vadd.f32 %v1627, %v1645
        %1647 = vmatmul.bf16.gmra.mxu0 %v718
        %v1648 = vpop.f32.mrf.mxu0
        %v1649 = vadd.f32 %v1630, %v1648
        %v1650 = vpop.f32.mrf.mxu0
        %v1651 = vadd.f32 %v1632, %v1650
        %1652 = vdwg.mxu0
        %1653 = vmatpush.bf16.msra.mxu0 %v1239
        %1654 = vmatpush.bf16.msra.mxu0 %v1235
        %1655 = vmatpush.bf16.msra.mxu0 %v1231
        %1656 = vmatpush.bf16.msra.mxu0 %v1227
        %1657 = vmatpush.bf16.msra.mxu0 %v1223
        %1658 = vmatpush.bf16.msra.mxu0 %v1219
        %1659 = vmatpush.bf16.msra.mxu0 %v1215
        %1660 = vmatpush.bf16.msra.mxu0 %v1211
        %1661 = vmatmul.bf16.gmra.mxu0 %v715
        %v1662 = vpop.f32.mrf.mxu0
        %v1663 = vadd.f32 %v1644, %v1662
        %v1664 = vpop.f32.mrf.mxu0
        %v1665 = vadd.f32 %v1646, %v1664
        %1666 = vmatmul.bf16.gmra.mxu0 %v719
        %v1667 = vpop.f32.mrf.mxu0
        %v1668 = vadd.f32 %v1649, %v1667
        %v1669 = vpop.f32.mrf.mxu0
        %v1670 = vadd.f32 %v1651, %v1669
        %1671 = vdwg.mxu0
        %v1672 = vld [vmem:[%s542] sm:$0xff]
        %v1673 = vld [vmem:[%s542 + $0x8] sm:$0xff]
        %v1674 = vld [vmem:[%s542 + $0x10] sm:$0xff]
        %v1675 = vld [vmem:[%s542 + $0x18] sm:$0xff]
        %1677 = vset.pattern.permute.xlu0 0
        %1678 = vperm.xlu0 %1677, %v1672
        %v1679 = vpop.permute.xlu0 %1678
        %1682 = vset.pattern.permute.xlu0 0
        %1683 = vperm.xlu0 %1682, %v1673
        %v1684 = vpop.permute.xlu0 %1683
        %1687 = vset.pattern.permute.xlu0 0
        %1688 = vperm.xlu0 %1687, %v1674
        %v1689 = vpop.permute.xlu0 %1688
        %1692 = vset.pattern.permute.xlu0 0
        %1693 = vperm.xlu0 %1692, %v1675
        %v1694 = vpop.permute.xlu0 %1693
        %v1696 = vmul.f32 %v1435, %v1679
        %v1697 = vmul.f32 %v1511, %v1679
        %v1698 = vmul.f32 %v1587, %v1679
        %v1699 = vmul.f32 %v1663, %v1679
        %v1700 = vmul.f32 %v1437, %v1684
        %v1701 = vmul.f32 %v1513, %v1684
        %v1702 = vmul.f32 %v1589, %v1684
        %v1703 = vmul.f32 %v1665, %v1684
        %v1704 = vmul.f32 %v1440, %v1689
        %v1705 = vmul.f32 %v1516, %v1689
        %v1706 = vmul.f32 %v1592, %v1689
        %v1707 = vmul.f32 %v1668, %v1689
        %v1708 = vmul.f32 %v1442, %v1694
        %v1709 = vmul.f32 %v1518, %v1694
        %v1710 = vmul.f32 %v1594, %v1694
        %v1711 = vmul.f32 %v1670, %v1694
        %v1712 = vld [vmem:[%s548] sm:$0xff]
        %v1713 = vld [vmem:[%s548 + $0x8] sm:$0xff]
        %v1714 = vld [vmem:[%s548 + $0x10] sm:$0xff]
        %v1715 = vld [vmem:[%s548 + $0x18] sm:$0xff]
        %1717 = vset.pattern.permute.xlu0 0
        %1718 = vperm.xlu0 %1717, %v1712
        %v1719 = vpop.permute.xlu0 %1718
        %1722 = vset.pattern.permute.xlu0 0
        %1723 = vperm.xlu0 %1722, %v1713
        %v1724 = vpop.permute.xlu0 %1723
        %1727 = vset.pattern.permute.xlu0 0
        %1728 = vperm.xlu0 %1727, %v1714
        %v1729 = vpop.permute.xlu0 %1728
        %1732 = vset.pattern.permute.xlu0 0
        %1733 = vperm.xlu0 %1732, %v1715
        %v1734 = vpop.permute.xlu0 %1733
        %v1736 = vadd.f32 %v1696, %v1719
        %v1737 = vadd.f32 %v1697, %v1719
        %v1738 = vadd.f32 %v1698, %v1719
        %v1739 = vadd.f32 %v1699, %v1719
        %v1740 = vadd.f32 %v1700, %v1724
        %v1741 = vadd.f32 %v1701, %v1724
        %v1742 = vadd.f32 %v1702, %v1724
        %v1743 = vadd.f32 %v1703, %v1724
        %v1744 = vadd.f32 %v1704, %v1729
        %v1745 = vadd.f32 %v1705, %v1729
        %v1746 = vadd.f32 %v1706, %v1729
        %v1747 = vadd.f32 %v1707, %v1729
        %v1748 = vadd.f32 %v1708, %v1734
        %v1749 = vadd.f32 %v1709, %v1734
        %v1750 = vadd.f32 %v1710, %v1734
        %v1751 = vadd.f32 %v1711, %v1734
        %v1752 = vmax.f32 %v1736, 0.0
        %v1753 = vmax.f32 %v1737, 0.0
        %v1754 = vmax.f32 %v1738, 0.0
        %v1755 = vmax.f32 %v1739, 0.0
        %v1756 = vmax.f32 %v1740, 0.0
        %v1757 = vmax.f32 %v1741, 0.0
        %v1758 = vmax.f32 %v1742, 0.0
        %v1759 = vmax.f32 %v1743, 0.0
        %v1760 = vmax.f32 %v1744, 0.0
        %v1761 = vmax.f32 %v1745, 0.0
        %v1762 = vmax.f32 %v1746, 0.0
        %v1763 = vmax.f32 %v1747, 0.0
        %v1764 = vmax.f32 %v1748, 0.0
        %v1765 = vmax.f32 %v1749, 0.0
        %v1766 = vmax.f32 %v1750, 0.0
        %v1767 = vmax.f32 %v1751, 0.0
        %v1768 = vpack.c.bf16 %v1753, %v1752
        %v1769 = vpack.c.bf16 %v1755, %v1754
        %v1770 = vpack.c.bf16 %v1757, %v1756
        %v1771 = vpack.c.bf16 %v1759, %v1758
        %v1772 = vpack.c.bf16 %v1761, %v1760
        %v1773 = vpack.c.bf16 %v1763, %v1762
        %v1774 = vpack.c.bf16 %v1765, %v1764
        %v1775 = vpack.c.bf16 %v1767, %v1766
        %1776 = vst [vmem:[%s529] sm:$0xff] %v1768
        %1777 = vst [vmem:[%s529 + $0x8] sm:$0xff] %v1769
        %1778 = vst [vmem:[%s529 + $0x10] sm:$0xff] %v1770
        %1779 = vst [vmem:[%s529 + $0x18] sm:$0xff] %v1771
        %1780 = vst [vmem:[%s529 + $0x20] sm:$0xff] %v1772
        %1781 = vst [vmem:[%s529 + $0x28] sm:$0xff] %v1773
        %1782 = vst [vmem:[%s529 + $0x30] sm:$0xff] %v1774
        %1783 = vst [vmem:[%s529 + $0x38] sm:$0xff] %v1775
        %s1784 = sand.u32 %s141, 1
        %s1785 = sand.u32 %s141, 1
        %s1786 = smul.addr %s1785, 64
        %s1787 = scalar_lea.vmem [#allocation3], %s1786
        // Predicated region
        $region60: #{forward.13} parent=54 // pred_check
          %p1788 = pneg %p151
        $region61: #{forward.13} parent=54 // pred_check_branch
          %1790 = sbr.rel (%p1788) target = $region63
        $region62: #{forward.13} parent=54 // pred_region
          %s1791 = smul.u32 4, %s19
          %s1792 = smul.u32 4, %s20
          %s1793 = smul.addr %s1791, 8
          %s1794 = sadd.s32 %s1792, %s1793
          %s1795 = smul.addr %s1794, 4
          %s1796 = scalar_lea.vmem %s4, %s1795
          // Predicated region
          $region64: #{forward.13} parent=62 // pred_check
            _
          $region65: #{forward.13} parent=62 // pred_check_branch
            %1798 = sbr.rel (0) target = $region67
          $region66: #{forward.13} parent=62 // pred_region
            // Predicated region
            $region68: #{forward.13} parent=66 // pred_check
              _
            $region69: #{forward.13} parent=66 // pred_check_branch
              %1800 = sbr.rel (0) target = $region71
            $region70: #{forward.13} parent=66 // pred_region
              loop: start=0, step=1, limit=1
              $region72: #{forward.13} parent=70 // loop_pre_header
                _
              $region73: #{forward.13} parent=70 // loop_header
                %s1802 = sphi 0, %s1806
                %p1803 = scmp.ge.s32.totalorder %s1802, 1
                %s1807 = sphi %s1787, %s1787
                %s1808 = sphi %s1796, %s1796
              $region74: #{forward.13} parent=70 // loop_header_branch
                %1805 = sbr.rel (%p1803) target = $region78
              $region75: #{forward.13} parent=70 // loop_body
                %v1809 = vld [vmem:[%s1807] sm:$0xff]
                %1810 = vst [vmem:[%s1808] sm:$0xff] %v1809
                %v1811 = vld [vmem:[%s1807 + $0x8] sm:$0xff]
                %1812 = vst [vmem:[%s1808 + $0x8] sm:$0xff] %v1811
                %v1813 = vld [vmem:[%s1807 + $0x10] sm:$0xff]
                %1814 = vst [vmem:[%s1808 + $0x20] sm:$0xff] %v1813
                %v1815 = vld [vmem:[%s1807 + $0x18] sm:$0xff]
                %1816 = vst [vmem:[%s1808 + $0x28] sm:$0xff] %v1815
                %v1817 = vld [vmem:[%s1807 + $0x20] sm:$0xff]
                %1818 = vst [vmem:[%s1808 + $0x40] sm:$0xff] %v1817
                %v1819 = vld [vmem:[%s1807 + $0x28] sm:$0xff]
                %1820 = vst [vmem:[%s1808 + $0x48] sm:$0xff] %v1819
                %v1821 = vld [vmem:[%s1807 + $0x30] sm:$0xff]
                %1822 = vst [vmem:[%s1808 + $0x60] sm:$0xff] %v1821
                %v1823 = vld [vmem:[%s1807 + $0x38] sm:$0xff]
                %1824 = vst [vmem:[%s1808 + $0x68] sm:$0xff] %v1823
              $region76: #{forward.13} parent=70 // loop_footer
                %s1806 = sadd.s32 1, %s1802
              $region77: #{forward.13} parent=70 // loop_footer_branch
                %1801 = sbr.rel target = $region73
              $region78: #{forward.13} parent=70 // loop_exit
                _
            $region71: #{forward.13} parent=66 // pred_fallthru
              _
            // Predicated region
            $region79: #{forward.13} parent=66 // pred_check
              _
            $region80: #{forward.13} parent=66 // pred_check_branch
              %1826 = sbr.rel target = $region82
            $region81: #{forward.13} parent=66 // pred_region
              _
            $region82: #{forward.13} parent=66 // pred_fallthru
              _
          $region67: #{forward.13} parent=62 // pred_fallthru
            _
          %1827 = vnop
        $region63: #{forward.13} parent=54 // pred_fallthru
          _
      $region55: #{forward.13} parent=5 // pred_fallthru
        _
      %p1828 = scmp.le.s32.totalorder 2, %s10
      // Predicated region
      $region83: #{forward.13} parent=5 // pred_check
        %p1829 = pneg %p1828
      $region84: #{forward.13} parent=5 // pred_check_branch
        %1831 = sbr.rel (%p1829) target = $region86
      $region85: #{forward.13} parent=5 // pred_region
        %s1832 = ssub.s32 %s10, 2
        // Predicated region
        $region87: #{forward.13} parent=85 // pred_check
          %p1833 = pneg %p157
        $region88: #{forward.13} parent=85 // pred_check_branch
          %1835 = sbr.rel (%p1833) target = $region90
        $region89: #{forward.13} parent=85 // pred_region
          %s1836 = sand.u32 %s142, 1
          %s1837 = sand.u32 %s142, 1
          %s1838 = smul.addr %s1837, 64
          %s1839 = scalar_lea.vmem [#allocation3], %s1838
        $region90: #{forward.13} parent=85 // pred_fallthru
          _
      $region86: #{forward.13} parent=5 // pred_fallthru
        _
    $region6: #{forward.13} parent=1 // loop_footer
      %s14 = sadd.s32 1, %s10
    $region7: #{forward.13} parent=1 // loop_footer_branch
      %9 = sbr.rel target = $region3
    $region8: #{forward.13} parent=1 // loop_exit
      _

// kernel: forward.14
$region0: #{forward.14}
  #allocation0 [shape = 'u32[]', space=smem, size = 0x4, offset = 0x4, fixed_abs, tag = 'smem constant byte address 0x4 - core index']
  #allocation1 [shape = 'u32[72,128]{1,0:T(1,128)}', space=vmem, size = 0x9000, scoped, tag = 'internal scratch']
  %s0 = inlined_call_operand.vmem [shape: bf16[16,128], index: 0, kind: input, shape index: {}]
  %s1 = inlined_call_operand.vmem [shape: bf16[128,2048], index: 1, kind: input, shape index: {}]
  %s2 = inlined_call_operand.vmem [shape: f32[16,1], index: 2, kind: input, shape index: {}]
  %s3 = inlined_call_operand.vmem [shape: f32[16,1], index: 3, kind: input, shape index: {}]
  %s4 = inlined_call_operand.vmem [shape: bf16[16,2048], index: 4, kind: output, shape index: {}]
  %s5 = sld [smem:[#allocation0]]
  $region91: #{forward.14} parent=0
    _
  %s7 = ssub.s32 1, %s5
  %s8 = scalar_select 0, %s7, %s5
  $region1: #{forward.14} parent=0
    #allocation2 [shape = 'u8[262144]{0}', space=vmem, size = 0x40000, scoped, tag = 'input window, operand 1']
    #allocation3 [shape = 'u8[32768]{0}', space=vmem, size = 0x8000, scoped, tag = 'output window, operand 0']
    loop: start=0, step=1, limit=6
    $region2: #{forward.14} parent=1 // loop_pre_header
      _
    $region3: #{forward.14} parent=1 // loop_header
      %s10 = sphi 0, %s14
      %p11 = scmp.ge.s32.totalorder %s10, 6
      %s17 = sphi 0, %s29
      %s18 = sphi 0, %s25
      %s19 = sphi 0, %s17
      %s20 = sphi 0, %s18
      %s21 = sphi 0, %s19
      %s22 = sphi 0, %s20
      %s32 = sphi 0, %s34
      %s35 = sphi 0, %s32
      %s36 = sphi 0, %s35
      %s52 = sphi 0, %s36
      %s58 = sphi 0, %s60
      %s61 = sphi 0, %s58
      %s62 = sphi 0, %s61
      %s78 = sphi 0, %s62
      %s84 = sphi 0, %s86
      %s87 = sphi 0, %s84
      %s88 = sphi 0, %s87
      %s104 = sphi 0, %s88
      %s110 = sphi 0, %s112
      %s113 = sphi 0, %s110
      %s114 = sphi 0, %s113
      %s130 = sphi 0, %s114
      %s138 = sphi 0, %s140
      %s141 = sphi 0, %s138
      %s142 = sphi 0, %s141
      %s158 = sphi 0, %s142
    $region4: #{forward.14} parent=1 // loop_header_branch
      %13 = sbr.rel (%p11) target = $region8
    $region5: #{forward.14} parent=1 // loop_body
      %s15 = ssub.s32 %s10, 1
      %s16 = ssub.s32 %s10, 2
      %s23 = sadd.s32 1, %s18
      %p24 = scmp.ge.s32.totalorder %s23, 4
      %s25 = scalar_select %p24, 0, %s23
      %s26 = sadd.s32 1, %s17
      %s27 = scalar_select %p24, %s26, %s17
      %p28 = scmp.ge.s32.totalorder %s27, 1
      %s29 = scalar_select %p28, 0, %s27
      %s30 = ssub.s32 %s17, %s29
      %p31 = scmp.eq.s32.totalorder %s30, 0
      %s33 = sadd.s32 %s32, 1
      %s34 = scalar_select %p31, %s32, %s33
      %p37 = pneg %p31
      %p38 = scmp.eq.s32.totalorder %s10, 3
      %p39 = por %p37, %p38
      %p40 = scmp.ne.s32.totalorder %s32, %s35
      %p41 = scmp.eq.s32.totalorder %s10, 0
      %p42 = por %p40, %p41
      %p43 = scmp.ne.s32.totalorder %s32, %s35
      %p44 = scmp.eq.s32.totalorder %s15, 3
      %p45 = por %p43, %p44
      %p46 = scmp.ne.s32.totalorder %s35, %s36
      %p47 = scmp.eq.s32.totalorder %s15, 0
      %p48 = por %p46, %p47
      %p49 = scmp.ne.s32.totalorder %s35, %s36
      %p50 = scmp.eq.s32.totalorder %s16, 3
      %p51 = por %p49, %p50
      %p53 = scmp.ne.s32.totalorder %s36, %s52
      %p54 = scmp.eq.s32.totalorder %s16, 0
      %p55 = por %p53, %p54
      %s56 = ssub.s32 %s18, %s25
      %p57 = scmp.eq.s32.totalorder %s56, 0
      %s59 = sadd.s32 %s58, 1
      %s60 = scalar_select %p57, %s58, %s59
      %p63 = pneg %p57
      %p64 = scmp.eq.s32.totalorder %s10, 3
      %p65 = por %p63, %p64
      %p66 = scmp.ne.s32.totalorder %s58, %s61
      %p67 = scmp.eq.s32.totalorder %s10, 0
      %p68 = por %p66, %p67
      %p69 = scmp.ne.s32.totalorder %s58, %s61
      %p70 = scmp.eq.s32.totalorder %s15, 3
      %p71 = por %p69, %p70
      %p72 = scmp.ne.s32.totalorder %s61, %s62
      %p73 = scmp.eq.s32.totalorder %s15, 0
      %p74 = por %p72, %p73
      %p75 = scmp.ne.s32.totalorder %s61, %s62
      %p76 = scmp.eq.s32.totalorder %s16, 3
      %p77 = por %p75, %p76
      %p79 = scmp.ne.s32.totalorder %s62, %s78
      %p80 = scmp.eq.s32.totalorder %s16, 0
      %p81 = por %p79, %p80
      %s82 = ssub.s32 %s17, %s29
      %p83 = scmp.eq.s32.totalorder %s82, 0
      %s85 = sadd.s32 %s84, 1
      %s86 = scalar_select %p83, %s84, %s85
      %p89 = pneg %p83
      %p90 = scmp.eq.s32.totalorder %s10, 3
      %p91 = por %p89, %p90
      %p92 = scmp.ne.s32.totalorder %s84, %s87
      %p93 = scmp.eq.s32.totalorder %s10, 0
      %p94 = por %p92, %p93
      %p95 = scmp.ne.s32.totalorder %s84, %s87
      %p96 = scmp.eq.s32.totalorder %s15, 3
      %p97 = por %p95, %p96
      %p98 = scmp.ne.s32.totalorder %s87, %s88
      %p99 = scmp.eq.s32.totalorder %s15, 0
      %p100 = por %p98, %p99
      %p101 = scmp.ne.s32.totalorder %s87, %s88
      %p102 = scmp.eq.s32.totalorder %s16, 3
      %p103 = por %p101, %p102
      %p105 = scmp.ne.s32.totalorder %s88, %s104
      %p106 = scmp.eq.s32.totalorder %s16, 0
      %p107 = por %p105, %p106
      %s108 = ssub.s32 %s17, %s29
      %p109 = scmp.eq.s32.totalorder %s108, 0
      %s111 = sadd.s32 %s110, 1
      %s112 = scalar_select %p109, %s110, %s111
      %p115 = pneg %p109
      %p116 = scmp.eq.s32.totalorder %s10, 3
      %p117 = por %p115, %p116
      %p118 = scmp.ne.s32.totalorder %s110, %s113
      %p119 = scmp.eq.s32.totalorder %s10, 0
      %p120 = por %p118, %p119
      %p121 = scmp.ne.s32.totalorder %s110, %s113
      %p122 = scmp.eq.s32.totalorder %s15, 3
      %p123 = por %p121, %p122
      %p124 = scmp.ne.s32.totalorder %s113, %s114
      %p125 = scmp.eq.s32.totalorder %s15, 0
      %p126 = por %p124, %p125
      %p127 = scmp.ne.s32.totalorder %s113, %s114
      %p128 = scmp.eq.s32.totalorder %s16, 3
      %p129 = por %p127, %p128
      %p131 = scmp.ne.s32.totalorder %s114, %s130
      %p132 = scmp.eq.s32.totalorder %s16, 0
      %p133 = por %p131, %p132
      %s134 = ssub.s32 %s17, %s29
      %s135 = ssub.s32 %s18, %s25
      %s136 = sor.u32 %s134, %s135
      %p137 = scmp.eq.s32.totalorder %s136, 0
      %s139 = sadd.s32 %s138, 1
      %s140 = scalar_select %p137, %s138, %s139
      %p143 = pneg %p137
      %p144 = scmp.eq.s32.totalorder %s10, 3
      %p145 = por %p143, %p144
      %p146 = scmp.ne.s32.totalorder %s138, %s141
      %p147 = scmp.eq.s32.totalorder %s10, 0
      %p148 = por %p146, %p147
      %p149 = scmp.ne.s32.totalorder %s138, %s141
      %p150 = scmp.eq.s32.totalorder %s15, 3
      %p151 = por %p149, %p150
      %p152 = scmp.ne.s32.totalorder %s141, %s142
      %p153 = scmp.eq.s32.totalorder %s15, 0
      %p154 = por %p152, %p153
      %p155 = scmp.ne.s32.totalorder %s141, %s142
      %p156 = scmp.eq.s32.totalorder %s16, 3
      %p157 = por %p155, %p156
      %p159 = scmp.ne.s32.totalorder %s142, %s158
      %p160 = scmp.eq.s32.totalorder %s16, 0
      %p161 = por %p159, %p160
      %p162 = scmp.le.s32.totalorder 1, %s10
      %p163 = scmp.lt.s32.totalorder %s10, 5
      %p164 = pnand %p162, %p163
      %p165 = pneg %p164
      // Predicated region
      $region9: #{forward.14} parent=5 // pred_check
        _
      $region10: #{forward.14} parent=5 // pred_check_branch
        %167 = sbr.rel (%p164) target = $region12
      $region11: #{forward.14} parent=5 // pred_region
        %s168 = ssub.s32 %s10, 1
        // Predicated region
        $region13: #{forward.14} parent=11 // pred_check
          %p169 = pneg %p48
        $region14: #{forward.14} parent=11 // pred_check_branch
          %171 = sbr.rel (%p169) target = $region16
        $region15: #{forward.14} parent=11 // pred_region
          %s172 = smul.u32 2, %s19
          %p173 = scmp.lt.s32.totalorder %s172, 1
          %s174 = scalar_select %p173, %s172, 1
          %s175 = smul.addr %s174, 4
          %s176 = scalar_lea.vmem %s0, %s175
          %s177 = smul.u32 2, %s19
        $region16: #{forward.14} parent=11 // pred_fallthru
          _
        // Predicated region
        $region17: #{forward.14} parent=11 // pred_check
          %p178 = pneg %p100
        $region18: #{forward.14} parent=11 // pred_check_branch
          %180 = sbr.rel (%p178) target = $region20
        $region19: #{forward.14} parent=11 // pred_region
          %s181 = smul.u32 2, %s19
          %p182 = scmp.lt.s32.totalorder %s181, 1
          %s183 = scalar_select %p182, %s181, 1
          %s184 = smul.addr %s183, 8
          %s185 = scalar_lea.vmem %s2, %s184
          %s186 = smul.u32 2, %s19
        $region20: #{forward.14} parent=11 // pred_fallthru
          _
        // Predicated region
        $region21: #{forward.14} parent=11 // pred_check
          %p187 = pneg %p126
        $region22: #{forward.14} parent=11 // pred_check_branch
          %189 = sbr.rel (%p187) target = $region24
        $region23: #{forward.14} parent=11 // pred_region
          %s190 = smul.u32 2, %s19
          %p191 = scmp.lt.s32.totalorder %s190, 1
          %s192 = scalar_select %p191, %s190, 1
          %s193 = smul.addr %s192, 8
          %s194 = scalar_lea.vmem %s3, %s193
          %s195 = smul.u32 2, %s19
        $region24: #{forward.14} parent=11 // pred_fallthru
          _
      $region12: #{forward.14} parent=5 // pred_fallthru
        _
      %p196 = scmp.lt.s32.totalorder %s10, 4
      // Predicated region
      $region25: #{forward.14} parent=5 // pred_check
        %p197 = pneg %p196
      $region26: #{forward.14} parent=5 // pred_check_branch
        %199 = sbr.rel (%p197) target = $region28
      $region27: #{forward.14} parent=5 // pred_region
        // Predicated region
        $region29: #{forward.14} parent=27 // pred_check
          %p200 = pneg %p68
        $region30: #{forward.14} parent=27 // pred_check_branch
          %202 = sbr.rel (%p200) target = $region32
        $region31: #{forward.14} parent=27 // pred_region
          %s203 = sand.u32 %s58, 1
          %s204 = sand.u32 %s58, 1
          %s205 = smul.addr %s204, 256
          %s206 = scalar_lea.vmem [#allocation2], %s205
          %s207 = smul.u32 4, %s18
          %s208 = smul.addr %s207, 4
          %s209 = scalar_lea.vmem %s1, %s208
          // Predicated region
          $region33: #{forward.14} parent=31 // pred_check
            _
          $region34: #{forward.14} parent=31 // pred_check_branch
            %211 = sbr.rel (0) target = $region36
          $region35: #{forward.14} parent=31 // pred_region
            // Predicated region
            $region37: #{forward.14} parent=35 // pred_check
              _
            $region38: #{forward.14} parent=35 // pred_check_branch
              %213 = sbr.rel (0) target = $region40
            $region39: #{forward.14} parent=35 // pred_region
              loop: start=0, step=1, limit=1
              $region41: #{forward.14} parent=39 // loop_pre_header
                _
              $region42: #{forward.14} parent=39 // loop_header
                %s215 = sphi 0, %s219
                %p216 = scmp.ge.s32.totalorder %s215, 1
                %s220 = sphi %s209, %s209
                %s221 = sphi %s206, %s206
              $region43: #{forward.14} parent=39 // loop_header_branch
                %218 = sbr.rel (%p216) target = $region47
              $region44: #{forward.14} parent=39 // loop_body
                %v222 = vld [vmem:[%s220] sm:$0xff]
                %223 = vst [vmem:[%s221] sm:$0xff] %v222
                %v224 = vld [vmem:[%s220 + $0x8] sm:$0xff]
                %225 = vst [vmem:[%s221 + $0x8] sm:$0xff] %v224
                %v226 = vld [vmem:[%s220 + $0x40] sm:$0xff]
                %227 = vst [vmem:[%s221 + $0x10] sm:$0xff] %v226
                %v228 = vld [vmem:[%s220 + $0x48] sm:$0xff]
                %229 = vst [vmem:[%s221 + $0x18] sm:$0xff] %v228
                %v230 = vld [vmem:[%s220 + $0x80] sm:$0xff]
                %231 = vst [vmem:[%s221 + $0x20] sm:$0xff] %v230
                %v232 = vld [vmem:[%s220 + $0x88] sm:$0xff]
                %233 = vst [vmem:[%s221 + $0x28] sm:$0xff] %v232
                %v234 = vld [vmem:[%s220 + $0xc0] sm:$0xff]
                %235 = vst [vmem:[%s221 + $0x30] sm:$0xff] %v234
                %v236 = vld [vmem:[%s220 + $0xc8] sm:$0xff]
                %237 = vst [vmem:[%s221 + $0x38] sm:$0xff] %v236
                %v238 = vld [vmem:[%s220 + $0x100] sm:$0xff]
                %239 = vst [vmem:[%s221 + $0x40] sm:$0xff] %v238
                %v240 = vld [vmem:[%s220 + $0x108] sm:$0xff]
                %241 = vst [vmem:[%s221 + $0x48] sm:$0xff] %v240
                %v242 = vld [vmem:[%s220 + $0x140] sm:$0xff]
                %243 = vst [vmem:[%s221 + $0x50] sm:$0xff] %v242
                %v244 = vld [vmem:[%s220 + $0x148] sm:$0xff]
                %245 = vst [vmem:[%s221 + $0x58] sm:$0xff] %v244
                %v246 = vld [vmem:[%s220 + $0x180] sm:$0xff]
                %247 = vst [vmem:[%s221 + $0x60] sm:$0xff] %v246
                %v248 = vld [vmem:[%s220 + $0x188] sm:$0xff]
                %249 = vst [vmem:[%s221 + $0x68] sm:$0xff] %v248
                %v250 = vld [vmem:[%s220 + $0x1c0] sm:$0xff]
                %251 = vst [vmem:[%s221 + $0x70] sm:$0xff] %v250
                %v252 = vld [vmem:[%s220 + $0x1c8] sm:$0xff]
                %253 = vst [vmem:[%s221 + $0x78] sm:$0xff] %v252
                %v254 = vld [vmem:[%s220 + $0x200] sm:$0xff]
                %255 = vst [vmem:[%s221 + $0x80] sm:$0xff] %v254
                %v256 = vld [vmem:[%s220 + $0x208] sm:$0xff]
                %257 = vst [vmem:[%s221 + $0x88] sm:$0xff] %v256
                %v258 = vld [vmem:[%s220 + $0x240] sm:$0xff]
                %259 = vst [vmem:[%s221 + $0x90] sm:$0xff] %v258
                %v260 = vld [vmem:[%s220 + $0x248] sm:$0xff]
                %261 = vst [vmem:[%s221 + $0x98] sm:$0xff] %v260
                %v262 = vld [vmem:[%s220 + $0x280] sm:$0xff]
                %263 = vst [vmem:[%s221 + $0xa0] sm:$0xff] %v262
                %v264 = vld [vmem:[%s220 + $0x288] sm:$0xff]
                %265 = vst [vmem:[%s221 + $0xa8] sm:$0xff] %v264
                %v266 = vld [vmem:[%s220 + $0x2c0] sm:$0xff]
                %267 = vst [vmem:[%s221 + $0xb0] sm:$0xff] %v266
                %v268 = vld [vmem:[%s220 + $0x2c8] sm:$0xff]
                %269 = vst [vmem:[%s221 + $0xb8] sm:$0xff] %v268
                %v270 = vld [vmem:[%s220 + $0x300] sm:$0xff]
                %271 = vst [vmem:[%s221 + $0xc0] sm:$0xff] %v270
                %v272 = vld [vmem:[%s220 + $0x308] sm:$0xff]
                %273 = vst [vmem:[%s221 + $0xc8] sm:$0xff] %v272
                %v274 = vld [vmem:[%s220 + $0x340] sm:$0xff]
                %275 = vst [vmem:[%s221 + $0xd0] sm:$0xff] %v274
                %v276 = vld [vmem:[%s220 + $0x348] sm:$0xff]
                %277 = vst [vmem:[%s221 + $0xd8] sm:$0xff] %v276
                %v278 = vld [vmem:[%s220 + $0x380] sm:$0xff]
                %279 = vst [vmem:[%s221 + $0xe0] sm:$0xff] %v278
                %v280 = vld [vmem:[%s220 + $0x388] sm:$0xff]
                %281 = vst [vmem:[%s221 + $0xe8] sm:$0xff] %v280
                %v282 = vld [vmem:[%s220 + $0x3c0] sm:$0xff]
                %283 = vst [vmem:[%s221 + $0xf0] sm:$0xff] %v282
                %v284 = vld [vmem:[%s220 + $0x3c8] sm:$0xff]
                %285 = vst [vmem:[%s221 + $0xf8] sm:$0xff] %v284
              $region45: #{forward.14} parent=39 // loop_footer
                %s219 = sadd.s32 1, %s215
              $region46: #{forward.14} parent=39 // loop_footer_branch
                %214 = sbr.rel target = $region42
              $region47: #{forward.14} parent=39 // loop_exit
                _
            $region40: #{forward.14} parent=35 // pred_fallthru
              _
            // Predicated region
            $region48: #{forward.14} parent=35 // pred_check
              _
            $region49: #{forward.14} parent=35 // pred_check_branch
              %287 = sbr.rel target = $region51
            $region50: #{forward.14} parent=35 // pred_region
              _
            $region51: #{forward.14} parent=35 // pred_fallthru
              _
          $region36: #{forward.14} parent=31 // pred_fallthru
            _
          %288 = vnop
        $region32: #{forward.14} parent=27 // pred_fallthru
          _
      $region28: #{forward.14} parent=5 // pred_fallthru
        _
      %p289 = scmp.le.s32.totalorder 1, %s10
      %p290 = scmp.lt.s32.totalorder %s10, 5
      %p291 = pnand %p289, %p290
      %p292 = pneg %p291
      // Predicated region
      $region52: #{forward.14} parent=5 // pred_check
        _
      $region53: #{forward.14} parent=5 // pred_check_branch
        %294 = sbr.rel (%p291) target = $region55
      $region54: #{forward.14} parent=5 // pred_region
        %s295 = ssub.s32 %s10, 1
        %s296 = sand.u32 %s61, 1
        %s297 = sand.u32 %s61, 1
        %s298 = smul.addr %s297, 256
        %s299 = scalar_lea.vmem [#allocation2], %s298
        // Predicated region
        $region56: #{forward.14} parent=54 // pred_check
          %p300 = pneg %p74
        $region57: #{forward.14} parent=54 // pred_check_branch
          %302 = sbr.rel (%p300) target = $region59
        $region58: #{forward.14} parent=54 // pred_region
          _
        $region59: #{forward.14} parent=54 // pred_fallthru
          _
        %s303 = smul.u32 2, %s19
        %p304 = scmp.lt.s32.totalorder %s303, 1
        %s305 = scalar_select %p304, %s303, 1
        %s306 = smul.addr %s305, 4
        %s307 = scalar_lea.vmem %s0, %s306
        %p308 = pneg %p48
        %p309 = pneg %p45
        %s310 = sand.u32 %s61, 1
        %s311 = sand.u32 %s61, 1
        %s312 = smul.addr %s311, 256
        %s313 = scalar_lea.vmem [#allocation2], %s312
        %p314 = pneg %p74
        %p315 = pneg %p71
        %s316 = smul.u32 2, %s19
        %p317 = scmp.lt.s32.totalorder %s316, 1
        %s318 = scalar_select %p317, %s316, 1
        %s319 = smul.addr %s318, 8
        %s320 = scalar_lea.vmem %s2, %s319
        %p321 = pneg %p100
        %p322 = pneg %p97
        %s323 = smul.u32 2, %s19
        %p324 = scmp.lt.s32.totalorder %s323, 1
        %s325 = scalar_select %p324, %s323, 1
        %s326 = smul.addr %s325, 8
        %s327 = scalar_lea.vmem %s3, %s326
        %p328 = pneg %p126
        %p329 = pneg %p123
        %p330 = pneg %p154
        %p331 = pneg %p151
        %s332 = sand.u32 %s141, 1
        %s333 = sand.u32 %s141, 1
        %s334 = smul.addr %s333, 32
        %s335 = scalar_lea.vmem [#allocation3], %s334
        %s336 = smul.u32 2, %s19
        %p337 = scmp.lt.s32.totalorder %s336, 1
        %s338 = scalar_select %p337, %s336, 1
        %s339 = smul.addr %s338, 4
        %s340 = scalar_lea.vmem %s0, %s339
        %s341 = smul.u32 2, %s19
        %s342 = smul.u32 4, %s20
        %s343 = smul.u32 2, %s19
        %p344 = scmp.lt.s32.totalorder %s343, 1
        %s345 = scalar_select %p344, %s343, 1
        %s346 = smul.addr %s345, 8
        %s347 = scalar_lea.vmem %s2, %s346
        %s348 = smul.u32 2, %s19
        %s349 = smul.u32 2, %s19
        %p350 = scmp.lt.s32.totalorder %s349, 1
        %s351 = scalar_select %p350, %s349, 1
        %s352 = smul.addr %s351, 8
        %s353 = scalar_lea.vmem %s3, %s352
        %s354 = smul.u32 2, %s19
        %s355 = smul.u32 2, %s19
        %s356 = smul.u32 4, %s20
        %v357 = vld [vmem:[%s340] sm:$0xf]
        %v358 = vld [vmem:[%s340 + $0x4] sm:$0xf]
        %v359 = vld [vmem:[%s299] sm:$0xff]
        %v360 = vld [vmem:[%s299 + $0x8] sm:$0xff]
        %v361 = vld [vmem:[%s299 + $0x10] sm:$0xff]
        %v362 = vld [vmem:[%s299 + $0x18] sm:$0xff]
        %v363 = vld [vmem:[%s299 + $0x20] sm:$0xff]
        %v364 = vld [vmem:[%s299 + $0x28] sm:$0xff]
        %v365 = vld [vmem:[%s299 + $0x30] sm:$0xff]
        %v366 = vld [vmem:[%s299 + $0x38] sm:$0xff]
        %v367 = vld [vmem:[%s299 + $0x40] sm:$0xff]
        %v368 = vld [vmem:[%s299 + $0x48] sm:$0xff]
        %v369 = vld [vmem:[%s299 + $0x50] sm:$0xff]
        %v370 = vld [vmem:[%s299 + $0x58] sm:$0xff]
        %v371 = vld [vmem:[%s299 + $0x60] sm:$0xff]
        %v372 = vld [vmem:[%s299 + $0x68] sm:$0xff]
        %v373 = vld [vmem:[%s299 + $0x70] sm:$0xff]
        %v374 = vld [vmem:[%s299 + $0x78] sm:$0xff]
        %v375 = vld [vmem:[%s299 + $0x80] sm:$0xff]
        %v376 = vld [vmem:[%s299 + $0x88] sm:$0xff]
        %v377 = vld [vmem:[%s299 + $0x90] sm:$0xff]
        %v378 = vld [vmem:[%s299 + $0x98] sm:$0xff]
        %v379 = vld [vmem:[%s299 + $0xa0] sm:$0xff]
        %v380 = vld [vmem:[%s299 + $0xa8] sm:$0xff]
        %v381 = vld [vmem:[%s299 + $0xb0] sm:$0xff]
        %v382 = vld [vmem:[%s299 + $0xb8] sm:$0xff]
        %v383 = vld [vmem:[%s299 + $0xc0] sm:$0xff]
        %v384 = vld [vmem:[%s299 + $0xc8] sm:$0xff]
        %v385 = vld [vmem:[%s299 + $0xd0] sm:$0xff]
        %v386 = vld [vmem:[%s299 + $0xd8] sm:$0xff]
        %v387 = vld [vmem:[%s299 + $0xe0] sm:$0xff]
        %v388 = vld [vmem:[%s299 + $0xe8] sm:$0xff]
        %v389 = vld [vmem:[%s299 + $0xf0] sm:$0xff]
        %v390 = vld [vmem:[%s299 + $0xf8] sm:$0xff]
        %v393 = vunpack.c.l.b16 %v357
        %v394 = vunpack.c.l.b16 %v358
        %v395 = vpack.c.b16 %v394, %v393
        %v429 = vunpack.c.l.b16 %v359
        %v430 = vunpack.c.h.b16 %v359
        %v431 = vunpack.c.l.b16 %v360
        %v432 = vunpack.c.h.b16 %v360
        %v433 = vunpack.c.l.b16 %v361
        %v434 = vunpack.c.h.b16 %v361
        %v435 = vunpack.c.l.b16 %v362
        %v436 = vunpack.c.h.b16 %v362
        %v437 = vunpack.c.l.b16 %v363
        %v438 = vunpack.c.h.b16 %v363
        %v439 = vunpack.c.l.b16 %v364
        %v440 = vunpack.c.h.b16 %v364
        %v441 = vunpack.c.l.b16 %v365
        %v442 = vunpack.c.h.b16 %v365
        %v443 = vunpack.c.l.b16 %v366
        %v444 = vunpack.c.h.b16 %v366
        %v445 = vunpack.c.l.b16 %v367
        %v446 = vunpack.c.h.b16 %v367
        %v447 = vunpack.c.l.b16 %v368
        %v448 = vunpack.c.h.b16 %v368
        %v449 = vunpack.c.l.b16 %v369
        %v450 = vunpack.c.h.b16 %v369
        %v451 = vunpack.c.l.b16 %v370
        %v452 = vunpack.c.h.b16 %v370
        %v453 = vunpack.c.l.b16 %v371
        %v454 = vunpack.c.h.b16 %v371
        %v455 = vunpack.c.l.b16 %v372
        %v456 = vunpack.c.h.b16 %v372
        %v457 = vunpack.c.l.b16 %v373
        %v458 = vunpack.c.h.b16 %v373
        %v459 = vunpack.c.l.b16 %v374
        %v460 = vunpack.c.h.b16 %v374
        %v461 = vunpack.c.l.b16 %v375
        %v462 = vunpack.c.h.b16 %v375
        %v463 = vunpack.c.l.b16 %v376
        %v464 = vunpack.c.h.b16 %v376
        %v465 = vunpack.c.l.b16 %v377
        %v466 = vunpack.c.h.b16 %v377
        %v467 = vunpack.c.l.b16 %v378
        %v468 = vunpack.c.h.b16 %v378
        %v469 = vunpack.c.l.b16 %v379
        %v470 = vunpack.c.h.b16 %v379
        %v471 = vunpack.c.l.b16 %v380
        %v472 = vunpack.c.h.b16 %v380
        %v473 = vunpack.c.l.b16 %v381
        %v474 = vunpack.c.h.b16 %v381
        %v475 = vunpack.c.l.b16 %v382
        %v476 = vunpack.c.h.b16 %v382
        %v477 = vunpack.c.l.b16 %v383
        %v478 = vunpack.c.h.b16 %v383
        %v479 = vunpack.c.l.b16 %v384
        %v480 = vunpack.c.h.b16 %v384
        %v481 = vunpack.c.l.b16 %v385
        %v482 = vunpack.c.h.b16 %v385
        %v483 = vunpack.c.l.b16 %v386
        %v484 = vunpack.c.h.b16 %v386
        %v485 = vunpack.c.l.b16 %v387
        %v486 = vunpack.c.h.b16 %v387
        %v487 = vunpack.c.l.b16 %v388
        %v488 = vunpack.c.h.b16 %v388
        %v489 = vunpack.c.l.b16 %v389
        %v490 = vunpack.c.h.b16 %v389
        %v491 = vunpack.c.l.b16 %v390
        %v492 = vunpack.c.h.b16 %v390
        %v493 = vpack.c.b16 %v433, %v429
        %v494 = vpack.c.b16 %v434, %v430
        %v495 = vpack.c.b16 %v435, %v431
        %v496 = vpack.c.b16 %v436, %v432
        %v497 = vpack.c.b16 %v441, %v437
        %v498 = vpack.c.b16 %v442, %v438
        %v499 = vpack.c.b16 %v443, %v439
        %v500 = vpack.c.b16 %v444, %v440
        %v501 = vpack.c.b16 %v449, %v445
        %v502 = vpack.c.b16 %v450, %v446
        %v503 = vpack.c.b16 %v451, %v447
        %v504 = vpack.c.b16 %v452, %v448
        %v505 = vpack.c.b16 %v457, %v453
        %v506 = vpack.c.b16 %v458, %v454
        %v507 = vpack.c.b16 %v459, %v455
        %v508 = vpack.c.b16 %v460, %v456
        %v509 = vpack.c.b16 %v465, %v461
        %v510 = vpack.c.b16 %v466, %v462
        %v511 = vpack.c.b16 %v467, %v463
        %v512 = vpack.c.b16 %v468, %v464
        %v513 = vpack.c.b16 %v473, %v469
        %v514 = vpack.c.b16 %v474, %v470
        %v515 = vpack.c.b16 %v475, %v471
        %v516 = vpack.c.b16 %v476, %v472
        %v517 = vpack.c.b16 %v481, %v477
        %v518 = vpack.c.b16 %v482, %v478
        %v519 = vpack.c.b16 %v483, %v479
        %v520 = vpack.c.b16 %v484, %v480
        %v521 = vpack.c.b16 %v489, %v485
        %v522 = vpack.c.b16 %v490, %v486
        %v523 = vpack.c.b16 %v491, %v487
        %v524 = vpack.c.b16 %v492, %v488
        %557 = vmatpush.bf16.msra.mxu0 %v521
        %558 = vmatpush.bf16.msra.mxu0 %v517
        %559 = vmatpush.bf16.msra.mxu0 %v513
        %560 = vmatpush.bf16.msra.mxu0 %v509
        %561 = vmatpush.bf16.msra.mxu0 %v505
        %562 = vmatpush.bf16.msra.mxu0 %v501
        %563 = vmatpush.bf16.msra.mxu0 %v497
        %564 = vmatpush.bf16.msra.mxu0 %v493
        %565 = vmatmul.bf16.gmra.mxu0 %v395
        %v566 = vpop.f32.mrf.mxu0
        %v567 = vadd.f32 0.0, %v566
        %v568 = vpop.f32.mrf.mxu0
        %v569 = vadd.f32 0.0, %v568
        %570 = vdwg.mxu0
        %571 = vmatpush.bf16.msra.mxu0 %v522
        %572 = vmatpush.bf16.msra.mxu0 %v518
        %573 = vmatpush.bf16.msra.mxu0 %v514
        %574 = vmatpush.bf16.msra.mxu0 %v510
        %575 = vmatpush.bf16.msra.mxu0 %v506
        %576 = vmatpush.bf16.msra.mxu0 %v502
        %577 = vmatpush.bf16.msra.mxu0 %v498
        %578 = vmatpush.bf16.msra.mxu0 %v494
        %579 = vmatmul.bf16.gmra.mxu0 %v395
        %v580 = vpop.f32.mrf.mxu0
        %v581 = vadd.f32 0.0, %v580
        %v582 = vpop.f32.mrf.mxu0
        %v583 = vadd.f32 0.0, %v582
        %584 = vdwg.mxu0
        %585 = vmatpush.bf16.msra.mxu0 %v523
        %586 = vmatpush.bf16.msra.mxu0 %v519
        %587 = vmatpush.bf16.msra.mxu0 %v515
        %588 = vmatpush.bf16.msra.mxu0 %v511
        %589 = vmatpush.bf16.msra.mxu0 %v507
        %590 = vmatpush.bf16.msra.mxu0 %v503
        %591 = vmatpush.bf16.msra.mxu0 %v499
        %592 = vmatpush.bf16.msra.mxu0 %v495
        %593 = vmatmul.bf16.gmra.mxu0 %v395
        %v594 = vpop.f32.mrf.mxu0
        %v595 = vadd.f32 0.0, %v594
        %v596 = vpop.f32.mrf.mxu0
        %v597 = vadd.f32 0.0, %v596
        %598 = vdwg.mxu0
        %599 = vmatpush.bf16.msra.mxu0 %v524
        %600 = vmatpush.bf16.msra.mxu0 %v520
        %601 = vmatpush.bf16.msra.mxu0 %v516
        %602 = vmatpush.bf16.msra.mxu0 %v512
        %603 = vmatpush.bf16.msra.mxu0 %v508
        %604 = vmatpush.bf16.msra.mxu0 %v504
        %605 = vmatpush.bf16.msra.mxu0 %v500
        %606 = vmatpush.bf16.msra.mxu0 %v496
        %607 = vmatmul.bf16.gmra.mxu0 %v395
        %v608 = vpop.f32.mrf.mxu0
        %v609 = vadd.f32 0.0, %v608
        %v610 = vpop.f32.mrf.mxu0
        %v611 = vadd.f32 0.0, %v610
        %612 = vdwg.mxu0
        %v613 = vld [vmem:[%s347] sm:$0xff]
        %v614 = vld [vmem:[%s347 + $0x8] sm:$0xff]
        %616 = vset.pattern.permute.xlu0 0
        %617 = vperm.xlu0 %616, %v613
        %v618 = vpop.permute.xlu0 %617
        %621 = vset.pattern.permute.xlu0 0
        %622 = vperm.xlu0 %621, %v614
        %v623 = vpop.permute.xlu0 %622
        %v625 = vmul.f32 %v567, %v618
        %v626 = vmul.f32 %v581, %v618
        %v627 = vmul.f32 %v595, %v618
        %v628 = vmul.f32 %v609, %v618
        %v629 = vmul.f32 %v569, %v623
        %v630 = vmul.f32 %v583, %v623
        %v631 = vmul.f32 %v597, %v623
        %v632 = vmul.f32 %v611, %v623
        %v633 = vld [vmem:[%s353] sm:$0xff]
        %v634 = vld [vmem:[%s353 + $0x8] sm:$0xff]
        %636 = vset.pattern.permute.xlu0 0
        %637 = vperm.xlu0 %636, %v633
        %v638 = vpop.permute.xlu0 %637
        %641 = vset.pattern.permute.xlu0 0
        %642 = vperm.xlu0 %641, %v634
        %v643 = vpop.permute.xlu0 %642
        %v645 = vadd.f32 %v625, %v638
        %v646 = vadd.f32 %v626, %v638
        %v647 = vadd.f32 %v627, %v638
        %v648 = vadd.f32 %v628, %v638
        %v649 = vadd.f32 %v629, %v643
        %v650 = vadd.f32 %v630, %v643
        %v651 = vadd.f32 %v631, %v643
        %v652 = vadd.f32 %v632, %v643
        %v653 = vmax.f32 %v645, 0.0
        %v654 = vmax.f32 %v646, 0.0
        %v655 = vmax.f32 %v647, 0.0
        %v656 = vmax.f32 %v648, 0.0
        %v657 = vmax.f32 %v649, 0.0
        %v658 = vmax.f32 %v650, 0.0
        %v659 = vmax.f32 %v651, 0.0
        %v660 = vmax.f32 %v652, 0.0
        %v661 = vpack.c.bf16 %v654, %v653
        %v662 = vpack.c.bf16 %v656, %v655
        %v663 = vpack.c.bf16 %v658, %v657
        %v664 = vpack.c.bf16 %v660, %v659
        %665 = vst [vmem:[%s335] sm:$0xff] %v661
        %666 = vst [vmem:[%s335 + $0x8] sm:$0xff] %v662
        %667 = vst [vmem:[%s335 + $0x10] sm:$0xff] %v663
        %668 = vst [vmem:[%s335 + $0x18] sm:$0xff] %v664
        %s669 = sand.u32 %s141, 1
        %s670 = sand.u32 %s141, 1
        %s671 = smul.addr %s670, 32
        %s672 = scalar_lea.vmem [#allocation3], %s671
        // Predicated region
        $region60: #{forward.14} parent=54 // pred_check
          %p673 = pneg %p151
        $region61: #{forward.14} parent=54 // pred_check_branch
          %675 = sbr.rel (%p673) target = $region63
        $region62: #{forward.14} parent=54 // pred_region
          %s676 = smul.u32 2, %s19
          %s677 = smul.u32 4, %s20
          %s678 = smul.addr %s676, 16
          %s679 = sadd.s32 %s677, %s678
          %s680 = smul.addr %s679, 4
          %s681 = scalar_lea.vmem %s4, %s680
          // Predicated region
          $region64: #{forward.14} parent=62 // pred_check
            _
          $region65: #{forward.14} parent=62 // pred_check_branch
            %683 = sbr.rel (0) target = $region67
          $region66: #{forward.14} parent=62 // pred_region
            // Predicated region
            $region68: #{forward.14} parent=66 // pred_check
              _
            $region69: #{forward.14} parent=66 // pred_check_branch
              %685 = sbr.rel (0) target = $region71
            $region70: #{forward.14} parent=66 // pred_region
              loop: start=0, step=1, limit=1
              $region72: #{forward.14} parent=70 // loop_pre_header
                _
              $region73: #{forward.14} parent=70 // loop_header
                %s687 = sphi 0, %s691
                %p688 = scmp.ge.s32.totalorder %s687, 1
                %s692 = sphi %s672, %s672
                %s693 = sphi %s681, %s681
              $region74: #{forward.14} parent=70 // loop_header_branch
                %690 = sbr.rel (%p688) target = $region78
              $region75: #{forward.14} parent=70 // loop_body
                %v694 = vld [vmem:[%s692] sm:$0xff]
                %695 = vst [vmem:[%s693] sm:$0xff] %v694
                %v696 = vld [vmem:[%s692 + $0x8] sm:$0xff]
                %697 = vst [vmem:[%s693 + $0x8] sm:$0xff] %v696
                %v698 = vld [vmem:[%s692 + $0x10] sm:$0xff]
                %699 = vst [vmem:[%s693 + $0x40] sm:$0xff] %v698
                %v700 = vld [vmem:[%s692 + $0x18] sm:$0xff]
                %701 = vst [vmem:[%s693 + $0x48] sm:$0xff] %v700
              $region76: #{forward.14} parent=70 // loop_footer
                %s691 = sadd.s32 1, %s687
              $region77: #{forward.14} parent=70 // loop_footer_branch
                %686 = sbr.rel target = $region73
              $region78: #{forward.14} parent=70 // loop_exit
                _
            $region71: #{forward.14} parent=66 // pred_fallthru
              _
            // Predicated region
            $region79: #{forward.14} parent=66 // pred_check
              _
            $region80: #{forward.14} parent=66 // pred_check_branch
              %703 = sbr.rel target = $region82
            $region81: #{forward.14} parent=66 // pred_region
              _
            $region82: #{forward.14} parent=66 // pred_fallthru
              _
          $region67: #{forward.14} parent=62 // pred_fallthru
            _
          %704 = vnop
        $region63: #{forward.14} parent=54 // pred_fallthru
          _
      $region55: #{forward.14} parent=5 // pred_fallthru
        _
      %p705 = scmp.le.s32.totalorder 2, %s10
      // Predicated region
      $region83: #{forward.14} parent=5 // pred_check
        %p706 = pneg %p705
      $region84: #{forward.14} parent=5 // pred_check_branch
        %708 = sbr.rel (%p706) target = $region86
      $region85: #{forward.14} parent=5 // pred_region
        %s709 = ssub.s32 %s10, 2
        // Predicated region
        $region87: #{forward.14} parent=85 // pred_check
          %p710 = pneg %p157
        $region88: #{forward.14} parent=85 // pred_check_branch
          %712 = sbr.rel (%p710) target = $region90
        $region89: #{forward.14} parent=85 // pred_region
          %s713 = sand.u32 %s142, 1
          %s714 = sand.u32 %s142, 1
          %s715 = smul.addr %s714, 32
          %s716 = scalar_lea.vmem [#allocation3], %s715
        $region90: #{forward.14} parent=85 // pred_fallthru
          _
      $region86: #{forward.14} parent=5 // pred_fallthru
        _
    $region6: #{forward.14} parent=1 // loop_footer
      %s14 = sadd.s32 1, %s10
    $region7: #{forward.14} parent=1 // loop_footer_branch
      %9 = sbr.rel target = $region3
    $region8: #{forward.14} parent=1 // loop_exit
      _

// kernel: forward.17
$region0: #{forward.17}
  #allocation0 [shape = 'u32[]', space=smem, size = 0x4, offset = 0x4, fixed_abs, tag = 'smem constant byte address 0x4 - core index']
  #allocation1 [shape = 'u32[72,128]{1,0:T(1,128)}', space=vmem, size = 0x9000, scoped, tag = 'internal scratch']
  %s0 = inlined_call_operand.vmem [shape: bf16[16,128], index: 0, kind: input, shape index: {}]
  %s1 = inlined_call_operand.vmem [shape: bf16[128,14848], index: 1, kind: input, shape index: {}]
  %s2 = inlined_call_operand.vmem [shape: f32[16,1], index: 2, kind: input, shape index: {}]
  %s3 = inlined_call_operand.vmem [shape: f32[16,1], index: 3, kind: input, shape index: {}]
  %s4 = inlined_call_operand.vmem [shape: bf16[16,14848], index: 4, kind: output, shape index: {}]
  %s5 = sld [smem:[#allocation0]]
  $region91: #{forward.17} parent=0
    _
  %s7 = ssub.s32 1, %s5
  %s8 = scalar_select 0, %s7, %s5
  $region1: #{forward.17} parent=0
    #allocation2 [shape = 'u8[262144]{0}', space=vmem, size = 0x40000, scoped, tag = 'input window, operand 1']
    #allocation3 [shape = 'u8[32768]{0}', space=vmem, size = 0x8000, scoped, tag = 'output window, operand 0']
    loop: start=0, step=1, limit=31
    $region2: #{forward.17} parent=1 // loop_pre_header
      _
    $region3: #{forward.17} parent=1 // loop_header
      %s10 = sphi 0, %s14
      %p11 = scmp.ge.s32.totalorder %s10, 31
      %s17 = sphi 0, %s29
      %s18 = sphi 0, %s25
      %s19 = sphi 0, %s17
      %s20 = sphi 0, %s18
      %s21 = sphi 0, %s19
      %s22 = sphi 0, %s20
      %s32 = sphi 0, %s34
      %s35 = sphi 0, %s32
      %s36 = sphi 0, %s35
      %s52 = sphi 0, %s36
      %s58 = sphi 0, %s60
      %s61 = sphi 0, %s58
      %s62 = sphi 0, %s61
      %s78 = sphi 0, %s62
      %s84 = sphi 0, %s86
      %s87 = sphi 0, %s84
      %s88 = sphi 0, %s87
      %s104 = sphi 0, %s88
      %s110 = sphi 0, %s112
      %s113 = sphi 0, %s110
      %s114 = sphi 0, %s113
      %s130 = sphi 0, %s114
      %s138 = sphi 0, %s140
      %s141 = sphi 0, %s138
      %s142 = sphi 0, %s141
      %s158 = sphi 0, %s142
    $region4: #{forward.17} parent=1 // loop_header_branch
      %13 = sbr.rel (%p11) target = $region8
    $region5: #{forward.17} parent=1 // loop_body
      %s15 = ssub.s32 %s10, 1
      %s16 = ssub.s32 %s10, 2
      %s23 = sadd.s32 1, %s18
      %p24 = scmp.ge.s32.totalorder %s23, 29
      %s25 = scalar_select %p24, 0, %s23
      %s26 = sadd.s32 1, %s17
      %s27 = scalar_select %p24, %s26, %s17
      %p28 = scmp.ge.s32.totalorder %s27, 1
      %s29 = scalar_select %p28, 0, %s27
      %s30 = ssub.s32 %s17, %s29
      %p31 = scmp.eq.s32.totalorder %s30, 0
      %s33 = sadd.s32 %s32, 1
      %s34 = scalar_select %p31, %s32, %s33
      %p37 = pneg %p31
      %p38 = scmp.eq.s32.totalorder %s10, 28
      %p39 = por %p37, %p38
      %p40 = scmp.ne.s32.totalorder %s32, %s35
      %p41 = scmp.eq.s32.totalorder %s10, 0
      %p42 = por %p40, %p41
      %p43 = scmp.ne.s32.totalorder %s32, %s35
      %p44 = scmp.eq.s32.totalorder %s15, 28
      %p45 = por %p43, %p44
      %p46 = scmp.ne.s32.totalorder %s35, %s36
      %p47 = scmp.eq.s32.totalorder %s15, 0
      %p48 = por %p46, %p47
      %p49 = scmp.ne.s32.totalorder %s35, %s36
      %p50 = scmp.eq.s32.totalorder %s16, 28
      %p51 = por %p49, %p50
      %p53 = scmp.ne.s32.totalorder %s36, %s52
      %p54 = scmp.eq.s32.totalorder %s16, 0
      %p55 = por %p53, %p54
      %s56 = ssub.s32 %s18, %s25
      %p57 = scmp.eq.s32.totalorder %s56, 0
      %s59 = sadd.s32 %s58, 1
      %s60 = scalar_select %p57, %s58, %s59
      %p63 = pneg %p57
      %p64 = scmp.eq.s32.totalorder %s10, 28
      %p65 = por %p63, %p64
      %p66 = scmp.ne.s32.totalorder %s58, %s61
      %p67 = scmp.eq.s32.totalorder %s10, 0
      %p68 = por %p66, %p67
      %p69 = scmp.ne.s32.totalorder %s58, %s61
      %p70 = scmp.eq.s32.totalorder %s15, 28
      %p71 = por %p69, %p70
      %p72 = scmp.ne.s32.totalorder %s61, %s62
      %p73 = scmp.eq.s32.totalorder %s15, 0
      %p74 = por %p72, %p73
      %p75 = scmp.ne.s32.totalorder %s61, %s62
      %p76 = scmp.eq.s32.totalorder %s16, 28
      %p77 = por %p75, %p76
      %p79 = scmp.ne.s32.totalorder %s62, %s78
      %p80 = scmp.eq.s32.totalorder %s16, 0
      %p81 = por %p79, %p80
      %s82 = ssub.s32 %s17, %s29
      %p83 = scmp.eq.s32.totalorder %s82, 0
      %s85 = sadd.s32 %s84, 1
      %s86 = scalar_select %p83, %s84, %s85
      %p89 = pneg %p83
      %p90 = scmp.eq.s32.totalorder %s10, 28
      %p91 = por %p89, %p90
      %p92 = scmp.ne.s32.totalorder %s84, %s87
      %p93 = scmp.eq.s32.totalorder %s10, 0
      %p94 = por %p92, %p93
      %p95 = scmp.ne.s32.totalorder %s84, %s87
      %p96 = scmp.eq.s32.totalorder %s15, 28
      %p97 = por %p95, %p96
      %p98 = scmp.ne.s32.totalorder %s87, %s88
      %p99 = scmp.eq.s32.totalorder %s15, 0
      %p100 = por %p98, %p99
      %p101 = scmp.ne.s32.totalorder %s87, %s88
      %p102 = scmp.eq.s32.totalorder %s16, 28
      %p103 = por %p101, %p102
      %p105 = scmp.ne.s32.totalorder %s88, %s104
      %p106 = scmp.eq.s32.totalorder %s16, 0
      %p107 = por %p105, %p106
      %s108 = ssub.s32 %s17, %s29
      %p109 = scmp.eq.s32.totalorder %s108, 0
      %s111 = sadd.s32 %s110, 1
      %s112 = scalar_select %p109, %s110, %s111
      %p115 = pneg %p109
      %p116 = scmp.eq.s32.totalorder %s10, 28
      %p117 = por %p115, %p116
      %p118 = scmp.ne.s32.totalorder %s110, %s113
      %p119 = scmp.eq.s32.totalorder %s10, 0
      %p120 = por %p118, %p119
      %p121 = scmp.ne.s32.totalorder %s110, %s113
      %p122 = scmp.eq.s32.totalorder %s15, 28
      %p123 = por %p121, %p122
      %p124 = scmp.ne.s32.totalorder %s113, %s114
      %p125 = scmp.eq.s32.totalorder %s15, 0
      %p126 = por %p124, %p125
      %p127 = scmp.ne.s32.totalorder %s113, %s114
      %p128 = scmp.eq.s32.totalorder %s16, 28
      %p129 = por %p127, %p128
      %p131 = scmp.ne.s32.totalorder %s114, %s130
      %p132 = scmp.eq.s32.totalorder %s16, 0
      %p133 = por %p131, %p132
      %s134 = ssub.s32 %s17, %s29
      %s135 = ssub.s32 %s18, %s25
      %s136 = sor.u32 %s134, %s135
      %p137 = scmp.eq.s32.totalorder %s136, 0
      %s139 = sadd.s32 %s138, 1
      %s140 = scalar_select %p137, %s138, %s139
      %p143 = pneg %p137
      %p144 = scmp.eq.s32.totalorder %s10, 28
      %p145 = por %p143, %p144
      %p146 = scmp.ne.s32.totalorder %s138, %s141
      %p147 = scmp.eq.s32.totalorder %s10, 0
      %p148 = por %p146, %p147
      %p149 = scmp.ne.s32.totalorder %s138, %s141
      %p150 = scmp.eq.s32.totalorder %s15, 28
      %p151 = por %p149, %p150
      %p152 = scmp.ne.s32.totalorder %s141, %s142
      %p153 = scmp.eq.s32.totalorder %s15, 0
      %p154 = por %p152, %p153
      %p155 = scmp.ne.s32.totalorder %s141, %s142
      %p156 = scmp.eq.s32.totalorder %s16, 28
      %p157 = por %p155, %p156
      %p159 = scmp.ne.s32.totalorder %s142, %s158
      %p160 = scmp.eq.s32.totalorder %s16, 0
      %p161 = por %p159, %p160
      %p162 = scmp.le.s32.totalorder 1, %s10
      %p163 = scmp.lt.s32.totalorder %s10, 30
      %p164 = pnand %p162, %p163
      %p165 = pneg %p164
      // Predicated region
      $region9: #{forward.17} parent=5 // pred_check
        _
      $region10: #{forward.17} parent=5 // pred_check_branch
        %167 = sbr.rel (%p164) target = $region12
      $region11: #{forward.17} parent=5 // pred_region
        %s168 = ssub.s32 %s10, 1
        // Predicated region
        $region13: #{forward.17} parent=11 // pred_check
          %p169 = pneg %p48
        $region14: #{forward.17} parent=11 // pred_check_branch
          %171 = sbr.rel (%p169) target = $region16
        $region15: #{forward.17} parent=11 // pred_region
          %s172 = smul.u32 2, %s19
          %p173 = scmp.lt.s32.totalorder %s172, 1
          %s174 = scalar_select %p173, %s172, 1
          %s175 = smul.addr %s174, 4
          %s176 = scalar_lea.vmem %s0, %s175
          %s177 = smul.u32 2, %s19
        $region16: #{forward.17} parent=11 // pred_fallthru
          _
        // Predicated region
        $region17: #{forward.17} parent=11 // pred_check
          %p178 = pneg %p100
        $region18: #{forward.17} parent=11 // pred_check_branch
          %180 = sbr.rel (%p178) target = $region20
        $region19: #{forward.17} parent=11 // pred_region
          %s181 = smul.u32 2, %s19
          %p182 = scmp.lt.s32.totalorder %s181, 1
          %s183 = scalar_select %p182, %s181, 1
          %s184 = smul.addr %s183, 8
          %s185 = scalar_lea.vmem %s2, %s184
          %s186 = smul.u32 2, %s19
        $region20: #{forward.17} parent=11 // pred_fallthru
          _
        // Predicated region
        $region21: #{forward.17} parent=11 // pred_check
          %p187 = pneg %p126
        $region22: #{forward.17} parent=11 // pred_check_branch
          %189 = sbr.rel (%p187) target = $region24
        $region23: #{forward.17} parent=11 // pred_region
          %s190 = smul.u32 2, %s19
          %p191 = scmp.lt.s32.totalorder %s190, 1
          %s192 = scalar_select %p191, %s190, 1
          %s193 = smul.addr %s192, 8
          %s194 = scalar_lea.vmem %s3, %s193
          %s195 = smul.u32 2, %s19
        $region24: #{forward.17} parent=11 // pred_fallthru
          _
      $region12: #{forward.17} parent=5 // pred_fallthru
        _
      %p196 = scmp.lt.s32.totalorder %s10, 29
      // Predicated region
      $region25: #{forward.17} parent=5 // pred_check
        %p197 = pneg %p196
      $region26: #{forward.17} parent=5 // pred_check_branch
        %199 = sbr.rel (%p197) target = $region28
      $region27: #{forward.17} parent=5 // pred_region
        // Predicated region
        $region29: #{forward.17} parent=27 // pred_check
          %p200 = pneg %p68
        $region30: #{forward.17} parent=27 // pred_check_branch
          %202 = sbr.rel (%p200) target = $region32
        $region31: #{forward.17} parent=27 // pred_region
          %s203 = sand.u32 %s58, 1
          %s204 = sand.u32 %s58, 1
          %s205 = smul.addr %s204, 256
          %s206 = scalar_lea.vmem [#allocation2], %s205
          %s207 = smul.u32 4, %s18
          %s208 = smul.addr %s207, 4
          %s209 = scalar_lea.vmem %s1, %s208
          // Predicated region
          $region33: #{forward.17} parent=31 // pred_check
            _
          $region34: #{forward.17} parent=31 // pred_check_branch
            %211 = sbr.rel (0) target = $region36
          $region35: #{forward.17} parent=31 // pred_region
            // Predicated region
            $region37: #{forward.17} parent=35 // pred_check
              _
            $region38: #{forward.17} parent=35 // pred_check_branch
              %213 = sbr.rel (0) target = $region40
            $region39: #{forward.17} parent=35 // pred_region
              loop: start=0, step=1, limit=1
              $region41: #{forward.17} parent=39 // loop_pre_header
                _
              $region42: #{forward.17} parent=39 // loop_header
                %s215 = sphi 0, %s219
                %p216 = scmp.ge.s32.totalorder %s215, 1
                %s220 = sphi %s209, %s209
                %s221 = sphi %s206, %s206
              $region43: #{forward.17} parent=39 // loop_header_branch
                %218 = sbr.rel (%p216) target = $region47
              $region44: #{forward.17} parent=39 // loop_body
                %v222 = vld [vmem:[%s220] sm:$0xff]
                %223 = vst [vmem:[%s221] sm:$0xff] %v222
                %v224 = vld [vmem:[%s220 + $0x8] sm:$0xff]
                %225 = vst [vmem:[%s221 + $0x8] sm:$0xff] %v224
                %v226 = vld [vmem:[%s220 + $0x1d0] sm:$0xff]
                %227 = vst [vmem:[%s221 + $0x10] sm:$0xff] %v226
                %v228 = vld [vmem:[%s220 + $0x1d8] sm:$0xff]
                %229 = vst [vmem:[%s221 + $0x18] sm:$0xff] %v228
                %v230 = vld [vmem:[%s220 + $0x3a0] sm:$0xff]
                %231 = vst [vmem:[%s221 + $0x20] sm:$0xff] %v230
                %v232 = vld [vmem:[%s220 + $0x3a8] sm:$0xff]
                %233 = vst [vmem:[%s221 + $0x28] sm:$0xff] %v232
                %v234 = vld [vmem:[%s220 + $0x570] sm:$0xff]
                %235 = vst [vmem:[%s221 + $0x30] sm:$0xff] %v234
                %v236 = vld [vmem:[%s220 + $0x578] sm:$0xff]
                %237 = vst [vmem:[%s221 + $0x38] sm:$0xff] %v236
                %v238 = vld [vmem:[%s220 + $0x740] sm:$0xff]
                %239 = vst [vmem:[%s221 + $0x40] sm:$0xff] %v238
                %v240 = vld [vmem:[%s220 + $0x748] sm:$0xff]
                %241 = vst [vmem:[%s221 + $0x48] sm:$0xff] %v240
                %v242 = vld [vmem:[%s220 + $0x910] sm:$0xff]
                %243 = vst [vmem:[%s221 + $0x50] sm:$0xff] %v242
                %v244 = vld [vmem:[%s220 + $0x918] sm:$0xff]
                %245 = vst [vmem:[%s221 + $0x58] sm:$0xff] %v244
                %v246 = vld [vmem:[%s220 + $0xae0] sm:$0xff]
                %247 = vst [vmem:[%s221 + $0x60] sm:$0xff] %v246
                %v248 = vld [vmem:[%s220 + $0xae8] sm:$0xff]
                %249 = vst [vmem:[%s221 + $0x68] sm:$0xff] %v248
                %v250 = vld [vmem:[%s220 + $0xcb0] sm:$0xff]
                %251 = vst [vmem:[%s221 + $0x70] sm:$0xff] %v250
                %v252 = vld [vmem:[%s220 + $0xcb8] sm:$0xff]
                %253 = vst [vmem:[%s221 + $0x78] sm:$0xff] %v252
                %v254 = vld [vmem:[%s220 + $0xe80] sm:$0xff]
                %255 = vst [vmem:[%s221 + $0x80] sm:$0xff] %v254
                %v256 = vld [vmem:[%s220 + $0xe88] sm:$0xff]
                %257 = vst [vmem:[%s221 + $0x88] sm:$0xff] %v256
                %v258 = vld [vmem:[%s220 + $0x1050] sm:$0xff]
                %259 = vst [vmem:[%s221 + $0x90] sm:$0xff] %v258
                %v260 = vld [vmem:[%s220 + $0x1058] sm:$0xff]
                %261 = vst [vmem:[%s221 + $0x98] sm:$0xff] %v260
                %v262 = vld [vmem:[%s220 + $0x1220] sm:$0xff]
                %263 = vst [vmem:[%s221 + $0xa0] sm:$0xff] %v262
                %v264 = vld [vmem:[%s220 + $0x1228] sm:$0xff]
                %265 = vst [vmem:[%s221 + $0xa8] sm:$0xff] %v264
                %v266 = vld [vmem:[%s220 + $0x13f0] sm:$0xff]
                %267 = vst [vmem:[%s221 + $0xb0] sm:$0xff] %v266
                %v268 = vld [vmem:[%s220 + $0x13f8] sm:$0xff]
                %269 = vst [vmem:[%s221 + $0xb8] sm:$0xff] %v268
                %v270 = vld [vmem:[%s220 + $0x15c0] sm:$0xff]
                %271 = vst [vmem:[%s221 + $0xc0] sm:$0xff] %v270
                %v272 = vld [vmem:[%s220 + $0x15c8] sm:$0xff]
                %273 = vst [vmem:[%s221 + $0xc8] sm:$0xff] %v272
                %v274 = vld [vmem:[%s220 + $0x1790] sm:$0xff]
                %275 = vst [vmem:[%s221 + $0xd0] sm:$0xff] %v274
                %v276 = vld [vmem:[%s220 + $0x1798] sm:$0xff]
                %277 = vst [vmem:[%s221 + $0xd8] sm:$0xff] %v276
                %v278 = vld [vmem:[%s220 + $0x1960] sm:$0xff]
                %279 = vst [vmem:[%s221 + $0xe0] sm:$0xff] %v278
                %v280 = vld [vmem:[%s220 + $0x1968] sm:$0xff]
                %281 = vst [vmem:[%s221 + $0xe8] sm:$0xff] %v280
                %v282 = vld [vmem:[%s220 + $0x1b30] sm:$0xff]
                %283 = vst [vmem:[%s221 + $0xf0] sm:$0xff] %v282
                %v284 = vld [vmem:[%s220 + $0x1b38] sm:$0xff]
                %285 = vst [vmem:[%s221 + $0xf8] sm:$0xff] %v284
              $region45: #{forward.17} parent=39 // loop_footer
                %s219 = sadd.s32 1, %s215
              $region46: #{forward.17} parent=39 // loop_footer_branch
                %214 = sbr.rel target = $region42
              $region47: #{forward.17} parent=39 // loop_exit
                _
            $region40: #{forward.17} parent=35 // pred_fallthru
              _
            // Predicated region
            $region48: #{forward.17} parent=35 // pred_check
              _
            $region49: #{forward.17} parent=35 // pred_check_branch
              %287 = sbr.rel target = $region51
            $region50: #{forward.17} parent=35 // pred_region
              _
            $region51: #{forward.17} parent=35 // pred_fallthru
              _
          $region36: #{forward.17} parent=31 // pred_fallthru
            _
          %288 = vnop
        $region32: #{forward.17} parent=27 // pred_fallthru
          _
      $region28: #{forward.17} parent=5 // pred_fallthru
        _
      %p289 = scmp.le.s32.totalorder 1, %s10
      %p290 = scmp.lt.s32.totalorder %s10, 30
      %p291 = pnand %p289, %p290
      %p292 = pneg %p291
      // Predicated region
      $region52: #{forward.17} parent=5 // pred_check
        _
      $region53: #{forward.17} parent=5 // pred_check_branch
        %294 = sbr.rel (%p291) target = $region55
      $region54: #{forward.17} parent=5 // pred_region
        %s295 = ssub.s32 %s10, 1
        %s296 = sand.u32 %s61, 1
        %s297 = sand.u32 %s61, 1
        %s298 = smul.addr %s297, 256
        %s299 = scalar_lea.vmem [#allocation2], %s298
        // Predicated region
        $region56: #{forward.17} parent=54 // pred_check
          %p300 = pneg %p74
        $region57: #{forward.17} parent=54 // pred_check_branch
          %302 = sbr.rel (%p300) target = $region59
        $region58: #{forward.17} parent=54 // pred_region
          _
        $region59: #{forward.17} parent=54 // pred_fallthru
          _
        %s303 = smul.u32 2, %s19
        %p304 = scmp.lt.s32.totalorder %s303, 1
        %s305 = scalar_select %p304, %s303, 1
        %s306 = smul.addr %s305, 4
        %s307 = scalar_lea.vmem %s0, %s306
        %p308 = pneg %p48
        %p309 = pneg %p45
        %s310 = sand.u32 %s61, 1
        %s311 = sand.u32 %s61, 1
        %s312 = smul.addr %s311, 256
        %s313 = scalar_lea.vmem [#allocation2], %s312
        %p314 = pneg %p74
        %p315 = pneg %p71
        %s316 = smul.u32 2, %s19
        %p317 = scmp.lt.s32.totalorder %s316, 1
        %s318 = scalar_select %p317, %s316, 1
        %s319 = smul.addr %s318, 8
        %s320 = scalar_lea.vmem %s2, %s319
        %p321 = pneg %p100
        %p322 = pneg %p97
        %s323 = smul.u32 2, %s19
        %p324 = scmp.lt.s32.totalorder %s323, 1
        %s325 = scalar_select %p324, %s323, 1
        %s326 = smul.addr %s325, 8
        %s327 = scalar_lea.vmem %s3, %s326
        %p328 = pneg %p126
        %p329 = pneg %p123
        %p330 = pneg %p154
        %p331 = pneg %p151
        %s332 = sand.u32 %s141, 1
        %s333 = sand.u32 %s141, 1
        %s334 = smul.addr %s333, 32
        %s335 = scalar_lea.vmem [#allocation3], %s334
        %s336 = smul.u32 2, %s19
        %p337 = scmp.lt.s32.totalorder %s336, 1
        %s338 = scalar_select %p337, %s336, 1
        %s339 = smul.addr %s338, 4
        %s340 = scalar_lea.vmem %s0, %s339
        %s341 = smul.u32 2, %s19
        %s342 = smul.u32 4, %s20
        %s343 = smul.u32 2, %s19
        %p344 = scmp.lt.s32.totalorder %s343, 1
        %s345 = scalar_select %p344, %s343, 1
        %s346 = smul.addr %s345, 8
        %s347 = scalar_lea.vmem %s2, %s346
        %s348 = smul.u32 2, %s19
        %s349 = smul.u32 2, %s19
        %p350 = scmp.lt.s32.totalorder %s349, 1
        %s351 = scalar_select %p350, %s349, 1
        %s352 = smul.addr %s351, 8
        %s353 = scalar_lea.vmem %s3, %s352
        %s354 = smul.u32 2, %s19
        %s355 = smul.u32 2, %s19
        %s356 = smul.u32 4, %s20
        %v357 = vld [vmem:[%s340] sm:$0xf]
        %v358 = vld [vmem:[%s340 + $0x4] sm:$0xf]
        %v359 = vld [vmem:[%s299] sm:$0xff]
        %v360 = vld [vmem:[%s299 + $0x8] sm:$0xff]
        %v361 = vld [vmem:[%s299 + $0x10] sm:$0xff]
        %v362 = vld [vmem:[%s299 + $0x18] sm:$0xff]
        %v363 = vld [vmem:[%s299 + $0x20] sm:$0xff]
        %v364 = vld [vmem:[%s299 + $0x28] sm:$0xff]
        %v365 = vld [vmem:[%s299 + $0x30] sm:$0xff]
        %v366 = vld [vmem:[%s299 + $0x38] sm:$0xff]
        %v367 = vld [vmem:[%s299 + $0x40] sm:$0xff]
        %v368 = vld [vmem:[%s299 + $0x48] sm:$0xff]
        %v369 = vld [vmem:[%s299 + $0x50] sm:$0xff]
        %v370 = vld [vmem:[%s299 + $0x58] sm:$0xff]
        %v371 = vld [vmem:[%s299 + $0x60] sm:$0xff]
        %v372 = vld [vmem:[%s299 + $0x68] sm:$0xff]
        %v373 = vld [vmem:[%s299 + $0x70] sm:$0xff]
        %v374 = vld [vmem:[%s299 + $0x78] sm:$0xff]
        %v375 = vld [vmem:[%s299 + $0x80] sm:$0xff]
        %v376 = vld [vmem:[%s299 + $0x88] sm:$0xff]
        %v377 = vld [vmem:[%s299 + $0x90] sm:$0xff]
        %v378 = vld [vmem:[%s299 + $0x98] sm:$0xff]
        %v379 = vld [vmem:[%s299 + $0xa0] sm:$0xff]
        %v380 = vld [vmem:[%s299 + $0xa8] sm:$0xff]
        %v381 = vld [vmem:[%s299 + $0xb0] sm:$0xff]
        %v382 = vld [vmem:[%s299 + $0xb8] sm:$0xff]
        %v383 = vld [vmem:[%s299 + $0xc0] sm:$0xff]
        %v384 = vld [vmem:[%s299 + $0xc8] sm:$0xff]
        %v385 = vld [vmem:[%s299 + $0xd0] sm:$0xff]
        %v386 = vld [vmem:[%s299 + $0xd8] sm:$0xff]
        %v387 = vld [vmem:[%s299 + $0xe0] sm:$0xff]
        %v388 = vld [vmem:[%s299 + $0xe8] sm:$0xff]
        %v389 = vld [vmem:[%s299 + $0xf0] sm:$0xff]
        %v390 = vld [vmem:[%s299 + $0xf8] sm:$0xff]
        %v393 = vunpack.c.l.b16 %v357
        %v394 = vunpack.c.l.b16 %v358
        %v395 = vpack.c.b16 %v394, %v393
        %v429 = vunpack.c.l.b16 %v359
        %v430 = vunpack.c.h.b16 %v359
        %v431 = vunpack.c.l.b16 %v360
        %v432 = vunpack.c.h.b16 %v360
        %v433 = vunpack.c.l.b16 %v361
        %v434 = vunpack.c.h.b16 %v361
        %v435 = vunpack.c.l.b16 %v362
        %v436 = vunpack.c.h.b16 %v362
        %v437 = vunpack.c.l.b16 %v363
        %v438 = vunpack.c.h.b16 %v363
        %v439 = vunpack.c.l.b16 %v364
        %v440 = vunpack.c.h.b16 %v364
        %v441 = vunpack.c.l.b16 %v365
        %v442 = vunpack.c.h.b16 %v365
        %v443 = vunpack.c.l.b16 %v366
        %v444 = vunpack.c.h.b16 %v366
        %v445 = vunpack.c.l.b16 %v367
        %v446 = vunpack.c.h.b16 %v367
        %v447 = vunpack.c.l.b16 %v368
        %v448 = vunpack.c.h.b16 %v368
        %v449 = vunpack.c.l.b16 %v369
        %v450 = vunpack.c.h.b16 %v369
        %v451 = vunpack.c.l.b16 %v370
        %v452 = vunpack.c.h.b16 %v370
        %v453 = vunpack.c.l.b16 %v371
        %v454 = vunpack.c.h.b16 %v371
        %v455 = vunpack.c.l.b16 %v372
        %v456 = vunpack.c.h.b16 %v372
        %v457 = vunpack.c.l.b16 %v373
        %v458 = vunpack.c.h.b16 %v373
        %v459 = vunpack.c.l.b16 %v374
        %v460 = vunpack.c.h.b16 %v374
        %v461 = vunpack.c.l.b16 %v375
        %v462 = vunpack.c.h.b16 %v375
        %v463 = vunpack.c.l.b16 %v376
        %v464 = vunpack.c.h.b16 %v376
        %v465 = vunpack.c.l.b16 %v377
        %v466 = vunpack.c.h.b16 %v377
        %v467 = vunpack.c.l.b16 %v378
        %v468 = vunpack.c.h.b16 %v378
        %v469 = vunpack.c.l.b16 %v379
        %v470 = vunpack.c.h.b16 %v379
        %v471 = vunpack.c.l.b16 %v380
        %v472 = vunpack.c.h.b16 %v380
        %v473 = vunpack.c.l.b16 %v381
        %v474 = vunpack.c.h.b16 %v381
        %v475 = vunpack.c.l.b16 %v382
        %v476 = vunpack.c.h.b16 %v382
        %v477 = vunpack.c.l.b16 %v383
        %v478 = vunpack.c.h.b16 %v383
        %v479 = vunpack.c.l.b16 %v384
        %v480 = vunpack.c.h.b16 %v384
        %v481 = vunpack.c.l.b16 %v385
        %v482 = vunpack.c.h.b16 %v385
        %v483 = vunpack.c.l.b16 %v386
        %v484 = vunpack.c.h.b16 %v386
        %v485 = vunpack.c.l.b16 %v387
        %v486 = vunpack.c.h.b16 %v387
        %v487 = vunpack.c.l.b16 %v388
        %v488 = vunpack.c.h.b16 %v388
        %v489 = vunpack.c.l.b16 %v389
        %v490 = vunpack.c.h.b16 %v389
        %v491 = vunpack.c.l.b16 %v390
        %v492 = vunpack.c.h.b16 %v390
        %v493 = vpack.c.b16 %v433, %v429
        %v494 = vpack.c.b16 %v434, %v430
        %v495 = vpack.c.b16 %v435, %v431
        %v496 = vpack.c.b16 %v436, %v432
        %v497 = vpack.c.b16 %v441, %v437
        %v498 = vpack.c.b16 %v442, %v438
        %v499 = vpack.c.b16 %v443, %v439
        %v500 = vpack.c.b16 %v444, %v440
        %v501 = vpack.c.b16 %v449, %v445
        %v502 = vpack.c.b16 %v450, %v446
        %v503 = vpack.c.b16 %v451, %v447
        %v504 = vpack.c.b16 %v452, %v448
        %v505 = vpack.c.b16 %v457, %v453
        %v506 = vpack.c.b16 %v458, %v454
        %v507 = vpack.c.b16 %v459, %v455
        %v508 = vpack.c.b16 %v460, %v456
        %v509 = vpack.c.b16 %v465, %v461
        %v510 = vpack.c.b16 %v466, %v462
        %v511 = vpack.c.b16 %v467, %v463
        %v512 = vpack.c.b16 %v468, %v464
        %v513 = vpack.c.b16 %v473, %v469
        %v514 = vpack.c.b16 %v474, %v470
        %v515 = vpack.c.b16 %v475, %v471
        %v516 = vpack.c.b16 %v476, %v472
        %v517 = vpack.c.b16 %v481, %v477
        %v518 = vpack.c.b16 %v482, %v478
        %v519 = vpack.c.b16 %v483, %v479
        %v520 = vpack.c.b16 %v484, %v480
        %v521 = vpack.c.b16 %v489, %v485
        %v522 = vpack.c.b16 %v490, %v486
        %v523 = vpack.c.b16 %v491, %v487
        %v524 = vpack.c.b16 %v492, %v488
        %557 = vmatpush.bf16.msra.mxu0 %v521
        %558 = vmatpush.bf16.msra.mxu0 %v517
        %559 = vmatpush.bf16.msra.mxu0 %v513
        %560 = vmatpush.bf16.msra.mxu0 %v509
        %561 = vmatpush.bf16.msra.mxu0 %v505
        %562 = vmatpush.bf16.msra.mxu0 %v501
        %563 = vmatpush.bf16.msra.mxu0 %v497
        %564 = vmatpush.bf16.msra.mxu0 %v493
        %565 = vmatmul.bf16.gmra.mxu0 %v395
        %v566 = vpop.f32.mrf.mxu0
        %v567 = vadd.f32 0.0, %v566
        %v568 = vpop.f32.mrf.mxu0
        %v569 = vadd.f32 0.0, %v568
        %570 = vdwg.mxu0
        %571 = vmatpush.bf16.msra.mxu0 %v522
        %572 = vmatpush.bf16.msra.mxu0 %v518
        %573 = vmatpush.bf16.msra.mxu0 %v514
        %574 = vmatpush.bf16.msra.mxu0 %v510
        %575 = vmatpush.bf16.msra.mxu0 %v506
        %576 = vmatpush.bf16.msra.mxu0 %v502
        %577 = vmatpush.bf16.msra.mxu0 %v498
        %578 = vmatpush.bf16.msra.mxu0 %v494
        %579 = vmatmul.bf16.gmra.mxu0 %v395
        %v580 = vpop.f32.mrf.mxu0
        %v581 = vadd.f32 0.0, %v580
        %v582 = vpop.f32.mrf.mxu0
        %v583 = vadd.f32 0.0, %v582
        %584 = vdwg.mxu0
        %585 = vmatpush.bf16.msra.mxu0 %v523
        %586 = vmatpush.bf16.msra.mxu0 %v519
        %587 = vmatpush.bf16.msra.mxu0 %v515
        %588 = vmatpush.bf16.msra.mxu0 %v511
        %589 = vmatpush.bf16.msra.mxu0 %v507
        %590 = vmatpush.bf16.msra.mxu0 %v503
        %591 = vmatpush.bf16.msra.mxu0 %v499
        %592 = vmatpush.bf16.msra.mxu0 %v495
        %593 = vmatmul.bf16.gmra.mxu0 %v395
        %v594 = vpop.f32.mrf.mxu0
        %v595 = vadd.f32 0.0, %v594
        %v596 = vpop.f32.mrf.mxu0
        %v597 = vadd.f32 0.0, %v596
        %598 = vdwg.mxu0
        %599 = vmatpush.bf16.msra.mxu0 %v524
        %600 = vmatpush.bf16.msra.mxu0 %v520
        %601 = vmatpush.bf16.msra.mxu0 %v516
        %602 = vmatpush.bf16.msra.mxu0 %v512
        %603 = vmatpush.bf16.msra.mxu0 %v508
        %604 = vmatpush.bf16.msra.mxu0 %v504
        %605 = vmatpush.bf16.msra.mxu0 %v500
        %606 = vmatpush.bf16.msra.mxu0 %v496
        %607 = vmatmul.bf16.gmra.mxu0 %v395
        %v608 = vpop.f32.mrf.mxu0
        %v609 = vadd.f32 0.0, %v608
        %v610 = vpop.f32.mrf.mxu0
        %v611 = vadd.f32 0.0, %v610
        %612 = vdwg.mxu0
        %v613 = vld [vmem:[%s347] sm:$0xff]
        %v614 = vld [vmem:[%s347 + $0x8] sm:$0xff]
        %616 = vset.pattern.permute.xlu0 0
        %617 = vperm.xlu0 %616, %v613
        %v618 = vpop.permute.xlu0 %617
        %621 = vset.pattern.permute.xlu0 0
        %622 = vperm.xlu0 %621, %v614
        %v623 = vpop.permute.xlu0 %622
        %v625 = vmul.f32 %v567, %v618
        %v626 = vmul.f32 %v581, %v618
        %v627 = vmul.f32 %v595, %v618
        %v628 = vmul.f32 %v609, %v618
        %v629 = vmul.f32 %v569, %v623
        %v630 = vmul.f32 %v583, %v623
        %v631 = vmul.f32 %v597, %v623
        %v632 = vmul.f32 %v611, %v623
        %v633 = vld [vmem:[%s353] sm:$0xff]
        %v634 = vld [vmem:[%s353 + $0x8] sm:$0xff]
        %636 = vset.pattern.permute.xlu0 0
        %637 = vperm.xlu0 %636, %v633
        %v638 = vpop.permute.xlu0 %637
        %641 = vset.pattern.permute.xlu0 0
        %642 = vperm.xlu0 %641, %v634
        %v643 = vpop.permute.xlu0 %642
        %v645 = vadd.f32 %v625, %v638
        %v646 = vadd.f32 %v626, %v638
        %v647 = vadd.f32 %v627, %v638
        %v648 = vadd.f32 %v628, %v638
        %v649 = vadd.f32 %v629, %v643
        %v650 = vadd.f32 %v630, %v643
        %v651 = vadd.f32 %v631, %v643
        %v652 = vadd.f32 %v632, %v643
        %v653 = vmax.f32 %v645, 0.0
        %v654 = vmax.f32 %v646, 0.0
        %v655 = vmax.f32 %v647, 0.0
        %v656 = vmax.f32 %v648, 0.0
        %v657 = vmax.f32 %v649, 0.0
        %v658 = vmax.f32 %v650, 0.0
        %v659 = vmax.f32 %v651, 0.0
        %v660 = vmax.f32 %v652, 0.0
        %v661 = vpack.c.bf16 %v654, %v653
        %v662 = vpack.c.bf16 %v656, %v655
        %v663 = vpack.c.bf16 %v658, %v657
        %v664 = vpack.c.bf16 %v660, %v659
        %665 = vst [vmem:[%s335] sm:$0xff] %v661
        %666 = vst [vmem:[%s335 + $0x8] sm:$0xff] %v662
        %667 = vst [vmem:[%s335 + $0x10] sm:$0xff] %v663
        %668 = vst [vmem:[%s335 + $0x18] sm:$0xff] %v664
        %s669 = sand.u32 %s141, 1
        %s670 = sand.u32 %s141, 1
        %s671 = smul.addr %s670, 32
        %s672 = scalar_lea.vmem [#allocation3], %s671
        // Predicated region
        $region60: #{forward.17} parent=54 // pred_check
          %p673 = pneg %p151
        $region61: #{forward.17} parent=54 // pred_check_branch
          %675 = sbr.rel (%p673) target = $region63
        $region62: #{forward.17} parent=54 // pred_region
          %s676 = smul.u32 2, %s19
          %s677 = smul.u32 4, %s20
          %s678 = smul.addr %s676, 116
          %s679 = sadd.s32 %s677, %s678
          %s680 = smul.addr %s679, 4
          %s681 = scalar_lea.vmem %s4, %s680
          // Predicated region
          $region64: #{forward.17} parent=62 // pred_check
            _
          $region65: #{forward.17} parent=62 // pred_check_branch
            %683 = sbr.rel (0) target = $region67
          $region66: #{forward.17} parent=62 // pred_region
            // Predicated region
            $region68: #{forward.17} parent=66 // pred_check
              _
            $region69: #{forward.17} parent=66 // pred_check_branch
              %685 = sbr.rel (0) target = $region71
            $region70: #{forward.17} parent=66 // pred_region
              loop: start=0, step=1, limit=1
              $region72: #{forward.17} parent=70 // loop_pre_header
                _
              $region73: #{forward.17} parent=70 // loop_header
                %s687 = sphi 0, %s691
                %p688 = scmp.ge.s32.totalorder %s687, 1
                %s692 = sphi %s672, %s672
                %s693 = sphi %s681, %s681
              $region74: #{forward.17} parent=70 // loop_header_branch
                %690 = sbr.rel (%p688) target = $region78
              $region75: #{forward.17} parent=70 // loop_body
                %v694 = vld [vmem:[%s692] sm:$0xff]
                %695 = vst [vmem:[%s693] sm:$0xff] %v694
                %v696 = vld [vmem:[%s692 + $0x8] sm:$0xff]
                %697 = vst [vmem:[%s693 + $0x8] sm:$0xff] %v696
                %v698 = vld [vmem:[%s692 + $0x10] sm:$0xff]
                %699 = vst [vmem:[%s693 + $0x1d0] sm:$0xff] %v698
                %v700 = vld [vmem:[%s692 + $0x18] sm:$0xff]
                %701 = vst [vmem:[%s693 + $0x1d8] sm:$0xff] %v700
              $region76: #{forward.17} parent=70 // loop_footer
                %s691 = sadd.s32 1, %s687
              $region77: #{forward.17} parent=70 // loop_footer_branch
                %686 = sbr.rel target = $region73
              $region78: #{forward.17} parent=70 // loop_exit
                _
            $region71: #{forward.17} parent=66 // pred_fallthru
              _
            // Predicated region
            $region79: #{forward.17} parent=66 // pred_check
              _
            $region80: #{forward.17} parent=66 // pred_check_branch
              %703 = sbr.rel target = $region82
            $region81: #{forward.17} parent=66 // pred_region
              _
            $region82: #{forward.17} parent=66 // pred_fallthru
              _
          $region67: #{forward.17} parent=62 // pred_fallthru
            _
          %704 = vnop
        $region63: #{forward.17} parent=54 // pred_fallthru
          _
      $region55: #{forward.17} parent=5 // pred_fallthru
        _
      %p705 = scmp.le.s32.totalorder 2, %s10
      // Predicated region
      $region83: #{forward.17} parent=5 // pred_check
        %p706 = pneg %p705
      $region84: #{forward.17} parent=5 // pred_check_branch
        %708 = sbr.rel (%p706) target = $region86
      $region85: #{forward.17} parent=5 // pred_region
        %s709 = ssub.s32 %s10, 2
        // Predicated region
        $region87: #{forward.17} parent=85 // pred_check
          %p710 = pneg %p157
        $region88: #{forward.17} parent=85 // pred_check_branch
          %712 = sbr.rel (%p710) target = $region90
        $region89: #{forward.17} parent=85 // pred_region
          %s713 = sand.u32 %s142, 1
          %s714 = sand.u32 %s142, 1
          %s715 = smul.addr %s714, 32
          %s716 = scalar_lea.vmem [#allocation3], %s715
        $region90: #{forward.17} parent=85 // pred_fallthru
          _
      $region86: #{forward.17} parent=5 // pred_fallthru
        _
    $region6: #{forward.17} parent=1 // loop_footer
      %s14 = sadd.s32 1, %s10
    $region7: #{forward.17} parent=1 // loop_footer_branch
      %9 = sbr.rel target = $region3
    $region8: #{forward.17} parent=1 // loop_exit
      _

// kernel: forward.18
$region0: #{forward.18}
  #allocation0 [shape = 'u32[]', space=smem, size = 0x4, offset = 0x4, fixed_abs, tag = 'smem constant byte address 0x4 - core index']
  #allocation1 [shape = 'u32[72,128]{1,0:T(1,128)}', space=vmem, size = 0x9000, scoped, tag = 'internal scratch']
  %s0 = inlined_call_operand.vmem [shape: bf16[16,128], index: 0, kind: input, shape index: {}]
  %s1 = inlined_call_operand.vmem [shape: bf16[128,5120], index: 1, kind: input, shape index: {}]
  %s2 = inlined_call_operand.vmem [shape: f32[16,1], index: 2, kind: input, shape index: {}]
  %s3 = inlined_call_operand.vmem [shape: f32[16,1], index: 3, kind: input, shape index: {}]
  %s4 = inlined_call_operand.vmem [shape: bf16[16,5120], index: 4, kind: output, shape index: {}]
  %s5 = sld [smem:[#allocation0]]
  $region91: #{forward.18} parent=0
    _
  %s7 = ssub.s32 1, %s5
  %s8 = scalar_select 0, %s7, %s5
  $region1: #{forward.18} parent=0
    #allocation2 [shape = 'u8[262144]{0}', space=vmem, size = 0x40000, scoped, tag = 'input window, operand 1']
    #allocation3 [shape = 'u8[32768]{0}', space=vmem, size = 0x8000, scoped, tag = 'output window, operand 0']
    loop: start=0, step=1, limit=12
    $region2: #{forward.18} parent=1 // loop_pre_header
      _
    $region3: #{forward.18} parent=1 // loop_header
      %s10 = sphi 0, %s14
      %p11 = scmp.ge.s32.totalorder %s10, 12
      %s17 = sphi 0, %s29
      %s18 = sphi 0, %s25
      %s19 = sphi 0, %s17
      %s20 = sphi 0, %s18
      %s21 = sphi 0, %s19
      %s22 = sphi 0, %s20
      %s32 = sphi 0, %s34
      %s35 = sphi 0, %s32
      %s36 = sphi 0, %s35
      %s52 = sphi 0, %s36
      %s58 = sphi 0, %s60
      %s61 = sphi 0, %s58
      %s62 = sphi 0, %s61
      %s78 = sphi 0, %s62
      %s84 = sphi 0, %s86
      %s87 = sphi 0, %s84
      %s88 = sphi 0, %s87
      %s104 = sphi 0, %s88
      %s110 = sphi 0, %s112
      %s113 = sphi 0, %s110
      %s114 = sphi 0, %s113
      %s130 = sphi 0, %s114
      %s138 = sphi 0, %s140
      %s141 = sphi 0, %s138
      %s142 = sphi 0, %s141
      %s158 = sphi 0, %s142
    $region4: #{forward.18} parent=1 // loop_header_branch
      %13 = sbr.rel (%p11) target = $region8
    $region5: #{forward.18} parent=1 // loop_body
      %s15 = ssub.s32 %s10, 1
      %s16 = ssub.s32 %s10, 2
      %s23 = sadd.s32 1, %s18
      %p24 = scmp.ge.s32.totalorder %s23, 10
      %s25 = scalar_select %p24, 0, %s23
      %s26 = sadd.s32 1, %s17
      %s27 = scalar_select %p24, %s26, %s17
      %p28 = scmp.ge.s32.totalorder %s27, 1
      %s29 = scalar_select %p28, 0, %s27
      %s30 = ssub.s32 %s17, %s29
      %p31 = scmp.eq.s32.totalorder %s30, 0
      %s33 = sadd.s32 %s32, 1
      %s34 = scalar_select %p31, %s32, %s33
      %p37 = pneg %p31
      %p38 = scmp.eq.s32.totalorder %s10, 9
      %p39 = por %p37, %p38
      %p40 = scmp.ne.s32.totalorder %s32, %s35
      %p41 = scmp.eq.s32.totalorder %s10, 0
      %p42 = por %p40, %p41
      %p43 = scmp.ne.s32.totalorder %s32, %s35
      %p44 = scmp.eq.s32.totalorder %s15, 9
      %p45 = por %p43, %p44
      %p46 = scmp.ne.s32.totalorder %s35, %s36
      %p47 = scmp.eq.s32.totalorder %s15, 0
      %p48 = por %p46, %p47
      %p49 = scmp.ne.s32.totalorder %s35, %s36
      %p50 = scmp.eq.s32.totalorder %s16, 9
      %p51 = por %p49, %p50
      %p53 = scmp.ne.s32.totalorder %s36, %s52
      %p54 = scmp.eq.s32.totalorder %s16, 0
      %p55 = por %p53, %p54
      %s56 = ssub.s32 %s18, %s25
      %p57 = scmp.eq.s32.totalorder %s56, 0
      %s59 = sadd.s32 %s58, 1
      %s60 = scalar_select %p57, %s58, %s59
      %p63 = pneg %p57
      %p64 = scmp.eq.s32.totalorder %s10, 9
      %p65 = por %p63, %p64
      %p66 = scmp.ne.s32.totalorder %s58, %s61
      %p67 = scmp.eq.s32.totalorder %s10, 0
      %p68 = por %p66, %p67
      %p69 = scmp.ne.s32.totalorder %s58, %s61
      %p70 = scmp.eq.s32.totalorder %s15, 9
      %p71 = por %p69, %p70
      %p72 = scmp.ne.s32.totalorder %s61, %s62
      %p73 = scmp.eq.s32.totalorder %s15, 0
      %p74 = por %p72, %p73
      %p75 = scmp.ne.s32.totalorder %s61, %s62
      %p76 = scmp.eq.s32.totalorder %s16, 9
      %p77 = por %p75, %p76
      %p79 = scmp.ne.s32.totalorder %s62, %s78
      %p80 = scmp.eq.s32.totalorder %s16, 0
      %p81 = por %p79, %p80
      %s82 = ssub.s32 %s17, %s29
      %p83 = scmp.eq.s32.totalorder %s82, 0
      %s85 = sadd.s32 %s84, 1
      %s86 = scalar_select %p83, %s84, %s85
      %p89 = pneg %p83
      %p90 = scmp.eq.s32.totalorder %s10, 9
      %p91 = por %p89, %p90
      %p92 = scmp.ne.s32.totalorder %s84, %s87
      %p93 = scmp.eq.s32.totalorder %s10, 0
      %p94 = por %p92, %p93
      %p95 = scmp.ne.s32.totalorder %s84, %s87
      %p96 = scmp.eq.s32.totalorder %s15, 9
      %p97 = por %p95, %p96
      %p98 = scmp.ne.s32.totalorder %s87, %s88
      %p99 = scmp.eq.s32.totalorder %s15, 0
      %p100 = por %p98, %p99
      %p101 = scmp.ne.s32.totalorder %s87, %s88
      %p102 = scmp.eq.s32.totalorder %s16, 9
      %p103 = por %p101, %p102
      %p105 = scmp.ne.s32.totalorder %s88, %s104
      %p106 = scmp.eq.s32.totalorder %s16, 0
      %p107 = por %p105, %p106
      %s108 = ssub.s32 %s17, %s29
      %p109 = scmp.eq.s32.totalorder %s108, 0
      %s111 = sadd.s32 %s110, 1
      %s112 = scalar_select %p109, %s110, %s111
      %p115 = pneg %p109
      %p116 = scmp.eq.s32.totalorder %s10, 9
      %p117 = por %p115, %p116
      %p118 = scmp.ne.s32.totalorder %s110, %s113
      %p119 = scmp.eq.s32.totalorder %s10, 0
      %p120 = por %p118, %p119
      %p121 = scmp.ne.s32.totalorder %s110, %s113
      %p122 = scmp.eq.s32.totalorder %s15, 9
      %p123 = por %p121, %p122
      %p124 = scmp.ne.s32.totalorder %s113, %s114
      %p125 = scmp.eq.s32.totalorder %s15, 0
      %p126 = por %p124, %p125
      %p127 = scmp.ne.s32.totalorder %s113, %s114
      %p128 = scmp.eq.s32.totalorder %s16, 9
      %p129 = por %p127, %p128
      %p131 = scmp.ne.s32.totalorder %s114, %s130
      %p132 = scmp.eq.s32.totalorder %s16, 0
      %p133 = por %p131, %p132
      %s134 = ssub.s32 %s17, %s29
      %s135 = ssub.s32 %s18, %s25
      %s136 = sor.u32 %s134, %s135
      %p137 = scmp.eq.s32.totalorder %s136, 0
      %s139 = sadd.s32 %s138, 1
      %s140 = scalar_select %p137, %s138, %s139
      %p143 = pneg %p137
      %p144 = scmp.eq.s32.totalorder %s10, 9
      %p145 = por %p143, %p144
      %p146 = scmp.ne.s32.totalorder %s138, %s141
      %p147 = scmp.eq.s32.totalorder %s10, 0
      %p148 = por %p146, %p147
      %p149 = scmp.ne.s32.totalorder %s138, %s141
      %p150 = scmp.eq.s32.totalorder %s15, 9
      %p151 = por %p149, %p150
      %p152 = scmp.ne.s32.totalorder %s141, %s142
      %p153 = scmp.eq.s32.totalorder %s15, 0
      %p154 = por %p152, %p153
      %p155 = scmp.ne.s32.totalorder %s141, %s142
      %p156 = scmp.eq.s32.totalorder %s16, 9
      %p157 = por %p155, %p156
      %p159 = scmp.ne.s32.totalorder %s142, %s158
      %p160 = scmp.eq.s32.totalorder %s16, 0
      %p161 = por %p159, %p160
      %p162 = scmp.le.s32.totalorder 1, %s10
      %p163 = scmp.lt.s32.totalorder %s10, 11
      %p164 = pnand %p162, %p163
      %p165 = pneg %p164
      // Predicated region
      $region9: #{forward.18} parent=5 // pred_check
        _
      $region10: #{forward.18} parent=5 // pred_check_branch
        %167 = sbr.rel (%p164) target = $region12
      $region11: #{forward.18} parent=5 // pred_region
        %s168 = ssub.s32 %s10, 1
        // Predicated region
        $region13: #{forward.18} parent=11 // pred_check
          %p169 = pneg %p48
        $region14: #{forward.18} parent=11 // pred_check_branch
          %171 = sbr.rel (%p169) target = $region16
        $region15: #{forward.18} parent=11 // pred_region
          %s172 = smul.u32 2, %s19
          %p173 = scmp.lt.s32.totalorder %s172, 1
          %s174 = scalar_select %p173, %s172, 1
          %s175 = smul.addr %s174, 4
          %s176 = scalar_lea.vmem %s0, %s175
          %s177 = smul.u32 2, %s19
        $region16: #{forward.18} parent=11 // pred_fallthru
          _
        // Predicated region
        $region17: #{forward.18} parent=11 // pred_check
          %p178 = pneg %p100
        $region18: #{forward.18} parent=11 // pred_check_branch
          %180 = sbr.rel (%p178) target = $region20
        $region19: #{forward.18} parent=11 // pred_region
          %s181 = smul.u32 2, %s19
          %p182 = scmp.lt.s32.totalorder %s181, 1
          %s183 = scalar_select %p182, %s181, 1
          %s184 = smul.addr %s183, 8
          %s185 = scalar_lea.vmem %s2, %s184
          %s186 = smul.u32 2, %s19
        $region20: #{forward.18} parent=11 // pred_fallthru
          _
        // Predicated region
        $region21: #{forward.18} parent=11 // pred_check
          %p187 = pneg %p126
        $region22: #{forward.18} parent=11 // pred_check_branch
          %189 = sbr.rel (%p187) target = $region24
        $region23: #{forward.18} parent=11 // pred_region
          %s190 = smul.u32 2, %s19
          %p191 = scmp.lt.s32.totalorder %s190, 1
          %s192 = scalar_select %p191, %s190, 1
          %s193 = smul.addr %s192, 8
          %s194 = scalar_lea.vmem %s3, %s193
          %s195 = smul.u32 2, %s19
        $region24: #{forward.18} parent=11 // pred_fallthru
          _
      $region12: #{forward.18} parent=5 // pred_fallthru
        _
      %p196 = scmp.lt.s32.totalorder %s10, 10
      // Predicated region
      $region25: #{forward.18} parent=5 // pred_check
        %p197 = pneg %p196
      $region26: #{forward.18} parent=5 // pred_check_branch
        %199 = sbr.rel (%p197) target = $region28
      $region27: #{forward.18} parent=5 // pred_region
        // Predicated region
        $region29: #{forward.18} parent=27 // pred_check
          %p200 = pneg %p68
        $region30: #{forward.18} parent=27 // pred_check_branch
          %202 = sbr.rel (%p200) target = $region32
        $region31: #{forward.18} parent=27 // pred_region
          %s203 = sand.u32 %s58, 1
          %s204 = sand.u32 %s58, 1
          %s205 = smul.addr %s204, 256
          %s206 = scalar_lea.vmem [#allocation2], %s205
          %s207 = smul.u32 4, %s18
          %s208 = smul.addr %s207, 4
          %s209 = scalar_lea.vmem %s1, %s208
          // Predicated region
          $region33: #{forward.18} parent=31 // pred_check
            _
          $region34: #{forward.18} parent=31 // pred_check_branch
            %211 = sbr.rel (0) target = $region36
          $region35: #{forward.18} parent=31 // pred_region
            // Predicated region
            $region37: #{forward.18} parent=35 // pred_check
              _
            $region38: #{forward.18} parent=35 // pred_check_branch
              %213 = sbr.rel (0) target = $region40
            $region39: #{forward.18} parent=35 // pred_region
              loop: start=0, step=1, limit=1
              $region41: #{forward.18} parent=39 // loop_pre_header
                _
              $region42: #{forward.18} parent=39 // loop_header
                %s215 = sphi 0, %s219
                %p216 = scmp.ge.s32.totalorder %s215, 1
                %s220 = sphi %s209, %s209
                %s221 = sphi %s206, %s206
              $region43: #{forward.18} parent=39 // loop_header_branch
                %218 = sbr.rel (%p216) target = $region47
              $region44: #{forward.18} parent=39 // loop_body
                %v222 = vld [vmem:[%s220] sm:$0xff]
                %223 = vst [vmem:[%s221] sm:$0xff] %v222
                %v224 = vld [vmem:[%s220 + $0x8] sm:$0xff]
                %225 = vst [vmem:[%s221 + $0x8] sm:$0xff] %v224
                %v226 = vld [vmem:[%s220 + $0xa0] sm:$0xff]
                %227 = vst [vmem:[%s221 + $0x10] sm:$0xff] %v226
                %v228 = vld [vmem:[%s220 + $0xa8] sm:$0xff]
                %229 = vst [vmem:[%s221 + $0x18] sm:$0xff] %v228
                %v230 = vld [vmem:[%s220 + $0x140] sm:$0xff]
                %231 = vst [vmem:[%s221 + $0x20] sm:$0xff] %v230
                %v232 = vld [vmem:[%s220 + $0x148] sm:$0xff]
                %233 = vst [vmem:[%s221 + $0x28] sm:$0xff] %v232
                %v234 = vld [vmem:[%s220 + $0x1e0] sm:$0xff]
                %235 = vst [vmem:[%s221 + $0x30] sm:$0xff] %v234
                %v236 = vld [vmem:[%s220 + $0x1e8] sm:$0xff]
                %237 = vst [vmem:[%s221 + $0x38] sm:$0xff] %v236
                %v238 = vld [vmem:[%s220 + $0x280] sm:$0xff]
                %239 = vst [vmem:[%s221 + $0x40] sm:$0xff] %v238
                %v240 = vld [vmem:[%s220 + $0x288] sm:$0xff]
                %241 = vst [vmem:[%s221 + $0x48] sm:$0xff] %v240
                %v242 = vld [vmem:[%s220 + $0x320] sm:$0xff]
                %243 = vst [vmem:[%s221 + $0x50] sm:$0xff] %v242
                %v244 = vld [vmem:[%s220 + $0x328] sm:$0xff]
                %245 = vst [vmem:[%s221 + $0x58] sm:$0xff] %v244
                %v246 = vld [vmem:[%s220 + $0x3c0] sm:$0xff]
                %247 = vst [vmem:[%s221 + $0x60] sm:$0xff] %v246
                %v248 = vld [vmem:[%s220 + $0x3c8] sm:$0xff]
                %249 = vst [vmem:[%s221 + $0x68] sm:$0xff] %v248
                %v250 = vld [vmem:[%s220 + $0x460] sm:$0xff]
                %251 = vst [vmem:[%s221 + $0x70] sm:$0xff] %v250
                %v252 = vld [vmem:[%s220 + $0x468] sm:$0xff]
                %253 = vst [vmem:[%s221 + $0x78] sm:$0xff] %v252
                %v254 = vld [vmem:[%s220 + $0x500] sm:$0xff]
                %255 = vst [vmem:[%s221 + $0x80] sm:$0xff] %v254
                %v256 = vld [vmem:[%s220 + $0x508] sm:$0xff]
                %257 = vst [vmem:[%s221 + $0x88] sm:$0xff] %v256
                %v258 = vld [vmem:[%s220 + $0x5a0] sm:$0xff]
                %259 = vst [vmem:[%s221 + $0x90] sm:$0xff] %v258
                %v260 = vld [vmem:[%s220 + $0x5a8] sm:$0xff]
                %261 = vst [vmem:[%s221 + $0x98] sm:$0xff] %v260
                %v262 = vld [vmem:[%s220 + $0x640] sm:$0xff]
                %263 = vst [vmem:[%s221 + $0xa0] sm:$0xff] %v262
                %v264 = vld [vmem:[%s220 + $0x648] sm:$0xff]
                %265 = vst [vmem:[%s221 + $0xa8] sm:$0xff] %v264
                %v266 = vld [vmem:[%s220 + $0x6e0] sm:$0xff]
                %267 = vst [vmem:[%s221 + $0xb0] sm:$0xff] %v266
                %v268 = vld [vmem:[%s220 + $0x6e8] sm:$0xff]
                %269 = vst [vmem:[%s221 + $0xb8] sm:$0xff] %v268
                %v270 = vld [vmem:[%s220 + $0x780] sm:$0xff]
                %271 = vst [vmem:[%s221 + $0xc0] sm:$0xff] %v270
                %v272 = vld [vmem:[%s220 + $0x788] sm:$0xff]
                %273 = vst [vmem:[%s221 + $0xc8] sm:$0xff] %v272
                %v274 = vld [vmem:[%s220 + $0x820] sm:$0xff]
                %275 = vst [vmem:[%s221 + $0xd0] sm:$0xff] %v274
                %v276 = vld [vmem:[%s220 + $0x828] sm:$0xff]
                %277 = vst [vmem:[%s221 + $0xd8] sm:$0xff] %v276
                %v278 = vld [vmem:[%s220 + $0x8c0] sm:$0xff]
                %279 = vst [vmem:[%s221 + $0xe0] sm:$0xff] %v278
                %v280 = vld [vmem:[%s220 + $0x8c8] sm:$0xff]
                %281 = vst [vmem:[%s221 + $0xe8] sm:$0xff] %v280
                %v282 = vld [vmem:[%s220 + $0x960] sm:$0xff]
                %283 = vst [vmem:[%s221 + $0xf0] sm:$0xff] %v282
                %v284 = vld [vmem:[%s220 + $0x968] sm:$0xff]
                %285 = vst [vmem:[%s221 + $0xf8] sm:$0xff] %v284
              $region45: #{forward.18} parent=39 // loop_footer
                %s219 = sadd.s32 1, %s215
              $region46: #{forward.18} parent=39 // loop_footer_branch
                %214 = sbr.rel target = $region42
              $region47: #{forward.18} parent=39 // loop_exit
                _
            $region40: #{forward.18} parent=35 // pred_fallthru
              _
            // Predicated region
            $region48: #{forward.18} parent=35 // pred_check
              _
            $region49: #{forward.18} parent=35 // pred_check_branch
              %287 = sbr.rel target = $region51
            $region50: #{forward.18} parent=35 // pred_region
              _
            $region51: #{forward.18} parent=35 // pred_fallthru
              _
          $region36: #{forward.18} parent=31 // pred_fallthru
            _
          %288 = vnop
        $region32: #{forward.18} parent=27 // pred_fallthru
          _
      $region28: #{forward.18} parent=5 // pred_fallthru
        _
      %p289 = scmp.le.s32.totalorder 1, %s10
      %p290 = scmp.lt.s32.totalorder %s10, 11
      %p291 = pnand %p289, %p290
      %p292 = pneg %p291
      // Predicated region
      $region52: #{forward.18} parent=5 // pred_check
        _
      $region53: #{forward.18} parent=5 // pred_check_branch
        %294 = sbr.rel (%p291) target = $region55
      $region54: #{forward.18} parent=5 // pred_region
        %s295 = ssub.s32 %s10, 1
        %s296 = sand.u32 %s61, 1
        %s297 = sand.u32 %s61, 1
        %s298 = smul.addr %s297, 256
        %s299 = scalar_lea.vmem [#allocation2], %s298
        // Predicated region
        $region56: #{forward.18} parent=54 // pred_check
          %p300 = pneg %p74
        $region57: #{forward.18} parent=54 // pred_check_branch
          %302 = sbr.rel (%p300) target = $region59
        $region58: #{forward.18} parent=54 // pred_region
          _
        $region59: #{forward.18} parent=54 // pred_fallthru
          _
        %s303 = smul.u32 2, %s19
        %p304 = scmp.lt.s32.totalorder %s303, 1
        %s305 = scalar_select %p304, %s303, 1
        %s306 = smul.addr %s305, 4
        %s307 = scalar_lea.vmem %s0, %s306
        %p308 = pneg %p48
        %p309 = pneg %p45
        %s310 = sand.u32 %s61, 1
        %s311 = sand.u32 %s61, 1
        %s312 = smul.addr %s311, 256
        %s313 = scalar_lea.vmem [#allocation2], %s312
        %p314 = pneg %p74
        %p315 = pneg %p71
        %s316 = smul.u32 2, %s19
        %p317 = scmp.lt.s32.totalorder %s316, 1
        %s318 = scalar_select %p317, %s316, 1
        %s319 = smul.addr %s318, 8
        %s320 = scalar_lea.vmem %s2, %s319
        %p321 = pneg %p100
        %p322 = pneg %p97
        %s323 = smul.u32 2, %s19
        %p324 = scmp.lt.s32.totalorder %s323, 1
        %s325 = scalar_select %p324, %s323, 1
        %s326 = smul.addr %s325, 8
        %s327 = scalar_lea.vmem %s3, %s326
        %p328 = pneg %p126
        %p329 = pneg %p123
        %p330 = pneg %p154
        %p331 = pneg %p151
        %s332 = sand.u32 %s141, 1
        %s333 = sand.u32 %s141, 1
        %s334 = smul.addr %s333, 32
        %s335 = scalar_lea.vmem [#allocation3], %s334
        %s336 = smul.u32 2, %s19
        %p337 = scmp.lt.s32.totalorder %s336, 1
        %s338 = scalar_select %p337, %s336, 1
        %s339 = smul.addr %s338, 4
        %s340 = scalar_lea.vmem %s0, %s339
        %s341 = smul.u32 2, %s19
        %s342 = smul.u32 4, %s20
        %s343 = smul.u32 2, %s19
        %p344 = scmp.lt.s32.totalorder %s343, 1
        %s345 = scalar_select %p344, %s343, 1
        %s346 = smul.addr %s345, 8
        %s347 = scalar_lea.vmem %s2, %s346
        %s348 = smul.u32 2, %s19
        %s349 = smul.u32 2, %s19
        %p350 = scmp.lt.s32.totalorder %s349, 1
        %s351 = scalar_select %p350, %s349, 1
        %s352 = smul.addr %s351, 8
        %s353 = scalar_lea.vmem %s3, %s352
        %s354 = smul.u32 2, %s19
        %s355 = smul.u32 2, %s19
        %s356 = smul.u32 4, %s20
        %v357 = vld [vmem:[%s340] sm:$0xf]
        %v358 = vld [vmem:[%s340 + $0x4] sm:$0xf]
        %v359 = vld [vmem:[%s299] sm:$0xff]
        %v360 = vld [vmem:[%s299 + $0x8] sm:$0xff]
        %v361 = vld [vmem:[%s299 + $0x10] sm:$0xff]
        %v362 = vld [vmem:[%s299 + $0x18] sm:$0xff]
        %v363 = vld [vmem:[%s299 + $0x20] sm:$0xff]
        %v364 = vld [vmem:[%s299 + $0x28] sm:$0xff]
        %v365 = vld [vmem:[%s299 + $0x30] sm:$0xff]
        %v366 = vld [vmem:[%s299 + $0x38] sm:$0xff]
        %v367 = vld [vmem:[%s299 + $0x40] sm:$0xff]
        %v368 = vld [vmem:[%s299 + $0x48] sm:$0xff]
        %v369 = vld [vmem:[%s299 + $0x50] sm:$0xff]
        %v370 = vld [vmem:[%s299 + $0x58] sm:$0xff]
        %v371 = vld [vmem:[%s299 + $0x60] sm:$0xff]
        %v372 = vld [vmem:[%s299 + $0x68] sm:$0xff]
        %v373 = vld [vmem:[%s299 + $0x70] sm:$0xff]
        %v374 = vld [vmem:[%s299 + $0x78] sm:$0xff]
        %v375 = vld [vmem:[%s299 + $0x80] sm:$0xff]
        %v376 = vld [vmem:[%s299 + $0x88] sm:$0xff]
        %v377 = vld [vmem:[%s299 + $0x90] sm:$0xff]
        %v378 = vld [vmem:[%s299 + $0x98] sm:$0xff]
        %v379 = vld [vmem:[%s299 + $0xa0] sm:$0xff]
        %v380 = vld [vmem:[%s299 + $0xa8] sm:$0xff]
        %v381 = vld [vmem:[%s299 + $0xb0] sm:$0xff]
        %v382 = vld [vmem:[%s299 + $0xb8] sm:$0xff]
        %v383 = vld [vmem:[%s299 + $0xc0] sm:$0xff]
        %v384 = vld [vmem:[%s299 + $0xc8] sm:$0xff]
        %v385 = vld [vmem:[%s299 + $0xd0] sm:$0xff]
        %v386 = vld [vmem:[%s299 + $0xd8] sm:$0xff]
        %v387 = vld [vmem:[%s299 + $0xe0] sm:$0xff]
        %v388 = vld [vmem:[%s299 + $0xe8] sm:$0xff]
        %v389 = vld [vmem:[%s299 + $0xf0] sm:$0xff]
        %v390 = vld [vmem:[%s299 + $0xf8] sm:$0xff]
        %v393 = vunpack.c.l.b16 %v357
        %v394 = vunpack.c.l.b16 %v358
        %v395 = vpack.c.b16 %v394, %v393
        %v429 = vunpack.c.l.b16 %v359
        %v430 = vunpack.c.h.b16 %v359
        %v431 = vunpack.c.l.b16 %v360
        %v432 = vunpack.c.h.b16 %v360
        %v433 = vunpack.c.l.b16 %v361
        %v434 = vunpack.c.h.b16 %v361
        %v435 = vunpack.c.l.b16 %v362
        %v436 = vunpack.c.h.b16 %v362
        %v437 = vunpack.c.l.b16 %v363
        %v438 = vunpack.c.h.b16 %v363
        %v439 = vunpack.c.l.b16 %v364
        %v440 = vunpack.c.h.b16 %v364
        %v441 = vunpack.c.l.b16 %v365
        %v442 = vunpack.c.h.b16 %v365
        %v443 = vunpack.c.l.b16 %v366
        %v444 = vunpack.c.h.b16 %v366
        %v445 = vunpack.c.l.b16 %v367
        %v446 = vunpack.c.h.b16 %v367
        %v447 = vunpack.c.l.b16 %v368
        %v448 = vunpack.c.h.b16 %v368
        %v449 = vunpack.c.l.b16 %v369
        %v450 = vunpack.c.h.b16 %v369
        %v451 = vunpack.c.l.b16 %v370
        %v452 = vunpack.c.h.b16 %v370
        %v453 = vunpack.c.l.b16 %v371
        %v454 = vunpack.c.h.b16 %v371
        %v455 = vunpack.c.l.b16 %v372
        %v456 = vunpack.c.h.b16 %v372
        %v457 = vunpack.c.l.b16 %v373
        %v458 = vunpack.c.h.b16 %v373
        %v459 = vunpack.c.l.b16 %v374
        %v460 = vunpack.c.h.b16 %v374
        %v461 = vunpack.c.l.b16 %v375
        %v462 = vunpack.c.h.b16 %v375
        %v463 = vunpack.c.l.b16 %v376
        %v464 = vunpack.c.h.b16 %v376
        %v465 = vunpack.c.l.b16 %v377
        %v466 = vunpack.c.h.b16 %v377
        %v467 = vunpack.c.l.b16 %v378
        %v468 = vunpack.c.h.b16 %v378
        %v469 = vunpack.c.l.b16 %v379
        %v470 = vunpack.c.h.b16 %v379
        %v471 = vunpack.c.l.b16 %v380
        %v472 = vunpack.c.h.b16 %v380
        %v473 = vunpack.c.l.b16 %v381
        %v474 = vunpack.c.h.b16 %v381
        %v475 = vunpack.c.l.b16 %v382
        %v476 = vunpack.c.h.b16 %v382
        %v477 = vunpack.c.l.b16 %v383
        %v478 = vunpack.c.h.b16 %v383
        %v479 = vunpack.c.l.b16 %v384
        %v480 = vunpack.c.h.b16 %v384
        %v481 = vunpack.c.l.b16 %v385
        %v482 = vunpack.c.h.b16 %v385
        %v483 = vunpack.c.l.b16 %v386
        %v484 = vunpack.c.h.b16 %v386
        %v485 = vunpack.c.l.b16 %v387
        %v486 = vunpack.c.h.b16 %v387
        %v487 = vunpack.c.l.b16 %v388
        %v488 = vunpack.c.h.b16 %v388
        %v489 = vunpack.c.l.b16 %v389
        %v490 = vunpack.c.h.b16 %v389
        %v491 = vunpack.c.l.b16 %v390
        %v492 = vunpack.c.h.b16 %v390
        %v493 = vpack.c.b16 %v433, %v429
        %v494 = vpack.c.b16 %v434, %v430
        %v495 = vpack.c.b16 %v435, %v431
        %v496 = vpack.c.b16 %v436, %v432
        %v497 = vpack.c.b16 %v441, %v437
        %v498 = vpack.c.b16 %v442, %v438
        %v499 = vpack.c.b16 %v443, %v439
        %v500 = vpack.c.b16 %v444, %v440
        %v501 = vpack.c.b16 %v449, %v445
        %v502 = vpack.c.b16 %v450, %v446
        %v503 = vpack.c.b16 %v451, %v447
        %v504 = vpack.c.b16 %v452, %v448
        %v505 = vpack.c.b16 %v457, %v453
        %v506 = vpack.c.b16 %v458, %v454
        %v507 = vpack.c.b16 %v459, %v455
        %v508 = vpack.c.b16 %v460, %v456
        %v509 = vpack.c.b16 %v465, %v461
        %v510 = vpack.c.b16 %v466, %v462
        %v511 = vpack.c.b16 %v467, %v463
        %v512 = vpack.c.b16 %v468, %v464
        %v513 = vpack.c.b16 %v473, %v469
        %v514 = vpack.c.b16 %v474, %v470
        %v515 = vpack.c.b16 %v475, %v471
        %v516 = vpack.c.b16 %v476, %v472
        %v517 = vpack.c.b16 %v481, %v477
        %v518 = vpack.c.b16 %v482, %v478
        %v519 = vpack.c.b16 %v483, %v479
        %v520 = vpack.c.b16 %v484, %v480
        %v521 = vpack.c.b16 %v489, %v485
        %v522 = vpack.c.b16 %v490, %v486
        %v523 = vpack.c.b16 %v491, %v487
        %v524 = vpack.c.b16 %v492, %v488
        %557 = vmatpush.bf16.msra.mxu0 %v521
        %558 = vmatpush.bf16.msra.mxu0 %v517
        %559 = vmatpush.bf16.msra.mxu0 %v513
        %560 = vmatpush.bf16.msra.mxu0 %v509
        %561 = vmatpush.bf16.msra.mxu0 %v505
        %562 = vmatpush.bf16.msra.mxu0 %v501
        %563 = vmatpush.bf16.msra.mxu0 %v497
        %564 = vmatpush.bf16.msra.mxu0 %v493
        %565 = vmatmul.bf16.gmra.mxu0 %v395
        %v566 = vpop.f32.mrf.mxu0
        %v567 = vadd.f32 0.0, %v566
        %v568 = vpop.f32.mrf.mxu0
        %v569 = vadd.f32 0.0, %v568
        %570 = vdwg.mxu0
        %571 = vmatpush.bf16.msra.mxu0 %v522
        %572 = vmatpush.bf16.msra.mxu0 %v518
        %573 = vmatpush.bf16.msra.mxu0 %v514
        %574 = vmatpush.bf16.msra.mxu0 %v510
        %575 = vmatpush.bf16.msra.mxu0 %v506
        %576 = vmatpush.bf16.msra.mxu0 %v502
        %577 = vmatpush.bf16.msra.mxu0 %v498
        %578 = vmatpush.bf16.msra.mxu0 %v494
        %579 = vmatmul.bf16.gmra.mxu0 %v395
        %v580 = vpop.f32.mrf.mxu0
        %v581 = vadd.f32 0.0, %v580
        %v582 = vpop.f32.mrf.mxu0
        %v583 = vadd.f32 0.0, %v582
        %584 = vdwg.mxu0
        %585 = vmatpush.bf16.msra.mxu0 %v523
        %586 = vmatpush.bf16.msra.mxu0 %v519
        %587 = vmatpush.bf16.msra.mxu0 %v515
        %588 = vmatpush.bf16.msra.mxu0 %v511
        %589 = vmatpush.bf16.msra.mxu0 %v507
        %590 = vmatpush.bf16.msra.mxu0 %v503
        %591 = vmatpush.bf16.msra.mxu0 %v499
        %592 = vmatpush.bf16.msra.mxu0 %v495
        %593 = vmatmul.bf16.gmra.mxu0 %v395
        %v594 = vpop.f32.mrf.mxu0
        %v595 = vadd.f32 0.0, %v594
        %v596 = vpop.f32.mrf.mxu0
        %v597 = vadd.f32 0.0, %v596
        %598 = vdwg.mxu0
        %599 = vmatpush.bf16.msra.mxu0 %v524
        %600 = vmatpush.bf16.msra.mxu0 %v520
        %601 = vmatpush.bf16.msra.mxu0 %v516
        %602 = vmatpush.bf16.msra.mxu0 %v512
        %603 = vmatpush.bf16.msra.mxu0 %v508
        %604 = vmatpush.bf16.msra.mxu0 %v504
        %605 = vmatpush.bf16.msra.mxu0 %v500
        %606 = vmatpush.bf16.msra.mxu0 %v496
        %607 = vmatmul.bf16.gmra.mxu0 %v395
        %v608 = vpop.f32.mrf.mxu0
        %v609 = vadd.f32 0.0, %v608
        %v610 = vpop.f32.mrf.mxu0
        %v611 = vadd.f32 0.0, %v610
        %612 = vdwg.mxu0
        %v613 = vld [vmem:[%s347] sm:$0xff]
        %v614 = vld [vmem:[%s347 + $0x8] sm:$0xff]
        %616 = vset.pattern.permute.xlu0 0
        %617 = vperm.xlu0 %616, %v613
        %v618 = vpop.permute.xlu0 %617
        %621 = vset.pattern.permute.xlu0 0
        %622 = vperm.xlu0 %621, %v614
        %v623 = vpop.permute.xlu0 %622
        %v625 = vmul.f32 %v567, %v618
        %v626 = vmul.f32 %v581, %v618
        %v627 = vmul.f32 %v595, %v618
        %v628 = vmul.f32 %v609, %v618
        %v629 = vmul.f32 %v569, %v623
        %v630 = vmul.f32 %v583, %v623
        %v631 = vmul.f32 %v597, %v623
        %v632 = vmul.f32 %v611, %v623
        %v633 = vld [vmem:[%s353] sm:$0xff]
        %v634 = vld [vmem:[%s353 + $0x8] sm:$0xff]
        %636 = vset.pattern.permute.xlu0 0
        %637 = vperm.xlu0 %636, %v633
        %v638 = vpop.permute.xlu0 %637
        %641 = vset.pattern.permute.xlu0 0
        %642 = vperm.xlu0 %641, %v634
        %v643 = vpop.permute.xlu0 %642
        %v645 = vadd.f32 %v625, %v638
        %v646 = vadd.f32 %v626, %v638
        %v647 = vadd.f32 %v627, %v638
        %v648 = vadd.f32 %v628, %v638
        %v649 = vadd.f32 %v629, %v643
        %v650 = vadd.f32 %v630, %v643
        %v651 = vadd.f32 %v631, %v643
        %v652 = vadd.f32 %v632, %v643
        %v653 = vmax.f32 %v645, 0.0
        %v654 = vmax.f32 %v646, 0.0
        %v655 = vmax.f32 %v647, 0.0
        %v656 = vmax.f32 %v648, 0.0
        %v657 = vmax.f32 %v649, 0.0
        %v658 = vmax.f32 %v650, 0.0
        %v659 = vmax.f32 %v651, 0.0
        %v660 = vmax.f32 %v652, 0.0
        %v661 = vpack.c.bf16 %v654, %v653
        %v662 = vpack.c.bf16 %v656, %v655
        %v663 = vpack.c.bf16 %v658, %v657
        %v664 = vpack.c.bf16 %v660, %v659
        %665 = vst [vmem:[%s335] sm:$0xff] %v661
        %666 = vst [vmem:[%s335 + $0x8] sm:$0xff] %v662
        %667 = vst [vmem:[%s335 + $0x10] sm:$0xff] %v663
        %668 = vst [vmem:[%s335 + $0x18] sm:$0xff] %v664
        %s669 = sand.u32 %s141, 1
        %s670 = sand.u32 %s141, 1
        %s671 = smul.addr %s670, 32
        %s672 = scalar_lea.vmem [#allocation3], %s671
        // Predicated region
        $region60: #{forward.18} parent=54 // pred_check
          %p673 = pneg %p151
        $region61: #{forward.18} parent=54 // pred_check_branch
          %675 = sbr.rel (%p673) target = $region63
        $region62: #{forward.18} parent=54 // pred_region
          %s676 = smul.u32 2, %s19
          %s677 = smul.u32 4, %s20
          %s678 = smul.addr %s676, 40
          %s679 = sadd.s32 %s677, %s678
          %s680 = smul.addr %s679, 4
          %s681 = scalar_lea.vmem %s4, %s680
          // Predicated region
          $region64: #{forward.18} parent=62 // pred_check
            _
          $region65: #{forward.18} parent=62 // pred_check_branch
            %683 = sbr.rel (0) target = $region67
          $region66: #{forward.18} parent=62 // pred_region
            // Predicated region
            $region68: #{forward.18} parent=66 // pred_check
              _
            $region69: #{forward.18} parent=66 // pred_check_branch
              %685 = sbr.rel (0) target = $region71
            $region70: #{forward.18} parent=66 // pred_region
              loop: start=0, step=1, limit=1
              $region72: #{forward.18} parent=70 // loop_pre_header
                _
              $region73: #{forward.18} parent=70 // loop_header
                %s687 = sphi 0, %s691
                %p688 = scmp.ge.s32.totalorder %s687, 1
                %s692 = sphi %s672, %s672
                %s693 = sphi %s681, %s681
              $region74: #{forward.18} parent=70 // loop_header_branch
                %690 = sbr.rel (%p688) target = $region78
              $region75: #{forward.18} parent=70 // loop_body
                %v694 = vld [vmem:[%s692] sm:$0xff]
                %695 = vst [vmem:[%s693] sm:$0xff] %v694
                %v696 = vld [vmem:[%s692 + $0x8] sm:$0xff]
                %697 = vst [vmem:[%s693 + $0x8] sm:$0xff] %v696
                %v698 = vld [vmem:[%s692 + $0x10] sm:$0xff]
                %699 = vst [vmem:[%s693 + $0xa0] sm:$0xff] %v698
                %v700 = vld [vmem:[%s692 + $0x18] sm:$0xff]
                %701 = vst [vmem:[%s693 + $0xa8] sm:$0xff] %v700
              $region76: #{forward.18} parent=70 // loop_footer
                %s691 = sadd.s32 1, %s687
              $region77: #{forward.18} parent=70 // loop_footer_branch
                %686 = sbr.rel target = $region73
              $region78: #{forward.18} parent=70 // loop_exit
                _
            $region71: #{forward.18} parent=66 // pred_fallthru
              _
            // Predicated region
            $region79: #{forward.18} parent=66 // pred_check
              _
            $region80: #{forward.18} parent=66 // pred_check_branch
              %703 = sbr.rel target = $region82
            $region81: #{forward.18} parent=66 // pred_region
              _
            $region82: #{forward.18} parent=66 // pred_fallthru
              _
          $region67: #{forward.18} parent=62 // pred_fallthru
            _
          %704 = vnop
        $region63: #{forward.18} parent=54 // pred_fallthru
          _
      $region55: #{forward.18} parent=5 // pred_fallthru
        _
      %p705 = scmp.le.s32.totalorder 2, %s10
      // Predicated region
      $region83: #{forward.18} parent=5 // pred_check
        %p706 = pneg %p705
      $region84: #{forward.18} parent=5 // pred_check_branch
        %708 = sbr.rel (%p706) target = $region86
      $region85: #{forward.18} parent=5 // pred_region
        %s709 = ssub.s32 %s10, 2
        // Predicated region
        $region87: #{forward.18} parent=85 // pred_check
          %p710 = pneg %p157
        $region88: #{forward.18} parent=85 // pred_check_branch
          %712 = sbr.rel (%p710) target = $region90
        $region89: #{forward.18} parent=85 // pred_region
          %s713 = sand.u32 %s142, 1
          %s714 = sand.u32 %s142, 1
          %s715 = smul.addr %s714, 32
          %s716 = scalar_lea.vmem [#allocation3], %s715
        $region90: #{forward.18} parent=85 // pred_fallthru
          _
      $region86: #{forward.18} parent=5 // pred_fallthru
        _
    $region6: #{forward.18} parent=1 // loop_footer
      %s14 = sadd.s32 1, %s10
    $region7: #{forward.18} parent=1 // loop_footer_branch
      %9 = sbr.rel target = $region3
    $region8: #{forward.18} parent=1 // loop_exit
      _

// kernel: forward.21
$region0: #{forward.21}
  #allocation0 [shape = 'u32[]', space=smem, size = 0x4, offset = 0x4, fixed_abs, tag = 'smem constant byte address 0x4 - core index']
  #allocation1 [shape = 'u32[72,128]{1,0:T(1,128)}', space=vmem, size = 0x9000, scoped, tag = 'internal scratch']
  %s0 = inlined_call_operand.vmem [shape: bf16[16,128], index: 0, kind: input, shape index: {}]
  %s1 = inlined_call_operand.vmem [shape: bf16[128,128], index: 1, kind: input, shape index: {}]
  %s2 = inlined_call_operand.vmem [shape: f32[1,128], index: 2, kind: input, shape index: {}]
  %s3 = inlined_call_operand.vmem [shape: f32[1,128], index: 3, kind: input, shape index: {}]
  %s4 = inlined_call_operand.vmem [shape: f32[16,128], index: 4, kind: output, shape index: {}]
  %s5 = sld [smem:[#allocation0]]
  $region26: #{forward.21} parent=0
    _
  %s7 = ssub.s32 1, %s5
  %s8 = scalar_select 0, %s7, %s5
  // Predicated region
  $region2: #{forward.21} parent=0 // pred_check
    _
  $region3: #{forward.21} parent=0 // pred_check_branch
    %10 = sbr.rel (0) target = $region5
  $region4: #{forward.21} parent=0 // pred_region
    _
  $region5: #{forward.21} parent=0 // pred_fallthru
    _
  // Predicated region
  $region6: #{forward.21} parent=0 // pred_check
    _
  $region7: #{forward.21} parent=0 // pred_check_branch
    %12 = sbr.rel (0) target = $region9
  $region8: #{forward.21} parent=0 // pred_region
    _
  $region9: #{forward.21} parent=0 // pred_fallthru
    _
  // Predicated region
  $region10: #{forward.21} parent=0 // pred_check
    _
  $region11: #{forward.21} parent=0 // pred_check_branch
    %14 = sbr.rel (0) target = $region13
  $region12: #{forward.21} parent=0 // pred_region
    _
  $region13: #{forward.21} parent=0 // pred_fallthru
    _
  // Predicated region
  $region14: #{forward.21} parent=0 // pred_check
    _
  $region15: #{forward.21} parent=0 // pred_check_branch
    %16 = sbr.rel (0) target = $region17
  $region16: #{forward.21} parent=0 // pred_region
    _
  $region17: #{forward.21} parent=0 // pred_fallthru
    _
  %v17 = vld [vmem:[%s0] sm:$0xf]
  %v18 = vld [vmem:[%s0 + $0x4] sm:$0xf]
  %v19 = vld [vmem:[%s1] sm:$0xf]
  %v20 = vld [vmem:[%s1 + $0x4] sm:$0xf]
  %v21 = vld [vmem:[%s1 + $0x8] sm:$0xf]
  %v22 = vld [vmem:[%s1 + $0xc] sm:$0xf]
  %v23 = vld [vmem:[%s1 + $0x10] sm:$0xf]
  %v24 = vld [vmem:[%s1 + $0x14] sm:$0xf]
  %v25 = vld [vmem:[%s1 + $0x18] sm:$0xf]
  %v26 = vld [vmem:[%s1 + $0x1c] sm:$0xf]
  %v27 = vld [vmem:[%s1 + $0x20] sm:$0xf]
  %v28 = vld [vmem:[%s1 + $0x24] sm:$0xf]
  %v29 = vld [vmem:[%s1 + $0x28] sm:$0xf]
  %v30 = vld [vmem:[%s1 + $0x2c] sm:$0xf]
  %v31 = vld [vmem:[%s1 + $0x30] sm:$0xf]
  %v32 = vld [vmem:[%s1 + $0x34] sm:$0xf]
  %v33 = vld [vmem:[%s1 + $0x38] sm:$0xf]
  %v34 = vld [vmem:[%s1 + $0x3c] sm:$0xf]
  %v37 = vunpack.c.l.b16 %v17
  %v38 = vunpack.c.l.b16 %v18
  %v39 = vpack.c.b16 %v38, %v37
  %v57 = vunpack.c.l.b16 %v19
  %v58 = vunpack.c.l.b16 %v20
  %v59 = vunpack.c.l.b16 %v21
  %v60 = vunpack.c.l.b16 %v22
  %v61 = vunpack.c.l.b16 %v23
  %v62 = vunpack.c.l.b16 %v24
  %v63 = vunpack.c.l.b16 %v25
  %v64 = vunpack.c.l.b16 %v26
  %v65 = vunpack.c.l.b16 %v27
  %v66 = vunpack.c.l.b16 %v28
  %v67 = vunpack.c.l.b16 %v29
  %v68 = vunpack.c.l.b16 %v30
  %v69 = vunpack.c.l.b16 %v31
  %v70 = vunpack.c.l.b16 %v32
  %v71 = vunpack.c.l.b16 %v33
  %v72 = vunpack.c.l.b16 %v34
  %v73 = vpack.c.b16 %v58, %v57
  %v74 = vpack.c.b16 %v60, %v59
  %v75 = vpack.c.b16 %v62, %v61
  %v76 = vpack.c.b16 %v64, %v63
  %v77 = vpack.c.b16 %v66, %v65
  %v78 = vpack.c.b16 %v68, %v67
  %v79 = vpack.c.b16 %v70, %v69
  %v80 = vpack.c.b16 %v72, %v71
  %89 = vmatpush.bf16.msra.mxu0 %v80
  %90 = vmatpush.bf16.msra.mxu0 %v79
  %91 = vmatpush.bf16.msra.mxu0 %v78
  %92 = vmatpush.bf16.msra.mxu0 %v77
  %93 = vmatpush.bf16.msra.mxu0 %v76
  %94 = vmatpush.bf16.msra.mxu0 %v75
  %95 = vmatpush.bf16.msra.mxu0 %v74
  %96 = vmatpush.bf16.msra.mxu0 %v73
  %97 = vmatmul.bf16.gmra.mxu0 %v39
  %v98 = vpop.f32.mrf.mxu0
  %v99 = vadd.f32 0.0, %v98
  %v100 = vpop.f32.mrf.mxu0
  %v101 = vadd.f32 0.0, %v100
  %102 = vdwg.mxu0
  %v103 = vld [vmem:[%s2] sm:$0x1]
  %v105 = vperm.slane %v103, 0
  %v107 = vmul.f32 %v99, %v105
  %v108 = vmul.f32 %v101, %v105
  %v109 = vld [vmem:[%s3] sm:$0x1]
  %v111 = vperm.slane %v109, 0
  %v113 = vadd.f32 %v107, %v111
  %v114 = vadd.f32 %v108, %v111
  %115 = vst [vmem:[%s4] sm:$0xff] %v113
  %116 = vst [vmem:[%s4 + $0x8] sm:$0xff] %v114
  // Predicated region
  $region18: #{forward.21} parent=0 // pred_check
    _
  $region19: #{forward.21} parent=0 // pred_check_branch
    %118 = sbr.rel (0) target = $region21
  $region20: #{forward.21} parent=0 // pred_region
    _
  $region21: #{forward.21} parent=0 // pred_fallthru
    _
  // Predicated region
  $region22: #{forward.21} parent=0 // pred_check
    _
  $region23: #{forward.21} parent=0 // pred_check_branch
    %120 = sbr.rel (0) target = $region25
  $region24: #{forward.21} parent=0 // pred_region
    _
  $region25: #{forward.21} parent=0 // pred_fallthru
    _

// kernel: forward.20
$region0: #{forward.20}
  #allocation0 [shape = 'u32[]', space=smem, size = 0x4, offset = 0x4, fixed_abs, tag = 'smem constant byte address 0x4 - core index']
  #allocation1 [shape = 'u32[72,128]{1,0:T(1,128)}', space=vmem, size = 0x9000, scoped, tag = 'internal scratch']
  #allocation2 [shape = 'f32[16,128]{1,0:T(8,128)}', space=vmem, size = 0x2000, scoped, tag = 'scratch operand']
  %s0 = inlined_call_operand.vmem [shape: bf16[16,14336], index: 0, kind: input, shape index: {}]
  %s1 = inlined_call_operand.vmem [shape: bf16[14336,128], index: 1, kind: input, shape index: {}]
  %s2 = inlined_call_operand.vmem [shape: f32[1,128], index: 2, kind: input, shape index: {}]
  %s3 = inlined_call_operand.vmem [shape: f32[1,128], index: 3, kind: input, shape index: {}]
  %s4 = inlined_call_operand.vmem [shape: bf16[16,128], index: 4, kind: output, shape index: {}]
  %s5 = sld [smem:[#allocation0]]
  $region80: #{forward.20} parent=0
    _
  %s7 = ssub.s32 1, %s5
  %s8 = scalar_select 0, %s7, %s5
  $region1: #{forward.20} parent=0
    #allocation3 [shape = 'u8[131072]{0}', space=vmem, size = 0x20000, scoped, tag = 'input window, operand 0']
    loop: start=0, step=1, limit=9
    $region2: #{forward.20} parent=1 // loop_pre_header
      _
    $region3: #{forward.20} parent=1 // loop_header
      %s10 = sphi 0, %s14
      %p11 = scmp.ge.s32.totalorder %s10, 9
      %s17 = sphi 0, %s36
      %s18 = sphi 0, %s32
      %s19 = sphi 0, %s28
      %s20 = sphi 0, %s17
      %s21 = sphi 0, %s18
      %s22 = sphi 0, %s19
      %s23 = sphi 0, %s20
      %s24 = sphi 0, %s21
      %s25 = sphi 0, %s22
      %s41 = sphi 0, %s43
      %s44 = sphi 0, %s41
      %s45 = sphi 0, %s44
      %s61 = sphi 0, %s45
      %s69 = sphi 0, %s71
      %s72 = sphi 0, %s69
      %s73 = sphi 0, %s72
      %s89 = sphi 0, %s73
      %s95 = sphi 0, %s97
      %s98 = sphi 0, %s95
      %s99 = sphi 0, %s98
      %s115 = sphi 0, %s99
      %s121 = sphi 0, %s123
      %s124 = sphi 0, %s121
      %s125 = sphi 0, %s124
      %s141 = sphi 0, %s125
      %s149 = sphi 0, %s151
      %s152 = sphi 0, %s149
      %s153 = sphi 0, %s152
      %s169 = sphi 0, %s153
    $region4: #{forward.20} parent=1 // loop_header_branch
      %13 = sbr.rel (%p11) target = $region8
    $region5: #{forward.20} parent=1 // loop_body
      %s15 = ssub.s32 %s10, 1
      %s16 = ssub.s32 %s10, 2
      %s26 = sadd.s32 1, %s19
      %p27 = scmp.ge.s32.totalorder %s26, 7
      %s28 = scalar_select %p27, 0, %s26
      %s29 = sadd.s32 1, %s18
      %s30 = scalar_select %p27, %s29, %s18
      %p31 = scmp.ge.s32.totalorder %s30, 1
      %s32 = scalar_select %p31, 0, %s30
      %s33 = sadd.s32 1, %s17
      %s34 = scalar_select %p31, %s33, %s17
      %p35 = scmp.ge.s32.totalorder %s34, 1
      %s36 = scalar_select %p35, 0, %s34
      %s37 = ssub.s32 %s17, %s36
      %s38 = ssub.s32 %s19, %s28
      %s39 = sor.u32 %s37, %s38
      %p40 = scmp.eq.s32.totalorder %s39, 0
      %s42 = sadd.s32 %s41, 1
      %s43 = scalar_select %p40, %s41, %s42
      %p46 = pneg %p40
      %p47 = scmp.eq.s32.totalorder %s10, 6
      %p48 = por %p46, %p47
      %p49 = scmp.ne.s32.totalorder %s41, %s44
      %p50 = scmp.eq.s32.totalorder %s10, 0
      %p51 = por %p49, %p50
      %p52 = scmp.ne.s32.totalorder %s41, %s44
      %p53 = scmp.eq.s32.totalorder %s15, 6
      %p54 = por %p52, %p53
      %p55 = scmp.ne.s32.totalorder %s44, %s45
      %p56 = scmp.eq.s32.totalorder %s15, 0
      %p57 = por %p55, %p56
      %p58 = scmp.ne.s32.totalorder %s44, %s45
      %p59 = scmp.eq.s32.totalorder %s16, 6
      %p60 = por %p58, %p59
      %p62 = scmp.ne.s32.totalorder %s45, %s61
      %p63 = scmp.eq.s32.totalorder %s16, 0
      %p64 = por %p62, %p63
      %s65 = ssub.s32 %s19, %s28
      %s66 = ssub.s32 %s18, %s32
      %s67 = sor.u32 %s65, %s66
      %p68 = scmp.eq.s32.totalorder %s67, 0
      %s70 = sadd.s32 %s69, 1
      %s71 = scalar_select %p68, %s69, %s70
      %p74 = pneg %p68
      %p75 = scmp.eq.s32.totalorder %s10, 6
      %p76 = por %p74, %p75
      %p77 = scmp.ne.s32.totalorder %s69, %s72
      %p78 = scmp.eq.s32.totalorder %s10, 0
      %p79 = por %p77, %p78
      %p80 = scmp.ne.s32.totalorder %s69, %s72
      %p81 = scmp.eq.s32.totalorder %s15, 6
      %p82 = por %p80, %p81
      %p83 = scmp.ne.s32.totalorder %s72, %s73
      %p84 = scmp.eq.s32.totalorder %s15, 0
      %p85 = por %p83, %p84
      %p86 = scmp.ne.s32.totalorder %s72, %s73
      %p87 = scmp.eq.s32.totalorder %s16, 6
      %p88 = por %p86, %p87
      %p90 = scmp.ne.s32.totalorder %s73, %s89
      %p91 = scmp.eq.s32.totalorder %s16, 0
      %p92 = por %p90, %p91
      %s93 = ssub.s32 %s18, %s32
      %p94 = scmp.eq.s32.totalorder %s93, 0
      %s96 = sadd.s32 %s95, 1
      %s97 = scalar_select %p94, %s95, %s96
      %p100 = pneg %p94
      %p101 = scmp.eq.s32.totalorder %s10, 6
      %p102 = por %p100, %p101
      %p103 = scmp.ne.s32.totalorder %s95, %s98
      %p104 = scmp.eq.s32.totalorder %s10, 0
      %p105 = por %p103, %p104
      %p106 = scmp.ne.s32.totalorder %s95, %s98
      %p107 = scmp.eq.s32.totalorder %s15, 6
      %p108 = por %p106, %p107
      %p109 = scmp.ne.s32.totalorder %s98, %s99
      %p110 = scmp.eq.s32.totalorder %s15, 0
      %p111 = por %p109, %p110
      %p112 = scmp.ne.s32.totalorder %s98, %s99
      %p113 = scmp.eq.s32.totalorder %s16, 6
      %p114 = por %p112, %p113
      %p116 = scmp.ne.s32.totalorder %s99, %s115
      %p117 = scmp.eq.s32.totalorder %s16, 0
      %p118 = por %p116, %p117
      %s119 = ssub.s32 %s18, %s32
      %p120 = scmp.eq.s32.totalorder %s119, 0
      %s122 = sadd.s32 %s121, 1
      %s123 = scalar_select %p120, %s121, %s122
      %p126 = pneg %p120
      %p127 = scmp.eq.s32.totalorder %s10, 6
      %p128 = por %p126, %p127
      %p129 = scmp.ne.s32.totalorder %s121, %s124
      %p130 = scmp.eq.s32.totalorder %s10, 0
      %p131 = por %p129, %p130
      %p132 = scmp.ne.s32.totalorder %s121, %s124
      %p133 = scmp.eq.s32.totalorder %s15, 6
      %p134 = por %p132, %p133
      %p135 = scmp.ne.s32.totalorder %s124, %s125
      %p136 = scmp.eq.s32.totalorder %s15, 0
      %p137 = por %p135, %p136
      %p138 = scmp.ne.s32.totalorder %s124, %s125
      %p139 = scmp.eq.s32.totalorder %s16, 6
      %p140 = por %p138, %p139
      %p142 = scmp.ne.s32.totalorder %s125, %s141
      %p143 = scmp.eq.s32.totalorder %s16, 0
      %p144 = por %p142, %p143
      %s145 = ssub.s32 %s17, %s36
      %s146 = ssub.s32 %s18, %s32
      %s147 = sor.u32 %s145, %s146
      %p148 = scmp.eq.s32.totalorder %s147, 0
      %s150 = sadd.s32 %s149, 1
      %s151 = scalar_select %p148, %s149, %s150
      %p154 = pneg %p148
      %p155 = scmp.eq.s32.totalorder %s10, 6
      %p156 = por %p154, %p155
      %p157 = scmp.ne.s32.totalorder %s149, %s152
      %p158 = scmp.eq.s32.totalorder %s10, 0
      %p159 = por %p157, %p158
      %p160 = scmp.ne.s32.totalorder %s149, %s152
      %p161 = scmp.eq.s32.totalorder %s15, 6
      %p162 = por %p160, %p161
      %p163 = scmp.ne.s32.totalorder %s152, %s153
      %p164 = scmp.eq.s32.totalorder %s15, 0
      %p165 = por %p163, %p164
      %p166 = scmp.ne.s32.totalorder %s152, %s153
      %p167 = scmp.eq.s32.totalorder %s16, 6
      %p168 = por %p166, %p167
      %p170 = scmp.ne.s32.totalorder %s153, %s169
      %p171 = scmp.eq.s32.totalorder %s16, 0
      %p172 = por %p170, %p171
      %p173 = scmp.le.s32.totalorder 1, %s10
      %p174 = scmp.lt.s32.totalorder %s10, 8
      %p175 = pnand %p173, %p174
      %p176 = pneg %p175
      // Predicated region
      $region9: #{forward.20} parent=5 // pred_check
        _
      $region10: #{forward.20} parent=5 // pred_check_branch
        %178 = sbr.rel (%p175) target = $region12
      $region11: #{forward.20} parent=5 // pred_region
        %s179 = ssub.s32 %s10, 1
        // Predicated region
        $region13: #{forward.20} parent=11 // pred_check
          %p180 = pneg %p111
        $region14: #{forward.20} parent=11 // pred_check_branch
          %182 = sbr.rel (%p180) target = $region16
        $region15: #{forward.20} parent=11 // pred_region
          %p183 = scmp.lt.s32.totalorder %s21, 0
          %s184 = scalar_select %p183, %s21, 0
          %s185 = scalar_lea.vmem %s2, %s184
        $region16: #{forward.20} parent=11 // pred_fallthru
          _
        // Predicated region
        $region17: #{forward.20} parent=11 // pred_check
          %p186 = pneg %p137
        $region18: #{forward.20} parent=11 // pred_check_branch
          %188 = sbr.rel (%p186) target = $region20
        $region19: #{forward.20} parent=11 // pred_region
          %p189 = scmp.lt.s32.totalorder %s21, 0
          %s190 = scalar_select %p189, %s21, 0
          %s191 = scalar_lea.vmem %s3, %s190
        $region20: #{forward.20} parent=11 // pred_fallthru
          _
      $region12: #{forward.20} parent=5 // pred_fallthru
        _
      %p192 = scmp.lt.s32.totalorder %s10, 7
      // Predicated region
      $region21: #{forward.20} parent=5 // pred_check
        %p193 = pneg %p192
      $region22: #{forward.20} parent=5 // pred_check_branch
        %195 = sbr.rel (%p193) target = $region24
      $region23: #{forward.20} parent=5 // pred_region
        // Predicated region
        $region25: #{forward.20} parent=23 // pred_check
          %p196 = pneg %p51
        $region26: #{forward.20} parent=23 // pred_check_branch
          %198 = sbr.rel (%p196) target = $region28
        $region27: #{forward.20} parent=23 // pred_region
          %s199 = sand.u32 %s41, 1
          %s200 = sand.u32 %s41, 1
          %s201 = smul.addr %s200, 128
          %s202 = scalar_lea.vmem [#allocation3], %s201
          %s203 = smul.u32 2, %s17
          %s204 = smul.u32 16, %s19
          %s205 = smul.addr %s203, 112
          %s206 = sadd.s32 %s204, %s205
          %s207 = smul.addr %s206, 4
          %s208 = scalar_lea.vmem %s0, %s207
          // Predicated region
          $region29: #{forward.20} parent=27 // pred_check
            _
          $region30: #{forward.20} parent=27 // pred_check_branch
            %210 = sbr.rel (0) target = $region32
          $region31: #{forward.20} parent=27 // pred_region
            // Predicated region
            $region33: #{forward.20} parent=31 // pred_check
              _
            $region34: #{forward.20} parent=31 // pred_check_branch
              %212 = sbr.rel (0) target = $region36
            $region35: #{forward.20} parent=31 // pred_region
              loop: start=0, step=1, limit=1
              $region37: #{forward.20} parent=35 // loop_pre_header
                _
              $region38: #{forward.20} parent=35 // loop_header
                %s214 = sphi 0, %s218
                %p215 = scmp.ge.s32.totalorder %s214, 1
                %s219 = sphi %s208, %s208
                %s220 = sphi %s202, %s202
              $region39: #{forward.20} parent=35 // loop_header_branch
                %217 = sbr.rel (%p215) target = $region43
              $region40: #{forward.20} parent=35 // loop_body
                %v221 = vld [vmem:[%s219] sm:$0xff]
                %222 = vst [vmem:[%s220] sm:$0xff] %v221
                %v223 = vld [vmem:[%s219 + $0x8] sm:$0xff]
                %224 = vst [vmem:[%s220 + $0x8] sm:$0xff] %v223
                %v225 = vld [vmem:[%s219 + $0x10] sm:$0xff]
                %226 = vst [vmem:[%s220 + $0x10] sm:$0xff] %v225
                %v227 = vld [vmem:[%s219 + $0x18] sm:$0xff]
                %228 = vst [vmem:[%s220 + $0x18] sm:$0xff] %v227
                %v229 = vld [vmem:[%s219 + $0x20] sm:$0xff]
                %230 = vst [vmem:[%s220 + $0x20] sm:$0xff] %v229
                %v231 = vld [vmem:[%s219 + $0x28] sm:$0xff]
                %232 = vst [vmem:[%s220 + $0x28] sm:$0xff] %v231
                %v233 = vld [vmem:[%s219 + $0x30] sm:$0xff]
                %234 = vst [vmem:[%s220 + $0x30] sm:$0xff] %v233
                %v235 = vld [vmem:[%s219 + $0x38] sm:$0xff]
                %236 = vst [vmem:[%s220 + $0x38] sm:$0xff] %v235
                %v237 = vld [vmem:[%s219 + $0x1c0] sm:$0xff]
                %238 = vst [vmem:[%s220 + $0x40] sm:$0xff] %v237
                %v239 = vld [vmem:[%s219 + $0x1c8] sm:$0xff]
                %240 = vst [vmem:[%s220 + $0x48] sm:$0xff] %v239
                %v241 = vld [vmem:[%s219 + $0x1d0] sm:$0xff]
                %242 = vst [vmem:[%s220 + $0x50] sm:$0xff] %v241
                %v243 = vld [vmem:[%s219 + $0x1d8] sm:$0xff]
                %244 = vst [vmem:[%s220 + $0x58] sm:$0xff] %v243
                %v245 = vld [vmem:[%s219 + $0x1e0] sm:$0xff]
                %246 = vst [vmem:[%s220 + $0x60] sm:$0xff] %v245
                %v247 = vld [vmem:[%s219 + $0x1e8] sm:$0xff]
                %248 = vst [vmem:[%s220 + $0x68] sm:$0xff] %v247
                %v249 = vld [vmem:[%s219 + $0x1f0] sm:$0xff]
                %250 = vst [vmem:[%s220 + $0x70] sm:$0xff] %v249
                %v251 = vld [vmem:[%s219 + $0x1f8] sm:$0xff]
                %252 = vst [vmem:[%s220 + $0x78] sm:$0xff] %v251
              $region41: #{forward.20} parent=35 // loop_footer
                %s218 = sadd.s32 1, %s214
              $region42: #{forward.20} parent=35 // loop_footer_branch
                %213 = sbr.rel target = $region38
              $region43: #{forward.20} parent=35 // loop_exit
                _
            $region36: #{forward.20} parent=31 // pred_fallthru
              _
            // Predicated region
            $region44: #{forward.20} parent=31 // pred_check
              _
            $region45: #{forward.20} parent=31 // pred_check_branch
              %254 = sbr.rel target = $region47
            $region46: #{forward.20} parent=31 // pred_region
              _
            $region47: #{forward.20} parent=31 // pred_fallthru
              _
          $region32: #{forward.20} parent=27 // pred_fallthru
            _
          %255 = vnop
        $region28: #{forward.20} parent=23 // pred_fallthru
          _
        // Predicated region
        $region48: #{forward.20} parent=23 // pred_check
          %p256 = pneg %p79
        $region49: #{forward.20} parent=23 // pred_check_branch
          %258 = sbr.rel (%p256) target = $region51
        $region50: #{forward.20} parent=23 // pred_region
          %s259 = smul.u32 256, %s19
          %p260 = scmp.lt.s32.totalorder %s259, 1791
          %s261 = scalar_select %p260, %s259, 1791
          %p262 = scmp.lt.s32.totalorder %s18, 0
          %s263 = scalar_select %p262, %s18, 0
          %s264 = sadd.s32 %s263, %s261
          %s265 = smul.addr %s264, 4
          %s266 = scalar_lea.vmem %s1, %s265
          %s267 = smul.u32 256, %s19
        $region51: #{forward.20} parent=23 // pred_fallthru
          _
      $region24: #{forward.20} parent=5 // pred_fallthru
        _
      %p268 = scmp.le.s32.totalorder 1, %s10
      %p269 = scmp.lt.s32.totalorder %s10, 8
      %p270 = pnand %p268, %p269
      %p271 = pneg %p270
      // Predicated region
      $region52: #{forward.20} parent=5 // pred_check
        _
      $region53: #{forward.20} parent=5 // pred_check_branch
        %273 = sbr.rel (%p270) target = $region55
      $region54: #{forward.20} parent=5 // pred_region
        %s274 = ssub.s32 %s10, 1
        %s275 = sand.u32 %s44, 1
        %s276 = sand.u32 %s44, 1
        %s277 = smul.addr %s276, 128
        %s278 = scalar_lea.vmem [#allocation3], %s277
        // Predicated region
        $region56: #{forward.20} parent=54 // pred_check
          %p279 = pneg %p57
        $region57: #{forward.20} parent=54 // pred_check_branch
          %281 = sbr.rel (%p279) target = $region59
        $region58: #{forward.20} parent=54 // pred_region
          _
        $region59: #{forward.20} parent=54 // pred_fallthru
          _
        %s282 = sand.u32 %s44, 1
        %s283 = sand.u32 %s44, 1
        %s284 = smul.addr %s283, 128
        %s285 = scalar_lea.vmem [#allocation3], %s284
        %p286 = pneg %p57
        %p287 = pneg %p54
        %s288 = smul.u32 256, %s22
        %p289 = scmp.lt.s32.totalorder %s288, 1791
        %s290 = scalar_select %p289, %s288, 1791
        %p291 = scmp.lt.s32.totalorder %s21, 0
        %s292 = scalar_select %p291, %s21, 0
        %s293 = sadd.s32 %s292, %s290
        %s294 = smul.addr %s293, 4
        %s295 = scalar_lea.vmem %s1, %s294
        %p296 = pneg %p85
        %p297 = pneg %p82
        %p298 = scmp.lt.s32.totalorder %s21, 0
        %s299 = scalar_select %p298, %s21, 0
        %s300 = scalar_lea.vmem %s2, %s299
        %p301 = pneg %p111
        %p302 = pneg %p108
        %p303 = scmp.lt.s32.totalorder %s21, 0
        %s304 = scalar_select %p303, %s21, 0
        %s305 = scalar_lea.vmem %s3, %s304
        %p306 = pneg %p137
        %p307 = pneg %p134
        %p308 = pneg %p165
        %p309 = pneg %p162
        %s310 = smul.u32 2, %s20
        %p311 = scmp.lt.s32.totalorder %s310, 1
        %s312 = scalar_select %p311, %s310, 1
        %p313 = scmp.lt.s32.totalorder %s21, 0
        %s314 = scalar_select %p313, %s21, 0
        %s315 = sadd.s32 %s314, %s312
        %s316 = smul.addr %s315, 4
        %s317 = scalar_lea.vmem %s4, %s316
        %s318 = smul.u32 2, %s20
        %s319 = smul.u32 16, %s22
        %s320 = smul.u32 256, %s22
        %p321 = scmp.lt.s32.totalorder %s320, 1791
        %s322 = scalar_select %p321, %s320, 1791
        %p323 = scmp.lt.s32.totalorder %s21, 0
        %s324 = scalar_select %p323, %s21, 0
        %s325 = sadd.s32 %s324, %s322
        %s326 = smul.addr %s325, 4
        %s327 = scalar_lea.vmem %s1, %s326
        %s328 = smul.u32 256, %s22
        %p329 = scmp.lt.s32.totalorder %s21, 0
        %s330 = scalar_select %p329, %s21, 0
        %s331 = scalar_lea.vmem %s2, %s330
        %p332 = scmp.lt.s32.totalorder %s21, 0
        %s333 = scalar_select %p332, %s21, 0
        %s334 = scalar_lea.vmem %s3, %s333
        %s335 = smul.u32 2, %s20
        %p336 = scmp.lt.s32.totalorder %s335, 1
        %s337 = scalar_select %p336, %s335, 1
        %p338 = scmp.lt.s32.totalorder %s21, 0
        %s339 = scalar_select %p338, %s21, 0
        %s340 = sadd.s32 %s339, %s337
        %s341 = smul.addr %s340, 4
        %s342 = scalar_lea.vmem %s4, %s341
        %s343 = smul.u32 2, %s20
        %p344 = scmp.eq.s32.totalorder %s22, 0
        // Predicated region
        $region60: #{forward.20} parent=54 // pred_check
          %p345 = pneg %p344
        $region61: #{forward.20} parent=54 // pred_check_branch
          %347 = sbr.rel (%p345) target = $region63
        $region62: #{forward.20} parent=54 // pred_region
          %348 = vst [vmem:[#allocation2] sm:$0xff] 0.0
          %349 = vst [vmem:[#allocation2 + $0x8] sm:$0xff] 0.0
        $region63: #{forward.20} parent=54 // pred_fallthru
          _
        %v350 = vld [vmem:[#allocation2] sm:$0xff]
        %v351 = vld [vmem:[#allocation2 + $0x8] sm:$0xff]
        %v352 = vld [vmem:[%s278] sm:$0xff]
        %v353 = vld [vmem:[%s278 + $0x8] sm:$0xff]
        %v354 = vld [vmem:[%s278 + $0x10] sm:$0xff]
        %v355 = vld [vmem:[%s278 + $0x18] sm:$0xff]
        %v356 = vld [vmem:[%s278 + $0x20] sm:$0xff]
        %v357 = vld [vmem:[%s278 + $0x28] sm:$0xff]
        %v358 = vld [vmem:[%s278 + $0x30] sm:$0xff]
        %v359 = vld [vmem:[%s278 + $0x38] sm:$0xff]
        %v360 = vld [vmem:[%s278 + $0x40] sm:$0xff]
        %v361 = vld [vmem:[%s278 + $0x48] sm:$0xff]
        %v362 = vld [vmem:[%s278 + $0x50] sm:$0xff]
        %v363 = vld [vmem:[%s278 + $0x58] sm:$0xff]
        %v364 = vld [vmem:[%s278 + $0x60] sm:$0xff]
        %v365 = vld [vmem:[%s278 + $0x68] sm:$0xff]
        %v366 = vld [vmem:[%s278 + $0x70] sm:$0xff]
        %v367 = vld [vmem:[%s278 + $0x78] sm:$0xff]
        %v368 = vld [vmem:[%s327] sm:$0xf]
        %v369 = vld [vmem:[%s327 + $0x4] sm:$0xf]
        %v370 = vld [vmem:[%s327 + $0x8] sm:$0xf]
        %v371 = vld [vmem:[%s327 + $0xc] sm:$0xf]
        %v372 = vld [vmem:[%s327 + $0x10] sm:$0xf]
        %v373 = vld [vmem:[%s327 + $0x14] sm:$0xf]
        %v374 = vld [vmem:[%s327 + $0x18] sm:$0xf]
        %v375 = vld [vmem:[%s327 + $0x1c] sm:$0xf]
        %v376 = vld [vmem:[%s327 + $0x20] sm:$0xf]
        %v377 = vld [vmem:[%s327 + $0x24] sm:$0xf]
        %v378 = vld [vmem:[%s327 + $0x28] sm:$0xf]
        %v379 = vld [vmem:[%s327 + $0x2c] sm:$0xf]
        %v380 = vld [vmem:[%s327 + $0x30] sm:$0xf]
        %v381 = vld [vmem:[%s327 + $0x34] sm:$0xf]
        %v382 = vld [vmem:[%s327 + $0x38] sm:$0xf]
        %v383 = vld [vmem:[%s327 + $0x3c] sm:$0xf]
        %v384 = vld [vmem:[%s327 + $0x40] sm:$0xf]
        %v385 = vld [vmem:[%s327 + $0x44] sm:$0xf]
        %v386 = vld [vmem:[%s327 + $0x48] sm:$0xf]
        %v387 = vld [vmem:[%s327 + $0x4c] sm:$0xf]
        %v388 = vld [vmem:[%s327 + $0x50] sm:$0xf]
        %v389 = vld [vmem:[%s327 + $0x54] sm:$0xf]
        %v390 = vld [vmem:[%s327 + $0x58] sm:$0xf]
        %v391 = vld [vmem:[%s327 + $0x5c] sm:$0xf]
        %v392 = vld [vmem:[%s327 + $0x60] sm:$0xf]
        %v393 = vld [vmem:[%s327 + $0x64] sm:$0xf]
        %v394 = vld [vmem:[%s327 + $0x68] sm:$0xf]
        %v395 = vld [vmem:[%s327 + $0x6c] sm:$0xf]
        %v396 = vld [vmem:[%s327 + $0x70] sm:$0xf]
        %v397 = vld [vmem:[%s327 + $0x74] sm:$0xf]
        %v398 = vld [vmem:[%s327 + $0x78] sm:$0xf]
        %v399 = vld [vmem:[%s327 + $0x7c] sm:$0xf]
        %v400 = vld [vmem:[%s327 + $0x80] sm:$0xf]
        %v401 = vld [vmem:[%s327 + $0x84] sm:$0xf]
        %v402 = vld [vmem:[%s327 + $0x88] sm:$0xf]
        %v403 = vld [vmem:[%s327 + $0x8c] sm:$0xf]
        %v404 = vld [vmem:[%s327 + $0x90] sm:$0xf]
        %v405 = vld [vmem:[%s327 + $0x94] sm:$0xf]
        %v406 = vld [vmem:[%s327 + $0x98] sm:$0xf]
        %v407 = vld [vmem:[%s327 + $0x9c] sm:$0xf]
        %v408 = vld [vmem:[%s327 + $0xa0] sm:$0xf]
        %v409 = vld [vmem:[%s327 + $0xa4] sm:$0xf]
        %v410 = vld [vmem:[%s327 + $0xa8] sm:$0xf]
        %v411 = vld [vmem:[%s327 + $0xac] sm:$0xf]
        %v412 = vld [vmem:[%s327 + $0xb0] sm:$0xf]
        %v413 = vld [vmem:[%s327 + $0xb4] sm:$0xf]
        %v414 = vld [vmem:[%s327 + $0xb8] sm:$0xf]
        %v415 = vld [vmem:[%s327 + $0xbc] sm:$0xf]
        %v416 = vld [vmem:[%s327 + $0xc0] sm:$0xf]
        %v417 = vld [vmem:[%s327 + $0xc4] sm:$0xf]
        %v418 = vld [vmem:[%s327 + $0xc8] sm:$0xf]
        %v419 = vld [vmem:[%s327 + $0xcc] sm:$0xf]
        %v420 = vld [vmem:[%s327 + $0xd0] sm:$0xf]
        %v421 = vld [vmem:[%s327 + $0xd4] sm:$0xf]
        %v422 = vld [vmem:[%s327 + $0xd8] sm:$0xf]
        %v423 = vld [vmem:[%s327 + $0xdc] sm:$0xf]
        %v424 = vld [vmem:[%s327 + $0xe0] sm:$0xf]
        %v425 = vld [vmem:[%s327 + $0xe4] sm:$0xf]
        %v426 = vld [vmem:[%s327 + $0xe8] sm:$0xf]
        %v427 = vld [vmem:[%s327 + $0xec] sm:$0xf]
        %v428 = vld [vmem:[%s327 + $0xf0] sm:$0xf]
        %v429 = vld [vmem:[%s327 + $0xf4] sm:$0xf]
        %v430 = vld [vmem:[%s327 + $0xf8] sm:$0xf]
        %v431 = vld [vmem:[%s327 + $0xfc] sm:$0xf]
        %v432 = vld [vmem:[%s327 + $0x100] sm:$0xf]
        %v433 = vld [vmem:[%s327 + $0x104] sm:$0xf]
        %v434 = vld [vmem:[%s327 + $0x108] sm:$0xf]
        %v435 = vld [vmem:[%s327 + $0x10c] sm:$0xf]
        %v436 = vld [vmem:[%s327 + $0x110] sm:$0xf]
        %v437 = vld [vmem:[%s327 + $0x114] sm:$0xf]
        %v438 = vld [vmem:[%s327 + $0x118] sm:$0xf]
        %v439 = vld [vmem:[%s327 + $0x11c] sm:$0xf]
        %v440 = vld [vmem:[%s327 + $0x120] sm:$0xf]
        %v441 = vld [vmem:[%s327 + $0x124] sm:$0xf]
        %v442 = vld [vmem:[%s327 + $0x128] sm:$0xf]
        %v443 = vld [vmem:[%s327 + $0x12c] sm:$0xf]
        %v444 = vld [vmem:[%s327 + $0x130] sm:$0xf]
        %v445 = vld [vmem:[%s327 + $0x134] sm:$0xf]
        %v446 = vld [vmem:[%s327 + $0x138] sm:$0xf]
        %v447 = vld [vmem:[%s327 + $0x13c] sm:$0xf]
        %v448 = vld [vmem:[%s327 + $0x140] sm:$0xf]
        %v449 = vld [vmem:[%s327 + $0x144] sm:$0xf]
        %v450 = vld [vmem:[%s327 + $0x148] sm:$0xf]
        %v451 = vld [vmem:[%s327 + $0x14c] sm:$0xf]
        %v452 = vld [vmem:[%s327 + $0x150] sm:$0xf]
        %v453 = vld [vmem:[%s327 + $0x154] sm:$0xf]
        %v454 = vld [vmem:[%s327 + $0x158] sm:$0xf]
        %v455 = vld [vmem:[%s327 + $0x15c] sm:$0xf]
        %v456 = vld [vmem:[%s327 + $0x160] sm:$0xf]
        %v457 = vld [vmem:[%s327 + $0x164] sm:$0xf]
        %v458 = vld [vmem:[%s327 + $0x168] sm:$0xf]
        %v459 = vld [vmem:[%s327 + $0x16c] sm:$0xf]
        %v460 = vld [vmem:[%s327 + $0x170] sm:$0xf]
        %v461 = vld [vmem:[%s327 + $0x174] sm:$0xf]
        %v462 = vld [vmem:[%s327 + $0x178] sm:$0xf]
        %v463 = vld [vmem:[%s327 + $0x17c] sm:$0xf]
        %v464 = vld [vmem:[%s327 + $0x180] sm:$0xf]
        %v465 = vld [vmem:[%s327 + $0x184] sm:$0xf]
        %v466 = vld [vmem:[%s327 + $0x188] sm:$0xf]
        %v467 = vld [vmem:[%s327 + $0x18c] sm:$0xf]
        %v468 = vld [vmem:[%s327 + $0x190] sm:$0xf]
        %v469 = vld [vmem:[%s327 + $0x194] sm:$0xf]
        %v470 = vld [vmem:[%s327 + $0x198] sm:$0xf]
        %v471 = vld [vmem:[%s327 + $0x19c] sm:$0xf]
        %v472 = vld [vmem:[%s327 + $0x1a0] sm:$0xf]
        %v473 = vld [vmem:[%s327 + $0x1a4] sm:$0xf]
        %v474 = vld [vmem:[%s327 + $0x1a8] sm:$0xf]
        %v475 = vld [vmem:[%s327 + $0x1ac] sm:$0xf]
        %v476 = vld [vmem:[%s327 + $0x1b0] sm:$0xf]
        %v477 = vld [vmem:[%s327 + $0x1b4] sm:$0xf]
        %v478 = vld [vmem:[%s327 + $0x1b8] sm:$0xf]
        %v479 = vld [vmem:[%s327 + $0x1bc] sm:$0xf]
        %v480 = vld [vmem:[%s327 + $0x1c0] sm:$0xf]
        %v481 = vld [vmem:[%s327 + $0x1c4] sm:$0xf]
        %v482 = vld [vmem:[%s327 + $0x1c8] sm:$0xf]
        %v483 = vld [vmem:[%s327 + $0x1cc] sm:$0xf]
        %v484 = vld [vmem:[%s327 + $0x1d0] sm:$0xf]
        %v485 = vld [vmem:[%s327 + $0x1d4] sm:$0xf]
        %v486 = vld [vmem:[%s327 + $0x1d8] sm:$0xf]
        %v487 = vld [vmem:[%s327 + $0x1dc] sm:$0xf]
        %v488 = vld [vmem:[%s327 + $0x1e0] sm:$0xf]
        %v489 = vld [vmem:[%s327 + $0x1e4] sm:$0xf]
        %v490 = vld [vmem:[%s327 + $0x1e8] sm:$0xf]
        %v491 = vld [vmem:[%s327 + $0x1ec] sm:$0xf]
        %v492 = vld [vmem:[%s327 + $0x1f0] sm:$0xf]
        %v493 = vld [vmem:[%s327 + $0x1f4] sm:$0xf]
        %v494 = vld [vmem:[%s327 + $0x1f8] sm:$0xf]
        %v495 = vld [vmem:[%s327 + $0x1fc] sm:$0xf]
        %v496 = vld [vmem:[%s327 + $0x200] sm:$0xf]
        %v497 = vld [vmem:[%s327 + $0x204] sm:$0xf]
        %v498 = vld [vmem:[%s327 + $0x208] sm:$0xf]
        %v499 = vld [vmem:[%s327 + $0x20c] sm:$0xf]
        %v500 = vld [vmem:[%s327 + $0x210] sm:$0xf]
        %v501 = vld [vmem:[%s327 + $0x214] sm:$0xf]
        %v502 = vld [vmem:[%s327 + $0x218] sm:$0xf]
        %v503 = vld [vmem:[%s327 + $0x21c] sm:$0xf]
        %v504 = vld [vmem:[%s327 + $0x220] sm:$0xf]
        %v505 = vld [vmem:[%s327 + $0x224] sm:$0xf]
        %v506 = vld [vmem:[%s327 + $0x228] sm:$0xf]
        %v507 = vld [vmem:[%s327 + $0x22c] sm:$0xf]
        %v508 = vld [vmem:[%s327 + $0x230] sm:$0xf]
        %v509 = vld [vmem:[%s327 + $0x234] sm:$0xf]
        %v510 = vld [vmem:[%s327 + $0x238] sm:$0xf]
        %v511 = vld [vmem:[%s327 + $0x23c] sm:$0xf]
        %v512 = vld [vmem:[%s327 + $0x240] sm:$0xf]
        %v513 = vld [vmem:[%s327 + $0x244] sm:$0xf]
        %v514 = vld [vmem:[%s327 + $0x248] sm:$0xf]
        %v515 = vld [vmem:[%s327 + $0x24c] sm:$0xf]
        %v516 = vld [vmem:[%s327 + $0x250] sm:$0xf]
        %v517 = vld [vmem:[%s327 + $0x254] sm:$0xf]
        %v518 = vld [vmem:[%s327 + $0x258] sm:$0xf]
        %v519 = vld [vmem:[%s327 + $0x25c] sm:$0xf]
        %v520 = vld [vmem:[%s327 + $0x260] sm:$0xf]
        %v521 = vld [vmem:[%s327 + $0x264] sm:$0xf]
        %v522 = vld [vmem:[%s327 + $0x268] sm:$0xf]
        %v523 = vld [vmem:[%s327 + $0x26c] sm:$0xf]
        %v524 = vld [vmem:[%s327 + $0x270] sm:$0xf]
        %v525 = vld [vmem:[%s327 + $0x274] sm:$0xf]
        %v526 = vld [vmem:[%s327 + $0x278] sm:$0xf]
        %v527 = vld [vmem:[%s327 + $0x27c] sm:$0xf]
        %v528 = vld [vmem:[%s327 + $0x280] sm:$0xf]
        %v529 = vld [vmem:[%s327 + $0x284] sm:$0xf]
        %v530 = vld [vmem:[%s327 + $0x288] sm:$0xf]
        %v531 = vld [vmem:[%s327 + $0x28c] sm:$0xf]
        %v532 = vld [vmem:[%s327 + $0x290] sm:$0xf]
        %v533 = vld [vmem:[%s327 + $0x294] sm:$0xf]
        %v534 = vld [vmem:[%s327 + $0x298] sm:$0xf]
        %v535 = vld [vmem:[%s327 + $0x29c] sm:$0xf]
        %v536 = vld [vmem:[%s327 + $0x2a0] sm:$0xf]
        %v537 = vld [vmem:[%s327 + $0x2a4] sm:$0xf]
        %v538 = vld [vmem:[%s327 + $0x2a8] sm:$0xf]
        %v539 = vld [vmem:[%s327 + $0x2ac] sm:$0xf]
        %v540 = vld [vmem:[%s327 + $0x2b0] sm:$0xf]
        %v541 = vld [vmem:[%s327 + $0x2b4] sm:$0xf]
        %v542 = vld [vmem:[%s327 + $0x2b8] sm:$0xf]
        %v543 = vld [vmem:[%s327 + $0x2bc] sm:$0xf]
        %v544 = vld [vmem:[%s327 + $0x2c0] sm:$0xf]
        %v545 = vld [vmem:[%s327 + $0x2c4] sm:$0xf]
        %v546 = vld [vmem:[%s327 + $0x2c8] sm:$0xf]
        %v547 = vld [vmem:[%s327 + $0x2cc] sm:$0xf]
        %v548 = vld [vmem:[%s327 + $0x2d0] sm:$0xf]
        %v549 = vld [vmem:[%s327 + $0x2d4] sm:$0xf]
        %v550 = vld [vmem:[%s327 + $0x2d8] sm:$0xf]
        %v551 = vld [vmem:[%s327 + $0x2dc] sm:$0xf]
        %v552 = vld [vmem:[%s327 + $0x2e0] sm:$0xf]
        %v553 = vld [vmem:[%s327 + $0x2e4] sm:$0xf]
        %v554 = vld [vmem:[%s327 + $0x2e8] sm:$0xf]
        %v555 = vld [vmem:[%s327 + $0x2ec] sm:$0xf]
        %v556 = vld [vmem:[%s327 + $0x2f0] sm:$0xf]
        %v557 = vld [vmem:[%s327 + $0x2f4] sm:$0xf]
        %v558 = vld [vmem:[%s327 + $0x2f8] sm:$0xf]
        %v559 = vld [vmem:[%s327 + $0x2fc] sm:$0xf]
        %v560 = vld [vmem:[%s327 + $0x300] sm:$0xf]
        %v561 = vld [vmem:[%s327 + $0x304] sm:$0xf]
        %v562 = vld [vmem:[%s327 + $0x308] sm:$0xf]
        %v563 = vld [vmem:[%s327 + $0x30c] sm:$0xf]
        %v564 = vld [vmem:[%s327 + $0x310] sm:$0xf]
        %v565 = vld [vmem:[%s327 + $0x314] sm:$0xf]
        %v566 = vld [vmem:[%s327 + $0x318] sm:$0xf]
        %v567 = vld [vmem:[%s327 + $0x31c] sm:$0xf]
        %v568 = vld [vmem:[%s327 + $0x320] sm:$0xf]
        %v569 = vld [vmem:[%s327 + $0x324] sm:$0xf]
        %v570 = vld [vmem:[%s327 + $0x328] sm:$0xf]
        %v571 = vld [vmem:[%s327 + $0x32c] sm:$0xf]
        %v572 = vld [vmem:[%s327 + $0x330] sm:$0xf]
        %v573 = vld [vmem:[%s327 + $0x334] sm:$0xf]
        %v574 = vld [vmem:[%s327 + $0x338] sm:$0xf]
        %v575 = vld [vmem:[%s327 + $0x33c] sm:$0xf]
        %v576 = vld [vmem:[%s327 + $0x340] sm:$0xf]
        %v577 = vld [vmem:[%s327 + $0x344] sm:$0xf]
        %v578 = vld [vmem:[%s327 + $0x348] sm:$0xf]
        %v579 = vld [vmem:[%s327 + $0x34c] sm:$0xf]
        %v580 = vld [vmem:[%s327 + $0x350] sm:$0xf]
        %v581 = vld [vmem:[%s327 + $0x354] sm:$0xf]
        %v582 = vld [vmem:[%s327 + $0x358] sm:$0xf]
        %v583 = vld [vmem:[%s327 + $0x35c] sm:$0xf]
        %v584 = vld [vmem:[%s327 + $0x360] sm:$0xf]
        %v585 = vld [vmem:[%s327 + $0x364] sm:$0xf]
        %v586 = vld [vmem:[%s327 + $0x368] sm:$0xf]
        %v587 = vld [vmem:[%s327 + $0x36c] sm:$0xf]
        %v588 = vld [vmem:[%s327 + $0x370] sm:$0xf]
        %v589 = vld [vmem:[%s327 + $0x374] sm:$0xf]
        %v590 = vld [vmem:[%s327 + $0x378] sm:$0xf]
        %v591 = vld [vmem:[%s327 + $0x37c] sm:$0xf]
        %v592 = vld [vmem:[%s327 + $0x380] sm:$0xf]
        %v593 = vld [vmem:[%s327 + $0x384] sm:$0xf]
        %v594 = vld [vmem:[%s327 + $0x388] sm:$0xf]
        %v595 = vld [vmem:[%s327 + $0x38c] sm:$0xf]
        %v596 = vld [vmem:[%s327 + $0x390] sm:$0xf]
        %v597 = vld [vmem:[%s327 + $0x394] sm:$0xf]
        %v598 = vld [vmem:[%s327 + $0x398] sm:$0xf]
        %v599 = vld [vmem:[%s327 + $0x39c] sm:$0xf]
        %v600 = vld [vmem:[%s327 + $0x3a0] sm:$0xf]
        %v601 = vld [vmem:[%s327 + $0x3a4] sm:$0xf]
        %v602 = vld [vmem:[%s327 + $0x3a8] sm:$0xf]
        %v603 = vld [vmem:[%s327 + $0x3ac] sm:$0xf]
        %v604 = vld [vmem:[%s327 + $0x3b0] sm:$0xf]
        %v605 = vld [vmem:[%s327 + $0x3b4] sm:$0xf]
        %v606 = vld [vmem:[%s327 + $0x3b8] sm:$0xf]
        %v607 = vld [vmem:[%s327 + $0x3bc] sm:$0xf]
        %v608 = vld [vmem:[%s327 + $0x3c0] sm:$0xf]
        %v609 = vld [vmem:[%s327 + $0x3c4] sm:$0xf]
        %v610 = vld [vmem:[%s327 + $0x3c8] sm:$0xf]
        %v611 = vld [vmem:[%s327 + $0x3cc] sm:$0xf]
        %v612 = vld [vmem:[%s327 + $0x3d0] sm:$0xf]
        %v613 = vld [vmem:[%s327 + $0x3d4] sm:$0xf]
        %v614 = vld [vmem:[%s327 + $0x3d8] sm:$0xf]
        %v615 = vld [vmem:[%s327 + $0x3dc] sm:$0xf]
        %v616 = vld [vmem:[%s327 + $0x3e0] sm:$0xf]
        %v617 = vld [vmem:[%s327 + $0x3e4] sm:$0xf]
        %v618 = vld [vmem:[%s327 + $0x3e8] sm:$0xf]
        %v619 = vld [vmem:[%s327 + $0x3ec] sm:$0xf]
        %v620 = vld [vmem:[%s327 + $0x3f0] sm:$0xf]
        %v621 = vld [vmem:[%s327 + $0x3f4] sm:$0xf]
        %v622 = vld [vmem:[%s327 + $0x3f8] sm:$0xf]
        %v623 = vld [vmem:[%s327 + $0x3fc] sm:$0xf]
        %v640 = vunpack.c.l.b16 %v352
        %v641 = vunpack.c.h.b16 %v352
        %v642 = vunpack.c.l.b16 %v353
        %v643 = vunpack.c.h.b16 %v353
        %v644 = vunpack.c.l.b16 %v354
        %v645 = vunpack.c.h.b16 %v354
        %v646 = vunpack.c.l.b16 %v355
        %v647 = vunpack.c.h.b16 %v355
        %v648 = vunpack.c.l.b16 %v356
        %v649 = vunpack.c.h.b16 %v356
        %v650 = vunpack.c.l.b16 %v357
        %v651 = vunpack.c.h.b16 %v357
        %v652 = vunpack.c.l.b16 %v358
        %v653 = vunpack.c.h.b16 %v358
        %v654 = vunpack.c.l.b16 %v359
        %v655 = vunpack.c.h.b16 %v359
        %v656 = vunpack.c.l.b16 %v360
        %v657 = vunpack.c.h.b16 %v360
        %v658 = vunpack.c.l.b16 %v361
        %v659 = vunpack.c.h.b16 %v361
        %v660 = vunpack.c.l.b16 %v362
        %v661 = vunpack.c.h.b16 %v362
        %v662 = vunpack.c.l.b16 %v363
        %v663 = vunpack.c.h.b16 %v363
        %v664 = vunpack.c.l.b16 %v364
        %v665 = vunpack.c.h.b16 %v364
        %v666 = vunpack.c.l.b16 %v365
        %v667 = vunpack.c.h.b16 %v365
        %v668 = vunpack.c.l.b16 %v366
        %v669 = vunpack.c.h.b16 %v366
        %v670 = vunpack.c.l.b16 %v367
        %v671 = vunpack.c.h.b16 %v367
        %v672 = vpack.c.b16 %v656, %v640
        %v673 = vpack.c.b16 %v657, %v641
        %v674 = vpack.c.b16 %v658, %v642
        %v675 = vpack.c.b16 %v659, %v643
        %v676 = vpack.c.b16 %v660, %v644
        %v677 = vpack.c.b16 %v661, %v645
        %v678 = vpack.c.b16 %v662, %v646
        %v679 = vpack.c.b16 %v663, %v647
        %v680 = vpack.c.b16 %v664, %v648
        %v681 = vpack.c.b16 %v665, %v649
        %v682 = vpack.c.b16 %v666, %v650
        %v683 = vpack.c.b16 %v667, %v651
        %v684 = vpack.c.b16 %v668, %v652
        %v685 = vpack.c.b16 %v669, %v653
        %v686 = vpack.c.b16 %v670, %v654
        %v687 = vpack.c.b16 %v671, %v655
        %v960 = vunpack.c.l.b16 %v368
        %v961 = vunpack.c.l.b16 %v369
        %v962 = vunpack.c.l.b16 %v370
        %v963 = vunpack.c.l.b16 %v371
        %v964 = vunpack.c.l.b16 %v372
        %v965 = vunpack.c.l.b16 %v373
        %v966 = vunpack.c.l.b16 %v374
        %v967 = vunpack.c.l.b16 %v375
        %v968 = vunpack.c.l.b16 %v376
        %v969 = vunpack.c.l.b16 %v377
        %v970 = vunpack.c.l.b16 %v378
        %v971 = vunpack.c.l.b16 %v379
        %v972 = vunpack.c.l.b16 %v380
        %v973 = vunpack.c.l.b16 %v381
        %v974 = vunpack.c.l.b16 %v382
        %v975 = vunpack.c.l.b16 %v383
        %v976 = vunpack.c.l.b16 %v384
        %v977 = vunpack.c.l.b16 %v385
        %v978 = vunpack.c.l.b16 %v386
        %v979 = vunpack.c.l.b16 %v387
        %v980 = vunpack.c.l.b16 %v388
        %v981 = vunpack.c.l.b16 %v389
        %v982 = vunpack.c.l.b16 %v390
        %v983 = vunpack.c.l.b16 %v391
        %v984 = vunpack.c.l.b16 %v392
        %v985 = vunpack.c.l.b16 %v393
        %v986 = vunpack.c.l.b16 %v394
        %v987 = vunpack.c.l.b16 %v395
        %v988 = vunpack.c.l.b16 %v396
        %v989 = vunpack.c.l.b16 %v397
        %v990 = vunpack.c.l.b16 %v398
        %v991 = vunpack.c.l.b16 %v399
        %v992 = vunpack.c.l.b16 %v400
        %v993 = vunpack.c.l.b16 %v401
        %v994 = vunpack.c.l.b16 %v402
        %v995 = vunpack.c.l.b16 %v403
        %v996 = vunpack.c.l.b16 %v404
        %v997 = vunpack.c.l.b16 %v405
        %v998 = vunpack.c.l.b16 %v406
        %v999 = vunpack.c.l.b16 %v407
        %v1000 = vunpack.c.l.b16 %v408
        %v1001 = vunpack.c.l.b16 %v409
        %v1002 = vunpack.c.l.b16 %v410
        %v1003 = vunpack.c.l.b16 %v411
        %v1004 = vunpack.c.l.b16 %v412
        %v1005 = vunpack.c.l.b16 %v413
        %v1006 = vunpack.c.l.b16 %v414
        %v1007 = vunpack.c.l.b16 %v415
        %v1008 = vunpack.c.l.b16 %v416
        %v1009 = vunpack.c.l.b16 %v417
        %v1010 = vunpack.c.l.b16 %v418
        %v1011 = vunpack.c.l.b16 %v419
        %v1012 = vunpack.c.l.b16 %v420
        %v1013 = vunpack.c.l.b16 %v421
        %v1014 = vunpack.c.l.b16 %v422
        %v1015 = vunpack.c.l.b16 %v423
        %v1016 = vunpack.c.l.b16 %v424
        %v1017 = vunpack.c.l.b16 %v425
        %v1018 = vunpack.c.l.b16 %v426
        %v1019 = vunpack.c.l.b16 %v427
        %v1020 = vunpack.c.l.b16 %v428
        %v1021 = vunpack.c.l.b16 %v429
        %v1022 = vunpack.c.l.b16 %v430
        %v1023 = vunpack.c.l.b16 %v431
        %v1024 = vunpack.c.l.b16 %v432
        %v1025 = vunpack.c.l.b16 %v433
        %v1026 = vunpack.c.l.b16 %v434
        %v1027 = vunpack.c.l.b16 %v435
        %v1028 = vunpack.c.l.b16 %v436
        %v1029 = vunpack.c.l.b16 %v437
        %v1030 = vunpack.c.l.b16 %v438
        %v1031 = vunpack.c.l.b16 %v439
        %v1032 = vunpack.c.l.b16 %v440
        %v1033 = vunpack.c.l.b16 %v441
        %v1034 = vunpack.c.l.b16 %v442
        %v1035 = vunpack.c.l.b16 %v443
        %v1036 = vunpack.c.l.b16 %v444
        %v1037 = vunpack.c.l.b16 %v445
        %v1038 = vunpack.c.l.b16 %v446
        %v1039 = vunpack.c.l.b16 %v447
        %v1040 = vunpack.c.l.b16 %v448
        %v1041 = vunpack.c.l.b16 %v449
        %v1042 = vunpack.c.l.b16 %v450
        %v1043 = vunpack.c.l.b16 %v451
        %v1044 = vunpack.c.l.b16 %v452
        %v1045 = vunpack.c.l.b16 %v453
        %v1046 = vunpack.c.l.b16 %v454
        %v1047 = vunpack.c.l.b16 %v455
        %v1048 = vunpack.c.l.b16 %v456
        %v1049 = vunpack.c.l.b16 %v457
        %v1050 = vunpack.c.l.b16 %v458
        %v1051 = vunpack.c.l.b16 %v459
        %v1052 = vunpack.c.l.b16 %v460
        %v1053 = vunpack.c.l.b16 %v461
        %v1054 = vunpack.c.l.b16 %v462
        %v1055 = vunpack.c.l.b16 %v463
        %v1056 = vunpack.c.l.b16 %v464
        %v1057 = vunpack.c.l.b16 %v465
        %v1058 = vunpack.c.l.b16 %v466
        %v1059 = vunpack.c.l.b16 %v467
        %v1060 = vunpack.c.l.b16 %v468
        %v1061 = vunpack.c.l.b16 %v469
        %v1062 = vunpack.c.l.b16 %v470
        %v1063 = vunpack.c.l.b16 %v471
        %v1064 = vunpack.c.l.b16 %v472
        %v1065 = vunpack.c.l.b16 %v473
        %v1066 = vunpack.c.l.b16 %v474
        %v1067 = vunpack.c.l.b16 %v475
        %v1068 = vunpack.c.l.b16 %v476
        %v1069 = vunpack.c.l.b16 %v477
        %v1070 = vunpack.c.l.b16 %v478
        %v1071 = vunpack.c.l.b16 %v479
        %v1072 = vunpack.c.l.b16 %v480
        %v1073 = vunpack.c.l.b16 %v481
        %v1074 = vunpack.c.l.b16 %v482
        %v1075 = vunpack.c.l.b16 %v483
        %v1076 = vunpack.c.l.b16 %v484
        %v1077 = vunpack.c.l.b16 %v485
        %v1078 = vunpack.c.l.b16 %v486
        %v1079 = vunpack.c.l.b16 %v487
        %v1080 = vunpack.c.l.b16 %v488
        %v1081 = vunpack.c.l.b16 %v489
        %v1082 = vunpack.c.l.b16 %v490
        %v1083 = vunpack.c.l.b16 %v491
        %v1084 = vunpack.c.l.b16 %v492
        %v1085 = vunpack.c.l.b16 %v493
        %v1086 = vunpack.c.l.b16 %v494
        %v1087 = vunpack.c.l.b16 %v495
        %v1088 = vunpack.c.l.b16 %v496
        %v1089 = vunpack.c.l.b16 %v497
        %v1090 = vunpack.c.l.b16 %v498
        %v1091 = vunpack.c.l.b16 %v499
        %v1092 = vunpack.c.l.b16 %v500
        %v1093 = vunpack.c.l.b16 %v501
        %v1094 = vunpack.c.l.b16 %v502
        %v1095 = vunpack.c.l.b16 %v503
        %v1096 = vunpack.c.l.b16 %v504
        %v1097 = vunpack.c.l.b16 %v505
        %v1098 = vunpack.c.l.b16 %v506
        %v1099 = vunpack.c.l.b16 %v507
        %v1100 = vunpack.c.l.b16 %v508
        %v1101 = vunpack.c.l.b16 %v509
        %v1102 = vunpack.c.l.b16 %v510
        %v1103 = vunpack.c.l.b16 %v511
        %v1104 = vunpack.c.l.b16 %v512
        %v1105 = vunpack.c.l.b16 %v513
        %v1106 = vunpack.c.l.b16 %v514
        %v1107 = vunpack.c.l.b16 %v515
        %v1108 = vunpack.c.l.b16 %v516
        %v1109 = vunpack.c.l.b16 %v517
        %v1110 = vunpack.c.l.b16 %v518
        %v1111 = vunpack.c.l.b16 %v519
        %v1112 = vunpack.c.l.b16 %v520
        %v1113 = vunpack.c.l.b16 %v521
        %v1114 = vunpack.c.l.b16 %v522
        %v1115 = vunpack.c.l.b16 %v523
        %v1116 = vunpack.c.l.b16 %v524
        %v1117 = vunpack.c.l.b16 %v525
        %v1118 = vunpack.c.l.b16 %v526
        %v1119 = vunpack.c.l.b16 %v527
        %v1120 = vunpack.c.l.b16 %v528
        %v1121 = vunpack.c.l.b16 %v529
        %v1122 = vunpack.c.l.b16 %v530
        %v1123 = vunpack.c.l.b16 %v531
        %v1124 = vunpack.c.l.b16 %v532
        %v1125 = vunpack.c.l.b16 %v533
        %v1126 = vunpack.c.l.b16 %v534
        %v1127 = vunpack.c.l.b16 %v535
        %v1128 = vunpack.c.l.b16 %v536
        %v1129 = vunpack.c.l.b16 %v537
        %v1130 = vunpack.c.l.b16 %v538
        %v1131 = vunpack.c.l.b16 %v539
        %v1132 = vunpack.c.l.b16 %v540
        %v1133 = vunpack.c.l.b16 %v541
        %v1134 = vunpack.c.l.b16 %v542
        %v1135 = vunpack.c.l.b16 %v543
        %v1136 = vunpack.c.l.b16 %v544
        %v1137 = vunpack.c.l.b16 %v545
        %v1138 = vunpack.c.l.b16 %v546
        %v1139 = vunpack.c.l.b16 %v547
        %v1140 = vunpack.c.l.b16 %v548
        %v1141 = vunpack.c.l.b16 %v549
        %v1142 = vunpack.c.l.b16 %v550
        %v1143 = vunpack.c.l.b16 %v551
        %v1144 = vunpack.c.l.b16 %v552
        %v1145 = vunpack.c.l.b16 %v553
        %v1146 = vunpack.c.l.b16 %v554
        %v1147 = vunpack.c.l.b16 %v555
        %v1148 = vunpack.c.l.b16 %v556
        %v1149 = vunpack.c.l.b16 %v557
        %v1150 = vunpack.c.l.b16 %v558
        %v1151 = vunpack.c.l.b16 %v559
        %v1152 = vunpack.c.l.b16 %v560
        %v1153 = vunpack.c.l.b16 %v561
        %v1154 = vunpack.c.l.b16 %v562
        %v1155 = vunpack.c.l.b16 %v563
        %v1156 = vunpack.c.l.b16 %v564
        %v1157 = vunpack.c.l.b16 %v565
        %v1158 = vunpack.c.l.b16 %v566
        %v1159 = vunpack.c.l.b16 %v567
        %v1160 = vunpack.c.l.b16 %v568
        %v1161 = vunpack.c.l.b16 %v569
        %v1162 = vunpack.c.l.b16 %v570
        %v1163 = vunpack.c.l.b16 %v571
        %v1164 = vunpack.c.l.b16 %v572
        %v1165 = vunpack.c.l.b16 %v573
        %v1166 = vunpack.c.l.b16 %v574
        %v1167 = vunpack.c.l.b16 %v575
        %v1168 = vunpack.c.l.b16 %v576
        %v1169 = vunpack.c.l.b16 %v577
        %v1170 = vunpack.c.l.b16 %v578
        %v1171 = vunpack.c.l.b16 %v579
        %v1172 = vunpack.c.l.b16 %v580
        %v1173 = vunpack.c.l.b16 %v581
        %v1174 = vunpack.c.l.b16 %v582
        %v1175 = vunpack.c.l.b16 %v583
        %v1176 = vunpack.c.l.b16 %v584
        %v1177 = vunpack.c.l.b16 %v585
        %v1178 = vunpack.c.l.b16 %v586
        %v1179 = vunpack.c.l.b16 %v587
        %v1180 = vunpack.c.l.b16 %v588
        %v1181 = vunpack.c.l.b16 %v589
        %v1182 = vunpack.c.l.b16 %v590
        %v1183 = vunpack.c.l.b16 %v591
        %v1184 = vunpack.c.l.b16 %v592
        %v1185 = vunpack.c.l.b16 %v593
        %v1186 = vunpack.c.l.b16 %v594
        %v1187 = vunpack.c.l.b16 %v595
        %v1188 = vunpack.c.l.b16 %v596
        %v1189 = vunpack.c.l.b16 %v597
        %v1190 = vunpack.c.l.b16 %v598
        %v1191 = vunpack.c.l.b16 %v599
        %v1192 = vunpack.c.l.b16 %v600
        %v1193 = vunpack.c.l.b16 %v601
        %v1194 = vunpack.c.l.b16 %v602
        %v1195 = vunpack.c.l.b16 %v603
        %v1196 = vunpack.c.l.b16 %v604
        %v1197 = vunpack.c.l.b16 %v605
        %v1198 = vunpack.c.l.b16 %v606
        %v1199 = vunpack.c.l.b16 %v607
        %v1200 = vunpack.c.l.b16 %v608
        %v1201 = vunpack.c.l.b16 %v609
        %v1202 = vunpack.c.l.b16 %v610
        %v1203 = vunpack.c.l.b16 %v611
        %v1204 = vunpack.c.l.b16 %v612
        %v1205 = vunpack.c.l.b16 %v613
        %v1206 = vunpack.c.l.b16 %v614
        %v1207 = vunpack.c.l.b16 %v615
        %v1208 = vunpack.c.l.b16 %v616
        %v1209 = vunpack.c.l.b16 %v617
        %v1210 = vunpack.c.l.b16 %v618
        %v1211 = vunpack.c.l.b16 %v619
        %v1212 = vunpack.c.l.b16 %v620
        %v1213 = vunpack.c.l.b16 %v621
        %v1214 = vunpack.c.l.b16 %v622
        %v1215 = vunpack.c.l.b16 %v623
        %v1216 = vpack.c.b16 %v961, %v960
        %v1217 = vpack.c.b16 %v963, %v962
        %v1218 = vpack.c.b16 %v965, %v964
        %v1219 = vpack.c.b16 %v967, %v966
        %v1220 = vpack.c.b16 %v969, %v968
        %v1221 = vpack.c.b16 %v971, %v970
        %v1222 = vpack.c.b16 %v973, %v972
        %v1223 = vpack.c.b16 %v975, %v974
        %v1224 = vpack.c.b16 %v977, %v976
        %v1225 = vpack.c.b16 %v979, %v978
        %v1226 = vpack.c.b16 %v981, %v980
        %v1227 = vpack.c.b16 %v983, %v982
        %v1228 = vpack.c.b16 %v985, %v984
        %v1229 = vpack.c.b16 %v987, %v986
        %v1230 = vpack.c.b16 %v989, %v988
        %v1231 = vpack.c.b16 %v991, %v990
        %v1232 = vpack.c.b16 %v993, %v992
        %v1233 = vpack.c.b16 %v995, %v994
        %v1234 = vpack.c.b16 %v997, %v996
        %v1235 = vpack.c.b16 %v999, %v998
        %v1236 = vpack.c.b16 %v1001, %v1000
        %v1237 = vpack.c.b16 %v1003, %v1002
        %v1238 = vpack.c.b16 %v1005, %v1004
        %v1239 = vpack.c.b16 %v1007, %v1006
        %v1240 = vpack.c.b16 %v1009, %v1008
        %v1241 = vpack.c.b16 %v1011, %v1010
        %v1242 = vpack.c.b16 %v1013, %v1012
        %v1243 = vpack.c.b16 %v1015, %v1014
        %v1244 = vpack.c.b16 %v1017, %v1016
        %v1245 = vpack.c.b16 %v1019, %v1018
        %v1246 = vpack.c.b16 %v1021, %v1020
        %v1247 = vpack.c.b16 %v1023, %v1022
        %v1248 = vpack.c.b16 %v1025, %v1024
        %v1249 = vpack.c.b16 %v1027, %v1026
        %v1250 = vpack.c.b16 %v1029, %v1028
        %v1251 = vpack.c.b16 %v1031, %v1030
        %v1252 = vpack.c.b16 %v1033, %v1032
        %v1253 = vpack.c.b16 %v1035, %v1034
        %v1254 = vpack.c.b16 %v1037, %v1036
        %v1255 = vpack.c.b16 %v1039, %v1038
        %v1256 = vpack.c.b16 %v1041, %v1040
        %v1257 = vpack.c.b16 %v1043, %v1042
        %v1258 = vpack.c.b16 %v1045, %v1044
        %v1259 = vpack.c.b16 %v1047, %v1046
        %v1260 = vpack.c.b16 %v1049, %v1048
        %v1261 = vpack.c.b16 %v1051, %v1050
        %v1262 = vpack.c.b16 %v1053, %v1052
        %v1263 = vpack.c.b16 %v1055, %v1054
        %v1264 = vpack.c.b16 %v1057, %v1056
        %v1265 = vpack.c.b16 %v1059, %v1058
        %v1266 = vpack.c.b16 %v1061, %v1060
        %v1267 = vpack.c.b16 %v1063, %v1062
        %v1268 = vpack.c.b16 %v1065, %v1064
        %v1269 = vpack.c.b16 %v1067, %v1066
        %v1270 = vpack.c.b16 %v1069, %v1068
        %v1271 = vpack.c.b16 %v1071, %v1070
        %v1272 = vpack.c.b16 %v1073, %v1072
        %v1273 = vpack.c.b16 %v1075, %v1074
        %v1274 = vpack.c.b16 %v1077, %v1076
        %v1275 = vpack.c.b16 %v1079, %v1078
        %v1276 = vpack.c.b16 %v1081, %v1080
        %v1277 = vpack.c.b16 %v1083, %v1082
        %v1278 = vpack.c.b16 %v1085, %v1084
        %v1279 = vpack.c.b16 %v1087, %v1086
        %v1280 = vpack.c.b16 %v1089, %v1088
        %v1281 = vpack.c.b16 %v1091, %v1090
        %v1282 = vpack.c.b16 %v1093, %v1092
        %v1283 = vpack.c.b16 %v1095, %v1094
        %v1284 = vpack.c.b16 %v1097, %v1096
        %v1285 = vpack.c.b16 %v1099, %v1098
        %v1286 = vpack.c.b16 %v1101, %v1100
        %v1287 = vpack.c.b16 %v1103, %v1102
        %v1288 = vpack.c.b16 %v1105, %v1104
        %v1289 = vpack.c.b16 %v1107, %v1106
        %v1290 = vpack.c.b16 %v1109, %v1108
        %v1291 = vpack.c.b16 %v1111, %v1110
        %v1292 = vpack.c.b16 %v1113, %v1112
        %v1293 = vpack.c.b16 %v1115, %v1114
        %v1294 = vpack.c.b16 %v1117, %v1116
        %v1295 = vpack.c.b16 %v1119, %v1118
        %v1296 = vpack.c.b16 %v1121, %v1120
        %v1297 = vpack.c.b16 %v1123, %v1122
        %v1298 = vpack.c.b16 %v1125, %v1124
        %v1299 = vpack.c.b16 %v1127, %v1126
        %v1300 = vpack.c.b16 %v1129, %v1128
        %v1301 = vpack.c.b16 %v1131, %v1130
        %v1302 = vpack.c.b16 %v1133, %v1132
        %v1303 = vpack.c.b16 %v1135, %v1134
        %v1304 = vpack.c.b16 %v1137, %v1136
        %v1305 = vpack.c.b16 %v1139, %v1138
        %v1306 = vpack.c.b16 %v1141, %v1140
        %v1307 = vpack.c.b16 %v1143, %v1142
        %v1308 = vpack.c.b16 %v1145, %v1144
        %v1309 = vpack.c.b16 %v1147, %v1146
        %v1310 = vpack.c.b16 %v1149, %v1148
        %v1311 = vpack.c.b16 %v1151, %v1150
        %v1312 = vpack.c.b16 %v1153, %v1152
        %v1313 = vpack.c.b16 %v1155, %v1154
        %v1314 = vpack.c.b16 %v1157, %v1156
        %v1315 = vpack.c.b16 %v1159, %v1158
        %v1316 = vpack.c.b16 %v1161, %v1160
        %v1317 = vpack.c.b16 %v1163, %v1162
        %v1318 = vpack.c.b16 %v1165, %v1164
        %v1319 = vpack.c.b16 %v1167, %v1166
        %v1320 = vpack.c.b16 %v1169, %v1168
        %v1321 = vpack.c.b16 %v1171, %v1170
        %v1322 = vpack.c.b16 %v1173, %v1172
        %v1323 = vpack.c.b16 %v1175, %v1174
        %v1324 = vpack.c.b16 %v1177, %v1176
        %v1325 = vpack.c.b16 %v1179, %v1178
        %v1326 = vpack.c.b16 %v1181, %v1180
        %v1327 = vpack.c.b16 %v1183, %v1182
        %v1328 = vpack.c.b16 %v1185, %v1184
        %v1329 = vpack.c.b16 %v1187, %v1186
        %v1330 = vpack.c.b16 %v1189, %v1188
        %v1331 = vpack.c.b16 %v1191, %v1190
        %v1332 = vpack.c.b16 %v1193, %v1192
        %v1333 = vpack.c.b16 %v1195, %v1194
        %v1334 = vpack.c.b16 %v1197, %v1196
        %v1335 = vpack.c.b16 %v1199, %v1198
        %v1336 = vpack.c.b16 %v1201, %v1200
        %v1337 = vpack.c.b16 %v1203, %v1202
        %v1338 = vpack.c.b16 %v1205, %v1204
        %v1339 = vpack.c.b16 %v1207, %v1206
        %v1340 = vpack.c.b16 %v1209, %v1208
        %v1341 = vpack.c.b16 %v1211, %v1210
        %v1342 = vpack.c.b16 %v1213, %v1212
        %v1343 = vpack.c.b16 %v1215, %v1214
        %1472 = vmatpush.bf16.msra.mxu0 %v1223
        %1473 = vmatpush.bf16.msra.mxu0 %v1222
        %1474 = vmatpush.bf16.msra.mxu0 %v1221
        %1475 = vmatpush.bf16.msra.mxu0 %v1220
        %1476 = vmatpush.bf16.msra.mxu0 %v1219
        %1477 = vmatpush.bf16.msra.mxu0 %v1218
        %1478 = vmatpush.bf16.msra.mxu0 %v1217
        %1479 = vmatpush.bf16.msra.mxu0 %v1216
        %1480 = vmatmul.bf16.gmra.mxu0 %v672
        %v1481 = vpop.f32.mrf.mxu0
        %v1482 = vadd.f32 0.0, %v1481
        %v1483 = vpop.f32.mrf.mxu0
        %v1484 = vadd.f32 0.0, %v1483
        %1485 = vdwg.mxu0
        %1486 = vmatpush.bf16.msra.mxu0 %v1231
        %1487 = vmatpush.bf16.msra.mxu0 %v1230
        %1488 = vmatpush.bf16.msra.mxu0 %v1229
        %1489 = vmatpush.bf16.msra.mxu0 %v1228
        %1490 = vmatpush.bf16.msra.mxu0 %v1227
        %1491 = vmatpush.bf16.msra.mxu0 %v1226
        %1492 = vmatpush.bf16.msra.mxu0 %v1225
        %1493 = vmatpush.bf16.msra.mxu0 %v1224
        %1494 = vmatmul.bf16.gmra.mxu0 %v673
        %v1495 = vpop.f32.mrf.mxu0
        %v1496 = vadd.f32 %v1482, %v1495
        %v1497 = vpop.f32.mrf.mxu0
        %v1498 = vadd.f32 %v1484, %v1497
        %1499 = vdwg.mxu0
        %1500 = vmatpush.bf16.msra.mxu0 %v1239
        %1501 = vmatpush.bf16.msra.mxu0 %v1238
        %1502 = vmatpush.bf16.msra.mxu0 %v1237
        %1503 = vmatpush.bf16.msra.mxu0 %v1236
        %1504 = vmatpush.bf16.msra.mxu0 %v1235
        %1505 = vmatpush.bf16.msra.mxu0 %v1234
        %1506 = vmatpush.bf16.msra.mxu0 %v1233
        %1507 = vmatpush.bf16.msra.mxu0 %v1232
        %1508 = vmatmul.bf16.gmra.mxu0 %v674
        %v1509 = vpop.f32.mrf.mxu0
        %v1510 = vadd.f32 %v1496, %v1509
        %v1511 = vpop.f32.mrf.mxu0
        %v1512 = vadd.f32 %v1498, %v1511
        %1513 = vdwg.mxu0
        %1514 = vmatpush.bf16.msra.mxu0 %v1247
        %1515 = vmatpush.bf16.msra.mxu0 %v1246
        %1516 = vmatpush.bf16.msra.mxu0 %v1245
        %1517 = vmatpush.bf16.msra.mxu0 %v1244
        %1518 = vmatpush.bf16.msra.mxu0 %v1243
        %1519 = vmatpush.bf16.msra.mxu0 %v1242
        %1520 = vmatpush.bf16.msra.mxu0 %v1241
        %1521 = vmatpush.bf16.msra.mxu0 %v1240
        %1522 = vmatmul.bf16.gmra.mxu0 %v675
        %v1523 = vpop.f32.mrf.mxu0
        %v1524 = vadd.f32 %v1510, %v1523
        %v1525 = vpop.f32.mrf.mxu0
        %v1526 = vadd.f32 %v1512, %v1525
        %1527 = vdwg.mxu0
        %1528 = vmatpush.bf16.msra.mxu0 %v1255
        %1529 = vmatpush.bf16.msra.mxu0 %v1254
        %1530 = vmatpush.bf16.msra.mxu0 %v1253
        %1531 = vmatpush.bf16.msra.mxu0 %v1252
        %1532 = vmatpush.bf16.msra.mxu0 %v1251
        %1533 = vmatpush.bf16.msra.mxu0 %v1250
        %1534 = vmatpush.bf16.msra.mxu0 %v1249
        %1535 = vmatpush.bf16.msra.mxu0 %v1248
        %1536 = vmatmul.bf16.gmra.mxu0 %v676
        %v1537 = vpop.f32.mrf.mxu0
        %v1538 = vadd.f32 %v1524, %v1537
        %v1539 = vpop.f32.mrf.mxu0
        %v1540 = vadd.f32 %v1526, %v1539
        %1541 = vdwg.mxu0
        %1542 = vmatpush.bf16.msra.mxu0 %v1263
        %1543 = vmatpush.bf16.msra.mxu0 %v1262
        %1544 = vmatpush.bf16.msra.mxu0 %v1261
        %1545 = vmatpush.bf16.msra.mxu0 %v1260
        %1546 = vmatpush.bf16.msra.mxu0 %v1259
        %1547 = vmatpush.bf16.msra.mxu0 %v1258
        %1548 = vmatpush.bf16.msra.mxu0 %v1257
        %1549 = vmatpush.bf16.msra.mxu0 %v1256
        %1550 = vmatmul.bf16.gmra.mxu0 %v677
        %v1551 = vpop.f32.mrf.mxu0
        %v1552 = vadd.f32 %v1538, %v1551
        %v1553 = vpop.f32.mrf.mxu0
        %v1554 = vadd.f32 %v1540, %v1553
        %1555 = vdwg.mxu0
        %1556 = vmatpush.bf16.msra.mxu0 %v1271
        %1557 = vmatpush.bf16.msra.mxu0 %v1270
        %1558 = vmatpush.bf16.msra.mxu0 %v1269
        %1559 = vmatpush.bf16.msra.mxu0 %v1268
        %1560 = vmatpush.bf16.msra.mxu0 %v1267
        %1561 = vmatpush.bf16.msra.mxu0 %v1266
        %1562 = vmatpush.bf16.msra.mxu0 %v1265
        %1563 = vmatpush.bf16.msra.mxu0 %v1264
        %1564 = vmatmul.bf16.gmra.mxu0 %v678
        %v1565 = vpop.f32.mrf.mxu0
        %v1566 = vadd.f32 %v1552, %v1565
        %v1567 = vpop.f32.mrf.mxu0
        %v1568 = vadd.f32 %v1554, %v1567
        %1569 = vdwg.mxu0
        %1570 = vmatpush.bf16.msra.mxu0 %v1279
        %1571 = vmatpush.bf16.msra.mxu0 %v1278
        %1572 = vmatpush.bf16.msra.mxu0 %v1277
        %1573 = vmatpush.bf16.msra.mxu0 %v1276
        %1574 = vmatpush.bf16.msra.mxu0 %v1275
        %1575 = vmatpush.bf16.msra.mxu0 %v1274
        %1576 = vmatpush.bf16.msra.mxu0 %v1273
        %1577 = vmatpush.bf16.msra.mxu0 %v1272
        %1578 = vmatmul.bf16.gmra.mxu0 %v679
        %v1579 = vpop.f32.mrf.mxu0
        %v1580 = vadd.f32 %v1566, %v1579
        %v1581 = vpop.f32.mrf.mxu0
        %v1582 = vadd.f32 %v1568, %v1581
        %1583 = vdwg.mxu0
        %1584 = vmatpush.bf16.msra.mxu0 %v1287
        %1585 = vmatpush.bf16.msra.mxu0 %v1286
        %1586 = vmatpush.bf16.msra.mxu0 %v1285
        %1587 = vmatpush.bf16.msra.mxu0 %v1284
        %1588 = vmatpush.bf16.msra.mxu0 %v1283
        %1589 = vmatpush.bf16.msra.mxu0 %v1282
        %1590 = vmatpush.bf16.msra.mxu0 %v1281
        %1591 = vmatpush.bf16.msra.mxu0 %v1280
        %1592 = vmatmul.bf16.gmra.mxu0 %v680
        %v1593 = vpop.f32.mrf.mxu0
        %v1594 = vadd.f32 %v1580, %v1593
        %v1595 = vpop.f32.mrf.mxu0
        %v1596 = vadd.f32 %v1582, %v1595
        %1597 = vdwg.mxu0
        %1598 = vmatpush.bf16.msra.mxu0 %v1295
        %1599 = vmatpush.bf16.msra.mxu0 %v1294
        %1600 = vmatpush.bf16.msra.mxu0 %v1293
        %1601 = vmatpush.bf16.msra.mxu0 %v1292
        %1602 = vmatpush.bf16.msra.mxu0 %v1291
        %1603 = vmatpush.bf16.msra.mxu0 %v1290
        %1604 = vmatpush.bf16.msra.mxu0 %v1289
        %1605 = vmatpush.bf16.msra.mxu0 %v1288
        %1606 = vmatmul.bf16.gmra.mxu0 %v681
        %v1607 = vpop.f32.mrf.mxu0
        %v1608 = vadd.f32 %v1594, %v1607
        %v1609 = vpop.f32.mrf.mxu0
        %v1610 = vadd.f32 %v1596, %v1609
        %1611 = vdwg.mxu0
        %1612 = vmatpush.bf16.msra.mxu0 %v1303
        %1613 = vmatpush.bf16.msra.mxu0 %v1302
        %1614 = vmatpush.bf16.msra.mxu0 %v1301
        %1615 = vmatpush.bf16.msra.mxu0 %v1300
        %1616 = vmatpush.bf16.msra.mxu0 %v1299
        %1617 = vmatpush.bf16.msra.mxu0 %v1298
        %1618 = vmatpush.bf16.msra.mxu0 %v1297
        %1619 = vmatpush.bf16.msra.mxu0 %v1296
        %1620 = vmatmul.bf16.gmra.mxu0 %v682
        %v1621 = vpop.f32.mrf.mxu0
        %v1622 = vadd.f32 %v1608, %v1621
        %v1623 = vpop.f32.mrf.mxu0
        %v1624 = vadd.f32 %v1610, %v1623
        %1625 = vdwg.mxu0
        %1626 = vmatpush.bf16.msra.mxu0 %v1311
        %1627 = vmatpush.bf16.msra.mxu0 %v1310
        %1628 = vmatpush.bf16.msra.mxu0 %v1309
        %1629 = vmatpush.bf16.msra.mxu0 %v1308
        %1630 = vmatpush.bf16.msra.mxu0 %v1307
        %1631 = vmatpush.bf16.msra.mxu0 %v1306
        %1632 = vmatpush.bf16.msra.mxu0 %v1305
        %1633 = vmatpush.bf16.msra.mxu0 %v1304
        %1634 = vmatmul.bf16.gmra.mxu0 %v683
        %v1635 = vpop.f32.mrf.mxu0
        %v1636 = vadd.f32 %v1622, %v1635
        %v1637 = vpop.f32.mrf.mxu0
        %v1638 = vadd.f32 %v1624, %v1637
        %1639 = vdwg.mxu0
        %1640 = vmatpush.bf16.msra.mxu0 %v1319
        %1641 = vmatpush.bf16.msra.mxu0 %v1318
        %1642 = vmatpush.bf16.msra.mxu0 %v1317
        %1643 = vmatpush.bf16.msra.mxu0 %v1316
        %1644 = vmatpush.bf16.msra.mxu0 %v1315
        %1645 = vmatpush.bf16.msra.mxu0 %v1314
        %1646 = vmatpush.bf16.msra.mxu0 %v1313
        %1647 = vmatpush.bf16.msra.mxu0 %v1312
        %1648 = vmatmul.bf16.gmra.mxu0 %v684
        %v1649 = vpop.f32.mrf.mxu0
        %v1650 = vadd.f32 %v1636, %v1649
        %v1651 = vpop.f32.mrf.mxu0
        %v1652 = vadd.f32 %v1638, %v1651
        %1653 = vdwg.mxu0
        %1654 = vmatpush.bf16.msra.mxu0 %v1327
        %1655 = vmatpush.bf16.msra.mxu0 %v1326
        %1656 = vmatpush.bf16.msra.mxu0 %v1325
        %1657 = vmatpush.bf16.msra.mxu0 %v1324
        %1658 = vmatpush.bf16.msra.mxu0 %v1323
        %1659 = vmatpush.bf16.msra.mxu0 %v1322
        %1660 = vmatpush.bf16.msra.mxu0 %v1321
        %1661 = vmatpush.bf16.msra.mxu0 %v1320
        %1662 = vmatmul.bf16.gmra.mxu0 %v685
        %v1663 = vpop.f32.mrf.mxu0
        %v1664 = vadd.f32 %v1650, %v1663
        %v1665 = vpop.f32.mrf.mxu0
        %v1666 = vadd.f32 %v1652, %v1665
        %1667 = vdwg.mxu0
        %1668 = vmatpush.bf16.msra.mxu0 %v1335
        %1669 = vmatpush.bf16.msra.mxu0 %v1334
        %1670 = vmatpush.bf16.msra.mxu0 %v1333
        %1671 = vmatpush.bf16.msra.mxu0 %v1332
        %1672 = vmatpush.bf16.msra.mxu0 %v1331
        %1673 = vmatpush.bf16.msra.mxu0 %v1330
        %1674 = vmatpush.bf16.msra.mxu0 %v1329
        %1675 = vmatpush.bf16.msra.mxu0 %v1328
        %1676 = vmatmul.bf16.gmra.mxu0 %v686
        %v1677 = vpop.f32.mrf.mxu0
        %v1678 = vadd.f32 %v1664, %v1677
        %v1679 = vpop.f32.mrf.mxu0
        %v1680 = vadd.f32 %v1666, %v1679
        %1681 = vdwg.mxu0
        %1682 = vmatpush.bf16.msra.mxu0 %v1343
        %1683 = vmatpush.bf16.msra.mxu0 %v1342
        %1684 = vmatpush.bf16.msra.mxu0 %v1341
        %1685 = vmatpush.bf16.msra.mxu0 %v1340
        %1686 = vmatpush.bf16.msra.mxu0 %v1339
        %1687 = vmatpush.bf16.msra.mxu0 %v1338
        %1688 = vmatpush.bf16.msra.mxu0 %v1337
        %1689 = vmatpush.bf16.msra.mxu0 %v1336
        %1690 = vmatmul.bf16.gmra.mxu0 %v687
        %v1691 = vpop.f32.mrf.mxu0
        %v1692 = vadd.f32 %v1678, %v1691
        %v1693 = vpop.f32.mrf.mxu0
        %v1694 = vadd.f32 %v1680, %v1693
        %1695 = vdwg.mxu0
        %v1696 = vadd.f32 %v350, %v1692
        %v1697 = vadd.f32 %v351, %v1694
        %1698 = vst [vmem:[#allocation2] sm:$0xff] %v1696
        %1699 = vst [vmem:[#allocation2 + $0x8] sm:$0xff] %v1697
        %p1700 = scmp.eq.s32.totalorder %s22, 6
        // Predicated region
        $region64: #{forward.20} parent=54 // pred_check
          %p1701 = pneg %p1700
        $region65: #{forward.20} parent=54 // pred_check_branch
          %1703 = sbr.rel (%p1701) target = $region67
        $region66: #{forward.20} parent=54 // pred_region
          %v1704 = vld [vmem:[#allocation2] sm:$0xff]
          %v1705 = vld [vmem:[#allocation2 + $0x8] sm:$0xff]
          %v1706 = vld [vmem:[%s331] sm:$0x1]
          %v1708 = vperm.slane %v1706, 0
          %v1710 = vmul.f32 %v1704, %v1708
          %v1711 = vmul.f32 %v1705, %v1708
          %v1712 = vld [vmem:[%s334] sm:$0x1]
          %v1714 = vperm.slane %v1712, 0
          %v1716 = vadd.f32 %v1710, %v1714
          %v1717 = vadd.f32 %v1711, %v1714
          %v1718 = vmax.f32 %v1716, 0.0
          %v1719 = vmax.f32 %v1717, 0.0
          %v1720 = vpack.c.bf16 %v1718, %v1718
          %v1721 = vpack.c.bf16 %v1719, %v1719
          %1722 = vst [vmem:[%s342] sm:$0xf] %v1720
          %1723 = vst [vmem:[%s342 + $0x4] sm:$0xf] %v1721
        $region67: #{forward.20} parent=54 // pred_fallthru
          _
        %s1724 = smul.u32 2, %s20
        %p1725 = scmp.lt.s32.totalorder %s1724, 1
        %s1726 = scalar_select %p1725, %s1724, 1
        %p1727 = scmp.lt.s32.totalorder %s21, 0
        %s1728 = scalar_select %p1727, %s21, 0
        %s1729 = sadd.s32 %s1728, %s1726
        %s1730 = smul.addr %s1729, 4
        %s1731 = scalar_lea.vmem %s4, %s1730
        // Predicated region
        $region68: #{forward.20} parent=54 // pred_check
          %p1732 = pneg %p162
        $region69: #{forward.20} parent=54 // pred_check_branch
          %1734 = sbr.rel (%p1732) target = $region71
        $region70: #{forward.20} parent=54 // pred_region
          %s1735 = smul.u32 2, %s20
        $region71: #{forward.20} parent=54 // pred_fallthru
          _
        // Predicated region
        $region72: #{forward.20} parent=54 // pred_check
          %p1736 = pneg %p162
        $region73: #{forward.20} parent=54 // pred_check_branch
          %1738 = sbr.rel (%p1736) target = $region75
        $region74: #{forward.20} parent=54 // pred_region
          %s1739 = smul.u32 2, %s20
          %p1740 = scmp.lt.s32.totalorder %s1739, 1
          %s1741 = scalar_select %p1740, %s1739, 1
          %p1742 = scmp.lt.s32.totalorder %s21, 0
          %s1743 = scalar_select %p1742, %s21, 0
          %s1744 = sadd.s32 %s1743, %s1741
          %s1745 = smul.addr %s1744, 4
          %s1746 = scalar_lea.vmem %s4, %s1745
        $region75: #{forward.20} parent=54 // pred_fallthru
          _
      $region55: #{forward.20} parent=5 // pred_fallthru
        _
      %p1747 = scmp.le.s32.totalorder 2, %s10
      // Predicated region
      $region76: #{forward.20} parent=5 // pred_check
        %p1748 = pneg %p1747
      $region77: #{forward.20} parent=5 // pred_check_branch
        %1750 = sbr.rel (%p1748) target = $region79
      $region78: #{forward.20} parent=5 // pred_region
        %s1751 = ssub.s32 %s10, 2
      $region79: #{forward.20} parent=5 // pred_fallthru
        _
    $region6: #{forward.20} parent=1 // loop_footer
      %s14 = sadd.s32 1, %s10
    $region7: #{forward.20} parent=1 // loop_footer_branch
      %9 = sbr.rel target = $region3
    $region8: #{forward.20} parent=1 // loop_exit
      _

</llo_original>
